<compile_context>
chip_gen: v5e
topology: v5e:2x2
jax: 0.10.0
libtpu: 0.0.40
codegen_flags: <defaults>
</compile_context>

<pallas_src>
import functools

import jax
import jax.numpy as jnp
from jax.experimental import pallas as pl
from jax.experimental.pallas import tpu as pltpu

LANE = 128
SUBLANE = 8
_VMEM_LIMIT = 48 * 1024 * 1024   # stay well under v7x's 64 MiB physical VMEM


def _round_up(x, m):
    return (x + m - 1) // m * m


def _rows_total(h):
    # rows of the canonical padded layout: 1 top halo + h + >=2 bottom zero rows,
    # rounded to even so the pool's parity packing never needs an extra pad copy.
    return _round_up(h + 3, 2)


# ---------------------------------------------------------------------------
# Pallas kernels
# ---------------------------------------------------------------------------

def _conv3x3_kernel(net_id_ref, x_ref, w_ref, b_ref, m_ref, o_ref, *, Wp2, Mc, relu):
    """Fused 3x3 same-conv + bias + ReLU for one image and one Cout tile.

    x_ref : (1, Mf, Cin_p)   canonical flat padded input (bf16), Mf = ROWS*Wp2
    w_ref : (1, 9, Cin_p, TC) per-net weight taps (bf16), tap index = kh*3+kw
    b_ref : (1, 1, TC)        bias (f32)
    m_ref : (Mc, 1)           validity mask (f32): 0 on halo / padding columns
    o_ref : (1, Mf, TC)       canonical flat padded output (bf16)
    Each of the 9 taps is a contiguous row-slice of the flat input -> 9 MXU dots
    accumulated in f32 (no im2col materialization in HBM).
    """
    del net_id_ref                       # only used by the index maps
    tc = o_ref.shape[-1]
    mf = o_ref.shape[1]
    q0 = Wp2 + 1                         # flat offset of logical pixel (0, 0)

    acc = jnp.zeros((Mc, tc), jnp.float32)
    for dy in range(3):
        for dx in range(3):
            off = dy * Wp2 + dx
            xs = x_ref[0, off:off + Mc, :]                       # (Mc, Cin_p)
            acc = acc + jnp.dot(xs, w_ref[0, dy * 3 + dx],
                                preferred_element_type=jnp.float32)

    acc = acc + b_ref[0]                                          # (1, TC) broadcast
    if relu:
        acc = jnp.maximum(acc, 0.0)
    acc = acc * m_ref[...]                                        # zero halo / pad cols

    # write back in canonical form: zero head rows, zero tail rows, valid chunk
    o_ref[0, 0:q0, :] = jnp.zeros((q0, tc), o_ref.dtype)
    o_ref[0, q0 + Mc:mf, :] = jnp.zeros((mf - q0 - Mc, tc), o_ref.dtype)
    o_ref[0, q0:q0 + Mc, :] = acc.astype(o_ref.dtype)


def _avgpool_kernel(x_ref, o_ref, *, H, W, Ho, Wo, Cp):
    """AvgPool2d(k=3, s=2, pad=0, ceil_mode=True) for one image.

    x_ref : (HP, 2, WP, 2*Cp) canonical padded input with row/col parities packed
            into dim 1 / channel halves (a free row-major reshape in the wrapper),
            so all 9 window taps are plain contiguous slices.
    o_ref : (1, ROWS_out, Woc+2, Cp) canonical padded output for the next level.
    """
    x = x_ref[...].astype(jnp.float32)        # (HP, 2, WP, 2Cp)
    xe = x[:, 0]                              # even padded rows  (HP, WP, 2Cp)
    xo = x[:, 1]                              # odd  padded rows

    def col_taps(r):                          # (Ho, WP, 2Cp) -> (Ho, Wo, Cp)
        return (r[:, 0:Wo, Cp:2 * Cp]         # padded col 1 + 2*wo
                + r[:, 1:Wo + 1, 0:Cp]        # padded col 2 + 2*wo
                + r[:, 1:Wo + 1, Cp:2 * Cp])  # padded col 3 + 2*wo

    acc = (col_taps(xo[0:Ho])                 # padded row 1 + 2*ho
           + col_taps(xe[1:Ho + 1])           # padded row 2 + 2*ho
           + col_taps(xo[1:Ho + 1]))          # padded row 3 + 2*ho

    # PyTorch divisor (ceil_mode, padding=0): number of in-bounds elements per window.
    oh = jax.lax.broadcasted_iota(jnp.int32, (Ho, Wo), 0)
    ow = jax.lax.broadcasted_iota(jnp.int32, (Ho, Wo), 1)
    cnt_h = jnp.minimum(2 * oh + 3, H) - 2 * oh
    cnt_w = jnp.minimum(2 * ow + 3, W) - 2 * ow
    inv = (1.0 / (cnt_h * cnt_w).astype(jnp.float32))[:, :, None]
    y = acc * inv

    o_ref[...] = jnp.zeros(o_ref.shape, o_ref.dtype)
    o_ref[0, 1:Ho + 1, 1:Wo + 1, :] = y.astype(o_ref.dtype)


def _latent_head_kernel(net_id_ref, x_ref, w_ref, b_ref, o_ref, *, inv_hw):
    """Global spatial mean -> 1x1 conv.  Output is lane dense (2L padded to 128)."""
    del net_id_ref
    x = x_ref[0].astype(jnp.float32)                      # (Mf, Cp), zeros off-interior
    m = jnp.sum(x, axis=0, keepdims=True) * inv_hw        # (1, Cp) spatial mean
    out = jnp.dot(m, w_ref[0], preferred_element_type=jnp.float32) + b_ref[0]
    o_ref[0] = out


# ---------------------------------------------------------------------------
# Layer wrappers (glue: free reshapes / padding / pallas_call plumbing)
# ---------------------------------------------------------------------------

def conv3x3_relu(feat, w_stack, b_stack, col_mask, net_id, H, W, Wc, *, relu=True):
    """feat: (B, Mf, Cin_p) canonical flat bf16.  w_stack: (G, 9, Cin_p, Cout_p) bf16.
    b_stack: (G, 1, Cout_p) f32.  col_mask: (Mc, 1) f32.  net_id: (B,) int32."""
    B, Mf, cin_p = feat.shape
    Wp2 = Wc + 2
    Mc = H * Wp2
    cout_p = w_stack.shape[-1]
    TC = 256 if cout_p % 256 == 0 else 128     # match 256-wide MXU tiles when possible
    J = cout_p // TC
    kernel = functools.partial(_conv3x3_kernel, Wp2=Wp2, Mc=Mc, relu=relu)
    return pl.pallas_call(
        kernel,
        out_shape=jax.ShapeDtypeStruct((B, Mf, cout_p), feat.dtype),
        grid_spec=pltpu.PrefetchScalarGridSpec(
            num_scalar_prefetch=1,
            grid=(B, J),
            in_specs=[
                pl.BlockSpec((1, Mf, cin_p), lambda b, j, nid: (b, 0, 0)),
                pl.BlockSpec((1, 9, cin_p, TC), lambda b, j, nid: (nid[b], 0, 0, j)),
                pl.BlockSpec((1, 1, TC), lambda b, j, nid: (nid[b], 0, j)),
                pl.BlockSpec((Mc, 1), lambda b, j, nid: (0, 0)),
            ],
            out_specs=pl.BlockSpec((1, Mf, TC), lambda b, j, nid: (b, 0, j)),
        ),
        compiler_params=pltpu.CompilerParams(
            dimension_semantics=("parallel", "parallel"),
            vmem_limit_bytes=_VMEM_LIMIT),
    )(net_id, feat, w_stack, b_stack, col_mask)


def avgpool3x3_s2_ceil(feat, H, W, Wc):
    """feat: (B, ROWS*(Wc+2), Cp) canonical flat.  Returns (pooled flat, Ho, Wo, Woc)."""
    B, Mf, Cp = feat.shape
    Wp2 = Wc + 2
    rows = _rows_total(H)
    Ho = -(-(H - 3) // 2) + 1
    Wo = -(-(W - 3) // 2) + 1
    Woc = _round_up(Wo, SUBLANE)
    HP = rows // 2
    WP = Wp2 // 2
    # free row-major relabel: pack row/col parity into dim 1 / channel halves
    xr = feat.reshape(B * HP, 2, WP, 2 * Cp)
    rows_o = _rows_total(Ho)
    kernel = functools.partial(_avgpool_kernel, H=H, W=W, Ho=Ho, Wo=Wo, Cp=Cp)
    out = pl.pallas_call(
        kernel,
        out_shape=jax.ShapeDtypeStruct((B, rows_o, Woc + 2, Cp), feat.dtype),
        grid_spec=pltpu.PrefetchScalarGridSpec(
            num_scalar_prefetch=0,
            grid=(B,),
            in_specs=[pl.BlockSpec((HP, 2, WP, 2 * Cp), lambda b: (b, 0, 0, 0))],
            out_specs=pl.BlockSpec((1, rows_o, Woc + 2, Cp), lambda b: (b, 0, 0, 0)),
        ),
        compiler_params=pltpu.CompilerParams(
            dimension_semantics=("parallel",),
            vmem_limit_bytes=_VMEM_LIMIT),
    )(xr)
    return out.reshape(B, rows_o * (Woc + 2), Cp), Ho, Wo, Woc


def latent_head(feat, hw_stack, hb_stack, net_id, H, W):
    """feat: (B, Mf, Cp).  hw_stack: (G, Cp, 2Lp) f32.  hb_stack: (G, 1, 2Lp) f32.
    Returns (B, 2Lp) f32 (caller slices the valid 2L columns)."""
    B, Mf, Cp = feat.shape
    two_lp = hw_stack.shape[-1]
    kernel = functools.partial(_latent_head_kernel, inv_hw=1.0 / float(H * W))
    out = pl.pallas_call(
        kernel,
        out_shape=jax.ShapeDtypeStruct((B, 1, two_lp), jnp.float32),
        grid_spec=pltpu.PrefetchScalarGridSpec(
            num_scalar_prefetch=1,
            grid=(B,),
            in_specs=[
                pl.BlockSpec((1, Mf, Cp), lambda b, nid: (b, 0, 0)),
                pl.BlockSpec((1, Cp, two_lp), lambda b, nid: (nid[b], 0, 0)),
                pl.BlockSpec((1, 1, two_lp), lambda b, nid: (nid[b], 0, 0)),
            ],
            out_specs=pl.BlockSpec((1, 1, two_lp), lambda b, nid: (b, 0, 0)),
        ),
        compiler_params=pltpu.CompilerParams(dimension_semantics=("parallel",)),
    )(net_id, feat, hw_stack, hb_stack)
    return out[:, 0, :]


# ---------------------------------------------------------------------------
# Parameter / input packing (glue)
# ---------------------------------------------------------------------------

def _to_canonical_flat(x_nhwc, cp, wc, dtype=jnp.bfloat16):
    n, h, w, c = x_nhwc.shape
    rows = _rows_total(h)
    x = jnp.pad(x_nhwc, ((0, 0), (1, rows - h - 1), (1, 1 + wc - w), (0, cp - c)))
    return x.astype(dtype).reshape(n, rows * (wc + 2), cp)


def _prep_conv_w(w, cin_p, cout_p):
    cout, cin = w.shape[0], w.shape[1]
    w2 = jnp.transpose(w, (2, 3, 1, 0)).reshape(9, cin, cout)     # tap = kh*3 + kw
    w2 = jnp.pad(w2, ((0, 0), (0, cin_p - cin), (0, cout_p - cout)))
    return w2.astype(jnp.bfloat16)


def _make_col_mask(H, W, Wp2):
    Mc = H * Wp2
    q = jnp.arange(Mc, dtype=jnp.int32) + (Wp2 + 1)
    c = q % Wp2
    r = q // Wp2
    valid = (c >= 1) & (c <= W) & (r <= H)
    return valid.astype(jnp.float32)[:, None]


# ---------------------------------------------------------------------------
# Model forward
# ---------------------------------------------------------------------------

def probabilistic_unet_forward(params, patch, segm=None, coord_features=None,
                               training=True):
    """patch/segm/coord_features are NCHW (PyTorch convention).
    Prior and posterior encoders are stacked along the batch axis and run through a
    single shared chain of Pallas kernels (per-net weights selected via a scalar-
    prefetched net id)."""
    x = patch
    if coord_features is not None:
        x = jnp.concatenate([x, coord_features], axis=1)
    x_nhwc = jnp.transpose(x, (0, 2, 3, 1))

    nets = [("prior", x_nhwc)]
    if training and segm is not None:
        segm_nhwc = jnp.transpose(segm, (0, 2, 3, 1))
        nets.append(("posterior", jnp.concatenate([x_nhwc, segm_nhwc], axis=-1)))

    G = len(nets)
    N, H, W, _ = x_nhwc.shape
    names = [nm for nm, _ in nets]
    plist = [params[nm] for nm in names]

    cin_p = _round_up(max(a.shape[-1] for _, a in nets), LANE)
    wc = _round_up(W, SUBLANE)
    feat = jnp.concatenate([_to_canonical_flat(a, cin_p, wc) for _, a in nets], axis=0)
    net_id = jnp.repeat(jnp.arange(G, dtype=jnp.int32), N)

    h_cur, w_cur, wc_cur = H, W, wc
    prev_cp = cin_p
    for lv in range(len(plist[0]["enc"])):
        if lv != 0:
            feat, h_cur, w_cur, wc_cur = avgpool3x3_s2_ceil(feat, h_cur, w_cur, wc_cur)
        col_mask = _make_col_mask(h_cur, w_cur, wc_cur + 2)
        for li in range(len(plist[0]["enc"][lv])):
            cout = plist[0]["enc"][lv][li][0].shape[0]
            cout_p = _round_up(cout, LANE)
            w_stack = jnp.stack(
                [_prep_conv_w(p["enc"][lv][li][0], prev_cp, cout_p) for p in plist], 0)
            b_stack = jnp.stack(
                [jnp.pad(p["enc"][lv][li][1], (0, cout_p - cout)) for p in plist],
                0)[:, None, :].astype(jnp.float32)
            feat = conv3x3_relu(feat, w_stack, b_stack, col_mask, net_id,
                                h_cur, w_cur, wc_cur, relu=True)
            prev_cp = cout_p

    two_l = plist[0]["head_w"].shape[1]
    two_lp = _round_up(two_l, LANE)
    hw_stack = jnp.stack(
        [jnp.pad(p["head_w"],
                 ((0, prev_cp - p["head_w"].shape[0]), (0, two_lp - two_l)))
         for p in plist], 0).astype(jnp.float32)
    hb_stack = jnp.stack(
        [jnp.pad(p["head_b"], (0, two_lp - two_l)) for p in plist],
        0)[:, None, :].astype(jnp.float32)
    head = latent_head(feat, hw_stack, hb_stack, net_id, h_cur, w_cur)[:, :two_l]

    latent = two_l // 2
    out = {}
    for gi, nm in enumerate(names):
        rows = head[gi * N:(gi + 1) * N]
        out[f"{nm}_mu"] = rows[:, :latent]
        out[f"{nm}_sigma"] = jnp.exp(rows[:, latent:])
    # TODO(synk): self.unet is None in the reference module, so unet_features is not
    # computed; fcomb is constructed in __init__ but unused by forward().
    return out


# ---------------------------------------------------------------------------
# Deterministic parameter init (shapes follow the module __init__)
# ---------------------------------------------------------------------------

def _init_conv(key, cin, cout):
    kw, kb = jax.random.split(key)
    w = jax.random.normal(kw, (cout, cin, 3, 3), jnp.float32) * jnp.sqrt(2.0 / (cin * 9))
    b = jax.random.normal(kb, (cout,), jnp.float32) * 0.01
    return w, b


def _init_gaussian_net(key, input_channels, num_filters, no_convs_per_block,
                       latent_dim, posterior):
    cin0 = input_channels + (1 if posterior else 0)       # +1 for the concatenated segm
    keys = jax.random.split(key, len(num_filters) * no_convs_per_block + 1)
    blocks, prev, ki = [], cin0, 0
    for nf in num_filters:
        block = []
        for j in range(no_convs_per_block):
            block.append(_init_conv(keys[ki], prev if j == 0 else nf, nf))
            ki += 1
        blocks.append(block)
        prev = nf
    kw, kb = jax.random.split(keys[ki])
    head_w = jax.random.normal(kw, (num_filters[-1], 2 * latent_dim), jnp.float32) \
        * jnp.sqrt(1.0 / num_filters[-1])
    head_b = jax.random.normal(kb, (2 * latent_dim,), jnp.float32) * 0.01
    return {"enc": blocks, "head_w": head_w, "head_b": head_b}


def init_probabilistic_unet_params(key, input_channels, num_filters,
                                   no_convs_per_block, latent_dim):
    kp, kq = jax.random.split(key)
    return {
        "prior": _init_gaussian_net(kp, input_channels, num_filters,
                                    no_convs_per_block, latent_dim, posterior=False),
        "posterior": _init_gaussian_net(kq, input_channels, num_filters,
                                        no_convs_per_block, latent_dim, posterior=True),
    }


# ---------------------------------------------------------------------------
# Demo
# ---------------------------------------------------------------------------

if __name__ == "__main__":
    key = jax.random.PRNGKey(0)
    kparam, kx, kc, ks = jax.random.split(key, 4)

    # Small shapes consistent with the module: patch channels + 1 coord channel.
    batch, patch_ch, H, W = 2, 4, 16, 16
    num_filters = [8, 16, 32]          # small analogue of [64,128,256,512,1024]
    latent_dim = 6
    no_convs_per_block = 3
    input_channels = patch_ch + 1      # analogue of 64 + 1

    params = init_probabilistic_unet_params(
        kparam, input_channels, num_filters, no_convs_per_block, latent_dim)

    patch = jax.random.normal(kx, (batch, patch_ch, H, W), jnp.float32)
    coord_features = jax.random.normal(kc, (batch, 1, H, W), jnp.float32)
    segm = (jax.random.uniform(ks, (batch, 1, H, W)) > 0.5).astype(jnp.float32)

    fwd = jax.jit(lambda p, x, s, c: probabilistic_unet_forward(
        p, x, segm=s, coord_features=c, training=True))
    out = fwd(params, patch, segm, coord_features)
    jax.block_until_ready(out)

    assert out["prior_mu"].shape == (batch, latent_dim)
    assert out["prior_sigma"].shape == (batch, latent_dim)
    assert out["posterior_mu"].shape == (batch, latent_dim)
    assert out["posterior_sigma"].shape == (batch, latent_dim)
    print("KERNEL_OK")
</pallas_src>

<mosaic_0001>
module attributes {stable_mosaic.version = 11 : i64} {
  func.func @_conv3x3_kernel(%arg0: i32, %arg1: i32, %arg2: memref<4xi32, #tpu.memory_space<smem>>, %arg3: memref<1x360x128xbf16, #tpu.memory_space<vmem>>, %arg4: memref<1x9x128x128xbf16, #tpu.memory_space<vmem>>, %arg5: memref<1x1x128xf32, #tpu.memory_space<vmem>>, %arg6: memref<288x1xf32, #tpu.memory_space<vmem>>, %arg7: memref<1x360x128xbf16, #tpu.memory_space<vmem>>) attributes {dimension_semantics = [#tpu.dimension_semantics<parallel>, #tpu.dimension_semantics<parallel>], iteration_bounds = array<i64: 4, 1>, scalar_prefetch = 1 : i64, scratch_operands = 0 : i64, tpu.core_type = #tpu.core_type<tc>, window_params = [{transform_indices = @transform_0, window_bounds = array<i64: 1, 360, 128>}, {transform_indices = @transform_1, window_bounds = array<i64: 1, 9, 128, 128>}, {transform_indices = @transform_2, window_bounds = array<i64: 1, 1, 128>}, {pipeline_mode = #tpu.pipeline_mode<synchronous>, transform_indices = @transform_3, window_bounds = array<i64: 288, 1>}, {transform_indices = @transform_4, window_bounds = array<i64: 1, 360, 128>}]} {
    %cst = arith.constant 0.000000e+00 : f32
    %0 = vector.broadcast %cst : f32 to vector<288x128xf32>
    %c0 = arith.constant 0 : index
    %c0_0 = arith.constant 0 : index
    %c0_1 = arith.constant 0 : index
    %1 = vector.load %arg3[%c0, %c0_0, %c0_1] : memref<1x360x128xbf16, #tpu.memory_space<vmem>>, vector<1x288x128xbf16>
    %2 = vector.shape_cast %1 : vector<1x288x128xbf16> to vector<288x128xbf16>
    %c0_2 = arith.constant 0 : index
    %c0_3 = arith.constant 0 : index
    %c0_4 = arith.constant 0 : index
    %c0_5 = arith.constant 0 : index
    %3 = vector.load %arg4[%c0_2, %c0_3, %c0_4, %c0_5] : memref<1x9x128x128xbf16, #tpu.memory_space<vmem>>, vector<1x1x128x128xbf16>
    %4 = vector.shape_cast %3 : vector<1x1x128x128xbf16> to vector<128x128xbf16>
    %cst_6 = arith.constant dense<0.000000e+00> : vector<288x128xf32>
    %5 = tpu.matmul %2, %4, %cst_6 {dimension_numbers = #tpu.dot_dimension_numbers<[1], [0], [0], [1], [0, 0, 1, 1], [], []>} : vector<288x128xbf16>, vector<128x128xbf16>, vector<288x128xf32> -> vector<288x128xf32>
    %6 = arith.addf %0, %5 : vector<288x128xf32>
    %c0_7 = arith.constant 0 : index
    %c1 = arith.constant 1 : index
    %c0_8 = arith.constant 0 : index
    %7 = vector.load %arg3[%c0_7, %c1, %c0_8] : memref<1x360x128xbf16, #tpu.memory_space<vmem>>, vector<1x288x128xbf16>
    %8 = vector.shape_cast %7 : vector<1x288x128xbf16> to vector<288x128xbf16>
    %c0_9 = arith.constant 0 : index
    %c1_10 = arith.constant 1 : index
    %c0_11 = arith.constant 0 : index
    %c0_12 = arith.constant 0 : index
    %9 = vector.load %arg4[%c0_9, %c1_10, %c0_11, %c0_12] : memref<1x9x128x128xbf16, #tpu.memory_space<vmem>>, vector<1x1x128x128xbf16>
    %10 = vector.shape_cast %9 : vector<1x1x128x128xbf16> to vector<128x128xbf16>
    %cst_13 = arith.constant dense<0.000000e+00> : vector<288x128xf32>
    %11 = tpu.matmul %8, %10, %cst_13 {dimension_numbers = #tpu.dot_dimension_numbers<[1], [0], [0], [1], [0, 0, 1, 1], [], []>} : vector<288x128xbf16>, vector<128x128xbf16>, vector<288x128xf32> -> vector<288x128xf32>
    %12 = arith.addf %6, %11 : vector<288x128xf32>
    %c0_14 = arith.constant 0 : index
    %c2 = arith.constant 2 : index
    %c0_15 = arith.constant 0 : index
    %13 = vector.load %arg3[%c0_14, %c2, %c0_15] : memref<1x360x128xbf16, #tpu.memory_space<vmem>>, vector<1x288x128xbf16>
    %14 = vector.shape_cast %13 : vector<1x288x128xbf16> to vector<288x128xbf16>
    %c0_16 = arith.constant 0 : index
    %c2_17 = arith.constant 2 : index
    %c0_18 = arith.constant 0 : index
    %c0_19 = arith.constant 0 : index
    %15 = vector.load %arg4[%c0_16, %c2_17, %c0_18, %c0_19] : memref<1x9x128x128xbf16, #tpu.memory_space<vmem>>, vector<1x1x128x128xbf16>
    %16 = vector.shape_cast %15 : vector<1x1x128x128xbf16> to vector<128x128xbf16>
    %cst_20 = arith.constant dense<0.000000e+00> : vector<288x128xf32>
    %17 = tpu.matmul %14, %16, %cst_20 {dimension_numbers = #tpu.dot_dimension_numbers<[1], [0], [0], [1], [0, 0, 1, 1], [], []>} : vector<288x128xbf16>, vector<128x128xbf16>, vector<288x128xf32> -> vector<288x128xf32>
    %18 = arith.addf %12, %17 : vector<288x128xf32>
    %c0_21 = arith.constant 0 : index
    %c18 = arith.constant 18 : index
    %c0_22 = arith.constant 0 : index
    %19 = vector.load %arg3[%c0_21, %c18, %c0_22] : memref<1x360x128xbf16, #tpu.memory_space<vmem>>, vector<1x288x128xbf16>
    %20 = vector.shape_cast %19 : vector<1x288x128xbf16> to vector<288x128xbf16>
    %c0_23 = arith.constant 0 : index
    %c3 = arith.constant 3 : index
    %c0_24 = arith.constant 0 : index
    %c0_25 = arith.constant 0 : index
    %21 = vector.load %arg4[%c0_23, %c3, %c0_24, %c0_25] : memref<1x9x128x128xbf16, #tpu.memory_space<vmem>>, vector<1x1x128x128xbf16>
    %22 = vector.shape_cast %21 : vector<1x1x128x128xbf16> to vector<128x128xbf16>
    %cst_26 = arith.constant dense<0.000000e+00> : vector<288x128xf32>
    %23 = tpu.matmul %20, %22, %cst_26 {dimension_numbers = #tpu.dot_dimension_numbers<[1], [0], [0], [1], [0, 0, 1, 1], [], []>} : vector<288x128xbf16>, vector<128x128xbf16>, vector<288x128xf32> -> vector<288x128xf32>
    %24 = arith.addf %18, %23 : vector<288x128xf32>
    %c0_27 = arith.constant 0 : index
    %c19 = arith.constant 19 : index
    %c0_28 = arith.constant 0 : index
    %25 = vector.load %arg3[%c0_27, %c19, %c0_28] : memref<1x360x128xbf16, #tpu.memory_space<vmem>>, vector<1x288x128xbf16>
    %26 = vector.shape_cast %25 : vector<1x288x128xbf16> to vector<288x128xbf16>
    %c0_29 = arith.constant 0 : index
    %c4 = arith.constant 4 : index
    %c0_30 = arith.constant 0 : index
    %c0_31 = arith.constant 0 : index
    %27 = vector.load %arg4[%c0_29, %c4, %c0_30, %c0_31] : memref<1x9x128x128xbf16, #tpu.memory_space<vmem>>, vector<1x1x128x128xbf16>
    %28 = vector.shape_cast %27 : vector<1x1x128x128xbf16> to vector<128x128xbf16>
    %cst_32 = arith.constant dense<0.000000e+00> : vector<288x128xf32>
    %29 = tpu.matmul %26, %28, %cst_32 {dimension_numbers = #tpu.dot_dimension_numbers<[1], [0], [0], [1], [0, 0, 1, 1], [], []>} : vector<288x128xbf16>, vector<128x128xbf16>, vector<288x128xf32> -> vector<288x128xf32>
    %30 = arith.addf %24, %29 : vector<288x128xf32>
    %c0_33 = arith.constant 0 : index
    %c20 = arith.constant 20 : index
    %c0_34 = arith.constant 0 : index
    %31 = vector.load %arg3[%c0_33, %c20, %c0_34] : memref<1x360x128xbf16, #tpu.memory_space<vmem>>, vector<1x288x128xbf16>
    %32 = vector.shape_cast %31 : vector<1x288x128xbf16> to vector<288x128xbf16>
    %c0_35 = arith.constant 0 : index
    %c5 = arith.constant 5 : index
    %c0_36 = arith.constant 0 : index
    %c0_37 = arith.constant 0 : index
    %33 = vector.load %arg4[%c0_35, %c5, %c0_36, %c0_37] : memref<1x9x128x128xbf16, #tpu.memory_space<vmem>>, vector<1x1x128x128xbf16>
    %34 = vector.shape_cast %33 : vector<1x1x128x128xbf16> to vector<128x128xbf16>
    %cst_38 = arith.constant dense<0.000000e+00> : vector<288x128xf32>
    %35 = tpu.matmul %32, %34, %cst_38 {dimension_numbers = #tpu.dot_dimension_numbers<[1], [0], [0], [1], [0, 0, 1, 1], [], []>} : vector<288x128xbf16>, vector<128x128xbf16>, vector<288x128xf32> -> vector<288x128xf32>
    %36 = arith.addf %30, %35 : vector<288x128xf32>
    %c0_39 = arith.constant 0 : index
    %c36 = arith.constant 36 : index
    %c0_40 = arith.constant 0 : index
    %37 = vector.load %arg3[%c0_39, %c36, %c0_40] : memref<1x360x128xbf16, #tpu.memory_space<vmem>>, vector<1x288x128xbf16>
    %38 = vector.shape_cast %37 : vector<1x288x128xbf16> to vector<288x128xbf16>
    %c0_41 = arith.constant 0 : index
    %c6 = arith.constant 6 : index
    %c0_42 = arith.constant 0 : index
    %c0_43 = arith.constant 0 : index
    %39 = vector.load %arg4[%c0_41, %c6, %c0_42, %c0_43] : memref<1x9x128x128xbf16, #tpu.memory_space<vmem>>, vector<1x1x128x128xbf16>
    %40 = vector.shape_cast %39 : vector<1x1x128x128xbf16> to vector<128x128xbf16>
    %cst_44 = arith.constant dense<0.000000e+00> : vector<288x128xf32>
    %41 = tpu.matmul %38, %40, %cst_44 {dimension_numbers = #tpu.dot_dimension_numbers<[1], [0], [0], [1], [0, 0, 1, 1], [], []>} : vector<288x128xbf16>, vector<128x128xbf16>, vector<288x128xf32> -> vector<288x128xf32>
    %42 = arith.addf %36, %41 : vector<288x128xf32>
    %c0_45 = arith.constant 0 : index
    %c37 = arith.constant 37 : index
    %c0_46 = arith.constant 0 : index
    %43 = vector.load %arg3[%c0_45, %c37, %c0_46] : memref<1x360x128xbf16, #tpu.memory_space<vmem>>, vector<1x288x128xbf16>
    %44 = vector.shape_cast %43 : vector<1x288x128xbf16> to vector<288x128xbf16>
    %c0_47 = arith.constant 0 : index
    %c7 = arith.constant 7 : index
    %c0_48 = arith.constant 0 : index
    %c0_49 = arith.constant 0 : index
    %45 = vector.load %arg4[%c0_47, %c7, %c0_48, %c0_49] : memref<1x9x128x128xbf16, #tpu.memory_space<vmem>>, vector<1x1x128x128xbf16>
    %46 = vector.shape_cast %45 : vector<1x1x128x128xbf16> to vector<128x128xbf16>
    %cst_50 = arith.constant dense<0.000000e+00> : vector<288x128xf32>
    %47 = tpu.matmul %44, %46, %cst_50 {dimension_numbers = #tpu.dot_dimension_numbers<[1], [0], [0], [1], [0, 0, 1, 1], [], []>} : vector<288x128xbf16>, vector<128x128xbf16>, vector<288x128xf32> -> vector<288x128xf32>
    %48 = arith.addf %42, %47 : vector<288x128xf32>
    %c0_51 = arith.constant 0 : index
    %c38 = arith.constant 38 : index
    %c0_52 = arith.constant 0 : index
    %49 = vector.load %arg3[%c0_51, %c38, %c0_52] : memref<1x360x128xbf16, #tpu.memory_space<vmem>>, vector<1x288x128xbf16>
    %50 = vector.shape_cast %49 : vector<1x288x128xbf16> to vector<288x128xbf16>
    %c0_53 = arith.constant 0 : index
    %c8 = arith.constant 8 : index
    %c0_54 = arith.constant 0 : index
    %c0_55 = arith.constant 0 : index
    %51 = vector.load %arg4[%c0_53, %c8, %c0_54, %c0_55] : memref<1x9x128x128xbf16, #tpu.memory_space<vmem>>, vector<1x1x128x128xbf16>
    %52 = vector.shape_cast %51 : vector<1x1x128x128xbf16> to vector<128x128xbf16>
    %cst_56 = arith.constant dense<0.000000e+00> : vector<288x128xf32>
    %53 = tpu.matmul %50, %52, %cst_56 {dimension_numbers = #tpu.dot_dimension_numbers<[1], [0], [0], [1], [0, 0, 1, 1], [], []>} : vector<288x128xbf16>, vector<128x128xbf16>, vector<288x128xf32> -> vector<288x128xf32>
    %54 = arith.addf %48, %53 : vector<288x128xf32>
    %c0_57 = arith.constant 0 : index
    %c0_58 = arith.constant 0 : index
    %c0_59 = arith.constant 0 : index
    %55 = vector.load %arg5[%c0_57, %c0_58, %c0_59] : memref<1x1x128xf32, #tpu.memory_space<vmem>>, vector<1x1x128xf32>
    %56 = vector.shape_cast %55 : vector<1x1x128xf32> to vector<1x128xf32>
    %57 = vector.broadcast %56 : vector<1x128xf32> to vector<288x128xf32>
    %58 = arith.addf %54, %57 : vector<288x128xf32>
    %cst_60 = arith.constant 0.000000e+00 : f32
    %59 = vector.broadcast %cst_60 : f32 to vector<288x128xf32>
    %60 = arith.maximumf %58, %59 : vector<288x128xf32>
    %c0_61 = arith.constant 0 : index
    %c0_62 = arith.constant 0 : index
    %61 = vector.load %arg6[%c0_61, %c0_62] : memref<288x1xf32, #tpu.memory_space<vmem>>, vector<288x1xf32>
    %62 = vector.broadcast %61 : vector<288x1xf32> to vector<288x128xf32>
    %63 = arith.mulf %60, %62 : vector<288x128xf32>
    %cst_63 = arith.constant 0.000000e+00 : bf16
    %64 = vector.broadcast %cst_63 : bf16 to vector<19x128xbf16>
    %c0_64 = arith.constant 0 : index
    %c0_65 = arith.constant 0 : index
    %c0_66 = arith.constant 0 : index
    %65 = vector.load %arg7[%c0_64, %c0_65, %c0_66] : memref<1x360x128xbf16, #tpu.memory_space<vmem>>, vector<1x19x128xbf16>
    %66 = vector.shape_cast %65 : vector<1x19x128xbf16> to vector<19x128xbf16>
    %67 = vector.shape_cast %64 : vector<19x128xbf16> to vector<1x19x128xbf16>
    tpu.vector_store %arg7[%c0_64, %c0_65, %c0_66], %67 {strides = array<i32>} : memref<1x360x128xbf16, #tpu.memory_space<vmem>>, vector<1x19x128xbf16>,
    %cst_67 = arith.constant 0.000000e+00 : bf16
    %68 = vector.broadcast %cst_67 : bf16 to vector<53x128xbf16>
    %c0_68 = arith.constant 0 : index
    %c307 = arith.constant 307 : index
    %c0_69 = arith.constant 0 : index
    %69 = vector.load %arg7[%c0_68, %c307, %c0_69] : memref<1x360x128xbf16, #tpu.memory_space<vmem>>, vector<1x53x128xbf16>
    %70 = vector.shape_cast %69 : vector<1x53x128xbf16> to vector<53x128xbf16>
    %71 = vector.shape_cast %68 : vector<53x128xbf16> to vector<1x53x128xbf16>
    tpu.vector_store %arg7[%c0_68, %c307, %c0_69], %71 {strides = array<i32>} : memref<1x360x128xbf16, #tpu.memory_space<vmem>>, vector<1x53x128xbf16>,
    %72 = arith.truncf %63 : vector<288x128xf32> to vector<288x128xbf16>
    %c0_70 = arith.constant 0 : index
    %c19_71 = arith.constant 19 : index
    %c0_72 = arith.constant 0 : index
    %73 = vector.load %arg7[%c0_70, %c19_71, %c0_72] : memref<1x360x128xbf16, #tpu.memory_space<vmem>>, vector<1x288x128xbf16>
    %74 = vector.shape_cast %73 : vector<1x288x128xbf16> to vector<288x128xbf16>
    %75 = vector.shape_cast %72 : vector<288x128xbf16> to vector<1x288x128xbf16>
    tpu.vector_store %arg7[%c0_70, %c19_71, %c0_72], %75 {strides = array<i32>} : memref<1x360x128xbf16, #tpu.memory_space<vmem>>, vector<1x288x128xbf16>,
    return
  }
  func.func @transform_0(%arg0: i32, %arg1: i32, %arg2: memref<4xi32, #tpu.memory_space<smem>>) -> (i32, i32, i32) {
    %c0_i32 = arith.constant 0 : i32
    %c0_i32_0 = arith.constant 0 : i32
    %c0_i32_1 = arith.constant 0 : i32
    return %arg0, %c0_i32, %c0_i32_0 : i32, i32, i32
  }
  func.func @transform_1(%arg0: i32, %arg1: i32, %arg2: memref<4xi32, #tpu.memory_space<smem>>) -> (i32, i32, i32, i32) {
    %0 = arith.index_cast %arg0 : i32 to index
    %1 = memref.load %arg2[%0] : memref<4xi32, #tpu.memory_space<smem>>
    %c0_i32 = arith.constant 0 : i32
    %c0_i32_0 = arith.constant 0 : i32
    %c0_i32_1 = arith.constant 0 : i32
    return %1, %c0_i32, %c0_i32_0, %arg1 : i32, i32, i32, i32
  }
  func.func @transform_2(%arg0: i32, %arg1: i32, %arg2: memref<4xi32, #tpu.memory_space<smem>>) -> (i32, i32, i32) {
    %0 = arith.index_cast %arg0 : i32 to index
    %1 = memref.load %arg2[%0] : memref<4xi32, #tpu.memory_space<smem>>
    %c0_i32 = arith.constant 0 : i32
    %c0_i32_0 = arith.constant 0 : i32
    return %1, %c0_i32, %arg1 : i32, i32, i32
  }
  func.func @transform_3(%arg0: i32, %arg1: i32, %arg2: memref<4xi32, #tpu.memory_space<smem>>) -> (i32, i32) {
    %c0_i32 = arith.constant 0 : i32
    %c0_i32_0 = arith.constant 0 : i32
    %c0_i32_1 = arith.constant 0 : i32
    return %c0_i32, %c0_i32_0 : i32, i32
  }
  func.func @transform_4(%arg0: i32, %arg1: i32, %arg2: memref<4xi32, #tpu.memory_space<smem>>) -> (i32, i32, i32) {
    %c0_i32 = arith.constant 0 : i32
    %c0_i32_0 = arith.constant 0 : i32
    return %arg0, %c0_i32, %arg1 : i32, i32, i32
  }
}

module attributes {stable_mosaic.version = 11 : i64} {
  func.func @_avgpool_kernel(%arg0: i32, %arg1: memref<10x2x9x256xbf16, #tpu.memory_space<vmem>>, %arg2: memref<1x12x10x128xbf16, #tpu.memory_space<vmem>>) attributes {dimension_semantics = [#tpu.dimension_semantics<parallel>], iteration_bounds = array<i64: 4>, scalar_prefetch = 0 : i64, scratch_operands = 0 : i64, tpu.core_type = #tpu.core_type<tc>, window_params = [{transform_indices = @transform_0, window_bounds = array<i64: 10, 2, 9, 256>}, {transform_indices = @transform_1, window_bounds = array<i64: 1, 12, 10, 128>}]} {
    %c0 = arith.constant 0 : index
    %c0_0 = arith.constant 0 : index
    %c0_1 = arith.constant 0 : index
    %c0_2 = arith.constant 0 : index
    %0 = vector.load %arg1[%c0, %c0_0, %c0_1, %c0_2] : memref<10x2x9x256xbf16, #tpu.memory_space<vmem>>, vector<10x2x9x256xbf16>
    %1 = arith.extf %0 : vector<10x2x9x256xbf16> to vector<10x2x9x256xf32>
    %2 = vector.extract_strided_slice %1 {offsets = [0, 0, 0, 0], sizes = [10, 1, 9, 256], strides = [1, 1, 1, 1]} : vector<10x2x9x256xf32> to vector<10x1x9x256xf32>
    %3 = vector.shape_cast %2 : vector<10x1x9x256xf32> to vector<10x9x256xf32>
    %4 = vector.extract_strided_slice %1 {offsets = [0, 1, 0, 0], sizes = [10, 1, 9, 256], strides = [1, 1, 1, 1]} : vector<10x2x9x256xf32> to vector<10x1x9x256xf32>
    %5 = vector.shape_cast %4 : vector<10x1x9x256xf32> to vector<10x9x256xf32>
    %6 = vector.extract_strided_slice %5 {offsets = [0, 0, 0], sizes = [8, 9, 256], strides = [1, 1, 1]} : vector<10x9x256xf32> to vector<8x9x256xf32>
    %7 = vector.extract_strided_slice %6 {offsets = [0, 0, 128], sizes = [8, 8, 128], strides = [1, 1, 1]} : vector<8x9x256xf32> to vector<8x8x128xf32>
    %8 = vector.extract_strided_slice %6 {offsets = [0, 1, 0], sizes = [8, 8, 128], strides = [1, 1, 1]} : vector<8x9x256xf32> to vector<8x8x128xf32>
    %9 = arith.addf %7, %8 : vector<8x8x128xf32>
    %10 = vector.extract_strided_slice %6 {offsets = [0, 1, 128], sizes = [8, 8, 128], strides = [1, 1, 1]} : vector<8x9x256xf32> to vector<8x8x128xf32>
    %11 = arith.addf %9, %10 : vector<8x8x128xf32>
    %12 = vector.extract_strided_slice %3 {offsets = [1, 0, 0], sizes = [8, 9, 256], strides = [1, 1, 1]} : vector<10x9x256xf32> to vector<8x9x256xf32>
    %13 = vector.extract_strided_slice %12 {offsets = [0, 0, 128], sizes = [8, 8, 128], strides = [1, 1, 1]} : vector<8x9x256xf32> to vector<8x8x128xf32>
    %14 = vector.extract_strided_slice %12 {offsets = [0, 1, 0], sizes = [8, 8, 128], strides = [1, 1, 1]} : vector<8x9x256xf32> to vector<8x8x128xf32>
    %15 = arith.addf %13, %14 : vector<8x8x128xf32>
    %16 = vector.extract_strided_slice %12 {offsets = [0, 1, 128], sizes = [8, 8, 128], strides = [1, 1, 1]} : vector<8x9x256xf32> to vector<8x8x128xf32>
    %17 = arith.addf %15, %16 : vector<8x8x128xf32>
    %18 = arith.addf %11, %17 : vector<8x8x128xf32>
    %19 = vector.extract_strided_slice %5 {offsets = [1, 0, 0], sizes = [8, 9, 256], strides = [1, 1, 1]} : vector<10x9x256xf32> to vector<8x9x256xf32>
    %20 = vector.extract_strided_slice %19 {offsets = [0, 0, 128], sizes = [8, 8, 128], strides = [1, 1, 1]} : vector<8x9x256xf32> to vector<8x8x128xf32>
    %21 = vector.extract_strided_slice %19 {offsets = [0, 1, 0], sizes = [8, 8, 128], strides = [1, 1, 1]} : vector<8x9x256xf32> to vector<8x8x128xf32>
    %22 = arith.addf %20, %21 : vector<8x8x128xf32>
    %23 = vector.extract_strided_slice %19 {offsets = [0, 1, 128], sizes = [8, 8, 128], strides = [1, 1, 1]} : vector<8x9x256xf32> to vector<8x8x128xf32>
    %24 = arith.addf %22, %23 : vector<8x8x128xf32>
    %25 = arith.addf %18, %24 : vector<8x8x128xf32>
    %26 = tpu.iota {dimensions = array<i32: 0>} : vector<8x8xi32>
    %27 = tpu.iota {dimensions = array<i32: 1>} : vector<8x8xi32>
    %c2_i32 = arith.constant 2 : i32
    %28 = vector.broadcast %c2_i32 : i32 to vector<8x8xi32>
    %29 = arith.muli %28, %26 : vector<8x8xi32>
    %c3_i32 = arith.constant 3 : i32
    %30 = vector.broadcast %c3_i32 : i32 to vector<8x8xi32>
    %31 = arith.addi %29, %30 : vector<8x8xi32>
    %c16_i32 = arith.constant 16 : i32
    %32 = vector.broadcast %c16_i32 : i32 to vector<8x8xi32>
    %33 = arith.minsi %31, %32 : vector<8x8xi32>
    %c2_i32_3 = arith.constant 2 : i32
    %34 = vector.broadcast %c2_i32_3 : i32 to vector<8x8xi32>
    %35 = arith.muli %34, %26 : vector<8x8xi32>
    %36 = arith.subi %33, %35 : vector<8x8xi32>
    %c2_i32_4 = arith.constant 2 : i32
    %37 = vector.broadcast %c2_i32_4 : i32 to vector<8x8xi32>
    %38 = arith.muli %37, %27 : vector<8x8xi32>
    %c3_i32_5 = arith.constant 3 : i32
    %39 = vector.broadcast %c3_i32_5 : i32 to vector<8x8xi32>
    %40 = arith.addi %38, %39 : vector<8x8xi32>
    %c16_i32_6 = arith.constant 16 : i32
    %41 = vector.broadcast %c16_i32_6 : i32 to vector<8x8xi32>
    %42 = arith.minsi %40, %41 : vector<8x8xi32>
    %c2_i32_7 = arith.constant 2 : i32
    %43 = vector.broadcast %c2_i32_7 : i32 to vector<8x8xi32>
    %44 = arith.muli %43, %27 : vector<8x8xi32>
    %45 = arith.subi %42, %44 : vector<8x8xi32>
    %46 = arith.muli %36, %45 : vector<8x8xi32>
    %47 = arith.sitofp %46 : vector<8x8xi32> to vector<8x8xf32>
    %cst = arith.constant 1.000000e+00 : f32
    %48 = vector.broadcast %cst : f32 to vector<8x8xf32>
    %49 = arith.divf %48, %47 : vector<8x8xf32>
    %50 = vector.shape_cast %49 : vector<8x8xf32> to vector<8x8x1xf32>
    %51 = vector.broadcast %50 : vector<8x8x1xf32> to vector<8x8x128xf32>
    %52 = arith.mulf %25, %51 : vector<8x8x128xf32>
    %cst_8 = arith.constant 0.000000e+00 : bf16
    %53 = vector.broadcast %cst_8 : bf16 to vector<1x12x10x128xbf16>
    %c0_9 = arith.constant 0 : index
    %c0_10 = arith.constant 0 : index
    %c0_11 = arith.constant 0 : index
    %c0_12 = arith.constant 0 : index
    %54 = vector.load %arg2[%c0_9, %c0_10, %c0_11, %c0_12] : memref<1x12x10x128xbf16, #tpu.memory_space<vmem>>, vector<1x12x10x128xbf16>
    tpu.vector_store %arg2[%c0_9, %c0_10, %c0_11, %c0_12], %53 {strides = array<i32>} : memref<1x12x10x128xbf16, #tpu.memory_space<vmem>>, vector<1x12x10x128xbf16>,
    %55 = arith.truncf %52 : vector<8x8x128xf32> to vector<8x8x128xbf16>
    %c0_13 = arith.constant 0 : index
    %c1 = arith.constant 1 : index
    %c1_14 = arith.constant 1 : index
    %c0_15 = arith.constant 0 : index
    %56 = vector.load %arg2[%c0_13, %c1, %c1_14, %c0_15] : memref<1x12x10x128xbf16, #tpu.memory_space<vmem>>, vector<1x8x8x128xbf16>
    %57 = vector.shape_cast %56 : vector<1x8x8x128xbf16> to vector<8x8x128xbf16>
    %58 = vector.shape_cast %55 : vector<8x8x128xbf16> to vector<1x8x8x128xbf16>
    tpu.vector_store %arg2[%c0_13, %c1, %c1_14, %c0_15], %58 {strides = array<i32>} : memref<1x12x10x128xbf16, #tpu.memory_space<vmem>>, vector<1x8x8x128xbf16>,
    return
  }
  func.func @transform_0(%arg0: i32) -> (i32, i32, i32, i32) {
    %c0_i32 = arith.constant 0 : i32
    %c0_i32_0 = arith.constant 0 : i32
    %c0_i32_1 = arith.constant 0 : i32
    %c0_i32_2 = arith.constant 0 : i32
    return %arg0, %c0_i32, %c0_i32_0, %c0_i32_1 : i32, i32, i32, i32
  }
  func.func @transform_1(%arg0: i32) -> (i32, i32, i32, i32) {
    %c0_i32 = arith.constant 0 : i32
    %c0_i32_0 = arith.constant 0 : i32
    %c0_i32_1 = arith.constant 0 : i32
    %c0_i32_2 = arith.constant 0 : i32
    return %arg0, %c0_i32, %c0_i32_0, %c0_i32_1 : i32, i32, i32, i32
  }
}

module attributes {stable_mosaic.version = 11 : i64} {
  func.func @_conv3x3_kernel(%arg0: i32, %arg1: i32, %arg2: memref<4xi32, #tpu.memory_space<smem>>, %arg3: memref<1x120x128xbf16, #tpu.memory_space<vmem>>, %arg4: memref<1x9x128x128xbf16, #tpu.memory_space<vmem>>, %arg5: memref<1x1x128xf32, #tpu.memory_space<vmem>>, %arg6: memref<80x1xf32, #tpu.memory_space<vmem>>, %arg7: memref<1x120x128xbf16, #tpu.memory_space<vmem>>) attributes {dimension_semantics = [#tpu.dimension_semantics<parallel>, #tpu.dimension_semantics<parallel>], iteration_bounds = array<i64: 4, 1>, scalar_prefetch = 1 : i64, scratch_operands = 0 : i64, tpu.core_type = #tpu.core_type<tc>, window_params = [{transform_indices = @transform_0, window_bounds = array<i64: 1, 120, 128>}, {transform_indices = @transform_1, window_bounds = array<i64: 1, 9, 128, 128>}, {transform_indices = @transform_2, window_bounds = array<i64: 1, 1, 128>}, {pipeline_mode = #tpu.pipeline_mode<synchronous>, transform_indices = @transform_3, window_bounds = array<i64: 80, 1>}, {transform_indices = @transform_4, window_bounds = array<i64: 1, 120, 128>}]} {
    %cst = arith.constant 0.000000e+00 : f32
    %0 = vector.broadcast %cst : f32 to vector<80x128xf32>
    %c0 = arith.constant 0 : index
    %c0_0 = arith.constant 0 : index
    %c0_1 = arith.constant 0 : index
    %1 = vector.load %arg3[%c0, %c0_0, %c0_1] : memref<1x120x128xbf16, #tpu.memory_space<vmem>>, vector<1x80x128xbf16>
    %2 = vector.shape_cast %1 : vector<1x80x128xbf16> to vector<80x128xbf16>
    %c0_2 = arith.constant 0 : index
    %c0_3 = arith.constant 0 : index
    %c0_4 = arith.constant 0 : index
    %c0_5 = arith.constant 0 : index
    %3 = vector.load %arg4[%c0_2, %c0_3, %c0_4, %c0_5] : memref<1x9x128x128xbf16, #tpu.memory_space<vmem>>, vector<1x1x128x128xbf16>
    %4 = vector.shape_cast %3 : vector<1x1x128x128xbf16> to vector<128x128xbf16>
    %cst_6 = arith.constant dense<0.000000e+00> : vector<80x128xf32>
    %5 = tpu.matmul %2, %4, %cst_6 {dimension_numbers = #tpu.dot_dimension_numbers<[1], [0], [0], [1], [0, 0, 1, 1], [], []>} : vector<80x128xbf16>, vector<128x128xbf16>, vector<80x128xf32> -> vector<80x128xf32>
    %6 = arith.addf %0, %5 : vector<80x128xf32>
    %c0_7 = arith.constant 0 : index
    %c1 = arith.constant 1 : index
    %c0_8 = arith.constant 0 : index
    %7 = vector.load %arg3[%c0_7, %c1, %c0_8] : memref<1x120x128xbf16, #tpu.memory_space<vmem>>, vector<1x80x128xbf16>
    %8 = vector.shape_cast %7 : vector<1x80x128xbf16> to vector<80x128xbf16>
    %c0_9 = arith.constant 0 : index
    %c1_10 = arith.constant 1 : index
    %c0_11 = arith.constant 0 : index
    %c0_12 = arith.constant 0 : index
    %9 = vector.load %arg4[%c0_9, %c1_10, %c0_11, %c0_12] : memref<1x9x128x128xbf16, #tpu.memory_space<vmem>>, vector<1x1x128x128xbf16>
    %10 = vector.shape_cast %9 : vector<1x1x128x128xbf16> to vector<128x128xbf16>
    %cst_13 = arith.constant dense<0.000000e+00> : vector<80x128xf32>
    %11 = tpu.matmul %8, %10, %cst_13 {dimension_numbers = #tpu.dot_dimension_numbers<[1], [0], [0], [1], [0, 0, 1, 1], [], []>} : vector<80x128xbf16>, vector<128x128xbf16>, vector<80x128xf32> -> vector<80x128xf32>
    %12 = arith.addf %6, %11 : vector<80x128xf32>
    %c0_14 = arith.constant 0 : index
    %c2 = arith.constant 2 : index
    %c0_15 = arith.constant 0 : index
    %13 = vector.load %arg3[%c0_14, %c2, %c0_15] : memref<1x120x128xbf16, #tpu.memory_space<vmem>>, vector<1x80x128xbf16>
    %14 = vector.shape_cast %13 : vector<1x80x128xbf16> to vector<80x128xbf16>
    %c0_16 = arith.constant 0 : index
    %c2_17 = arith.constant 2 : index
    %c0_18 = arith.constant 0 : index
    %c0_19 = arith.constant 0 : index
    %15 = vector.load %arg4[%c0_16, %c2_17, %c0_18, %c0_19] : memref<1x9x128x128xbf16, #tpu.memory_space<vmem>>, vector<1x1x128x128xbf16>
    %16 = vector.shape_cast %15 : vector<1x1x128x128xbf16> to vector<128x128xbf16>
    %cst_20 = arith.constant dense<0.000000e+00> : vector<80x128xf32>
    %17 = tpu.matmul %14, %16, %cst_20 {dimension_numbers = #tpu.dot_dimension_numbers<[1], [0], [0], [1], [0, 0, 1, 1], [], []>} : vector<80x128xbf16>, vector<128x128xbf16>, vector<80x128xf32> -> vector<80x128xf32>
    %18 = arith.addf %12, %17 : vector<80x128xf32>
    %c0_21 = arith.constant 0 : index
    %c10 = arith.constant 10 : index
    %c0_22 = arith.constant 0 : index
    %19 = vector.load %arg3[%c0_21, %c10, %c0_22] : memref<1x120x128xbf16, #tpu.memory_space<vmem>>, vector<1x80x128xbf16>
    %20 = vector.shape_cast %19 : vector<1x80x128xbf16> to vector<80x128xbf16>
    %c0_23 = arith.constant 0 : index
    %c3 = arith.constant 3 : index
    %c0_24 = arith.constant 0 : index
    %c0_25 = arith.constant 0 : index
    %21 = vector.load %arg4[%c0_23, %c3, %c0_24, %c0_25] : memref<1x9x128x128xbf16, #tpu.memory_space<vmem>>, vector<1x1x128x128xbf16>
    %22 = vector.shape_cast %21 : vector<1x1x128x128xbf16> to vector<128x128xbf16>
    %cst_26 = arith.constant dense<0.000000e+00> : vector<80x128xf32>
    %23 = tpu.matmul %20, %22, %cst_26 {dimension_numbers = #tpu.dot_dimension_numbers<[1], [0], [0], [1], [0, 0, 1, 1], [], []>} : vector<80x128xbf16>, vector<128x128xbf16>, vector<80x128xf32> -> vector<80x128xf32>
    %24 = arith.addf %18, %23 : vector<80x128xf32>
    %c0_27 = arith.constant 0 : index
    %c11 = arith.constant 11 : index
    %c0_28 = arith.constant 0 : index
    %25 = vector.load %arg3[%c0_27, %c11, %c0_28] : memref<1x120x128xbf16, #tpu.memory_space<vmem>>, vector<1x80x128xbf16>
    %26 = vector.shape_cast %25 : vector<1x80x128xbf16> to vector<80x128xbf16>
    %c0_29 = arith.constant 0 : index
    %c4 = arith.constant 4 : index
    %c0_30 = arith.constant 0 : index
    %c0_31 = arith.constant 0 : index
    %27 = vector.load %arg4[%c0_29, %c4, %c0_30, %c0_31] : memref<1x9x128x128xbf16, #tpu.memory_space<vmem>>, vector<1x1x128x128xbf16>
    %28 = vector.shape_cast %27 : vector<1x1x128x128xbf16> to vector<128x128xbf16>
    %cst_32 = arith.constant dense<0.000000e+00> : vector<80x128xf32>
    %29 = tpu.matmul %26, %28, %cst_32 {dimension_numbers = #tpu.dot_dimension_numbers<[1], [0], [0], [1], [0, 0, 1, 1], [], []>} : vector<80x128xbf16>, vector<128x128xbf16>, vector<80x128xf32> -> vector<80x128xf32>
    %30 = arith.addf %24, %29 : vector<80x128xf32>
    %c0_33 = arith.constant 0 : index
    %c12 = arith.constant 12 : index
    %c0_34 = arith.constant 0 : index
    %31 = vector.load %arg3[%c0_33, %c12, %c0_34] : memref<1x120x128xbf16, #tpu.memory_space<vmem>>, vector<1x80x128xbf16>
    %32 = vector.shape_cast %31 : vector<1x80x128xbf16> to vector<80x128xbf16>
    %c0_35 = arith.constant 0 : index
    %c5 = arith.constant 5 : index
    %c0_36 = arith.constant 0 : index
    %c0_37 = arith.constant 0 : index
    %33 = vector.load %arg4[%c0_35, %c5, %c0_36, %c0_37] : memref<1x9x128x128xbf16, #tpu.memory_space<vmem>>, vector<1x1x128x128xbf16>
    %34 = vector.shape_cast %33 : vector<1x1x128x128xbf16> to vector<128x128xbf16>
    %cst_38 = arith.constant dense<0.000000e+00> : vector<80x128xf32>
    %35 = tpu.matmul %32, %34, %cst_38 {dimension_numbers = #tpu.dot_dimension_numbers<[1], [0], [0], [1], [0, 0, 1, 1], [], []>} : vector<80x128xbf16>, vector<128x128xbf16>, vector<80x128xf32> -> vector<80x128xf32>
    %36 = arith.addf %30, %35 : vector<80x128xf32>
    %c0_39 = arith.constant 0 : index
    %c20 = arith.constant 20 : index
    %c0_40 = arith.constant 0 : index
    %37 = vector.load %arg3[%c0_39, %c20, %c0_40] : memref<1x120x128xbf16, #tpu.memory_space<vmem>>, vector<1x80x128xbf16>
    %38 = vector.shape_cast %37 : vector<1x80x128xbf16> to vector<80x128xbf16>
    %c0_41 = arith.constant 0 : index
    %c6 = arith.constant 6 : index
    %c0_42 = arith.constant 0 : index
    %c0_43 = arith.constant 0 : index
    %39 = vector.load %arg4[%c0_41, %c6, %c0_42, %c0_43] : memref<1x9x128x128xbf16, #tpu.memory_space<vmem>>, vector<1x1x128x128xbf16>
    %40 = vector.shape_cast %39 : vector<1x1x128x128xbf16> to vector<128x128xbf16>
    %cst_44 = arith.constant dense<0.000000e+00> : vector<80x128xf32>
    %41 = tpu.matmul %38, %40, %cst_44 {dimension_numbers = #tpu.dot_dimension_numbers<[1], [0], [0], [1], [0, 0, 1, 1], [], []>} : vector<80x128xbf16>, vector<128x128xbf16>, vector<80x128xf32> -> vector<80x128xf32>
    %42 = arith.addf %36, %41 : vector<80x128xf32>
    %c0_45 = arith.constant 0 : index
    %c21 = arith.constant 21 : index
    %c0_46 = arith.constant 0 : index
    %43 = vector.load %arg3[%c0_45, %c21, %c0_46] : memref<1x120x128xbf16, #tpu.memory_space<vmem>>, vector<1x80x128xbf16>
    %44 = vector.shape_cast %43 : vector<1x80x128xbf16> to vector<80x128xbf16>
    %c0_47 = arith.constant 0 : index
    %c7 = arith.constant 7 : index
    %c0_48 = arith.constant 0 : index
    %c0_49 = arith.constant 0 : index
    %45 = vector.load %arg4[%c0_47, %c7, %c0_48, %c0_49] : memref<1x9x128x128xbf16, #tpu.memory_space<vmem>>, vector<1x1x128x128xbf16>
    %46 = vector.shape_cast %45 : vector<1x1x128x128xbf16> to vector<128x128xbf16>
    %cst_50 = arith.constant dense<0.000000e+00> : vector<80x128xf32>
    %47 = tpu.matmul %44, %46, %cst_50 {dimension_numbers = #tpu.dot_dimension_numbers<[1], [0], [0], [1], [0, 0, 1, 1], [], []>} : vector<80x128xbf16>, vector<128x128xbf16>, vector<80x128xf32> -> vector<80x128xf32>
    %48 = arith.addf %42, %47 : vector<80x128xf32>
    %c0_51 = arith.constant 0 : index
    %c22 = arith.constant 22 : index
    %c0_52 = arith.constant 0 : index
    %49 = vector.load %arg3[%c0_51, %c22, %c0_52] : memref<1x120x128xbf16, #tpu.memory_space<vmem>>, vector<1x80x128xbf16>
    %50 = vector.shape_cast %49 : vector<1x80x128xbf16> to vector<80x128xbf16>
    %c0_53 = arith.constant 0 : index
    %c8 = arith.constant 8 : index
    %c0_54 = arith.constant 0 : index
    %c0_55 = arith.constant 0 : index
    %51 = vector.load %arg4[%c0_53, %c8, %c0_54, %c0_55] : memref<1x9x128x128xbf16, #tpu.memory_space<vmem>>, vector<1x1x128x128xbf16>
    %52 = vector.shape_cast %51 : vector<1x1x128x128xbf16> to vector<128x128xbf16>
    %cst_56 = arith.constant dense<0.000000e+00> : vector<80x128xf32>
    %53 = tpu.matmul %50, %52, %cst_56 {dimension_numbers = #tpu.dot_dimension_numbers<[1], [0], [0], [1], [0, 0, 1, 1], [], []>} : vector<80x128xbf16>, vector<128x128xbf16>, vector<80x128xf32> -> vector<80x128xf32>
    %54 = arith.addf %48, %53 : vector<80x128xf32>
    %c0_57 = arith.constant 0 : index
    %c0_58 = arith.constant 0 : index
    %c0_59 = arith.constant 0 : index
    %55 = vector.load %arg5[%c0_57, %c0_58, %c0_59] : memref<1x1x128xf32, #tpu.memory_space<vmem>>, vector<1x1x128xf32>
    %56 = vector.shape_cast %55 : vector<1x1x128xf32> to vector<1x128xf32>
    %57 = vector.broadcast %56 : vector<1x128xf32> to vector<80x128xf32>
    %58 = arith.addf %54, %57 : vector<80x128xf32>
    %cst_60 = arith.constant 0.000000e+00 : f32
    %59 = vector.broadcast %cst_60 : f32 to vector<80x128xf32>
    %60 = arith.maximumf %58, %59 : vector<80x128xf32>
    %c0_61 = arith.constant 0 : index
    %c0_62 = arith.constant 0 : index
    %61 = vector.load %arg6[%c0_61, %c0_62] : memref<80x1xf32, #tpu.memory_space<vmem>>, vector<80x1xf32>
    %62 = vector.broadcast %61 : vector<80x1xf32> to vector<80x128xf32>
    %63 = arith.mulf %60, %62 : vector<80x128xf32>
    %cst_63 = arith.constant 0.000000e+00 : bf16
    %64 = vector.broadcast %cst_63 : bf16 to vector<11x128xbf16>
    %c0_64 = arith.constant 0 : index
    %c0_65 = arith.constant 0 : index
    %c0_66 = arith.constant 0 : index
    %65 = vector.load %arg7[%c0_64, %c0_65, %c0_66] : memref<1x120x128xbf16, #tpu.memory_space<vmem>>, vector<1x11x128xbf16>
    %66 = vector.shape_cast %65 : vector<1x11x128xbf16> to vector<11x128xbf16>
    %67 = vector.shape_cast %64 : vector<11x128xbf16> to vector<1x11x128xbf16>
    tpu.vector_store %arg7[%c0_64, %c0_65, %c0_66], %67 {strides = array<i32>} : memref<1x120x128xbf16, #tpu.memory_space<vmem>>, vector<1x11x128xbf16>,
    %cst_67 = arith.constant 0.000000e+00 : bf16
    %68 = vector.broadcast %cst_67 : bf16 to vector<29x128xbf16>
    %c0_68 = arith.constant 0 : index
    %c91 = arith.constant 91 : index
    %c0_69 = arith.constant 0 : index
    %69 = vector.load %arg7[%c0_68, %c91, %c0_69] : memref<1x120x128xbf16, #tpu.memory_space<vmem>>, vector<1x29x128xbf16>
    %70 = vector.shape_cast %69 : vector<1x29x128xbf16> to vector<29x128xbf16>
    %71 = vector.shape_cast %68 : vector<29x128xbf16> to vector<1x29x128xbf16>
    tpu.vector_store %arg7[%c0_68, %c91, %c0_69], %71 {strides = array<i32>} : memref<1x120x128xbf16, #tpu.memory_space<vmem>>, vector<1x29x128xbf16>,
    %72 = arith.truncf %63 : vector<80x128xf32> to vector<80x128xbf16>
    %c0_70 = arith.constant 0 : index
    %c11_71 = arith.constant 11 : index
    %c0_72 = arith.constant 0 : index
    %73 = vector.load %arg7[%c0_70, %c11_71, %c0_72] : memref<1x120x128xbf16, #tpu.memory_space<vmem>>, vector<1x80x128xbf16>
    %74 = vector.shape_cast %73 : vector<1x80x128xbf16> to vector<80x128xbf16>
    %75 = vector.shape_cast %72 : vector<80x128xbf16> to vector<1x80x128xbf16>
    tpu.vector_store %arg7[%c0_70, %c11_71, %c0_72], %75 {strides = array<i32>} : memref<1x120x128xbf16, #tpu.memory_space<vmem>>, vector<1x80x128xbf16>,
    return
  }
  func.func @transform_0(%arg0: i32, %arg1: i32, %arg2: memref<4xi32, #tpu.memory_space<smem>>) -> (i32, i32, i32) {
    %c0_i32 = arith.constant 0 : i32
    %c0_i32_0 = arith.constant 0 : i32
    %c0_i32_1 = arith.constant 0 : i32
    return %arg0, %c0_i32, %c0_i32_0 : i32, i32, i32
  }
  func.func @transform_1(%arg0: i32, %arg1: i32, %arg2: memref<4xi32, #tpu.memory_space<smem>>) -> (i32, i32, i32, i32) {
    %0 = arith.index_cast %arg0 : i32 to index
    %1 = memref.load %arg2[%0] : memref<4xi32, #tpu.memory_space<smem>>
    %c0_i32 = arith.constant 0 : i32
    %c0_i32_0 = arith.constant 0 : i32
    %c0_i32_1 = arith.constant 0 : i32
    return %1, %c0_i32, %c0_i32_0, %arg1 : i32, i32, i32, i32
  }
  func.func @transform_2(%arg0: i32, %arg1: i32, %arg2: memref<4xi32, #tpu.memory_space<smem>>) -> (i32, i32, i32) {
    %0 = arith.index_cast %arg0 : i32 to index
    %1 = memref.load %arg2[%0] : memref<4xi32, #tpu.memory_space<smem>>
    %c0_i32 = arith.constant 0 : i32
    %c0_i32_0 = arith.constant 0 : i32
    return %1, %c0_i32, %arg1 : i32, i32, i32
  }
  func.func @transform_3(%arg0: i32, %arg1: i32, %arg2: memref<4xi32, #tpu.memory_space<smem>>) -> (i32, i32) {
    %c0_i32 = arith.constant 0 : i32
    %c0_i32_0 = arith.constant 0 : i32
    %c0_i32_1 = arith.constant 0 : i32
    return %c0_i32, %c0_i32_0 : i32, i32
  }
  func.func @transform_4(%arg0: i32, %arg1: i32, %arg2: memref<4xi32, #tpu.memory_space<smem>>) -> (i32, i32, i32) {
    %c0_i32 = arith.constant 0 : i32
    %c0_i32_0 = arith.constant 0 : i32
    return %arg0, %c0_i32, %arg1 : i32, i32, i32
  }
}

module attributes {stable_mosaic.version = 11 : i64} {
  func.func @_avgpool_kernel(%arg0: i32, %arg1: memref<6x2x5x256xbf16, #tpu.memory_space<vmem>>, %arg2: memref<1x8x10x128xbf16, #tpu.memory_space<vmem>>) attributes {dimension_semantics = [#tpu.dimension_semantics<parallel>], iteration_bounds = array<i64: 4>, scalar_prefetch = 0 : i64, scratch_operands = 0 : i64, tpu.core_type = #tpu.core_type<tc>, window_params = [{transform_indices = @transform_0, window_bounds = array<i64: 6, 2, 5, 256>}, {transform_indices = @transform_1, window_bounds = array<i64: 1, 8, 10, 128>}]} {
    %c0 = arith.constant 0 : index
    %c0_0 = arith.constant 0 : index
    %c0_1 = arith.constant 0 : index
    %c0_2 = arith.constant 0 : index
    %0 = vector.load %arg1[%c0, %c0_0, %c0_1, %c0_2] : memref<6x2x5x256xbf16, #tpu.memory_space<vmem>>, vector<6x2x5x256xbf16>
    %1 = arith.extf %0 : vector<6x2x5x256xbf16> to vector<6x2x5x256xf32>
    %2 = vector.extract_strided_slice %1 {offsets = [0, 0, 0, 0], sizes = [6, 1, 5, 256], strides = [1, 1, 1, 1]} : vector<6x2x5x256xf32> to vector<6x1x5x256xf32>
    %3 = vector.shape_cast %2 : vector<6x1x5x256xf32> to vector<6x5x256xf32>
    %4 = vector.extract_strided_slice %1 {offsets = [0, 1, 0, 0], sizes = [6, 1, 5, 256], strides = [1, 1, 1, 1]} : vector<6x2x5x256xf32> to vector<6x1x5x256xf32>
    %5 = vector.shape_cast %4 : vector<6x1x5x256xf32> to vector<6x5x256xf32>
    %6 = vector.extract_strided_slice %5 {offsets = [0, 0, 0], sizes = [4, 5, 256], strides = [1, 1, 1]} : vector<6x5x256xf32> to vector<4x5x256xf32>
    %7 = vector.extract_strided_slice %6 {offsets = [0, 0, 128], sizes = [4, 4, 128], strides = [1, 1, 1]} : vector<4x5x256xf32> to vector<4x4x128xf32>
    %8 = vector.extract_strided_slice %6 {offsets = [0, 1, 0], sizes = [4, 4, 128], strides = [1, 1, 1]} : vector<4x5x256xf32> to vector<4x4x128xf32>
    %9 = arith.addf %7, %8 : vector<4x4x128xf32>
    %10 = vector.extract_strided_slice %6 {offsets = [0, 1, 128], sizes = [4, 4, 128], strides = [1, 1, 1]} : vector<4x5x256xf32> to vector<4x4x128xf32>
    %11 = arith.addf %9, %10 : vector<4x4x128xf32>
    %12 = vector.extract_strided_slice %3 {offsets = [1, 0, 0], sizes = [4, 5, 256], strides = [1, 1, 1]} : vector<6x5x256xf32> to vector<4x5x256xf32>
    %13 = vector.extract_strided_slice %12 {offsets = [0, 0, 128], sizes = [4, 4, 128], strides = [1, 1, 1]} : vector<4x5x256xf32> to vector<4x4x128xf32>
    %14 = vector.extract_strided_slice %12 {offsets = [0, 1, 0], sizes = [4, 4, 128], strides = [1, 1, 1]} : vector<4x5x256xf32> to vector<4x4x128xf32>
    %15 = arith.addf %13, %14 : vector<4x4x128xf32>
    %16 = vector.extract_strided_slice %12 {offsets = [0, 1, 128], sizes = [4, 4, 128], strides = [1, 1, 1]} : vector<4x5x256xf32> to vector<4x4x128xf32>
    %17 = arith.addf %15, %16 : vector<4x4x128xf32>
    %18 = arith.addf %11, %17 : vector<4x4x128xf32>
    %19 = vector.extract_strided_slice %5 {offsets = [1, 0, 0], sizes = [4, 5, 256], strides = [1, 1, 1]} : vector<6x5x256xf32> to vector<4x5x256xf32>
    %20 = vector.extract_strided_slice %19 {offsets = [0, 0, 128], sizes = [4, 4, 128], strides = [1, 1, 1]} : vector<4x5x256xf32> to vector<4x4x128xf32>
    %21 = vector.extract_strided_slice %19 {offsets = [0, 1, 0], sizes = [4, 4, 128], strides = [1, 1, 1]} : vector<4x5x256xf32> to vector<4x4x128xf32>
    %22 = arith.addf %20, %21 : vector<4x4x128xf32>
    %23 = vector.extract_strided_slice %19 {offsets = [0, 1, 128], sizes = [4, 4, 128], strides = [1, 1, 1]} : vector<4x5x256xf32> to vector<4x4x128xf32>
    %24 = arith.addf %22, %23 : vector<4x4x128xf32>
    %25 = arith.addf %18, %24 : vector<4x4x128xf32>
    %26 = tpu.iota {dimensions = array<i32: 0>} : vector<4x4xi32>
    %27 = tpu.iota {dimensions = array<i32: 1>} : vector<4x4xi32>
    %c2_i32 = arith.constant 2 : i32
    %28 = vector.broadcast %c2_i32 : i32 to vector<4x4xi32>
    %29 = arith.muli %28, %26 : vector<4x4xi32>
    %c3_i32 = arith.constant 3 : i32
    %30 = vector.broadcast %c3_i32 : i32 to vector<4x4xi32>
    %31 = arith.addi %29, %30 : vector<4x4xi32>
    %c8_i32 = arith.constant 8 : i32
    %32 = vector.broadcast %c8_i32 : i32 to vector<4x4xi32>
    %33 = arith.minsi %31, %32 : vector<4x4xi32>
    %c2_i32_3 = arith.constant 2 : i32
    %34 = vector.broadcast %c2_i32_3 : i32 to vector<4x4xi32>
    %35 = arith.muli %34, %26 : vector<4x4xi32>
    %36 = arith.subi %33, %35 : vector<4x4xi32>
    %c2_i32_4 = arith.constant 2 : i32
    %37 = vector.broadcast %c2_i32_4 : i32 to vector<4x4xi32>
    %38 = arith.muli %37, %27 : vector<4x4xi32>
    %c3_i32_5 = arith.constant 3 : i32
    %39 = vector.broadcast %c3_i32_5 : i32 to vector<4x4xi32>
    %40 = arith.addi %38, %39 : vector<4x4xi32>
    %c8_i32_6 = arith.constant 8 : i32
    %41 = vector.broadcast %c8_i32_6 : i32 to vector<4x4xi32>
    %42 = arith.minsi %40, %41 : vector<4x4xi32>
    %c2_i32_7 = arith.constant 2 : i32
    %43 = vector.broadcast %c2_i32_7 : i32 to vector<4x4xi32>
    %44 = arith.muli %43, %27 : vector<4x4xi32>
    %45 = arith.subi %42, %44 : vector<4x4xi32>
    %46 = arith.muli %36, %45 : vector<4x4xi32>
    %47 = arith.sitofp %46 : vector<4x4xi32> to vector<4x4xf32>
    %cst = arith.constant 1.000000e+00 : f32
    %48 = vector.broadcast %cst : f32 to vector<4x4xf32>
    %49 = arith.divf %48, %47 : vector<4x4xf32>
    %50 = vector.shape_cast %49 : vector<4x4xf32> to vector<4x4x1xf32>
    %51 = vector.broadcast %50 : vector<4x4x1xf32> to vector<4x4x128xf32>
    %52 = arith.mulf %25, %51 : vector<4x4x128xf32>
    %cst_8 = arith.constant 0.000000e+00 : bf16
    %53 = vector.broadcast %cst_8 : bf16 to vector<1x8x10x128xbf16>
    %c0_9 = arith.constant 0 : index
    %c0_10 = arith.constant 0 : index
    %c0_11 = arith.constant 0 : index
    %c0_12 = arith.constant 0 : index
    %54 = vector.load %arg2[%c0_9, %c0_10, %c0_11, %c0_12] : memref<1x8x10x128xbf16, #tpu.memory_space<vmem>>, vector<1x8x10x128xbf16>
    tpu.vector_store %arg2[%c0_9, %c0_10, %c0_11, %c0_12], %53 {strides = array<i32>} : memref<1x8x10x128xbf16, #tpu.memory_space<vmem>>, vector<1x8x10x128xbf16>,
    %55 = arith.truncf %52 : vector<4x4x128xf32> to vector<4x4x128xbf16>
    %c0_13 = arith.constant 0 : index
    %c1 = arith.constant 1 : index
    %c1_14 = arith.constant 1 : index
    %c0_15 = arith.constant 0 : index
    %56 = vector.load %arg2[%c0_13, %c1, %c1_14, %c0_15] : memref<1x8x10x128xbf16, #tpu.memory_space<vmem>>, vector<1x4x4x128xbf16>
    %57 = vector.shape_cast %56 : vector<1x4x4x128xbf16> to vector<4x4x128xbf16>
    %58 = vector.shape_cast %55 : vector<4x4x128xbf16> to vector<1x4x4x128xbf16>
    tpu.vector_store %arg2[%c0_13, %c1, %c1_14, %c0_15], %58 {strides = array<i32>} : memref<1x8x10x128xbf16, #tpu.memory_space<vmem>>, vector<1x4x4x128xbf16>,
    return
  }
  func.func @transform_0(%arg0: i32) -> (i32, i32, i32, i32) {
    %c0_i32 = arith.constant 0 : i32
    %c0_i32_0 = arith.constant 0 : i32
    %c0_i32_1 = arith.constant 0 : i32
    %c0_i32_2 = arith.constant 0 : i32
    return %arg0, %c0_i32, %c0_i32_0, %c0_i32_1 : i32, i32, i32, i32
  }
  func.func @transform_1(%arg0: i32) -> (i32, i32, i32, i32) {
    %c0_i32 = arith.constant 0 : i32
    %c0_i32_0 = arith.constant 0 : i32
    %c0_i32_1 = arith.constant 0 : i32
    %c0_i32_2 = arith.constant 0 : i32
    return %arg0, %c0_i32, %c0_i32_0, %c0_i32_1 : i32, i32, i32, i32
  }
}

module attributes {stable_mosaic.version = 11 : i64} {
  func.func @_conv3x3_kernel(%arg0: i32, %arg1: i32, %arg2: memref<4xi32, #tpu.memory_space<smem>>, %arg3: memref<1x80x128xbf16, #tpu.memory_space<vmem>>, %arg4: memref<1x9x128x128xbf16, #tpu.memory_space<vmem>>, %arg5: memref<1x1x128xf32, #tpu.memory_space<vmem>>, %arg6: memref<40x1xf32, #tpu.memory_space<vmem>>, %arg7: memref<1x80x128xbf16, #tpu.memory_space<vmem>>) attributes {dimension_semantics = [#tpu.dimension_semantics<parallel>, #tpu.dimension_semantics<parallel>], iteration_bounds = array<i64: 4, 1>, scalar_prefetch = 1 : i64, scratch_operands = 0 : i64, tpu.core_type = #tpu.core_type<tc>, window_params = [{transform_indices = @transform_0, window_bounds = array<i64: 1, 80, 128>}, {transform_indices = @transform_1, window_bounds = array<i64: 1, 9, 128, 128>}, {transform_indices = @transform_2, window_bounds = array<i64: 1, 1, 128>}, {pipeline_mode = #tpu.pipeline_mode<synchronous>, transform_indices = @transform_3, window_bounds = array<i64: 40, 1>}, {transform_indices = @transform_4, window_bounds = array<i64: 1, 80, 128>}]} {
    %cst = arith.constant 0.000000e+00 : f32
    %0 = vector.broadcast %cst : f32 to vector<40x128xf32>
    %c0 = arith.constant 0 : index
    %c0_0 = arith.constant 0 : index
    %c0_1 = arith.constant 0 : index
    %1 = vector.load %arg3[%c0, %c0_0, %c0_1] : memref<1x80x128xbf16, #tpu.memory_space<vmem>>, vector<1x40x128xbf16>
    %2 = vector.shape_cast %1 : vector<1x40x128xbf16> to vector<40x128xbf16>
    %c0_2 = arith.constant 0 : index
    %c0_3 = arith.constant 0 : index
    %c0_4 = arith.constant 0 : index
    %c0_5 = arith.constant 0 : index
    %3 = vector.load %arg4[%c0_2, %c0_3, %c0_4, %c0_5] : memref<1x9x128x128xbf16, #tpu.memory_space<vmem>>, vector<1x1x128x128xbf16>
    %4 = vector.shape_cast %3 : vector<1x1x128x128xbf16> to vector<128x128xbf16>
    %cst_6 = arith.constant dense<0.000000e+00> : vector<40x128xf32>
    %5 = tpu.matmul %2, %4, %cst_6 {dimension_numbers = #tpu.dot_dimension_numbers<[1], [0], [0], [1], [0, 0, 1, 1], [], []>} : vector<40x128xbf16>, vector<128x128xbf16>, vector<40x128xf32> -> vector<40x128xf32>
    %6 = arith.addf %0, %5 : vector<40x128xf32>
    %c0_7 = arith.constant 0 : index
    %c1 = arith.constant 1 : index
    %c0_8 = arith.constant 0 : index
    %7 = vector.load %arg3[%c0_7, %c1, %c0_8] : memref<1x80x128xbf16, #tpu.memory_space<vmem>>, vector<1x40x128xbf16>
    %8 = vector.shape_cast %7 : vector<1x40x128xbf16> to vector<40x128xbf16>
    %c0_9 = arith.constant 0 : index
    %c1_10 = arith.constant 1 : index
    %c0_11 = arith.constant 0 : index
    %c0_12 = arith.constant 0 : index
    %9 = vector.load %arg4[%c0_9, %c1_10, %c0_11, %c0_12] : memref<1x9x128x128xbf16, #tpu.memory_space<vmem>>, vector<1x1x128x128xbf16>
    %10 = vector.shape_cast %9 : vector<1x1x128x128xbf16> to vector<128x128xbf16>
    %cst_13 = arith.constant dense<0.000000e+00> : vector<40x128xf32>
    %11 = tpu.matmul %8, %10, %cst_13 {dimension_numbers = #tpu.dot_dimension_numbers<[1], [0], [0], [1], [0, 0, 1, 1], [], []>} : vector<40x128xbf16>, vector<128x128xbf16>, vector<40x128xf32> -> vector<40x128xf32>
    %12 = arith.addf %6, %11 : vector<40x128xf32>
    %c0_14 = arith.constant 0 : index
    %c2 = arith.constant 2 : index
    %c0_15 = arith.constant 0 : index
    %13 = vector.load %arg3[%c0_14, %c2, %c0_15] : memref<1x80x128xbf16, #tpu.memory_space<vmem>>, vector<1x40x128xbf16>
    %14 = vector.shape_cast %13 : vector<1x40x128xbf16> to vector<40x128xbf16>
    %c0_16 = arith.constant 0 : index
    %c2_17 = arith.constant 2 : index
    %c0_18 = arith.constant 0 : index
    %c0_19 = arith.constant 0 : index
    %15 = vector.load %arg4[%c0_16, %c2_17, %c0_18, %c0_19] : memref<1x9x128x128xbf16, #tpu.memory_space<vmem>>, vector<1x1x128x128xbf16>
    %16 = vector.shape_cast %15 : vector<1x1x128x128xbf16> to vector<128x128xbf16>
    %cst_20 = arith.constant dense<0.000000e+00> : vector<40x128xf32>
    %17 = tpu.matmul %14, %16, %cst_20 {dimension_numbers = #tpu.dot_dimension_numbers<[1], [0], [0], [1], [0, 0, 1, 1], [], []>} : vector<40x128xbf16>, vector<128x128xbf16>, vector<40x128xf32> -> vector<40x128xf32>
    %18 = arith.addf %12, %17 : vector<40x128xf32>
    %c0_21 = arith.constant 0 : index
    %c10 = arith.constant 10 : index
    %c0_22 = arith.constant 0 : index
    %19 = vector.load %arg3[%c0_21, %c10, %c0_22] : memref<1x80x128xbf16, #tpu.memory_space<vmem>>, vector<1x40x128xbf16>
    %20 = vector.shape_cast %19 : vector<1x40x128xbf16> to vector<40x128xbf16>
    %c0_23 = arith.constant 0 : index
    %c3 = arith.constant 3 : index
    %c0_24 = arith.constant 0 : index
    %c0_25 = arith.constant 0 : index
    %21 = vector.load %arg4[%c0_23, %c3, %c0_24, %c0_25] : memref<1x9x128x128xbf16, #tpu.memory_space<vmem>>, vector<1x1x128x128xbf16>
    %22 = vector.shape_cast %21 : vector<1x1x128x128xbf16> to vector<128x128xbf16>
    %cst_26 = arith.constant dense<0.000000e+00> : vector<40x128xf32>
    %23 = tpu.matmul %20, %22, %cst_26 {dimension_numbers = #tpu.dot_dimension_numbers<[1], [0], [0], [1], [0, 0, 1, 1], [], []>} : vector<40x128xbf16>, vector<128x128xbf16>, vector<40x128xf32> -> vector<40x128xf32>
    %24 = arith.addf %18, %23 : vector<40x128xf32>
    %c0_27 = arith.constant 0 : index
    %c11 = arith.constant 11 : index
    %c0_28 = arith.constant 0 : index
    %25 = vector.load %arg3[%c0_27, %c11, %c0_28] : memref<1x80x128xbf16, #tpu.memory_space<vmem>>, vector<1x40x128xbf16>
    %26 = vector.shape_cast %25 : vector<1x40x128xbf16> to vector<40x128xbf16>
    %c0_29 = arith.constant 0 : index
    %c4 = arith.constant 4 : index
    %c0_30 = arith.constant 0 : index
    %c0_31 = arith.constant 0 : index
    %27 = vector.load %arg4[%c0_29, %c4, %c0_30, %c0_31] : memref<1x9x128x128xbf16, #tpu.memory_space<vmem>>, vector<1x1x128x128xbf16>
    %28 = vector.shape_cast %27 : vector<1x1x128x128xbf16> to vector<128x128xbf16>
    %cst_32 = arith.constant dense<0.000000e+00> : vector<40x128xf32>
    %29 = tpu.matmul %26, %28, %cst_32 {dimension_numbers = #tpu.dot_dimension_numbers<[1], [0], [0], [1], [0, 0, 1, 1], [], []>} : vector<40x128xbf16>, vector<128x128xbf16>, vector<40x128xf32> -> vector<40x128xf32>
    %30 = arith.addf %24, %29 : vector<40x128xf32>
    %c0_33 = arith.constant 0 : index
    %c12 = arith.constant 12 : index
    %c0_34 = arith.constant 0 : index
    %31 = vector.load %arg3[%c0_33, %c12, %c0_34] : memref<1x80x128xbf16, #tpu.memory_space<vmem>>, vector<1x40x128xbf16>
    %32 = vector.shape_cast %31 : vector<1x40x128xbf16> to vector<40x128xbf16>
    %c0_35 = arith.constant 0 : index
    %c5 = arith.constant 5 : index
    %c0_36 = arith.constant 0 : index
    %c0_37 = arith.constant 0 : index
    %33 = vector.load %arg4[%c0_35, %c5, %c0_36, %c0_37] : memref<1x9x128x128xbf16, #tpu.memory_space<vmem>>, vector<1x1x128x128xbf16>
    %34 = vector.shape_cast %33 : vector<1x1x128x128xbf16> to vector<128x128xbf16>
    %cst_38 = arith.constant dense<0.000000e+00> : vector<40x128xf32>
    %35 = tpu.matmul %32, %34, %cst_38 {dimension_numbers = #tpu.dot_dimension_numbers<[1], [0], [0], [1], [0, 0, 1, 1], [], []>} : vector<40x128xbf16>, vector<128x128xbf16>, vector<40x128xf32> -> vector<40x128xf32>
    %36 = arith.addf %30, %35 : vector<40x128xf32>
    %c0_39 = arith.constant 0 : index
    %c20 = arith.constant 20 : index
    %c0_40 = arith.constant 0 : index
    %37 = vector.load %arg3[%c0_39, %c20, %c0_40] : memref<1x80x128xbf16, #tpu.memory_space<vmem>>, vector<1x40x128xbf16>
    %38 = vector.shape_cast %37 : vector<1x40x128xbf16> to vector<40x128xbf16>
    %c0_41 = arith.constant 0 : index
    %c6 = arith.constant 6 : index
    %c0_42 = arith.constant 0 : index
    %c0_43 = arith.constant 0 : index
    %39 = vector.load %arg4[%c0_41, %c6, %c0_42, %c0_43] : memref<1x9x128x128xbf16, #tpu.memory_space<vmem>>, vector<1x1x128x128xbf16>
    %40 = vector.shape_cast %39 : vector<1x1x128x128xbf16> to vector<128x128xbf16>
    %cst_44 = arith.constant dense<0.000000e+00> : vector<40x128xf32>
    %41 = tpu.matmul %38, %40, %cst_44 {dimension_numbers = #tpu.dot_dimension_numbers<[1], [0], [0], [1], [0, 0, 1, 1], [], []>} : vector<40x128xbf16>, vector<128x128xbf16>, vector<40x128xf32> -> vector<40x128xf32>
    %42 = arith.addf %36, %41 : vector<40x128xf32>
    %c0_45 = arith.constant 0 : index
    %c21 = arith.constant 21 : index
    %c0_46 = arith.constant 0 : index
    %43 = vector.load %arg3[%c0_45, %c21, %c0_46] : memref<1x80x128xbf16, #tpu.memory_space<vmem>>, vector<1x40x128xbf16>
    %44 = vector.shape_cast %43 : vector<1x40x128xbf16> to vector<40x128xbf16>
    %c0_47 = arith.constant 0 : index
    %c7 = arith.constant 7 : index
    %c0_48 = arith.constant 0 : index
    %c0_49 = arith.constant 0 : index
    %45 = vector.load %arg4[%c0_47, %c7, %c0_48, %c0_49] : memref<1x9x128x128xbf16, #tpu.memory_space<vmem>>, vector<1x1x128x128xbf16>
    %46 = vector.shape_cast %45 : vector<1x1x128x128xbf16> to vector<128x128xbf16>
    %cst_50 = arith.constant dense<0.000000e+00> : vector<40x128xf32>
    %47 = tpu.matmul %44, %46, %cst_50 {dimension_numbers = #tpu.dot_dimension_numbers<[1], [0], [0], [1], [0, 0, 1, 1], [], []>} : vector<40x128xbf16>, vector<128x128xbf16>, vector<40x128xf32> -> vector<40x128xf32>
    %48 = arith.addf %42, %47 : vector<40x128xf32>
    %c0_51 = arith.constant 0 : index
    %c22 = arith.constant 22 : index
    %c0_52 = arith.constant 0 : index
    %49 = vector.load %arg3[%c0_51, %c22, %c0_52] : memref<1x80x128xbf16, #tpu.memory_space<vmem>>, vector<1x40x128xbf16>
    %50 = vector.shape_cast %49 : vector<1x40x128xbf16> to vector<40x128xbf16>
    %c0_53 = arith.constant 0 : index
    %c8 = arith.constant 8 : index
    %c0_54 = arith.constant 0 : index
    %c0_55 = arith.constant 0 : index
    %51 = vector.load %arg4[%c0_53, %c8, %c0_54, %c0_55] : memref<1x9x128x128xbf16, #tpu.memory_space<vmem>>, vector<1x1x128x128xbf16>
    %52 = vector.shape_cast %51 : vector<1x1x128x128xbf16> to vector<128x128xbf16>
    %cst_56 = arith.constant dense<0.000000e+00> : vector<40x128xf32>
    %53 = tpu.matmul %50, %52, %cst_56 {dimension_numbers = #tpu.dot_dimension_numbers<[1], [0], [0], [1], [0, 0, 1, 1], [], []>} : vector<40x128xbf16>, vector<128x128xbf16>, vector<40x128xf32> -> vector<40x128xf32>
    %54 = arith.addf %48, %53 : vector<40x128xf32>
    %c0_57 = arith.constant 0 : index
    %c0_58 = arith.constant 0 : index
    %c0_59 = arith.constant 0 : index
    %55 = vector.load %arg5[%c0_57, %c0_58, %c0_59] : memref<1x1x128xf32, #tpu.memory_space<vmem>>, vector<1x1x128xf32>
    %56 = vector.shape_cast %55 : vector<1x1x128xf32> to vector<1x128xf32>
    %57 = vector.broadcast %56 : vector<1x128xf32> to vector<40x128xf32>
    %58 = arith.addf %54, %57 : vector<40x128xf32>
    %cst_60 = arith.constant 0.000000e+00 : f32
    %59 = vector.broadcast %cst_60 : f32 to vector<40x128xf32>
    %60 = arith.maximumf %58, %59 : vector<40x128xf32>
    %c0_61 = arith.constant 0 : index
    %c0_62 = arith.constant 0 : index
    %61 = vector.load %arg6[%c0_61, %c0_62] : memref<40x1xf32, #tpu.memory_space<vmem>>, vector<40x1xf32>
    %62 = vector.broadcast %61 : vector<40x1xf32> to vector<40x128xf32>
    %63 = arith.mulf %60, %62 : vector<40x128xf32>
    %cst_63 = arith.constant 0.000000e+00 : bf16
    %64 = vector.broadcast %cst_63 : bf16 to vector<11x128xbf16>
    %c0_64 = arith.constant 0 : index
    %c0_65 = arith.constant 0 : index
    %c0_66 = arith.constant 0 : index
    %65 = vector.load %arg7[%c0_64, %c0_65, %c0_66] : memref<1x80x128xbf16, #tpu.memory_space<vmem>>, vector<1x11x128xbf16>
    %66 = vector.shape_cast %65 : vector<1x11x128xbf16> to vector<11x128xbf16>
    %67 = vector.shape_cast %64 : vector<11x128xbf16> to vector<1x11x128xbf16>
    tpu.vector_store %arg7[%c0_64, %c0_65, %c0_66], %67 {strides = array<i32>} : memref<1x80x128xbf16, #tpu.memory_space<vmem>>, vector<1x11x128xbf16>,
    %cst_67 = arith.constant 0.000000e+00 : bf16
    %68 = vector.broadcast %cst_67 : bf16 to vector<29x128xbf16>
    %c0_68 = arith.constant 0 : index
    %c51 = arith.constant 51 : index
    %c0_69 = arith.constant 0 : index
    %69 = vector.load %arg7[%c0_68, %c51, %c0_69] : memref<1x80x128xbf16, #tpu.memory_space<vmem>>, vector<1x29x128xbf16>
    %70 = vector.shape_cast %69 : vector<1x29x128xbf16> to vector<29x128xbf16>
    %71 = vector.shape_cast %68 : vector<29x128xbf16> to vector<1x29x128xbf16>
    tpu.vector_store %arg7[%c0_68, %c51, %c0_69], %71 {strides = array<i32>} : memref<1x80x128xbf16, #tpu.memory_space<vmem>>, vector<1x29x128xbf16>,
    %72 = arith.truncf %63 : vector<40x128xf32> to vector<40x128xbf16>
    %c0_70 = arith.constant 0 : index
    %c11_71 = arith.constant 11 : index
    %c0_72 = arith.constant 0 : index
    %73 = vector.load %arg7[%c0_70, %c11_71, %c0_72] : memref<1x80x128xbf16, #tpu.memory_space<vmem>>, vector<1x40x128xbf16>
    %74 = vector.shape_cast %73 : vector<1x40x128xbf16> to vector<40x128xbf16>
    %75 = vector.shape_cast %72 : vector<40x128xbf16> to vector<1x40x128xbf16>
    tpu.vector_store %arg7[%c0_70, %c11_71, %c0_72], %75 {strides = array<i32>} : memref<1x80x128xbf16, #tpu.memory_space<vmem>>, vector<1x40x128xbf16>,
    return
  }
  func.func @transform_0(%arg0: i32, %arg1: i32, %arg2: memref<4xi32, #tpu.memory_space<smem>>) -> (i32, i32, i32) {
    %c0_i32 = arith.constant 0 : i32
    %c0_i32_0 = arith.constant 0 : i32
    %c0_i32_1 = arith.constant 0 : i32
    return %arg0, %c0_i32, %c0_i32_0 : i32, i32, i32
  }
  func.func @transform_1(%arg0: i32, %arg1: i32, %arg2: memref<4xi32, #tpu.memory_space<smem>>) -> (i32, i32, i32, i32) {
    %0 = arith.index_cast %arg0 : i32 to index
    %1 = memref.load %arg2[%0] : memref<4xi32, #tpu.memory_space<smem>>
    %c0_i32 = arith.constant 0 : i32
    %c0_i32_0 = arith.constant 0 : i32
    %c0_i32_1 = arith.constant 0 : i32
    return %1, %c0_i32, %c0_i32_0, %arg1 : i32, i32, i32, i32
  }
  func.func @transform_2(%arg0: i32, %arg1: i32, %arg2: memref<4xi32, #tpu.memory_space<smem>>) -> (i32, i32, i32) {
    %0 = arith.index_cast %arg0 : i32 to index
    %1 = memref.load %arg2[%0] : memref<4xi32, #tpu.memory_space<smem>>
    %c0_i32 = arith.constant 0 : i32
    %c0_i32_0 = arith.constant 0 : i32
    return %1, %c0_i32, %arg1 : i32, i32, i32
  }
  func.func @transform_3(%arg0: i32, %arg1: i32, %arg2: memref<4xi32, #tpu.memory_space<smem>>) -> (i32, i32) {
    %c0_i32 = arith.constant 0 : i32
    %c0_i32_0 = arith.constant 0 : i32
    %c0_i32_1 = arith.constant 0 : i32
    return %c0_i32, %c0_i32_0 : i32, i32
  }
  func.func @transform_4(%arg0: i32, %arg1: i32, %arg2: memref<4xi32, #tpu.memory_space<smem>>) -> (i32, i32, i32) {
    %c0_i32 = arith.constant 0 : i32
    %c0_i32_0 = arith.constant 0 : i32
    return %arg0, %c0_i32, %arg1 : i32, i32, i32
  }
}

module attributes {stable_mosaic.version = 11 : i64} {
  func.func @_latent_head_kernel(%arg0: i32, %arg1: memref<4xi32, #tpu.memory_space<smem>>, %arg2: memref<1x80x128xbf16, #tpu.memory_space<vmem>>, %arg3: memref<1x128x128xf32, #tpu.memory_space<vmem>>, %arg4: memref<1x1x128xf32, #tpu.memory_space<vmem>>, %arg5: memref<1x1x128xf32, #tpu.memory_space<vmem>>) attributes {dimension_semantics = [#tpu.dimension_semantics<parallel>], iteration_bounds = array<i64: 4>, scalar_prefetch = 1 : i64, scratch_operands = 0 : i64, tpu.core_type = #tpu.core_type<tc>, window_params = [{transform_indices = @transform_0, window_bounds = array<i64: 1, 80, 128>}, {transform_indices = @transform_1, window_bounds = array<i64: 1, 128, 128>}, {transform_indices = @transform_2, window_bounds = array<i64: 1, 1, 128>}, {transform_indices = @transform_3, window_bounds = array<i64: 1, 1, 128>}]} {
    %c0 = arith.constant 0 : index
    %c0_0 = arith.constant 0 : index
    %c0_1 = arith.constant 0 : index
    %0 = vector.load %arg2[%c0, %c0_0, %c0_1] : memref<1x80x128xbf16, #tpu.memory_space<vmem>>, vector<1x80x128xbf16>
    %1 = vector.shape_cast %0 : vector<1x80x128xbf16> to vector<80x128xbf16>
    %2 = arith.extf %1 : vector<80x128xbf16> to vector<80x128xf32>
    %cst = arith.constant dense<0.000000e+00> : vector<128xf32>
    %3 = vector.multi_reduction <add>, %2, %cst [0] : vector<80x128xf32> to vector<128xf32>
    %4 = vector.shape_cast %3 : vector<128xf32> to vector<1x128xf32>
    %cst_2 = arith.constant 6.250000e-02 : f32
    %5 = vector.broadcast %cst_2 : f32 to vector<1x128xf32>
    %6 = arith.mulf %4, %5 : vector<1x128xf32>
    %c0_3 = arith.constant 0 : index
    %c0_4 = arith.constant 0 : index
    %c0_5 = arith.constant 0 : index
    %7 = vector.load %arg3[%c0_3, %c0_4, %c0_5] : memref<1x128x128xf32, #tpu.memory_space<vmem>>, vector<1x128x128xf32>
    %8 = vector.shape_cast %7 : vector<1x128x128xf32> to vector<128x128xf32>
    %cst_6 = arith.constant dense<0.000000e+00> : vector<1x128xf32>
    %9 = tpu.matmul %6, %8, %cst_6 {dimension_numbers = #tpu.dot_dimension_numbers<[1], [0], [0], [1], [0, 0, 1, 1], [], []>} : vector<1x128xf32>, vector<128x128xf32>, vector<1x128xf32> -> vector<1x128xf32>
    %c0_7 = arith.constant 0 : index
    %c0_8 = arith.constant 0 : index
    %c0_9 = arith.constant 0 : index
    %10 = vector.load %arg4[%c0_7, %c0_8, %c0_9] : memref<1x1x128xf32, #tpu.memory_space<vmem>>, vector<1x1x128xf32>
    %11 = vector.shape_cast %10 : vector<1x1x128xf32> to vector<1x128xf32>
    %12 = arith.addf %9, %11 : vector<1x128xf32>
    %c0_10 = arith.constant 0 : index
    %c0_11 = arith.constant 0 : index
    %c0_12 = arith.constant 0 : index
    %13 = vector.load %arg5[%c0_10, %c0_11, %c0_12] : memref<1x1x128xf32, #tpu.memory_space<vmem>>, vector<1x1x128xf32>
    %14 = vector.shape_cast %13 : vector<1x1x128xf32> to vector<1x128xf32>
    %15 = vector.shape_cast %12 : vector<1x128xf32> to vector<1x1x128xf32>
    tpu.vector_store %arg5[%c0_10, %c0_11, %c0_12], %15 {strides = array<i32>} : memref<1x1x128xf32, #tpu.memory_space<vmem>>, vector<1x1x128xf32>,
    return
  }
  func.func @transform_0(%arg0: i32, %arg1: memref<4xi32, #tpu.memory_space<smem>>) -> (i32, i32, i32) {
    %c0_i32 = arith.constant 0 : i32
    %c0_i32_0 = arith.constant 0 : i32
    %c0_i32_1 = arith.constant 0 : i32
    return %arg0, %c0_i32, %c0_i32_0 : i32, i32, i32
  }
  func.func @transform_1(%arg0: i32, %arg1: memref<4xi32, #tpu.memory_space<smem>>) -> (i32, i32, i32) {
    %0 = arith.index_cast %arg0 : i32 to index
    %1 = memref.load %arg1[%0] : memref<4xi32, #tpu.memory_space<smem>>
    %c0_i32 = arith.constant 0 : i32
    %c0_i32_0 = arith.constant 0 : i32
    %c0_i32_1 = arith.constant 0 : i32
    return %1, %c0_i32, %c0_i32_0 : i32, i32, i32
  }
  func.func @transform_2(%arg0: i32, %arg1: memref<4xi32, #tpu.memory_space<smem>>) -> (i32, i32, i32) {
    %0 = arith.index_cast %arg0 : i32 to index
    %1 = memref.load %arg1[%0] : memref<4xi32, #tpu.memory_space<smem>>
    %c0_i32 = arith.constant 0 : i32
    %c0_i32_0 = arith.constant 0 : i32
    %c0_i32_1 = arith.constant 0 : i32
    return %1, %c0_i32, %c0_i32_0 : i32, i32, i32
  }
  func.func @transform_3(%arg0: i32, %arg1: memref<4xi32, #tpu.memory_space<smem>>) -> (i32, i32, i32) {
    %c0_i32 = arith.constant 0 : i32
    %c0_i32_0 = arith.constant 0 : i32
    %c0_i32_1 = arith.constant 0 : i32
    return %arg0, %c0_i32, %c0_i32_0 : i32, i32, i32
  }
}

</mosaic_0001>

<llo_original>
// kernel: _lambda_.15
$region0: #{_lambda_.15}
  #allocation0 [shape = 'u32[]', space=smem, size = 0x4, offset = 0x4, fixed_abs, tag = 'smem constant byte address 0x4 - core index']
  #allocation1 [shape = 'u32[72,128]{1,0:T(1,128)}', space=vmem, size = 0x9000, scoped, tag = 'internal scratch']
  %s0 = inlined_call_operand.vmem [shape: bf16[40,2,9,256], index: 0, kind: input, shape index: {}]
  %s1 = inlined_call_operand.vmem [shape: bf16[4,12,10,128], index: 1, kind: output, shape index: {}]
  %s2 = sld [smem:[#allocation0]]
  $region37: #{_lambda_.15} parent=0
    _
  %s4 = ssub.s32 1, %s2
  %s5 = scalar_select 0, %s4, %s2
  loop: start=0, step=1, limit=6
  $region2: #{_lambda_.15} parent=0 // loop_pre_header
    _
  $region3: #{_lambda_.15} parent=0 // loop_header
    %s7 = sphi 0, %s11
    %p8 = scmp.ge.s32.totalorder %s7, 6
    %s17 = sphi 0, %s19
    %s20 = sphi 0, %s17
    %s21 = sphi 0, %s20
    %s37 = sphi 0, %s21
    %s43 = sphi 0, %s45
    %s46 = sphi 0, %s43
    %s47 = sphi 0, %s46
    %s63 = sphi 0, %s47
  $region4: #{_lambda_.15} parent=0 // loop_header_branch
    %10 = sbr.rel (%p8) target = $region8
  $region5: #{_lambda_.15} parent=0 // loop_body
    %s12 = ssub.s32 %s7, 1
    %s13 = ssub.s32 %s7, 2
    %s14 = sadd.s32 %s7, 1
    %s15 = ssub.s32 %s7, %s14
    %p16 = scmp.eq.s32.totalorder %s15, 0
    %s18 = sadd.s32 %s17, 1
    %s19 = scalar_select %p16, %s17, %s18
    %p22 = pneg %p16
    %p23 = scmp.eq.s32.totalorder %s7, 3
    %p24 = por %p22, %p23
    %p25 = scmp.ne.s32.totalorder %s17, %s20
    %p26 = scmp.eq.s32.totalorder %s7, 0
    %p27 = por %p25, %p26
    %p28 = scmp.ne.s32.totalorder %s17, %s20
    %p29 = scmp.eq.s32.totalorder %s12, 3
    %p30 = por %p28, %p29
    %p31 = scmp.ne.s32.totalorder %s20, %s21
    %p32 = scmp.eq.s32.totalorder %s12, 0
    %p33 = por %p31, %p32
    %p34 = scmp.ne.s32.totalorder %s20, %s21
    %p35 = scmp.eq.s32.totalorder %s13, 3
    %p36 = por %p34, %p35
    %p38 = scmp.ne.s32.totalorder %s21, %s37
    %p39 = scmp.eq.s32.totalorder %s13, 0
    %p40 = por %p38, %p39
    %s41 = ssub.s32 %s7, %s14
    %p42 = scmp.eq.s32.totalorder %s41, 0
    %s44 = sadd.s32 %s43, 1
    %s45 = scalar_select %p42, %s43, %s44
    %p48 = pneg %p42
    %p49 = scmp.eq.s32.totalorder %s7, 3
    %p50 = por %p48, %p49
    %p51 = scmp.ne.s32.totalorder %s43, %s46
    %p52 = scmp.eq.s32.totalorder %s7, 0
    %p53 = por %p51, %p52
    %p54 = scmp.ne.s32.totalorder %s43, %s46
    %p55 = scmp.eq.s32.totalorder %s12, 3
    %p56 = por %p54, %p55
    %p57 = scmp.ne.s32.totalorder %s46, %s47
    %p58 = scmp.eq.s32.totalorder %s12, 0
    %p59 = por %p57, %p58
    %p60 = scmp.ne.s32.totalorder %s46, %s47
    %p61 = scmp.eq.s32.totalorder %s13, 3
    %p62 = por %p60, %p61
    %p64 = scmp.ne.s32.totalorder %s47, %s63
    %p65 = scmp.eq.s32.totalorder %s13, 0
    %p66 = por %p64, %p65
    %p67 = scmp.le.s32.totalorder 1, %s7
    %p68 = scmp.lt.s32.totalorder %s7, 5
    %p69 = pnand %p67, %p68
    %p70 = pneg %p69
    // Predicated region
    $region9: #{_lambda_.15} parent=5 // pred_check
      _
    $region10: #{_lambda_.15} parent=5 // pred_check_branch
      %72 = sbr.rel (%p69) target = $region12
    $region11: #{_lambda_.15} parent=5 // pred_region
      %s73 = ssub.s32 %s7, 1
    $region12: #{_lambda_.15} parent=5 // pred_fallthru
      _
    %p74 = scmp.lt.s32.totalorder %s7, 4
    // Predicated region
    $region13: #{_lambda_.15} parent=5 // pred_check
      %p75 = pneg %p74
    $region14: #{_lambda_.15} parent=5 // pred_check_branch
      %77 = sbr.rel (%p75) target = $region16
    $region15: #{_lambda_.15} parent=5 // pred_region
      // Predicated region
      $region17: #{_lambda_.15} parent=15 // pred_check
        %p78 = pneg %p27
      $region18: #{_lambda_.15} parent=15 // pred_check_branch
        %80 = sbr.rel (%p78) target = $region20
      $region19: #{_lambda_.15} parent=15 // pred_region
        %s81 = smul.u32 10, %s7
        %p82 = scmp.lt.s32.totalorder %s81, 39
        %s83 = scalar_select %p82, %s81, 39
        %s84 = smul.addr %s83, 8
        %s85 = smul.addr %s84, 4
        %s86 = scalar_lea.vmem %s0, %s85
        %s87 = smul.u32 10, %s7
      $region20: #{_lambda_.15} parent=15 // pred_fallthru
        _
    $region16: #{_lambda_.15} parent=5 // pred_fallthru
      _
    %p88 = scmp.le.s32.totalorder 1, %s7
    %p89 = scmp.lt.s32.totalorder %s7, 5
    %p90 = pnand %p88, %p89
    %p91 = pneg %p90
    // Predicated region
    $region21: #{_lambda_.15} parent=5 // pred_check
      _
    $region22: #{_lambda_.15} parent=5 // pred_check_branch
      %93 = sbr.rel (%p90) target = $region24
    $region23: #{_lambda_.15} parent=5 // pred_region
      %s94 = ssub.s32 %s7, 1
      %s95 = smul.u32 10, %s12
      %p96 = scmp.lt.s32.totalorder %s95, 39
      %s97 = scalar_select %p96, %s95, 39
      %s98 = smul.addr %s97, 8
      %s99 = smul.addr %s98, 4
      %s100 = scalar_lea.vmem %s0, %s99
      %p101 = pneg %p33
      %p102 = pneg %p30
      %p103 = pneg %p59
      %p104 = pneg %p56
      %p105 = scmp.lt.s32.totalorder %s12, 3
      %s106 = scalar_select %p105, %s12, 3
      %s107 = smul.addr %s106, 24
      %s108 = smul.addr %s107, 4
      %s109 = scalar_lea.vmem %s1, %s108
      %s110 = smul.u32 10, %s12
      %p111 = scmp.lt.s32.totalorder %s110, 39
      %s112 = scalar_select %p111, %s110, 39
      %s113 = smul.addr %s112, 8
      %s114 = smul.addr %s113, 4
      %s115 = scalar_lea.vmem %s0, %s114
      %s116 = smul.u32 10, %s12
      %p117 = scmp.lt.s32.totalorder %s12, 3
      %s118 = scalar_select %p117, %s12, 3
      %s119 = smul.addr %s118, 24
      %s120 = smul.addr %s119, 4
      %s121 = scalar_lea.vmem %s1, %s120
      %v123 = vld [vmem:[%s115 + $0x10] sm:$0xff]
      %v124 = vld [vmem:[%s115 + $0x18] sm:$0x11]
      %v125 = vld [vmem:[%s115 + $0x20] sm:$0xff]
      %v126 = vld [vmem:[%s115 + $0x28] sm:$0x11]
      %v127 = vld [vmem:[%s115 + $0x30] sm:$0xff]
      %v128 = vld [vmem:[%s115 + $0x38] sm:$0x11]
      %v129 = vld [vmem:[%s115 + $0x40] sm:$0xff]
      %v130 = vld [vmem:[%s115 + $0x48] sm:$0x11]
      %v131 = vld [vmem:[%s115 + $0x50] sm:$0xff]
      %v132 = vld [vmem:[%s115 + $0x58] sm:$0x11]
      %v133 = vld [vmem:[%s115 + $0x60] sm:$0xff]
      %v134 = vld [vmem:[%s115 + $0x68] sm:$0x11]
      %v135 = vld [vmem:[%s115 + $0x70] sm:$0xff]
      %v136 = vld [vmem:[%s115 + $0x78] sm:$0x11]
      %v137 = vld [vmem:[%s115 + $0x80] sm:$0xff]
      %v138 = vld [vmem:[%s115 + $0x88] sm:$0x11]
      %v139 = vld [vmem:[%s115 + $0x90] sm:$0xff]
      %v140 = vld [vmem:[%s115 + $0x98] sm:$0x11]
      %v141 = vld [vmem:[%s115 + $0xa0] sm:$0xff]
      %v142 = vld [vmem:[%s115 + $0xa8] sm:$0x11]
      %v143 = vld [vmem:[%s115 + $0xb0] sm:$0xff]
      %v144 = vld [vmem:[%s115 + $0xb8] sm:$0x11]
      %v145 = vld [vmem:[%s115 + $0xc0] sm:$0xff]
      %v146 = vld [vmem:[%s115 + $0xc8] sm:$0x11]
      %v147 = vld [vmem:[%s115 + $0xd0] sm:$0xff]
      %v148 = vld [vmem:[%s115 + $0xd8] sm:$0x11]
      %v149 = vld [vmem:[%s115 + $0xe0] sm:$0xff]
      %v150 = vld [vmem:[%s115 + $0xe8] sm:$0x11]
      %v151 = vld [vmem:[%s115 + $0xf0] sm:$0xff]
      %v152 = vld [vmem:[%s115 + $0xf8] sm:$0x11]
      %v153 = vld [vmem:[%s115 + $0x100] sm:$0xff]
      %v154 = vld [vmem:[%s115 + $0x108] sm:$0x11]
      %v155 = vld [vmem:[%s115 + $0x110] sm:$0xff]
      %v156 = vld [vmem:[%s115 + $0x118] sm:$0x11]
      %v157 = vunpack.c.l.bf16 %v123
      %v158 = vunpack.c.h.bf16 %v123
      %v159 = vunpack.c.l.bf16 %v124
      %v160 = vunpack.c.h.bf16 %v124
      %v161 = vunpack.c.l.bf16 %v125
      %v162 = vunpack.c.h.bf16 %v125
      %v163 = vunpack.c.l.bf16 %v126
      %v164 = vunpack.c.h.bf16 %v126
      %v165 = vunpack.c.l.bf16 %v127
      %v166 = vunpack.c.h.bf16 %v127
      %v167 = vunpack.c.l.bf16 %v128
      %v168 = vunpack.c.h.bf16 %v128
      %v169 = vunpack.c.l.bf16 %v129
      %v170 = vunpack.c.h.bf16 %v129
      %v171 = vunpack.c.l.bf16 %v130
      %v172 = vunpack.c.h.bf16 %v130
      %v173 = vunpack.c.l.bf16 %v131
      %v174 = vunpack.c.h.bf16 %v131
      %v175 = vunpack.c.l.bf16 %v132
      %v176 = vunpack.c.h.bf16 %v132
      %v177 = vunpack.c.l.bf16 %v133
      %v178 = vunpack.c.h.bf16 %v133
      %v179 = vunpack.c.l.bf16 %v134
      %v180 = vunpack.c.h.bf16 %v134
      %v181 = vunpack.c.l.bf16 %v135
      %v182 = vunpack.c.h.bf16 %v135
      %v183 = vunpack.c.l.bf16 %v136
      %v184 = vunpack.c.h.bf16 %v136
      %v185 = vunpack.c.l.bf16 %v137
      %v186 = vunpack.c.h.bf16 %v137
      %v187 = vunpack.c.l.bf16 %v138
      %v188 = vunpack.c.h.bf16 %v138
      %v189 = vunpack.c.l.bf16 %v139
      %v190 = vunpack.c.h.bf16 %v139
      %v191 = vunpack.c.l.bf16 %v140
      %v192 = vunpack.c.h.bf16 %v140
      %v193 = vunpack.c.l.bf16 %v141
      %v194 = vunpack.c.h.bf16 %v141
      %v195 = vunpack.c.l.bf16 %v142
      %v196 = vunpack.c.h.bf16 %v142
      %v197 = vunpack.c.l.bf16 %v143
      %v198 = vunpack.c.h.bf16 %v143
      %v199 = vunpack.c.l.bf16 %v144
      %v200 = vunpack.c.h.bf16 %v144
      %v201 = vunpack.c.l.bf16 %v145
      %v202 = vunpack.c.h.bf16 %v145
      %v203 = vunpack.c.l.bf16 %v146
      %v204 = vunpack.c.h.bf16 %v146
      %v205 = vunpack.c.l.bf16 %v147
      %v206 = vunpack.c.h.bf16 %v147
      %v207 = vunpack.c.l.bf16 %v148
      %v208 = vunpack.c.h.bf16 %v148
      %v209 = vunpack.c.l.bf16 %v149
      %v210 = vunpack.c.h.bf16 %v149
      %v211 = vunpack.c.l.bf16 %v150
      %v212 = vunpack.c.h.bf16 %v150
      %v213 = vunpack.c.l.bf16 %v151
      %v214 = vunpack.c.h.bf16 %v151
      %v215 = vunpack.c.l.bf16 %v152
      %v216 = vunpack.c.h.bf16 %v152
      %v217 = vunpack.c.l.bf16 %v153
      %v218 = vunpack.c.h.bf16 %v153
      %v219 = vunpack.c.l.bf16 %v154
      %v220 = vunpack.c.h.bf16 %v154
      %v221 = vunpack.c.l.bf16 %v155
      %v222 = vunpack.c.h.bf16 %v155
      %v223 = vunpack.c.l.bf16 %v156
      %v224 = vunpack.c.h.bf16 %v156
      %vm241 = vcmask 1046528
      %v242 = vrot.slane %v157, 1
      %v243 = vrot.slane %v159, 1
      %v244 = vsel %vm241, %v242, %v243
      %v245 = vrot.slane %v165, 1
      %v246 = vrot.slane %v167, 1
      %v247 = vsel %vm241, %v245, %v246
      %v248 = vrot.slane %v173, 1
      %v249 = vrot.slane %v175, 1
      %v250 = vsel %vm241, %v248, %v249
      %v251 = vrot.slane %v181, 1
      %v252 = vrot.slane %v183, 1
      %v253 = vsel %vm241, %v251, %v252
      %v254 = vrot.slane %v189, 1
      %v255 = vrot.slane %v191, 1
      %v256 = vsel %vm241, %v254, %v255
      %v257 = vrot.slane %v197, 1
      %v258 = vrot.slane %v199, 1
      %v259 = vsel %vm241, %v257, %v258
      %v260 = vrot.slane %v205, 1
      %v261 = vrot.slane %v207, 1
      %v262 = vsel %vm241, %v260, %v261
      %v263 = vrot.slane %v213, 1
      %v264 = vrot.slane %v215, 1
      %v265 = vsel %vm241, %v263, %v264
      %v274 = vadd.f32 %v158, %v244
      %v275 = vadd.f32 %v166, %v247
      %v276 = vadd.f32 %v174, %v250
      %v277 = vadd.f32 %v182, %v253
      %v278 = vadd.f32 %v190, %v256
      %v279 = vadd.f32 %v198, %v259
      %v280 = vadd.f32 %v206, %v262
      %v281 = vadd.f32 %v214, %v265
      %v298 = vrot.slane %v158, 1
      %v299 = vrot.slane %v160, 1
      %v300 = vsel %vm241, %v298, %v299
      %v301 = vrot.slane %v166, 1
      %v302 = vrot.slane %v168, 1
      %v303 = vsel %vm241, %v301, %v302
      %v304 = vrot.slane %v174, 1
      %v305 = vrot.slane %v176, 1
      %v306 = vsel %vm241, %v304, %v305
      %v307 = vrot.slane %v182, 1
      %v308 = vrot.slane %v184, 1
      %v309 = vsel %vm241, %v307, %v308
      %v310 = vrot.slane %v190, 1
      %v311 = vrot.slane %v192, 1
      %v312 = vsel %vm241, %v310, %v311
      %v313 = vrot.slane %v198, 1
      %v314 = vrot.slane %v200, 1
      %v315 = vsel %vm241, %v313, %v314
      %v316 = vrot.slane %v206, 1
      %v317 = vrot.slane %v208, 1
      %v318 = vsel %vm241, %v316, %v317
      %v319 = vrot.slane %v214, 1
      %v320 = vrot.slane %v216, 1
      %v321 = vsel %vm241, %v319, %v320
      %v330 = vadd.f32 %v274, %v300
      %v331 = vadd.f32 %v275, %v303
      %v332 = vadd.f32 %v276, %v306
      %v333 = vadd.f32 %v277, %v309
      %v334 = vadd.f32 %v278, %v312
      %v335 = vadd.f32 %v279, %v315
      %v336 = vadd.f32 %v280, %v318
      %v337 = vadd.f32 %v281, %v321
      %v354 = vrot.slane %v161, 1
      %v355 = vrot.slane %v163, 1
      %v356 = vsel %vm241, %v354, %v355
      %v357 = vrot.slane %v169, 1
      %v358 = vrot.slane %v171, 1
      %v359 = vsel %vm241, %v357, %v358
      %v360 = vrot.slane %v177, 1
      %v361 = vrot.slane %v179, 1
      %v362 = vsel %vm241, %v360, %v361
      %v363 = vrot.slane %v185, 1
      %v364 = vrot.slane %v187, 1
      %v365 = vsel %vm241, %v363, %v364
      %v366 = vrot.slane %v193, 1
      %v367 = vrot.slane %v195, 1
      %v368 = vsel %vm241, %v366, %v367
      %v369 = vrot.slane %v201, 1
      %v370 = vrot.slane %v203, 1
      %v371 = vsel %vm241, %v369, %v370
      %v372 = vrot.slane %v209, 1
      %v373 = vrot.slane %v211, 1
      %v374 = vsel %vm241, %v372, %v373
      %v375 = vrot.slane %v217, 1
      %v376 = vrot.slane %v219, 1
      %v377 = vsel %vm241, %v375, %v376
      %v386 = vadd.f32 %v162, %v356
      %v387 = vadd.f32 %v170, %v359
      %v388 = vadd.f32 %v178, %v362
      %v389 = vadd.f32 %v186, %v365
      %v390 = vadd.f32 %v194, %v368
      %v391 = vadd.f32 %v202, %v371
      %v392 = vadd.f32 %v210, %v374
      %v393 = vadd.f32 %v218, %v377
      %v410 = vrot.slane %v162, 1
      %v411 = vrot.slane %v164, 1
      %v412 = vsel %vm241, %v410, %v411
      %v413 = vrot.slane %v170, 1
      %v414 = vrot.slane %v172, 1
      %v415 = vsel %vm241, %v413, %v414
      %v416 = vrot.slane %v178, 1
      %v417 = vrot.slane %v180, 1
      %v418 = vsel %vm241, %v416, %v417
      %v419 = vrot.slane %v186, 1
      %v420 = vrot.slane %v188, 1
      %v421 = vsel %vm241, %v419, %v420
      %v422 = vrot.slane %v194, 1
      %v423 = vrot.slane %v196, 1
      %v424 = vsel %vm241, %v422, %v423
      %v425 = vrot.slane %v202, 1
      %v426 = vrot.slane %v204, 1
      %v427 = vsel %vm241, %v425, %v426
      %v428 = vrot.slane %v210, 1
      %v429 = vrot.slane %v212, 1
      %v430 = vsel %vm241, %v428, %v429
      %v431 = vrot.slane %v218, 1
      %v432 = vrot.slane %v220, 1
      %v433 = vsel %vm241, %v431, %v432
      %v442 = vadd.f32 %v386, %v412
      %v443 = vadd.f32 %v387, %v415
      %v444 = vadd.f32 %v388, %v418
      %v445 = vadd.f32 %v389, %v421
      %v446 = vadd.f32 %v390, %v424
      %v447 = vadd.f32 %v391, %v427
      %v448 = vadd.f32 %v392, %v430
      %v449 = vadd.f32 %v393, %v433
      %v450 = vadd.f32 %v330, %v442
      %v451 = vadd.f32 %v331, %v443
      %v452 = vadd.f32 %v332, %v444
      %v453 = vadd.f32 %v333, %v445
      %v454 = vadd.f32 %v334, %v446
      %v455 = vadd.f32 %v335, %v447
      %v456 = vadd.f32 %v336, %v448
      %v457 = vadd.f32 %v337, %v449
      %v460 = vrot.slane %v221, 1
      %v461 = vrot.slane %v223, 1
      %v462 = vsel %vm241, %v460, %v461
      %v464 = vadd.f32 %v222, %v462
      %v467 = vrot.slane %v222, 1
      %v468 = vrot.slane %v224, 1
      %v469 = vsel %vm241, %v467, %v468
      %v471 = vadd.f32 %v464, %v469
      %v472 = vadd.f32 %v450, %v331
      %v473 = vadd.f32 %v451, %v332
      %v474 = vadd.f32 %v452, %v333
      %v475 = vadd.f32 %v453, %v334
      %v476 = vadd.f32 %v454, %v335
      %v477 = vadd.f32 %v455, %v336
      %v478 = vadd.f32 %v456, %v337
      %v479 = vadd.f32 %v457, %v471
      %v480 = vlaneseq
      %v481 = vshrl.u32 %v480, 7
      %v482 = vlaneseq
      %v483 = vand.u32 %v482, 127
      %v484 = vmul.u32 %v481, 2
      %v485 = vadd.s32 %v484, 3
      %vm486 = vcmp.lt.s32.totalorder %v485, 16
      %v487 = vsel %vm486, %v485, 16
      %v488 = vsub.s32 %v487, %v484
      %v489 = vmul.u32 %v483, 2
      %v490 = vadd.s32 %v489, 3
      %vm491 = vcmp.lt.s32.totalorder %v490, 16
      %v492 = vsel %vm491, %v490, 16
      %v493 = vsub.s32 %v492, %v489
      %v494 = vmul.u32 %v488, %v493
      %v495 = vcvt.s32.f32 %v494
      %v496 = vrcp.pop %v495
      %v497 = vmul.f32 %v495, %v496
      %v498 = vsub.f32 1.0, %v497
      %v499 = vmul.f32 %v496, %v498
      %v500 = vadd.f32 %v496, %v499
      %vm501 = vweird.f32 %v495
      %vm502 = vweird.f32 %v496
      %vm503 = vmor %vm501, %vm502
      %v504 = vsel %vm503, %v496, %v500
      %v505 = vand.u32 2147483647, %v495
      %vm506 = vcmp.eq.f32.partialorder %v505, 8.507059e+37
      %v507 = vand.u32 %v495, 2147483648
      %v508 = vor.u32 1.1754944e-38, %v507
      %v509 = vsel %vm506, %v508, %v504
      %v510 = vmul.f32 1.0, %v509
      %v511 = vperm.slane %v510, 0
      %v512 = vlaneseq
      %v513 = vshrl.u32 %v512, 7
      %515 = vset.pattern.permute.xlu0 %v513
      %516 = vperm.xlu0 %515, %v511
      %v517 = vpop.permute.xlu0 %516
      %v518 = vperm.slane %v510, 1
      %v519 = vlaneseq
      %v520 = vshrl.u32 %v519, 7
      %522 = vset.pattern.permute.xlu0 %v520
      %523 = vperm.xlu0 %522, %v518
      %v524 = vpop.permute.xlu0 %523
      %v525 = vperm.slane %v510, 2
      %v526 = vlaneseq
      %v527 = vshrl.u32 %v526, 7
      %529 = vset.pattern.permute.xlu0 %v527
      %530 = vperm.xlu0 %529, %v525
      %v531 = vpop.permute.xlu0 %530
      %v532 = vperm.slane %v510, 3
      %v533 = vlaneseq
      %v534 = vshrl.u32 %v533, 7
      %536 = vset.pattern.permute.xlu0 %v534
      %537 = vperm.xlu0 %536, %v532
      %v538 = vpop.permute.xlu0 %537
      %v539 = vperm.slane %v510, 4
      %v540 = vlaneseq
      %v541 = vshrl.u32 %v540, 7
      %543 = vset.pattern.permute.xlu0 %v541
      %544 = vperm.xlu0 %543, %v539
      %v545 = vpop.permute.xlu0 %544
      %v546 = vperm.slane %v510, 5
      %v547 = vlaneseq
      %v548 = vshrl.u32 %v547, 7
      %550 = vset.pattern.permute.xlu0 %v548
      %551 = vperm.xlu0 %550, %v546
      %v552 = vpop.permute.xlu0 %551
      %v553 = vperm.slane %v510, 6
      %v554 = vlaneseq
      %v555 = vshrl.u32 %v554, 7
      %557 = vset.pattern.permute.xlu0 %v555
      %558 = vperm.xlu0 %557, %v553
      %v559 = vpop.permute.xlu0 %558
      %v560 = vperm.slane %v510, 7
      %v561 = vlaneseq
      %v562 = vshrl.u32 %v561, 7
      %564 = vset.pattern.permute.xlu0 %v562
      %565 = vperm.xlu0 %564, %v560
      %v566 = vpop.permute.xlu0 %565
      %v567 = vmul.f32 %v472, %v517
      %v568 = vmul.f32 %v473, %v524
      %v569 = vmul.f32 %v474, %v531
      %v570 = vmul.f32 %v475, %v538
      %v571 = vmul.f32 %v476, %v545
      %v572 = vmul.f32 %v477, %v552
      %v573 = vmul.f32 %v478, %v559
      %v574 = vmul.f32 %v479, %v566
      %575 = vst [vmem:[%s121] sm:$0xf] 0
      %576 = vst [vmem:[%s121 + $0x4] sm:$0x1] 0
      %577 = vst [vmem:[%s121 + $0x8] sm:$0xf] 0
      %578 = vst [vmem:[%s121 + $0xc] sm:$0x1] 0
      %579 = vst [vmem:[%s121 + $0x10] sm:$0xf] 0
      %580 = vst [vmem:[%s121 + $0x14] sm:$0x1] 0
      %581 = vst [vmem:[%s121 + $0x18] sm:$0xf] 0
      %582 = vst [vmem:[%s121 + $0x1c] sm:$0x1] 0
      %583 = vst [vmem:[%s121 + $0x20] sm:$0xf] 0
      %584 = vst [vmem:[%s121 + $0x24] sm:$0x1] 0
      %585 = vst [vmem:[%s121 + $0x28] sm:$0xf] 0
      %586 = vst [vmem:[%s121 + $0x2c] sm:$0x1] 0
      %587 = vst [vmem:[%s121 + $0x30] sm:$0xf] 0
      %588 = vst [vmem:[%s121 + $0x34] sm:$0x1] 0
      %589 = vst [vmem:[%s121 + $0x38] sm:$0xf] 0
      %590 = vst [vmem:[%s121 + $0x3c] sm:$0x1] 0
      %591 = vst [vmem:[%s121 + $0x40] sm:$0xf] 0
      %592 = vst [vmem:[%s121 + $0x44] sm:$0x1] 0
      %593 = vst [vmem:[%s121 + $0x48] sm:$0xf] 0
      %594 = vst [vmem:[%s121 + $0x4c] sm:$0x1] 0
      %595 = vst [vmem:[%s121 + $0x50] sm:$0xf] 0
      %596 = vst [vmem:[%s121 + $0x54] sm:$0x1] 0
      %597 = vst [vmem:[%s121 + $0x58] sm:$0xf] 0
      %598 = vst [vmem:[%s121 + $0x5c] sm:$0x1] 0
      %v599 = vpack.c.bf16 %v567, %v567
      %v600 = vpack.c.bf16 %v568, %v568
      %v601 = vpack.c.bf16 %v569, %v569
      %v602 = vpack.c.bf16 %v570, %v570
      %v603 = vpack.c.bf16 %v571, %v571
      %v604 = vpack.c.bf16 %v572, %v572
      %v605 = vpack.c.bf16 %v573, %v573
      %v606 = vpack.c.bf16 %v574, %v574
      %v608 = vshrl.u32 %v599, 16
      %v610 = vrot.slane %v608, 7
      %v611 = vshll.u32 %v599, 16
      %v613 = vor.u32 %v610, %v611
      %v614 = vrot.slane %v610, 4
      %v616 = vshrl.u32 %v600, 16
      %v618 = vrot.slane %v616, 7
      %v619 = vshll.u32 %v600, 16
      %v621 = vor.u32 %v618, %v619
      %v622 = vrot.slane %v618, 4
      %v624 = vshrl.u32 %v601, 16
      %v626 = vrot.slane %v624, 7
      %v627 = vshll.u32 %v601, 16
      %v629 = vor.u32 %v626, %v627
      %v630 = vrot.slane %v626, 4
      %v632 = vshrl.u32 %v602, 16
      %v634 = vrot.slane %v632, 7
      %v635 = vshll.u32 %v602, 16
      %v637 = vor.u32 %v634, %v635
      %v638 = vrot.slane %v634, 4
      %v640 = vshrl.u32 %v603, 16
      %v642 = vrot.slane %v640, 7
      %v643 = vshll.u32 %v603, 16
      %v645 = vor.u32 %v642, %v643
      %v646 = vrot.slane %v642, 4
      %v648 = vshrl.u32 %v604, 16
      %v650 = vrot.slane %v648, 7
      %v651 = vshll.u32 %v604, 16
      %v653 = vor.u32 %v650, %v651
      %v654 = vrot.slane %v650, 4
      %v656 = vshrl.u32 %v605, 16
      %v658 = vrot.slane %v656, 7
      %v659 = vshll.u32 %v605, 16
      %v661 = vor.u32 %v658, %v659
      %v662 = vrot.slane %v658, 4
      %v664 = vshrl.u32 %v606, 16
      %v666 = vrot.slane %v664, 7
      %v667 = vshll.u32 %v606, 16
      %v669 = vor.u32 %v666, %v667
      %v670 = vrot.slane %v666, 4
      %s687 = scalar_lea.vmem %s121, 8
      %vm688 = vcmask 1043456
      %vm689 = vsmask.f32 7938
      %vm690 = vmand %vm688, %vm689
      %v691 = vld [vmem:[%s687] sm:$0xf]
      %v692 = vsel %vm690, %v613, %v691
      %693 = vst [vmem:[%s687] sm:$0xf] %v692
      %vm694 = vcmask 1040384
      %vm695 = vsmask.f32 256
      %vm696 = vmand %vm694, %vm695
      %v697 = vld [vmem:[%s687 + $0x4] sm:$0x1]
      %v698 = vsel %vm696, %v614, %v697
      %699 = vst [vmem:[%s687 + $0x4] sm:$0x1] %v698
      %v700 = vld [vmem:[%s687 + $0x8] sm:$0xf]
      %v701 = vsel %vm690, %v621, %v700
      %702 = vst [vmem:[%s687 + $0x8] sm:$0xf] %v701
      %v703 = vld [vmem:[%s687 + $0xc] sm:$0x1]
      %v704 = vsel %vm696, %v622, %v703
      %705 = vst [vmem:[%s687 + $0xc] sm:$0x1] %v704
      %v706 = vld [vmem:[%s687 + $0x10] sm:$0xf]
      %v707 = vsel %vm690, %v629, %v706
      %708 = vst [vmem:[%s687 + $0x10] sm:$0xf] %v707
      %v709 = vld [vmem:[%s687 + $0x14] sm:$0x1]
      %v710 = vsel %vm696, %v630, %v709
      %711 = vst [vmem:[%s687 + $0x14] sm:$0x1] %v710
      %v712 = vld [vmem:[%s687 + $0x18] sm:$0xf]
      %v713 = vsel %vm690, %v637, %v712
      %714 = vst [vmem:[%s687 + $0x18] sm:$0xf] %v713
      %v715 = vld [vmem:[%s687 + $0x1c] sm:$0x1]
      %v716 = vsel %vm696, %v638, %v715
      %717 = vst [vmem:[%s687 + $0x1c] sm:$0x1] %v716
      %v718 = vld [vmem:[%s687 + $0x20] sm:$0xf]
      %v719 = vsel %vm690, %v645, %v718
      %720 = vst [vmem:[%s687 + $0x20] sm:$0xf] %v719
      %v721 = vld [vmem:[%s687 + $0x24] sm:$0x1]
      %v722 = vsel %vm696, %v646, %v721
      %723 = vst [vmem:[%s687 + $0x24] sm:$0x1] %v722
      %v724 = vld [vmem:[%s687 + $0x28] sm:$0xf]
      %v725 = vsel %vm690, %v653, %v724
      %726 = vst [vmem:[%s687 + $0x28] sm:$0xf] %v725
      %v727 = vld [vmem:[%s687 + $0x2c] sm:$0x1]
      %v728 = vsel %vm696, %v654, %v727
      %729 = vst [vmem:[%s687 + $0x2c] sm:$0x1] %v728
      %v730 = vld [vmem:[%s687 + $0x30] sm:$0xf]
      %v731 = vsel %vm690, %v661, %v730
      %732 = vst [vmem:[%s687 + $0x30] sm:$0xf] %v731
      %v733 = vld [vmem:[%s687 + $0x34] sm:$0x1]
      %v734 = vsel %vm696, %v662, %v733
      %735 = vst [vmem:[%s687 + $0x34] sm:$0x1] %v734
      %v736 = vld [vmem:[%s687 + $0x38] sm:$0xf]
      %v737 = vsel %vm690, %v669, %v736
      %738 = vst [vmem:[%s687 + $0x38] sm:$0xf] %v737
      %v739 = vld [vmem:[%s687 + $0x3c] sm:$0x1]
      %v740 = vsel %vm696, %v670, %v739
      %741 = vst [vmem:[%s687 + $0x3c] sm:$0x1] %v740
      %p742 = scmp.lt.s32.totalorder %s12, 3
      %s743 = scalar_select %p742, %s12, 3
      %s744 = smul.addr %s743, 24
      %s745 = smul.addr %s744, 4
      %s746 = scalar_lea.vmem %s1, %s745
      // Predicated region
      $region25: #{_lambda_.15} parent=23 // pred_check
        %p747 = pneg %p56
      $region26: #{_lambda_.15} parent=23 // pred_check_branch
        %749 = sbr.rel (%p747) target = $region28
      $region27: #{_lambda_.15} parent=23 // pred_region
        _
      $region28: #{_lambda_.15} parent=23 // pred_fallthru
        _
    $region24: #{_lambda_.15} parent=5 // pred_fallthru
      _
    %p750 = scmp.le.s32.totalorder 2, %s7
    // Predicated region
    $region29: #{_lambda_.15} parent=5 // pred_check
      %p751 = pneg %p750
    $region30: #{_lambda_.15} parent=5 // pred_check_branch
      %753 = sbr.rel (%p751) target = $region32
    $region31: #{_lambda_.15} parent=5 // pred_region
      %s754 = ssub.s32 %s7, 2
      // Predicated region
      $region33: #{_lambda_.15} parent=31 // pred_check
        %p755 = pneg %p62
      $region34: #{_lambda_.15} parent=31 // pred_check_branch
        %757 = sbr.rel (%p755) target = $region36
      $region35: #{_lambda_.15} parent=31 // pred_region
        %p758 = scmp.lt.s32.totalorder %s13, 3
        %s759 = scalar_select %p758, %s13, 3
        %s760 = smul.addr %s759, 24
        %s761 = smul.addr %s760, 4
        %s762 = scalar_lea.vmem %s1, %s761
      $region36: #{_lambda_.15} parent=31 // pred_fallthru
        _
    $region32: #{_lambda_.15} parent=5 // pred_fallthru
      _
  $region6: #{_lambda_.15} parent=0 // loop_footer
    %s11 = sadd.s32 1, %s7
  $region7: #{_lambda_.15} parent=0 // loop_footer_branch
    %6 = sbr.rel target = $region3
  $region8: #{_lambda_.15} parent=0 // loop_exit
    _

// kernel: _lambda_.12
$region0: #{_lambda_.12}
  #allocation0 [shape = 'u32[]', space=smem, size = 0x4, offset = 0x4, fixed_abs, tag = 'smem constant byte address 0x4 - core index']
  #allocation1 [shape = 'u32[72,128]{1,0:T(1,128)}', space=vmem, size = 0x9000, scoped, tag = 'internal scratch']
  #allocation2 [shape = 's32[1]{0}', space=sflag, size = 0x4, scoped, tag = 'scoped memory for _lambda_.12']
  #allocation3 [shape = 'u8[512]{0}', space=smem, size = 0x200, scoped, tag = 'prefetched SMEM operand 0']
  %s0 = inlined_call_operand.vmem [shape: s32[4], index: 0, kind: input, shape index: {}]
  %s1 = inlined_call_operand.vmem [shape: bf16[4,360,128], index: 1, kind: input, shape index: {}]
  %s2 = inlined_call_operand.vmem [shape: bf16[2,9,128,128], index: 2, kind: input, shape index: {}]
  %s3 = inlined_call_operand.vmem [shape: f32[2,1,128], index: 3, kind: input, shape index: {}]
  %s4 = inlined_call_operand.vmem [shape: f32[288,1], index: 4, kind: input, shape index: {}]
  %s5 = inlined_call_operand.vmem [shape: bf16[4,360,128], index: 5, kind: output, shape index: {}]
  %s6 = sld [smem:[#allocation0]]
  $region49: #{_lambda_.12} parent=0
    _
  %s8 = ssub.s32 1, %s6
  %s9 = scalar_select 0, %s8, %s6
  %s11 = sshll.u32 %s0, 4
  %s12 = int_to_ptr.vmem [resolvable:$true] %s11
  %14 = dma.vmem_to_smem %s12, 16, [#allocation3], [#allocation2]
  %16 = dma.done [#allocation2], 16
  %17 = sfence
  loop: start=0, step=1, limit=6
  $region2: #{_lambda_.12} parent=0 // loop_pre_header
    _
  $region3: #{_lambda_.12} parent=0 // loop_header
    %s19 = sphi 0, %s23
    %p20 = scmp.ge.s32.totalorder %s19, 6
    %s26 = sphi 0, %s38
    %s27 = sphi 0, %s34
    %s28 = sphi 0, %s26
    %s29 = sphi 0, %s27
    %s30 = sphi 0, %s28
    %s31 = sphi 0, %s29
    %s41 = sphi 0, %s43
    %s44 = sphi 0, %s41
    %s45 = sphi 0, %s44
    %s61 = sphi 0, %s45
    %s71 = sphi 0, %s73
    %s74 = sphi 0, %s71
    %s75 = sphi 0, %s74
    %s91 = sphi 0, %s75
    %s101 = sphi 0, %s103
    %s104 = sphi 0, %s101
    %s105 = sphi 0, %s104
    %s121 = sphi 0, %s105
    %s125 = sphi 0, %s125
    %s127 = sphi 0, %s125
    %s128 = sphi 0, %s127
    %s142 = sphi 0, %s128
    %s150 = sphi 0, %s152
    %s153 = sphi 0, %s150
    %s154 = sphi 0, %s153
    %s170 = sphi 0, %s154
  $region4: #{_lambda_.12} parent=0 // loop_header_branch
    %22 = sbr.rel (%p20) target = $region8
  $region5: #{_lambda_.12} parent=0 // loop_body
    %s24 = ssub.s32 %s19, 1
    %s25 = ssub.s32 %s19, 2
    %s32 = sadd.s32 1, %s27
    %p33 = scmp.ge.s32.totalorder %s32, 1
    %s34 = scalar_select %p33, 0, %s32
    %s35 = sadd.s32 1, %s26
    %s36 = scalar_select %p33, %s35, %s26
    %p37 = scmp.ge.s32.totalorder %s36, 4
    %s38 = scalar_select %p37, 0, %s36
    %s39 = ssub.s32 %s26, %s38
    %p40 = scmp.eq.s32.totalorder %s39, 0
    %s42 = sadd.s32 %s41, 1
    %s43 = scalar_select %p40, %s41, %s42
    %p46 = pneg %p40
    %p47 = scmp.eq.s32.totalorder %s19, 3
    %p48 = por %p46, %p47
    %p49 = scmp.ne.s32.totalorder %s41, %s44
    %p50 = scmp.eq.s32.totalorder %s19, 0
    %p51 = por %p49, %p50
    %p52 = scmp.ne.s32.totalorder %s41, %s44
    %p53 = scmp.eq.s32.totalorder %s24, 3
    %p54 = por %p52, %p53
    %p55 = scmp.ne.s32.totalorder %s44, %s45
    %p56 = scmp.eq.s32.totalorder %s24, 0
    %p57 = por %p55, %p56
    %p58 = scmp.ne.s32.totalorder %s44, %s45
    %p59 = scmp.eq.s32.totalorder %s25, 3
    %p60 = por %p58, %p59
    %p62 = scmp.ne.s32.totalorder %s45, %s61
    %p63 = scmp.eq.s32.totalorder %s25, 0
    %p64 = por %p62, %p63
    %s65 = sld [smem:[#allocation3 + %s26]]
    %s66 = sld [smem:[#allocation3 + %s38]]
    %s67 = ssub.s32 %s65, %s66
    %s68 = ssub.s32 %s27, %s34
    %s69 = sor.u32 %s67, %s68
    %p70 = scmp.eq.s32.totalorder %s69, 0
    %s72 = sadd.s32 %s71, 1
    %s73 = scalar_select %p70, %s71, %s72
    %p76 = pneg %p70
    %p77 = scmp.eq.s32.totalorder %s19, 3
    %p78 = por %p76, %p77
    %p79 = scmp.ne.s32.totalorder %s71, %s74
    %p80 = scmp.eq.s32.totalorder %s19, 0
    %p81 = por %p79, %p80
    %p82 = scmp.ne.s32.totalorder %s71, %s74
    %p83 = scmp.eq.s32.totalorder %s24, 3
    %p84 = por %p82, %p83
    %p85 = scmp.ne.s32.totalorder %s74, %s75
    %p86 = scmp.eq.s32.totalorder %s24, 0
    %p87 = por %p85, %p86
    %p88 = scmp.ne.s32.totalorder %s74, %s75
    %p89 = scmp.eq.s32.totalorder %s25, 3
    %p90 = por %p88, %p89
    %p92 = scmp.ne.s32.totalorder %s75, %s91
    %p93 = scmp.eq.s32.totalorder %s25, 0
    %p94 = por %p92, %p93
    %s95 = sld [smem:[#allocation3 + %s26]]
    %s96 = sld [smem:[#allocation3 + %s38]]
    %s97 = ssub.s32 %s95, %s96
    %s98 = ssub.s32 %s27, %s34
    %s99 = sor.u32 %s97, %s98
    %p100 = scmp.eq.s32.totalorder %s99, 0
    %s102 = sadd.s32 %s101, 1
    %s103 = scalar_select %p100, %s101, %s102
    %p106 = pneg %p100
    %p107 = scmp.eq.s32.totalorder %s19, 3
    %p108 = por %p106, %p107
    %p109 = scmp.ne.s32.totalorder %s101, %s104
    %p110 = scmp.eq.s32.totalorder %s19, 0
    %p111 = por %p109, %p110
    %p112 = scmp.ne.s32.totalorder %s101, %s104
    %p113 = scmp.eq.s32.totalorder %s24, 3
    %p114 = por %p112, %p113
    %p115 = scmp.ne.s32.totalorder %s104, %s105
    %p116 = scmp.eq.s32.totalorder %s24, 0
    %p117 = por %p115, %p116
    %p118 = scmp.ne.s32.totalorder %s104, %s105
    %p119 = scmp.eq.s32.totalorder %s25, 3
    %p120 = por %p118, %p119
    %p122 = scmp.ne.s32.totalorder %s105, %s121
    %p123 = scmp.eq.s32.totalorder %s25, 0
    %p124 = por %p122, %p123
    %s126 = sadd.s32 %s125, 1
    %p129 = scmp.eq.s32.totalorder %s19, 3
    %p130 = scmp.ne.s32.totalorder %s125, %s127
    %p131 = scmp.eq.s32.totalorder %s19, 0
    %p132 = por %p130, %p131
    %p133 = scmp.ne.s32.totalorder %s125, %s127
    %p134 = scmp.eq.s32.totalorder %s24, 3
    %p135 = por %p133, %p134
    %p136 = scmp.ne.s32.totalorder %s127, %s128
    %p137 = scmp.eq.s32.totalorder %s24, 0
    %p138 = por %p136, %p137
    %p139 = scmp.ne.s32.totalorder %s127, %s128
    %p140 = scmp.eq.s32.totalorder %s25, 3
    %p141 = por %p139, %p140
    %p143 = scmp.ne.s32.totalorder %s128, %s142
    %p144 = scmp.eq.s32.totalorder %s25, 0
    %p145 = por %p143, %p144
    %s146 = ssub.s32 %s26, %s38
    %s147 = ssub.s32 %s27, %s34
    %s148 = sor.u32 %s146, %s147
    %p149 = scmp.eq.s32.totalorder %s148, 0
    %s151 = sadd.s32 %s150, 1
    %s152 = scalar_select %p149, %s150, %s151
    %p155 = pneg %p149
    %p156 = scmp.eq.s32.totalorder %s19, 3
    %p157 = por %p155, %p156
    %p158 = scmp.ne.s32.totalorder %s150, %s153
    %p159 = scmp.eq.s32.totalorder %s19, 0
    %p160 = por %p158, %p159
    %p161 = scmp.ne.s32.totalorder %s150, %s153
    %p162 = scmp.eq.s32.totalorder %s24, 3
    %p163 = por %p161, %p162
    %p164 = scmp.ne.s32.totalorder %s153, %s154
    %p165 = scmp.eq.s32.totalorder %s24, 0
    %p166 = por %p164, %p165
    %p167 = scmp.ne.s32.totalorder %s153, %s154
    %p168 = scmp.eq.s32.totalorder %s25, 3
    %p169 = por %p167, %p168
    %p171 = scmp.ne.s32.totalorder %s154, %s170
    %p172 = scmp.eq.s32.totalorder %s25, 0
    %p173 = por %p171, %p172
    %p174 = scmp.le.s32.totalorder 1, %s19
    %p175 = scmp.lt.s32.totalorder %s19, 5
    %p176 = pnand %p174, %p175
    %p177 = pneg %p176
    // Predicated region
    $region9: #{_lambda_.12} parent=5 // pred_check
      _
    $region10: #{_lambda_.12} parent=5 // pred_check_branch
      %179 = sbr.rel (%p176) target = $region12
    $region11: #{_lambda_.12} parent=5 // pred_region
      %s180 = ssub.s32 %s19, 1
      // Predicated region
      $region13: #{_lambda_.12} parent=11 // pred_check
        %p181 = pneg %p138
      $region14: #{_lambda_.12} parent=11 // pred_check_branch
        %183 = sbr.rel (%p181) target = $region16
      $region15: #{_lambda_.12} parent=11 // pred_region
        _
      $region16: #{_lambda_.12} parent=11 // pred_fallthru
        _
    $region12: #{_lambda_.12} parent=5 // pred_fallthru
      _
    %p184 = scmp.lt.s32.totalorder %s19, 4
    // Predicated region
    $region17: #{_lambda_.12} parent=5 // pred_check
      %p185 = pneg %p184
    $region18: #{_lambda_.12} parent=5 // pred_check_branch
      %187 = sbr.rel (%p185) target = $region20
    $region19: #{_lambda_.12} parent=5 // pred_region
      // Predicated region
      $region21: #{_lambda_.12} parent=19 // pred_check
        %p188 = pneg %p51
      $region22: #{_lambda_.12} parent=19 // pred_check_branch
        %190 = sbr.rel (%p188) target = $region24
      $region23: #{_lambda_.12} parent=19 // pred_region
        %p191 = scmp.lt.s32.totalorder %s26, 3
        %s192 = scalar_select %p191, %s26, 3
        %s193 = smul.addr %s192, 45
        %s194 = smul.addr %s193, 4
        %s195 = scalar_lea.vmem %s1, %s194
      $region24: #{_lambda_.12} parent=19 // pred_fallthru
        _
      // Predicated region
      $region25: #{_lambda_.12} parent=19 // pred_check
        %p196 = pneg %p81
      $region26: #{_lambda_.12} parent=19 // pred_check_branch
        %198 = sbr.rel (%p196) target = $region28
      $region27: #{_lambda_.12} parent=19 // pred_region
        %s199 = sld [smem:[#allocation3 + %s26]]
        %p200 = scmp.lt.s32.totalorder %s199, 1
        %s201 = scalar_select %p200, %s199, 1
        %p202 = scmp.lt.s32.totalorder %s27, 0
        %s203 = scalar_select %p202, %s27, 0
        %s204 = smul.addr %s201, 144
        %s205 = sadd.s32 %s203, %s204
        %s206 = smul.addr %s205, 4
        %s207 = scalar_lea.vmem %s2, %s206
        %s208 = sld [smem:[#allocation3 + %s26]]
      $region28: #{_lambda_.12} parent=19 // pred_fallthru
        _
      // Predicated region
      $region29: #{_lambda_.12} parent=19 // pred_check
        %p209 = pneg %p111
      $region30: #{_lambda_.12} parent=19 // pred_check_branch
        %211 = sbr.rel (%p209) target = $region32
      $region31: #{_lambda_.12} parent=19 // pred_region
        %s212 = sld [smem:[#allocation3 + %s26]]
        %p213 = scmp.lt.s32.totalorder %s212, 1
        %s214 = scalar_select %p213, %s212, 1
        %p215 = scmp.lt.s32.totalorder %s27, 0
        %s216 = scalar_select %p215, %s27, 0
        %s217 = sadd.s32 %s216, %s214
        %s218 = scalar_lea.vmem %s3, %s217
        %s219 = sld [smem:[#allocation3 + %s26]]
      $region32: #{_lambda_.12} parent=19 // pred_fallthru
        _
    $region20: #{_lambda_.12} parent=5 // pred_fallthru
      _
    %p220 = scmp.le.s32.totalorder 1, %s19
    %p221 = scmp.lt.s32.totalorder %s19, 5
    %p222 = pnand %p220, %p221
    %p223 = pneg %p222
    // Predicated region
    $region33: #{_lambda_.12} parent=5 // pred_check
      _
    $region34: #{_lambda_.12} parent=5 // pred_check_branch
      %225 = sbr.rel (%p222) target = $region36
    $region35: #{_lambda_.12} parent=5 // pred_region
      %s226 = ssub.s32 %s19, 1
      %p227 = scmp.lt.s32.totalorder %s28, 3
      %s228 = scalar_select %p227, %s28, 3
      %s229 = smul.addr %s228, 45
      %s230 = smul.addr %s229, 4
      %s231 = scalar_lea.vmem %s1, %s230
      %p232 = pneg %p57
      %p233 = pneg %p54
      %s234 = sld [smem:[#allocation3 + %s28]]
      %p235 = scmp.lt.s32.totalorder %s234, 1
      %s236 = scalar_select %p235, %s234, 1
      %p237 = scmp.lt.s32.totalorder %s29, 0
      %s238 = scalar_select %p237, %s29, 0
      %s239 = smul.addr %s236, 144
      %s240 = sadd.s32 %s238, %s239
      %s241 = smul.addr %s240, 4
      %s242 = scalar_lea.vmem %s2, %s241
      %p243 = pneg %p87
      %p244 = pneg %p84
      %s245 = sld [smem:[#allocation3 + %s28]]
      %p246 = scmp.lt.s32.totalorder %s245, 1
      %s247 = scalar_select %p246, %s245, 1
      %p248 = scmp.lt.s32.totalorder %s29, 0
      %s249 = scalar_select %p248, %s29, 0
      %s250 = sadd.s32 %s249, %s247
      %s251 = scalar_lea.vmem %s3, %s250
      %p252 = pneg %p117
      %p253 = pneg %p114
      %p254 = pneg %p138
      %p255 = pneg %p135
      %p256 = pneg %p166
      %p257 = pneg %p163
      %p258 = scmp.lt.s32.totalorder %s28, 3
      %s259 = scalar_select %p258, %s28, 3
      %p260 = scmp.lt.s32.totalorder %s29, 0
      %s261 = scalar_select %p260, %s29, 0
      %s262 = smul.addr %s259, 45
      %s263 = sadd.s32 %s261, %s262
      %s264 = smul.addr %s263, 4
      %s265 = scalar_lea.vmem %s5, %s264
      %p266 = scmp.lt.s32.totalorder %s28, 3
      %s267 = scalar_select %p266, %s28, 3
      %s268 = smul.addr %s267, 45
      %s269 = smul.addr %s268, 4
      %s270 = scalar_lea.vmem %s1, %s269
      %s271 = sld [smem:[#allocation3 + %s28]]
      %p272 = scmp.lt.s32.totalorder %s271, 1
      %s273 = scalar_select %p272, %s271, 1
      %p274 = scmp.lt.s32.totalorder %s29, 0
      %s275 = scalar_select %p274, %s29, 0
      %s276 = smul.addr %s273, 144
      %s277 = sadd.s32 %s275, %s276
      %s278 = smul.addr %s277, 4
      %s279 = scalar_lea.vmem %s2, %s278
      %s280 = sld [smem:[#allocation3 + %s28]]
      %s281 = sld [smem:[#allocation3 + %s28]]
      %p282 = scmp.lt.s32.totalorder %s281, 1
      %s283 = scalar_select %p282, %s281, 1
      %p284 = scmp.lt.s32.totalorder %s29, 0
      %s285 = scalar_select %p284, %s29, 0
      %s286 = sadd.s32 %s285, %s283
      %s287 = scalar_lea.vmem %s3, %s286
      %s288 = sld [smem:[#allocation3 + %s28]]
      %p289 = scmp.lt.s32.totalorder %s28, 3
      %s290 = scalar_select %p289, %s28, 3
      %p291 = scmp.lt.s32.totalorder %s29, 0
      %s292 = scalar_select %p291, %s29, 0
      %s293 = smul.addr %s290, 45
      %s294 = sadd.s32 %s292, %s293
      %s295 = smul.addr %s294, 4
      %s296 = scalar_lea.vmem %s5, %s295
      %v298 = vld [vmem:[%s270] sm:$0xf]
      %v299 = vld [vmem:[%s270 + $0x4] sm:$0xf]
      %v300 = vld [vmem:[%s270 + $0x8] sm:$0xf]
      %v301 = vld [vmem:[%s270 + $0xc] sm:$0xf]
      %v302 = vld [vmem:[%s270 + $0x10] sm:$0xf]
      %v303 = vld [vmem:[%s270 + $0x14] sm:$0xf]
      %v304 = vld [vmem:[%s270 + $0x18] sm:$0xf]
      %v305 = vld [vmem:[%s270 + $0x1c] sm:$0xf]
      %v306 = vld [vmem:[%s270 + $0x20] sm:$0xf]
      %v307 = vld [vmem:[%s270 + $0x24] sm:$0xf]
      %v308 = vld [vmem:[%s270 + $0x28] sm:$0xf]
      %v309 = vld [vmem:[%s270 + $0x2c] sm:$0xf]
      %v310 = vld [vmem:[%s270 + $0x30] sm:$0xf]
      %v311 = vld [vmem:[%s270 + $0x34] sm:$0xf]
      %v312 = vld [vmem:[%s270 + $0x38] sm:$0xf]
      %v313 = vld [vmem:[%s270 + $0x3c] sm:$0xf]
      %v314 = vld [vmem:[%s270 + $0x40] sm:$0xf]
      %v315 = vld [vmem:[%s270 + $0x44] sm:$0xf]
      %v316 = vld [vmem:[%s270 + $0x48] sm:$0xf]
      %v317 = vld [vmem:[%s270 + $0x4c] sm:$0xf]
      %v318 = vld [vmem:[%s270 + $0x50] sm:$0xf]
      %v319 = vld [vmem:[%s270 + $0x54] sm:$0xf]
      %v320 = vld [vmem:[%s270 + $0x58] sm:$0xf]
      %v321 = vld [vmem:[%s270 + $0x5c] sm:$0xf]
      %v322 = vld [vmem:[%s270 + $0x60] sm:$0xf]
      %v323 = vld [vmem:[%s270 + $0x64] sm:$0xf]
      %v324 = vld [vmem:[%s270 + $0x68] sm:$0xf]
      %v325 = vld [vmem:[%s270 + $0x6c] sm:$0xf]
      %v326 = vld [vmem:[%s270 + $0x70] sm:$0xf]
      %v327 = vld [vmem:[%s270 + $0x74] sm:$0xf]
      %v328 = vld [vmem:[%s270 + $0x78] sm:$0xf]
      %v329 = vld [vmem:[%s270 + $0x7c] sm:$0xf]
      %v330 = vld [vmem:[%s270 + $0x80] sm:$0xf]
      %v331 = vld [vmem:[%s270 + $0x84] sm:$0xf]
      %v332 = vld [vmem:[%s270 + $0x88] sm:$0xf]
      %v333 = vld [vmem:[%s270 + $0x8c] sm:$0xf]
      %v334 = vld [vmem:[%s279] sm:$0xf]
      %v335 = vld [vmem:[%s279 + $0x4] sm:$0xf]
      %v336 = vld [vmem:[%s279 + $0x8] sm:$0xf]
      %v337 = vld [vmem:[%s279 + $0xc] sm:$0xf]
      %v338 = vld [vmem:[%s279 + $0x10] sm:$0xf]
      %v339 = vld [vmem:[%s279 + $0x14] sm:$0xf]
      %v340 = vld [vmem:[%s279 + $0x18] sm:$0xf]
      %v341 = vld [vmem:[%s279 + $0x1c] sm:$0xf]
      %v342 = vld [vmem:[%s279 + $0x20] sm:$0xf]
      %v343 = vld [vmem:[%s279 + $0x24] sm:$0xf]
      %v344 = vld [vmem:[%s279 + $0x28] sm:$0xf]
      %v345 = vld [vmem:[%s279 + $0x2c] sm:$0xf]
      %v346 = vld [vmem:[%s279 + $0x30] sm:$0xf]
      %v347 = vld [vmem:[%s279 + $0x34] sm:$0xf]
      %v348 = vld [vmem:[%s279 + $0x38] sm:$0xf]
      %v349 = vld [vmem:[%s279 + $0x3c] sm:$0xf]
      %v350 = vld [vmem:[%s270 + $0x90] sm:$0x1]
      %s351 = scalar_lea.vmem %s279, 64
      %v352 = vld [vmem:[%s351] sm:$0xf]
      %v353 = vld [vmem:[%s351 + $0x4] sm:$0xf]
      %v354 = vld [vmem:[%s351 + $0x8] sm:$0xf]
      %v355 = vld [vmem:[%s351 + $0xc] sm:$0xf]
      %v356 = vld [vmem:[%s351 + $0x10] sm:$0xf]
      %v357 = vld [vmem:[%s351 + $0x14] sm:$0xf]
      %v358 = vld [vmem:[%s351 + $0x18] sm:$0xf]
      %v359 = vld [vmem:[%s351 + $0x1c] sm:$0xf]
      %v360 = vld [vmem:[%s351 + $0x20] sm:$0xf]
      %v361 = vld [vmem:[%s351 + $0x24] sm:$0xf]
      %v362 = vld [vmem:[%s351 + $0x28] sm:$0xf]
      %v363 = vld [vmem:[%s351 + $0x2c] sm:$0xf]
      %v364 = vld [vmem:[%s351 + $0x30] sm:$0xf]
      %v365 = vld [vmem:[%s351 + $0x34] sm:$0xf]
      %v366 = vld [vmem:[%s351 + $0x38] sm:$0xf]
      %v367 = vld [vmem:[%s351 + $0x3c] sm:$0xf]
      %v405 = vunpack.c.l.b16 %v298
      %v406 = vunpack.c.l.b16 %v299
      %v407 = vunpack.c.l.b16 %v300
      %v408 = vunpack.c.l.b16 %v301
      %v409 = vunpack.c.l.b16 %v302
      %v410 = vunpack.c.l.b16 %v303
      %v411 = vunpack.c.l.b16 %v304
      %v412 = vunpack.c.l.b16 %v305
      %v413 = vunpack.c.l.b16 %v306
      %v414 = vunpack.c.l.b16 %v307
      %v415 = vunpack.c.l.b16 %v308
      %v416 = vunpack.c.l.b16 %v309
      %v417 = vunpack.c.l.b16 %v310
      %v418 = vunpack.c.l.b16 %v311
      %v419 = vunpack.c.l.b16 %v312
      %v420 = vunpack.c.l.b16 %v313
      %v421 = vunpack.c.l.b16 %v314
      %v422 = vunpack.c.l.b16 %v315
      %v423 = vunpack.c.l.b16 %v316
      %v424 = vunpack.c.l.b16 %v317
      %v425 = vunpack.c.l.b16 %v318
      %v426 = vunpack.c.l.b16 %v319
      %v427 = vunpack.c.l.b16 %v320
      %v428 = vunpack.c.l.b16 %v321
      %v429 = vunpack.c.l.b16 %v322
      %v430 = vunpack.c.l.b16 %v323
      %v431 = vunpack.c.l.b16 %v324
      %v432 = vunpack.c.l.b16 %v325
      %v433 = vunpack.c.l.b16 %v326
      %v434 = vunpack.c.l.b16 %v327
      %v435 = vunpack.c.l.b16 %v328
      %v436 = vunpack.c.l.b16 %v329
      %v437 = vunpack.c.l.b16 %v330
      %v438 = vunpack.c.l.b16 %v331
      %v439 = vunpack.c.l.b16 %v332
      %v440 = vunpack.c.l.b16 %v333
      %v441 = vunpack.c.l.b16 %v350
      %v442 = vpack.c.b16 %v406, %v405
      %v443 = vpack.c.b16 %v408, %v407
      %v444 = vpack.c.b16 %v410, %v409
      %v445 = vpack.c.b16 %v412, %v411
      %v446 = vpack.c.b16 %v414, %v413
      %v447 = vpack.c.b16 %v416, %v415
      %v448 = vpack.c.b16 %v418, %v417
      %v449 = vpack.c.b16 %v420, %v419
      %v450 = vpack.c.b16 %v422, %v421
      %v451 = vpack.c.b16 %v424, %v423
      %v452 = vpack.c.b16 %v426, %v425
      %v453 = vpack.c.b16 %v428, %v427
      %v454 = vpack.c.b16 %v430, %v429
      %v455 = vpack.c.b16 %v432, %v431
      %v456 = vpack.c.b16 %v434, %v433
      %v457 = vpack.c.b16 %v436, %v435
      %v458 = vpack.c.b16 %v438, %v437
      %v459 = vpack.c.b16 %v440, %v439
      %v460 = vpack.c.b16 %v441, %v441
      %vm461 = vsmask.f32 7424
      %v463 = vshrl.u32 %v442, 16
      %v465 = vshll.u32 %v442, 16
      %v467 = vrot.slane %v465, 1
      %v468 = vor.u32 %v463, %v467
      %v470 = vshll.u32 %v443, 16
      %v472 = vrot.slane %v470, 1
      %v473 = vsel %vm461, %v468, %v472
      %v474 = vshrl.u32 %v443, 16
      %v476 = vor.u32 %v474, %v472
      %v478 = vshll.u32 %v444, 16
      %v480 = vrot.slane %v478, 1
      %v481 = vsel %vm461, %v476, %v480
      %v482 = vshrl.u32 %v444, 16
      %v484 = vor.u32 %v482, %v480
      %v486 = vshll.u32 %v445, 16
      %v488 = vrot.slane %v486, 1
      %v489 = vsel %vm461, %v484, %v488
      %v490 = vshrl.u32 %v445, 16
      %v492 = vor.u32 %v490, %v488
      %v494 = vshll.u32 %v446, 16
      %v496 = vrot.slane %v494, 1
      %v497 = vsel %vm461, %v492, %v496
      %v498 = vshrl.u32 %v446, 16
      %v500 = vor.u32 %v498, %v496
      %v502 = vshll.u32 %v447, 16
      %v504 = vrot.slane %v502, 1
      %v505 = vsel %vm461, %v500, %v504
      %v506 = vshrl.u32 %v447, 16
      %v508 = vor.u32 %v506, %v504
      %v510 = vshll.u32 %v448, 16
      %v512 = vrot.slane %v510, 1
      %v513 = vsel %vm461, %v508, %v512
      %v514 = vshrl.u32 %v448, 16
      %v516 = vor.u32 %v514, %v512
      %v518 = vshll.u32 %v449, 16
      %v520 = vrot.slane %v518, 1
      %v521 = vsel %vm461, %v516, %v520
      %v522 = vshrl.u32 %v449, 16
      %v524 = vor.u32 %v522, %v520
      %v526 = vshll.u32 %v450, 16
      %v528 = vrot.slane %v526, 1
      %v529 = vsel %vm461, %v524, %v528
      %v530 = vshrl.u32 %v450, 16
      %v532 = vor.u32 %v530, %v528
      %v534 = vshll.u32 %v451, 16
      %v536 = vrot.slane %v534, 1
      %v537 = vsel %vm461, %v532, %v536
      %v538 = vshrl.u32 %v451, 16
      %v540 = vor.u32 %v538, %v536
      %v542 = vshll.u32 %v452, 16
      %v544 = vrot.slane %v542, 1
      %v545 = vsel %vm461, %v540, %v544
      %v546 = vshrl.u32 %v452, 16
      %v548 = vor.u32 %v546, %v544
      %v550 = vshll.u32 %v453, 16
      %v552 = vrot.slane %v550, 1
      %v553 = vsel %vm461, %v548, %v552
      %v554 = vshrl.u32 %v453, 16
      %v556 = vor.u32 %v554, %v552
      %v558 = vshll.u32 %v454, 16
      %v560 = vrot.slane %v558, 1
      %v561 = vsel %vm461, %v556, %v560
      %v562 = vshrl.u32 %v454, 16
      %v564 = vor.u32 %v562, %v560
      %v566 = vshll.u32 %v455, 16
      %v568 = vrot.slane %v566, 1
      %v569 = vsel %vm461, %v564, %v568
      %v570 = vshrl.u32 %v455, 16
      %v572 = vor.u32 %v570, %v568
      %v574 = vshll.u32 %v456, 16
      %v576 = vrot.slane %v574, 1
      %v577 = vsel %vm461, %v572, %v576
      %v578 = vshrl.u32 %v456, 16
      %v580 = vor.u32 %v578, %v576
      %v582 = vshll.u32 %v457, 16
      %v584 = vrot.slane %v582, 1
      %v585 = vsel %vm461, %v580, %v584
      %v586 = vshrl.u32 %v457, 16
      %v588 = vor.u32 %v586, %v584
      %v590 = vshll.u32 %v458, 16
      %v592 = vrot.slane %v590, 1
      %v593 = vsel %vm461, %v588, %v592
      %v594 = vshrl.u32 %v458, 16
      %v596 = vor.u32 %v594, %v592
      %v598 = vshll.u32 %v459, 16
      %v600 = vrot.slane %v598, 1
      %v601 = vsel %vm461, %v596, %v600
      %v602 = vshrl.u32 %v459, 16
      %v604 = vor.u32 %v602, %v600
      %v606 = vshll.u32 %v460, 16
      %v608 = vrot.slane %v606, 1
      %v609 = vsel %vm461, %v604, %v608
      %v644 = vunpack.c.l.b16 %v352
      %v645 = vunpack.c.l.b16 %v353
      %v646 = vunpack.c.l.b16 %v354
      %v647 = vunpack.c.l.b16 %v355
      %v648 = vunpack.c.l.b16 %v356
      %v649 = vunpack.c.l.b16 %v357
      %v650 = vunpack.c.l.b16 %v358
      %v651 = vunpack.c.l.b16 %v359
      %v652 = vunpack.c.l.b16 %v360
      %v653 = vunpack.c.l.b16 %v361
      %v654 = vunpack.c.l.b16 %v362
      %v655 = vunpack.c.l.b16 %v363
      %v656 = vunpack.c.l.b16 %v364
      %v657 = vunpack.c.l.b16 %v365
      %v658 = vunpack.c.l.b16 %v366
      %v659 = vunpack.c.l.b16 %v367
      %v660 = vpack.c.b16 %v645, %v644
      %v661 = vpack.c.b16 %v647, %v646
      %v662 = vpack.c.b16 %v649, %v648
      %v663 = vpack.c.b16 %v651, %v650
      %v664 = vpack.c.b16 %v653, %v652
      %v665 = vpack.c.b16 %v655, %v654
      %v666 = vpack.c.b16 %v657, %v656
      %v667 = vpack.c.b16 %v659, %v658
      %676 = vmatpush.bf16.msra.mxu0 %v667
      %677 = vmatpush.bf16.msra.mxu0 %v666
      %678 = vmatpush.bf16.msra.mxu0 %v665
      %679 = vmatpush.bf16.msra.mxu0 %v664
      %680 = vmatpush.bf16.msra.mxu0 %v663
      %681 = vmatpush.bf16.msra.mxu0 %v662
      %682 = vmatpush.bf16.msra.mxu0 %v661
      %683 = vmatpush.bf16.msra.mxu0 %v660
      %684 = vmatmul.bf16.gmra.mxu0 %v473
      %v685 = vpop.f32.mrf.mxu0
      %v686 = vadd.f32 0.0, %v685
      %v687 = vpop.f32.mrf.mxu0
      %v688 = vadd.f32 0.0, %v687
      %689 = vmatmul.bf16.gmra.mxu0 %v481
      %v690 = vpop.f32.mrf.mxu0
      %v691 = vadd.f32 0.0, %v690
      %v692 = vpop.f32.mrf.mxu0
      %v693 = vadd.f32 0.0, %v692
      %694 = vmatmul.bf16.gmra.mxu0 %v489
      %v695 = vpop.f32.mrf.mxu0
      %v696 = vadd.f32 0.0, %v695
      %v697 = vpop.f32.mrf.mxu0
      %v698 = vadd.f32 0.0, %v697
      %699 = vmatmul.bf16.gmra.mxu0 %v497
      %v700 = vpop.f32.mrf.mxu0
      %v701 = vadd.f32 0.0, %v700
      %v702 = vpop.f32.mrf.mxu0
      %v703 = vadd.f32 0.0, %v702
      %704 = vmatmul.bf16.gmra.mxu0 %v505
      %v705 = vpop.f32.mrf.mxu0
      %v706 = vadd.f32 0.0, %v705
      %v707 = vpop.f32.mrf.mxu0
      %v708 = vadd.f32 0.0, %v707
      %709 = vmatmul.bf16.gmra.mxu0 %v513
      %v710 = vpop.f32.mrf.mxu0
      %v711 = vadd.f32 0.0, %v710
      %v712 = vpop.f32.mrf.mxu0
      %v713 = vadd.f32 0.0, %v712
      %714 = vmatmul.bf16.gmra.mxu0 %v521
      %v715 = vpop.f32.mrf.mxu0
      %v716 = vadd.f32 0.0, %v715
      %v717 = vpop.f32.mrf.mxu0
      %v718 = vadd.f32 0.0, %v717
      %719 = vmatmul.bf16.gmra.mxu0 %v529
      %v720 = vpop.f32.mrf.mxu0
      %v721 = vadd.f32 0.0, %v720
      %v722 = vpop.f32.mrf.mxu0
      %v723 = vadd.f32 0.0, %v722
      %724 = vmatmul.bf16.gmra.mxu0 %v537
      %v725 = vpop.f32.mrf.mxu0
      %v726 = vadd.f32 0.0, %v725
      %v727 = vpop.f32.mrf.mxu0
      %v728 = vadd.f32 0.0, %v727
      %729 = vmatmul.bf16.gmra.mxu0 %v545
      %v730 = vpop.f32.mrf.mxu0
      %v731 = vadd.f32 0.0, %v730
      %v732 = vpop.f32.mrf.mxu0
      %v733 = vadd.f32 0.0, %v732
      %734 = vmatmul.bf16.gmra.mxu0 %v553
      %v735 = vpop.f32.mrf.mxu0
      %v736 = vadd.f32 0.0, %v735
      %v737 = vpop.f32.mrf.mxu0
      %v738 = vadd.f32 0.0, %v737
      %739 = vmatmul.bf16.gmra.mxu0 %v561
      %v740 = vpop.f32.mrf.mxu0
      %v741 = vadd.f32 0.0, %v740
      %v742 = vpop.f32.mrf.mxu0
      %v743 = vadd.f32 0.0, %v742
      %744 = vmatmul.bf16.gmra.mxu0 %v569
      %v745 = vpop.f32.mrf.mxu0
      %v746 = vadd.f32 0.0, %v745
      %v747 = vpop.f32.mrf.mxu0
      %v748 = vadd.f32 0.0, %v747
      %749 = vmatmul.bf16.gmra.mxu0 %v577
      %v750 = vpop.f32.mrf.mxu0
      %v751 = vadd.f32 0.0, %v750
      %v752 = vpop.f32.mrf.mxu0
      %v753 = vadd.f32 0.0, %v752
      %754 = vmatmul.bf16.gmra.mxu0 %v585
      %v755 = vpop.f32.mrf.mxu0
      %v756 = vadd.f32 0.0, %v755
      %v757 = vpop.f32.mrf.mxu0
      %v758 = vadd.f32 0.0, %v757
      %759 = vmatmul.bf16.gmra.mxu0 %v593
      %v760 = vpop.f32.mrf.mxu0
      %v761 = vadd.f32 0.0, %v760
      %v762 = vpop.f32.mrf.mxu0
      %v763 = vadd.f32 0.0, %v762
      %764 = vmatmul.bf16.gmra.mxu0 %v601
      %v765 = vpop.f32.mrf.mxu0
      %v766 = vadd.f32 0.0, %v765
      %v767 = vpop.f32.mrf.mxu0
      %v768 = vadd.f32 0.0, %v767
      %769 = vmatmul.bf16.gmra.mxu0 %v609
      %v770 = vpop.f32.mrf.mxu0
      %v771 = vadd.f32 0.0, %v770
      %v772 = vpop.f32.mrf.mxu0
      %v773 = vadd.f32 0.0, %v772
      %774 = vdwg.mxu0
      %v809 = vunpack.c.l.b16 %v334
      %v810 = vunpack.c.l.b16 %v335
      %v811 = vunpack.c.l.b16 %v336
      %v812 = vunpack.c.l.b16 %v337
      %v813 = vunpack.c.l.b16 %v338
      %v814 = vunpack.c.l.b16 %v339
      %v815 = vunpack.c.l.b16 %v340
      %v816 = vunpack.c.l.b16 %v341
      %v817 = vunpack.c.l.b16 %v342
      %v818 = vunpack.c.l.b16 %v343
      %v819 = vunpack.c.l.b16 %v344
      %v820 = vunpack.c.l.b16 %v345
      %v821 = vunpack.c.l.b16 %v346
      %v822 = vunpack.c.l.b16 %v347
      %v823 = vunpack.c.l.b16 %v348
      %v824 = vunpack.c.l.b16 %v349
      %v825 = vpack.c.b16 %v810, %v809
      %v826 = vpack.c.b16 %v812, %v811
      %v827 = vpack.c.b16 %v814, %v813
      %v828 = vpack.c.b16 %v816, %v815
      %v829 = vpack.c.b16 %v818, %v817
      %v830 = vpack.c.b16 %v820, %v819
      %v831 = vpack.c.b16 %v822, %v821
      %v832 = vpack.c.b16 %v824, %v823
      %841 = vmatpush.bf16.msra.mxu0 %v832
      %842 = vmatpush.bf16.msra.mxu0 %v831
      %843 = vmatpush.bf16.msra.mxu0 %v830
      %844 = vmatpush.bf16.msra.mxu0 %v829
      %845 = vmatpush.bf16.msra.mxu0 %v828
      %846 = vmatpush.bf16.msra.mxu0 %v827
      %847 = vmatpush.bf16.msra.mxu0 %v826
      %848 = vmatpush.bf16.msra.mxu0 %v825
      %849 = vmatmul.bf16.gmra.mxu0 %v442
      %v850 = vpop.f32.mrf.mxu0
      %v851 = vadd.f32 %v686, %v850
      %v852 = vpop.f32.mrf.mxu0
      %v853 = vadd.f32 %v688, %v852
      %854 = vmatmul.bf16.gmra.mxu0 %v443
      %v855 = vpop.f32.mrf.mxu0
      %v856 = vadd.f32 %v691, %v855
      %v857 = vpop.f32.mrf.mxu0
      %v858 = vadd.f32 %v693, %v857
      %859 = vmatmul.bf16.gmra.mxu0 %v444
      %v860 = vpop.f32.mrf.mxu0
      %v861 = vadd.f32 %v696, %v860
      %v862 = vpop.f32.mrf.mxu0
      %v863 = vadd.f32 %v698, %v862
      %864 = vmatmul.bf16.gmra.mxu0 %v445
      %v865 = vpop.f32.mrf.mxu0
      %v866 = vadd.f32 %v701, %v865
      %v867 = vpop.f32.mrf.mxu0
      %v868 = vadd.f32 %v703, %v867
      %869 = vmatmul.bf16.gmra.mxu0 %v446
      %v870 = vpop.f32.mrf.mxu0
      %v871 = vadd.f32 %v706, %v870
      %v872 = vpop.f32.mrf.mxu0
      %v873 = vadd.f32 %v708, %v872
      %874 = vmatmul.bf16.gmra.mxu0 %v447
      %v875 = vpop.f32.mrf.mxu0
      %v876 = vadd.f32 %v711, %v875
      %v877 = vpop.f32.mrf.mxu0
      %v878 = vadd.f32 %v713, %v877
      %879 = vmatmul.bf16.gmra.mxu0 %v448
      %v880 = vpop.f32.mrf.mxu0
      %v881 = vadd.f32 %v716, %v880
      %v882 = vpop.f32.mrf.mxu0
      %v883 = vadd.f32 %v718, %v882
      %884 = vmatmul.bf16.gmra.mxu0 %v449
      %v885 = vpop.f32.mrf.mxu0
      %v886 = vadd.f32 %v721, %v885
      %v887 = vpop.f32.mrf.mxu0
      %v888 = vadd.f32 %v723, %v887
      %889 = vmatmul.bf16.gmra.mxu0 %v450
      %v890 = vpop.f32.mrf.mxu0
      %v891 = vadd.f32 %v726, %v890
      %v892 = vpop.f32.mrf.mxu0
      %v893 = vadd.f32 %v728, %v892
      %894 = vmatmul.bf16.gmra.mxu0 %v451
      %v895 = vpop.f32.mrf.mxu0
      %v896 = vadd.f32 %v731, %v895
      %v897 = vpop.f32.mrf.mxu0
      %v898 = vadd.f32 %v733, %v897
      %899 = vmatmul.bf16.gmra.mxu0 %v452
      %v900 = vpop.f32.mrf.mxu0
      %v901 = vadd.f32 %v736, %v900
      %v902 = vpop.f32.mrf.mxu0
      %v903 = vadd.f32 %v738, %v902
      %904 = vmatmul.bf16.gmra.mxu0 %v453
      %v905 = vpop.f32.mrf.mxu0
      %v906 = vadd.f32 %v741, %v905
      %v907 = vpop.f32.mrf.mxu0
      %v908 = vadd.f32 %v743, %v907
      %909 = vmatmul.bf16.gmra.mxu0 %v454
      %v910 = vpop.f32.mrf.mxu0
      %v911 = vadd.f32 %v746, %v910
      %v912 = vpop.f32.mrf.mxu0
      %v913 = vadd.f32 %v748, %v912
      %914 = vmatmul.bf16.gmra.mxu0 %v455
      %v915 = vpop.f32.mrf.mxu0
      %v916 = vadd.f32 %v751, %v915
      %v917 = vpop.f32.mrf.mxu0
      %v918 = vadd.f32 %v753, %v917
      %919 = vmatmul.bf16.gmra.mxu0 %v456
      %v920 = vpop.f32.mrf.mxu0
      %v921 = vadd.f32 %v756, %v920
      %v922 = vpop.f32.mrf.mxu0
      %v923 = vadd.f32 %v758, %v922
      %924 = vmatmul.bf16.gmra.mxu0 %v457
      %v925 = vpop.f32.mrf.mxu0
      %v926 = vadd.f32 %v761, %v925
      %v927 = vpop.f32.mrf.mxu0
      %v928 = vadd.f32 %v763, %v927
      %929 = vmatmul.bf16.gmra.mxu0 %v458
      %v930 = vpop.f32.mrf.mxu0
      %v931 = vadd.f32 %v766, %v930
      %v932 = vpop.f32.mrf.mxu0
      %v933 = vadd.f32 %v768, %v932
      %934 = vmatmul.bf16.gmra.mxu0 %v459
      %v935 = vpop.f32.mrf.mxu0
      %v936 = vadd.f32 %v771, %v935
      %v937 = vpop.f32.mrf.mxu0
      %v938 = vadd.f32 %v773, %v937
      %939 = vdwg.mxu0
      %v940 = vld [vmem:[%s270] sm:$0xe]
      %s941 = scalar_lea.vmem %s279, 128
      %v942 = vld [vmem:[%s941] sm:$0xf]
      %v943 = vld [vmem:[%s941 + $0x4] sm:$0xf]
      %v944 = vld [vmem:[%s941 + $0x8] sm:$0xf]
      %v945 = vld [vmem:[%s941 + $0xc] sm:$0xf]
      %v946 = vld [vmem:[%s941 + $0x10] sm:$0xf]
      %v947 = vld [vmem:[%s941 + $0x14] sm:$0xf]
      %v948 = vld [vmem:[%s941 + $0x18] sm:$0xf]
      %v949 = vld [vmem:[%s941 + $0x1c] sm:$0xf]
      %v950 = vld [vmem:[%s941 + $0x20] sm:$0xf]
      %v951 = vld [vmem:[%s941 + $0x24] sm:$0xf]
      %v952 = vld [vmem:[%s941 + $0x28] sm:$0xf]
      %v953 = vld [vmem:[%s941 + $0x2c] sm:$0xf]
      %v954 = vld [vmem:[%s941 + $0x30] sm:$0xf]
      %v955 = vld [vmem:[%s941 + $0x34] sm:$0xf]
      %v956 = vld [vmem:[%s941 + $0x38] sm:$0xf]
      %v957 = vld [vmem:[%s941 + $0x3c] sm:$0xf]
      %v959 = vunpack.c.l.b16 %v940
      %v960 = vpack.c.b16 %v406, %v959
      %vm961 = vcmask 1046528
      %v962 = vrot.slane %v960, 1
      %v963 = vrot.slane %v443, 1
      %v964 = vsel %vm961, %v962, %v963
      %v965 = vrot.slane %v444, 1
      %v966 = vsel %vm961, %v963, %v965
      %v967 = vrot.slane %v445, 1
      %v968 = vsel %vm961, %v965, %v967
      %v969 = vrot.slane %v446, 1
      %v970 = vsel %vm961, %v967, %v969
      %v971 = vrot.slane %v447, 1
      %v972 = vsel %vm961, %v969, %v971
      %v973 = vrot.slane %v448, 1
      %v974 = vsel %vm961, %v971, %v973
      %v975 = vrot.slane %v449, 1
      %v976 = vsel %vm961, %v973, %v975
      %v977 = vrot.slane %v450, 1
      %v978 = vsel %vm961, %v975, %v977
      %v979 = vrot.slane %v451, 1
      %v980 = vsel %vm961, %v977, %v979
      %v981 = vrot.slane %v452, 1
      %v982 = vsel %vm961, %v979, %v981
      %v983 = vrot.slane %v453, 1
      %v984 = vsel %vm961, %v981, %v983
      %v985 = vrot.slane %v454, 1
      %v986 = vsel %vm961, %v983, %v985
      %v987 = vrot.slane %v455, 1
      %v988 = vsel %vm961, %v985, %v987
      %v989 = vrot.slane %v456, 1
      %v990 = vsel %vm961, %v987, %v989
      %v991 = vrot.slane %v457, 1
      %v992 = vsel %vm961, %v989, %v991
      %v993 = vrot.slane %v458, 1
      %v994 = vsel %vm961, %v991, %v993
      %v995 = vrot.slane %v459, 1
      %v996 = vsel %vm961, %v993, %v995
      %v997 = vrot.slane %v460, 1
      %v998 = vsel %vm961, %v995, %v997
      %v1033 = vunpack.c.l.b16 %v942
      %v1034 = vunpack.c.l.b16 %v943
      %v1035 = vunpack.c.l.b16 %v944
      %v1036 = vunpack.c.l.b16 %v945
      %v1037 = vunpack.c.l.b16 %v946
      %v1038 = vunpack.c.l.b16 %v947
      %v1039 = vunpack.c.l.b16 %v948
      %v1040 = vunpack.c.l.b16 %v949
      %v1041 = vunpack.c.l.b16 %v950
      %v1042 = vunpack.c.l.b16 %v951
      %v1043 = vunpack.c.l.b16 %v952
      %v1044 = vunpack.c.l.b16 %v953
      %v1045 = vunpack.c.l.b16 %v954
      %v1046 = vunpack.c.l.b16 %v955
      %v1047 = vunpack.c.l.b16 %v956
      %v1048 = vunpack.c.l.b16 %v957
      %v1049 = vpack.c.b16 %v1034, %v1033
      %v1050 = vpack.c.b16 %v1036, %v1035
      %v1051 = vpack.c.b16 %v1038, %v1037
      %v1052 = vpack.c.b16 %v1040, %v1039
      %v1053 = vpack.c.b16 %v1042, %v1041
      %v1054 = vpack.c.b16 %v1044, %v1043
      %v1055 = vpack.c.b16 %v1046, %v1045
      %v1056 = vpack.c.b16 %v1048, %v1047
      %1065 = vmatpush.bf16.msra.mxu0 %v1056
      %1066 = vmatpush.bf16.msra.mxu0 %v1055
      %1067 = vmatpush.bf16.msra.mxu0 %v1054
      %1068 = vmatpush.bf16.msra.mxu0 %v1053
      %1069 = vmatpush.bf16.msra.mxu0 %v1052
      %1070 = vmatpush.bf16.msra.mxu0 %v1051
      %1071 = vmatpush.bf16.msra.mxu0 %v1050
      %1072 = vmatpush.bf16.msra.mxu0 %v1049
      %1073 = vmatmul.bf16.gmra.mxu0 %v964
      %v1074 = vpop.f32.mrf.mxu0
      %v1075 = vadd.f32 0.0, %v1074
      %v1076 = vpop.f32.mrf.mxu0
      %v1077 = vadd.f32 0.0, %v1076
      %1078 = vmatmul.bf16.gmra.mxu0 %v966
      %v1079 = vpop.f32.mrf.mxu0
      %v1080 = vadd.f32 0.0, %v1079
      %v1081 = vpop.f32.mrf.mxu0
      %v1082 = vadd.f32 0.0, %v1081
      %1083 = vmatmul.bf16.gmra.mxu0 %v968
      %v1084 = vpop.f32.mrf.mxu0
      %v1085 = vadd.f32 0.0, %v1084
      %v1086 = vpop.f32.mrf.mxu0
      %v1087 = vadd.f32 0.0, %v1086
      %1088 = vmatmul.bf16.gmra.mxu0 %v970
      %v1089 = vpop.f32.mrf.mxu0
      %v1090 = vadd.f32 0.0, %v1089
      %v1091 = vpop.f32.mrf.mxu0
      %v1092 = vadd.f32 0.0, %v1091
      %1093 = vmatmul.bf16.gmra.mxu0 %v972
      %v1094 = vpop.f32.mrf.mxu0
      %v1095 = vadd.f32 0.0, %v1094
      %v1096 = vpop.f32.mrf.mxu0
      %v1097 = vadd.f32 0.0, %v1096
      %1098 = vmatmul.bf16.gmra.mxu0 %v974
      %v1099 = vpop.f32.mrf.mxu0
      %v1100 = vadd.f32 0.0, %v1099
      %v1101 = vpop.f32.mrf.mxu0
      %v1102 = vadd.f32 0.0, %v1101
      %1103 = vmatmul.bf16.gmra.mxu0 %v976
      %v1104 = vpop.f32.mrf.mxu0
      %v1105 = vadd.f32 0.0, %v1104
      %v1106 = vpop.f32.mrf.mxu0
      %v1107 = vadd.f32 0.0, %v1106
      %1108 = vmatmul.bf16.gmra.mxu0 %v978
      %v1109 = vpop.f32.mrf.mxu0
      %v1110 = vadd.f32 0.0, %v1109
      %v1111 = vpop.f32.mrf.mxu0
      %v1112 = vadd.f32 0.0, %v1111
      %1113 = vmatmul.bf16.gmra.mxu0 %v980
      %v1114 = vpop.f32.mrf.mxu0
      %v1115 = vadd.f32 0.0, %v1114
      %v1116 = vpop.f32.mrf.mxu0
      %v1117 = vadd.f32 0.0, %v1116
      %1118 = vmatmul.bf16.gmra.mxu0 %v982
      %v1119 = vpop.f32.mrf.mxu0
      %v1120 = vadd.f32 0.0, %v1119
      %v1121 = vpop.f32.mrf.mxu0
      %v1122 = vadd.f32 0.0, %v1121
      %1123 = vmatmul.bf16.gmra.mxu0 %v984
      %v1124 = vpop.f32.mrf.mxu0
      %v1125 = vadd.f32 0.0, %v1124
      %v1126 = vpop.f32.mrf.mxu0
      %v1127 = vadd.f32 0.0, %v1126
      %1128 = vmatmul.bf16.gmra.mxu0 %v986
      %v1129 = vpop.f32.mrf.mxu0
      %v1130 = vadd.f32 0.0, %v1129
      %v1131 = vpop.f32.mrf.mxu0
      %v1132 = vadd.f32 0.0, %v1131
      %1133 = vmatmul.bf16.gmra.mxu0 %v988
      %v1134 = vpop.f32.mrf.mxu0
      %v1135 = vadd.f32 0.0, %v1134
      %v1136 = vpop.f32.mrf.mxu0
      %v1137 = vadd.f32 0.0, %v1136
      %1138 = vmatmul.bf16.gmra.mxu0 %v990
      %v1139 = vpop.f32.mrf.mxu0
      %v1140 = vadd.f32 0.0, %v1139
      %v1141 = vpop.f32.mrf.mxu0
      %v1142 = vadd.f32 0.0, %v1141
      %1143 = vmatmul.bf16.gmra.mxu0 %v992
      %v1144 = vpop.f32.mrf.mxu0
      %v1145 = vadd.f32 0.0, %v1144
      %v1146 = vpop.f32.mrf.mxu0
      %v1147 = vadd.f32 0.0, %v1146
      %1148 = vmatmul.bf16.gmra.mxu0 %v994
      %v1149 = vpop.f32.mrf.mxu0
      %v1150 = vadd.f32 0.0, %v1149
      %v1151 = vpop.f32.mrf.mxu0
      %v1152 = vadd.f32 0.0, %v1151
      %1153 = vmatmul.bf16.gmra.mxu0 %v996
      %v1154 = vpop.f32.mrf.mxu0
      %v1155 = vadd.f32 0.0, %v1154
      %v1156 = vpop.f32.mrf.mxu0
      %v1157 = vadd.f32 0.0, %v1156
      %1158 = vmatmul.bf16.gmra.mxu0 %v998
      %v1159 = vpop.f32.mrf.mxu0
      %v1160 = vadd.f32 0.0, %v1159
      %v1161 = vpop.f32.mrf.mxu0
      %v1162 = vadd.f32 0.0, %v1161
      %1163 = vdwg.mxu0
      %v1164 = vadd.f32 %v851, %v1075
      %v1165 = vadd.f32 %v853, %v1077
      %v1166 = vadd.f32 %v856, %v1080
      %v1167 = vadd.f32 %v858, %v1082
      %v1168 = vadd.f32 %v861, %v1085
      %v1169 = vadd.f32 %v863, %v1087
      %v1170 = vadd.f32 %v866, %v1090
      %v1171 = vadd.f32 %v868, %v1092
      %v1172 = vadd.f32 %v871, %v1095
      %v1173 = vadd.f32 %v873, %v1097
      %v1174 = vadd.f32 %v876, %v1100
      %v1175 = vadd.f32 %v878, %v1102
      %v1176 = vadd.f32 %v881, %v1105
      %v1177 = vadd.f32 %v883, %v1107
      %v1178 = vadd.f32 %v886, %v1110
      %v1179 = vadd.f32 %v888, %v1112
      %v1180 = vadd.f32 %v891, %v1115
      %v1181 = vadd.f32 %v893, %v1117
      %v1182 = vadd.f32 %v896, %v1120
      %v1183 = vadd.f32 %v898, %v1122
      %v1184 = vadd.f32 %v901, %v1125
      %v1185 = vadd.f32 %v903, %v1127
      %v1186 = vadd.f32 %v906, %v1130
      %v1187 = vadd.f32 %v908, %v1132
      %v1188 = vadd.f32 %v911, %v1135
      %v1189 = vadd.f32 %v913, %v1137
      %v1190 = vadd.f32 %v916, %v1140
      %v1191 = vadd.f32 %v918, %v1142
      %v1192 = vadd.f32 %v921, %v1145
      %v1193 = vadd.f32 %v923, %v1147
      %v1194 = vadd.f32 %v926, %v1150
      %v1195 = vadd.f32 %v928, %v1152
      %v1196 = vadd.f32 %v931, %v1155
      %v1197 = vadd.f32 %v933, %v1157
      %v1198 = vadd.f32 %v936, %v1160
      %v1199 = vadd.f32 %v938, %v1162
      %v1200 = vld [vmem:[%s270 + $0x8] sm:$0xe]
      %v1201 = vld [vmem:[%s270 + $0xc] sm:$0xf]
      %v1202 = vld [vmem:[%s270 + $0x10] sm:$0xf]
      %v1203 = vld [vmem:[%s270 + $0x14] sm:$0xf]
      %v1204 = vld [vmem:[%s270 + $0x18] sm:$0xf]
      %v1205 = vld [vmem:[%s270 + $0x1c] sm:$0xf]
      %v1206 = vld [vmem:[%s270 + $0x20] sm:$0xf]
      %v1207 = vld [vmem:[%s270 + $0x24] sm:$0xf]
      %v1208 = vld [vmem:[%s270 + $0x28] sm:$0xf]
      %v1209 = vld [vmem:[%s270 + $0x2c] sm:$0xf]
      %v1210 = vld [vmem:[%s270 + $0x30] sm:$0xf]
      %v1211 = vld [vmem:[%s270 + $0x34] sm:$0xf]
      %v1212 = vld [vmem:[%s270 + $0x38] sm:$0xf]
      %v1213 = vld [vmem:[%s270 + $0x3c] sm:$0xf]
      %v1214 = vld [vmem:[%s270 + $0x40] sm:$0xf]
      %v1215 = vld [vmem:[%s270 + $0x44] sm:$0xf]
      %v1216 = vld [vmem:[%s270 + $0x48] sm:$0xf]
      %v1217 = vld [vmem:[%s270 + $0x4c] sm:$0xf]
      %v1218 = vld [vmem:[%s270 + $0x50] sm:$0xf]
      %v1219 = vld [vmem:[%s270 + $0x54] sm:$0xf]
      %v1220 = vld [vmem:[%s270 + $0x58] sm:$0xf]
      %v1221 = vld [vmem:[%s270 + $0x5c] sm:$0xf]
      %v1222 = vld [vmem:[%s270 + $0x60] sm:$0xf]
      %v1223 = vld [vmem:[%s270 + $0x64] sm:$0xf]
      %v1224 = vld [vmem:[%s270 + $0x68] sm:$0xf]
      %v1225 = vld [vmem:[%s270 + $0x6c] sm:$0xf]
      %v1226 = vld [vmem:[%s270 + $0x70] sm:$0xf]
      %v1227 = vld [vmem:[%s270 + $0x74] sm:$0xf]
      %v1228 = vld [vmem:[%s270 + $0x78] sm:$0xf]
      %v1229 = vld [vmem:[%s270 + $0x7c] sm:$0xf]
      %v1230 = vld [vmem:[%s270 + $0x80] sm:$0xf]
      %v1231 = vld [vmem:[%s270 + $0x84] sm:$0xf]
      %v1232 = vld [vmem:[%s270 + $0x88] sm:$0xf]
      %v1233 = vld [vmem:[%s270 + $0x8c] sm:$0xf]
      %v1234 = vld [vmem:[%s270 + $0x90] sm:$0xf]
      %v1235 = vld [vmem:[%s270 + $0x94] sm:$0xf]
      %v1236 = vld [vmem:[%s270 + $0x98] sm:$0x1]
      %s1237 = scalar_lea.vmem %s279, 192
      %v1238 = vld [vmem:[%s1237] sm:$0xf]
      %v1239 = vld [vmem:[%s1237 + $0x4] sm:$0xf]
      %v1240 = vld [vmem:[%s1237 + $0x8] sm:$0xf]
      %v1241 = vld [vmem:[%s1237 + $0xc] sm:$0xf]
      %v1242 = vld [vmem:[%s1237 + $0x10] sm:$0xf]
      %v1243 = vld [vmem:[%s1237 + $0x14] sm:$0xf]
      %v1244 = vld [vmem:[%s1237 + $0x18] sm:$0xf]
      %v1245 = vld [vmem:[%s1237 + $0x1c] sm:$0xf]
      %v1246 = vld [vmem:[%s1237 + $0x20] sm:$0xf]
      %v1247 = vld [vmem:[%s1237 + $0x24] sm:$0xf]
      %v1248 = vld [vmem:[%s1237 + $0x28] sm:$0xf]
      %v1249 = vld [vmem:[%s1237 + $0x2c] sm:$0xf]
      %v1250 = vld [vmem:[%s1237 + $0x30] sm:$0xf]
      %v1251 = vld [vmem:[%s1237 + $0x34] sm:$0xf]
      %v1252 = vld [vmem:[%s1237 + $0x38] sm:$0xf]
      %v1253 = vld [vmem:[%s1237 + $0x3c] sm:$0xf]
      %v1291 = vunpack.c.l.b16 %v1200
      %v1292 = vunpack.c.l.b16 %v1201
      %v1293 = vunpack.c.l.b16 %v1202
      %v1294 = vunpack.c.l.b16 %v1203
      %v1295 = vunpack.c.l.b16 %v1204
      %v1296 = vunpack.c.l.b16 %v1205
      %v1297 = vunpack.c.l.b16 %v1206
      %v1298 = vunpack.c.l.b16 %v1207
      %v1299 = vunpack.c.l.b16 %v1208
      %v1300 = vunpack.c.l.b16 %v1209
      %v1301 = vunpack.c.l.b16 %v1210
      %v1302 = vunpack.c.l.b16 %v1211
      %v1303 = vunpack.c.l.b16 %v1212
      %v1304 = vunpack.c.l.b16 %v1213
      %v1305 = vunpack.c.l.b16 %v1214
      %v1306 = vunpack.c.l.b16 %v1215
      %v1307 = vunpack.c.l.b16 %v1216
      %v1308 = vunpack.c.l.b16 %v1217
      %v1309 = vunpack.c.l.b16 %v1218
      %v1310 = vunpack.c.l.b16 %v1219
      %v1311 = vunpack.c.l.b16 %v1220
      %v1312 = vunpack.c.l.b16 %v1221
      %v1313 = vunpack.c.l.b16 %v1222
      %v1314 = vunpack.c.l.b16 %v1223
      %v1315 = vunpack.c.l.b16 %v1224
      %v1316 = vunpack.c.l.b16 %v1225
      %v1317 = vunpack.c.l.b16 %v1226
      %v1318 = vunpack.c.l.b16 %v1227
      %v1319 = vunpack.c.l.b16 %v1228
      %v1320 = vunpack.c.l.b16 %v1229
      %v1321 = vunpack.c.l.b16 %v1230
      %v1322 = vunpack.c.l.b16 %v1231
      %v1323 = vunpack.c.l.b16 %v1232
      %v1324 = vunpack.c.l.b16 %v1233
      %v1325 = vunpack.c.l.b16 %v1234
      %v1326 = vunpack.c.l.b16 %v1235
      %v1327 = vunpack.c.l.b16 %v1236
      %v1328 = vpack.c.b16 %v1292, %v1291
      %v1329 = vpack.c.b16 %v1294, %v1293
      %v1330 = vpack.c.b16 %v1296, %v1295
      %v1331 = vpack.c.b16 %v1298, %v1297
      %v1332 = vpack.c.b16 %v1300, %v1299
      %v1333 = vpack.c.b16 %v1302, %v1301
      %v1334 = vpack.c.b16 %v1304, %v1303
      %v1335 = vpack.c.b16 %v1306, %v1305
      %v1336 = vpack.c.b16 %v1308, %v1307
      %v1337 = vpack.c.b16 %v1310, %v1309
      %v1338 = vpack.c.b16 %v1312, %v1311
      %v1339 = vpack.c.b16 %v1314, %v1313
      %v1340 = vpack.c.b16 %v1316, %v1315
      %v1341 = vpack.c.b16 %v1318, %v1317
      %v1342 = vpack.c.b16 %v1320, %v1319
      %v1343 = vpack.c.b16 %v1322, %v1321
      %v1344 = vpack.c.b16 %v1324, %v1323
      %v1345 = vpack.c.b16 %v1326, %v1325
      %v1346 = vpack.c.b16 %v1327, %v1327
      %v1347 = vrot.slane %v1328, 1
      %v1348 = vrot.slane %v1329, 1
      %v1349 = vsel %vm961, %v1347, %v1348
      %v1350 = vrot.slane %v1330, 1
      %v1351 = vsel %vm961, %v1348, %v1350
      %v1352 = vrot.slane %v1331, 1
      %v1353 = vsel %vm961, %v1350, %v1352
      %v1354 = vrot.slane %v1332, 1
      %v1355 = vsel %vm961, %v1352, %v1354
      %v1356 = vrot.slane %v1333, 1
      %v1357 = vsel %vm961, %v1354, %v1356
      %v1358 = vrot.slane %v1334, 1
      %v1359 = vsel %vm961, %v1356, %v1358
      %v1360 = vrot.slane %v1335, 1
      %v1361 = vsel %vm961, %v1358, %v1360
      %v1362 = vrot.slane %v1336, 1
      %v1363 = vsel %vm961, %v1360, %v1362
      %v1364 = vrot.slane %v1337, 1
      %v1365 = vsel %vm961, %v1362, %v1364
      %v1366 = vrot.slane %v1338, 1
      %v1367 = vsel %vm961, %v1364, %v1366
      %v1368 = vrot.slane %v1339, 1
      %v1369 = vsel %vm961, %v1366, %v1368
      %v1370 = vrot.slane %v1340, 1
      %v1371 = vsel %vm961, %v1368, %v1370
      %v1372 = vrot.slane %v1341, 1
      %v1373 = vsel %vm961, %v1370, %v1372
      %v1374 = vrot.slane %v1342, 1
      %v1375 = vsel %vm961, %v1372, %v1374
      %v1376 = vrot.slane %v1343, 1
      %v1377 = vsel %vm961, %v1374, %v1376
      %v1378 = vrot.slane %v1344, 1
      %v1379 = vsel %vm961, %v1376, %v1378
      %v1380 = vrot.slane %v1345, 1
      %v1381 = vsel %vm961, %v1378, %v1380
      %v1382 = vrot.slane %v1346, 1
      %v1383 = vsel %vm961, %v1380, %v1382
      %v1418 = vunpack.c.l.b16 %v1238
      %v1419 = vunpack.c.l.b16 %v1239
      %v1420 = vunpack.c.l.b16 %v1240
      %v1421 = vunpack.c.l.b16 %v1241
      %v1422 = vunpack.c.l.b16 %v1242
      %v1423 = vunpack.c.l.b16 %v1243
      %v1424 = vunpack.c.l.b16 %v1244
      %v1425 = vunpack.c.l.b16 %v1245
      %v1426 = vunpack.c.l.b16 %v1246
      %v1427 = vunpack.c.l.b16 %v1247
      %v1428 = vunpack.c.l.b16 %v1248
      %v1429 = vunpack.c.l.b16 %v1249
      %v1430 = vunpack.c.l.b16 %v1250
      %v1431 = vunpack.c.l.b16 %v1251
      %v1432 = vunpack.c.l.b16 %v1252
      %v1433 = vunpack.c.l.b16 %v1253
      %v1434 = vpack.c.b16 %v1419, %v1418
      %v1435 = vpack.c.b16 %v1421, %v1420
      %v1436 = vpack.c.b16 %v1423, %v1422
      %v1437 = vpack.c.b16 %v1425, %v1424
      %v1438 = vpack.c.b16 %v1427, %v1426
      %v1439 = vpack.c.b16 %v1429, %v1428
      %v1440 = vpack.c.b16 %v1431, %v1430
      %v1441 = vpack.c.b16 %v1433, %v1432
      %1450 = vmatpush.bf16.msra.mxu0 %v1441
      %1451 = vmatpush.bf16.msra.mxu0 %v1440
      %1452 = vmatpush.bf16.msra.mxu0 %v1439
      %1453 = vmatpush.bf16.msra.mxu0 %v1438
      %1454 = vmatpush.bf16.msra.mxu0 %v1437
      %1455 = vmatpush.bf16.msra.mxu0 %v1436
      %1456 = vmatpush.bf16.msra.mxu0 %v1435
      %1457 = vmatpush.bf16.msra.mxu0 %v1434
      %1458 = vmatmul.bf16.gmra.mxu0 %v1349
      %v1459 = vpop.f32.mrf.mxu0
      %v1460 = vadd.f32 0.0, %v1459
      %v1461 = vpop.f32.mrf.mxu0
      %v1462 = vadd.f32 0.0, %v1461
      %1463 = vmatmul.bf16.gmra.mxu0 %v1351
      %v1464 = vpop.f32.mrf.mxu0
      %v1465 = vadd.f32 0.0, %v1464
      %v1466 = vpop.f32.mrf.mxu0
      %v1467 = vadd.f32 0.0, %v1466
      %1468 = vmatmul.bf16.gmra.mxu0 %v1353
      %v1469 = vpop.f32.mrf.mxu0
      %v1470 = vadd.f32 0.0, %v1469
      %v1471 = vpop.f32.mrf.mxu0
      %v1472 = vadd.f32 0.0, %v1471
      %1473 = vmatmul.bf16.gmra.mxu0 %v1355
      %v1474 = vpop.f32.mrf.mxu0
      %v1475 = vadd.f32 0.0, %v1474
      %v1476 = vpop.f32.mrf.mxu0
      %v1477 = vadd.f32 0.0, %v1476
      %1478 = vmatmul.bf16.gmra.mxu0 %v1357
      %v1479 = vpop.f32.mrf.mxu0
      %v1480 = vadd.f32 0.0, %v1479
      %v1481 = vpop.f32.mrf.mxu0
      %v1482 = vadd.f32 0.0, %v1481
      %1483 = vmatmul.bf16.gmra.mxu0 %v1359
      %v1484 = vpop.f32.mrf.mxu0
      %v1485 = vadd.f32 0.0, %v1484
      %v1486 = vpop.f32.mrf.mxu0
      %v1487 = vadd.f32 0.0, %v1486
      %1488 = vmatmul.bf16.gmra.mxu0 %v1361
      %v1489 = vpop.f32.mrf.mxu0
      %v1490 = vadd.f32 0.0, %v1489
      %v1491 = vpop.f32.mrf.mxu0
      %v1492 = vadd.f32 0.0, %v1491
      %1493 = vmatmul.bf16.gmra.mxu0 %v1363
      %v1494 = vpop.f32.mrf.mxu0
      %v1495 = vadd.f32 0.0, %v1494
      %v1496 = vpop.f32.mrf.mxu0
      %v1497 = vadd.f32 0.0, %v1496
      %1498 = vmatmul.bf16.gmra.mxu0 %v1365
      %v1499 = vpop.f32.mrf.mxu0
      %v1500 = vadd.f32 0.0, %v1499
      %v1501 = vpop.f32.mrf.mxu0
      %v1502 = vadd.f32 0.0, %v1501
      %1503 = vmatmul.bf16.gmra.mxu0 %v1367
      %v1504 = vpop.f32.mrf.mxu0
      %v1505 = vadd.f32 0.0, %v1504
      %v1506 = vpop.f32.mrf.mxu0
      %v1507 = vadd.f32 0.0, %v1506
      %1508 = vmatmul.bf16.gmra.mxu0 %v1369
      %v1509 = vpop.f32.mrf.mxu0
      %v1510 = vadd.f32 0.0, %v1509
      %v1511 = vpop.f32.mrf.mxu0
      %v1512 = vadd.f32 0.0, %v1511
      %1513 = vmatmul.bf16.gmra.mxu0 %v1371
      %v1514 = vpop.f32.mrf.mxu0
      %v1515 = vadd.f32 0.0, %v1514
      %v1516 = vpop.f32.mrf.mxu0
      %v1517 = vadd.f32 0.0, %v1516
      %1518 = vmatmul.bf16.gmra.mxu0 %v1373
      %v1519 = vpop.f32.mrf.mxu0
      %v1520 = vadd.f32 0.0, %v1519
      %v1521 = vpop.f32.mrf.mxu0
      %v1522 = vadd.f32 0.0, %v1521
      %1523 = vmatmul.bf16.gmra.mxu0 %v1375
      %v1524 = vpop.f32.mrf.mxu0
      %v1525 = vadd.f32 0.0, %v1524
      %v1526 = vpop.f32.mrf.mxu0
      %v1527 = vadd.f32 0.0, %v1526
      %1528 = vmatmul.bf16.gmra.mxu0 %v1377
      %v1529 = vpop.f32.mrf.mxu0
      %v1530 = vadd.f32 0.0, %v1529
      %v1531 = vpop.f32.mrf.mxu0
      %v1532 = vadd.f32 0.0, %v1531
      %1533 = vmatmul.bf16.gmra.mxu0 %v1379
      %v1534 = vpop.f32.mrf.mxu0
      %v1535 = vadd.f32 0.0, %v1534
      %v1536 = vpop.f32.mrf.mxu0
      %v1537 = vadd.f32 0.0, %v1536
      %1538 = vmatmul.bf16.gmra.mxu0 %v1381
      %v1539 = vpop.f32.mrf.mxu0
      %v1540 = vadd.f32 0.0, %v1539
      %v1541 = vpop.f32.mrf.mxu0
      %v1542 = vadd.f32 0.0, %v1541
      %1543 = vmatmul.bf16.gmra.mxu0 %v1383
      %v1544 = vpop.f32.mrf.mxu0
      %v1545 = vadd.f32 0.0, %v1544
      %v1546 = vpop.f32.mrf.mxu0
      %v1547 = vadd.f32 0.0, %v1546
      %1548 = vdwg.mxu0
      %v1549 = vadd.f32 %v1164, %v1460
      %v1550 = vadd.f32 %v1165, %v1462
      %v1551 = vadd.f32 %v1166, %v1465
      %v1552 = vadd.f32 %v1167, %v1467
      %v1553 = vadd.f32 %v1168, %v1470
      %v1554 = vadd.f32 %v1169, %v1472
      %v1555 = vadd.f32 %v1170, %v1475
      %v1556 = vadd.f32 %v1171, %v1477
      %v1557 = vadd.f32 %v1172, %v1480
      %v1558 = vadd.f32 %v1173, %v1482
      %v1559 = vadd.f32 %v1174, %v1485
      %v1560 = vadd.f32 %v1175, %v1487
      %v1561 = vadd.f32 %v1176, %v1490
      %v1562 = vadd.f32 %v1177, %v1492
      %v1563 = vadd.f32 %v1178, %v1495
      %v1564 = vadd.f32 %v1179, %v1497
      %v1565 = vadd.f32 %v1180, %v1500
      %v1566 = vadd.f32 %v1181, %v1502
      %v1567 = vadd.f32 %v1182, %v1505
      %v1568 = vadd.f32 %v1183, %v1507
      %v1569 = vadd.f32 %v1184, %v1510
      %v1570 = vadd.f32 %v1185, %v1512
      %v1571 = vadd.f32 %v1186, %v1515
      %v1572 = vadd.f32 %v1187, %v1517
      %v1573 = vadd.f32 %v1188, %v1520
      %v1574 = vadd.f32 %v1189, %v1522
      %v1575 = vadd.f32 %v1190, %v1525
      %v1576 = vadd.f32 %v1191, %v1527
      %v1577 = vadd.f32 %v1192, %v1530
      %v1578 = vadd.f32 %v1193, %v1532
      %v1579 = vadd.f32 %v1194, %v1535
      %v1580 = vadd.f32 %v1195, %v1537
      %v1581 = vadd.f32 %v1196, %v1540
      %v1582 = vadd.f32 %v1197, %v1542
      %v1583 = vadd.f32 %v1198, %v1545
      %v1584 = vadd.f32 %v1199, %v1547
      %v1585 = vld [vmem:[%s270 + $0x98] sm:$0x3]
      %s1586 = scalar_lea.vmem %s279, 256
      %v1587 = vld [vmem:[%s1586] sm:$0xf]
      %v1588 = vld [vmem:[%s1586 + $0x4] sm:$0xf]
      %v1589 = vld [vmem:[%s1586 + $0x8] sm:$0xf]
      %v1590 = vld [vmem:[%s1586 + $0xc] sm:$0xf]
      %v1591 = vld [vmem:[%s1586 + $0x10] sm:$0xf]
      %v1592 = vld [vmem:[%s1586 + $0x14] sm:$0xf]
      %v1593 = vld [vmem:[%s1586 + $0x18] sm:$0xf]
      %v1594 = vld [vmem:[%s1586 + $0x1c] sm:$0xf]
      %v1595 = vld [vmem:[%s1586 + $0x20] sm:$0xf]
      %v1596 = vld [vmem:[%s1586 + $0x24] sm:$0xf]
      %v1597 = vld [vmem:[%s1586 + $0x28] sm:$0xf]
      %v1598 = vld [vmem:[%s1586 + $0x2c] sm:$0xf]
      %v1599 = vld [vmem:[%s1586 + $0x30] sm:$0xf]
      %v1600 = vld [vmem:[%s1586 + $0x34] sm:$0xf]
      %v1601 = vld [vmem:[%s1586 + $0x38] sm:$0xf]
      %v1602 = vld [vmem:[%s1586 + $0x3c] sm:$0xf]
      %v1604 = vunpack.c.l.b16 %v1585
      %v1605 = vpack.c.b16 %v1604, %v1604
      %vm1606 = vsmask.f32 6400
      %v1608 = vshrl.u32 %v1328, 16
      %v1610 = vrot.slane %v1608, 1
      %v1611 = vshll.u32 %v1328, 16
      %v1613 = vrot.slane %v1611, 2
      %v1614 = vor.u32 %v1610, %v1613
      %v1616 = vshrl.u32 %v1329, 16
      %v1618 = vrot.slane %v1616, 1
      %v1619 = vshll.u32 %v1329, 16
      %v1621 = vrot.slane %v1619, 2
      %v1622 = vor.u32 %v1618, %v1621
      %v1623 = vsel %vm1606, %v1614, %v1622
      %v1625 = vshrl.u32 %v1330, 16
      %v1627 = vrot.slane %v1625, 1
      %v1628 = vshll.u32 %v1330, 16
      %v1630 = vrot.slane %v1628, 2
      %v1631 = vor.u32 %v1627, %v1630
      %v1632 = vsel %vm1606, %v1622, %v1631
      %v1634 = vshrl.u32 %v1331, 16
      %v1636 = vrot.slane %v1634, 1
      %v1637 = vshll.u32 %v1331, 16
      %v1639 = vrot.slane %v1637, 2
      %v1640 = vor.u32 %v1636, %v1639
      %v1641 = vsel %vm1606, %v1631, %v1640
      %v1643 = vshrl.u32 %v1332, 16
      %v1645 = vrot.slane %v1643, 1
      %v1646 = vshll.u32 %v1332, 16
      %v1648 = vrot.slane %v1646, 2
      %v1649 = vor.u32 %v1645, %v1648
      %v1650 = vsel %vm1606, %v1640, %v1649
      %v1652 = vshrl.u32 %v1333, 16
      %v1654 = vrot.slane %v1652, 1
      %v1655 = vshll.u32 %v1333, 16
      %v1657 = vrot.slane %v1655, 2
      %v1658 = vor.u32 %v1654, %v1657
      %v1659 = vsel %vm1606, %v1649, %v1658
      %v1661 = vshrl.u32 %v1334, 16
      %v1663 = vrot.slane %v1661, 1
      %v1664 = vshll.u32 %v1334, 16
      %v1666 = vrot.slane %v1664, 2
      %v1667 = vor.u32 %v1663, %v1666
      %v1668 = vsel %vm1606, %v1658, %v1667
      %v1670 = vshrl.u32 %v1335, 16
      %v1672 = vrot.slane %v1670, 1
      %v1673 = vshll.u32 %v1335, 16
      %v1675 = vrot.slane %v1673, 2
      %v1676 = vor.u32 %v1672, %v1675
      %v1677 = vsel %vm1606, %v1667, %v1676
      %v1679 = vshrl.u32 %v1336, 16
      %v1681 = vrot.slane %v1679, 1
      %v1682 = vshll.u32 %v1336, 16
      %v1684 = vrot.slane %v1682, 2
      %v1685 = vor.u32 %v1681, %v1684
      %v1686 = vsel %vm1606, %v1676, %v1685
      %v1688 = vshrl.u32 %v1337, 16
      %v1690 = vrot.slane %v1688, 1
      %v1691 = vshll.u32 %v1337, 16
      %v1693 = vrot.slane %v1691, 2
      %v1694 = vor.u32 %v1690, %v1693
      %v1695 = vsel %vm1606, %v1685, %v1694
      %v1697 = vshrl.u32 %v1338, 16
      %v1699 = vrot.slane %v1697, 1
      %v1700 = vshll.u32 %v1338, 16
      %v1702 = vrot.slane %v1700, 2
      %v1703 = vor.u32 %v1699, %v1702
      %v1704 = vsel %vm1606, %v1694, %v1703
      %v1706 = vshrl.u32 %v1339, 16
      %v1708 = vrot.slane %v1706, 1
      %v1709 = vshll.u32 %v1339, 16
      %v1711 = vrot.slane %v1709, 2
      %v1712 = vor.u32 %v1708, %v1711
      %v1713 = vsel %vm1606, %v1703, %v1712
      %v1715 = vshrl.u32 %v1340, 16
      %v1717 = vrot.slane %v1715, 1
      %v1718 = vshll.u32 %v1340, 16
      %v1720 = vrot.slane %v1718, 2
      %v1721 = vor.u32 %v1717, %v1720
      %v1722 = vsel %vm1606, %v1712, %v1721
      %v1724 = vshrl.u32 %v1341, 16
      %v1726 = vrot.slane %v1724, 1
      %v1727 = vshll.u32 %v1341, 16
      %v1729 = vrot.slane %v1727, 2
      %v1730 = vor.u32 %v1726, %v1729
      %v1731 = vsel %vm1606, %v1721, %v1730
      %v1733 = vshrl.u32 %v1342, 16
      %v1735 = vrot.slane %v1733, 1
      %v1736 = vshll.u32 %v1342, 16
      %v1738 = vrot.slane %v1736, 2
      %v1739 = vor.u32 %v1735, %v1738
      %v1740 = vsel %vm1606, %v1730, %v1739
      %v1742 = vshrl.u32 %v1343, 16
      %v1744 = vrot.slane %v1742, 1
      %v1745 = vshll.u32 %v1343, 16
      %v1747 = vrot.slane %v1745, 2
      %v1748 = vor.u32 %v1744, %v1747
      %v1749 = vsel %vm1606, %v1739, %v1748
      %v1751 = vshrl.u32 %v1344, 16
      %v1753 = vrot.slane %v1751, 1
      %v1754 = vshll.u32 %v1344, 16
      %v1756 = vrot.slane %v1754, 2
      %v1757 = vor.u32 %v1753, %v1756
      %v1758 = vsel %vm1606, %v1748, %v1757
      %v1760 = vshrl.u32 %v1345, 16
      %v1762 = vrot.slane %v1760, 1
      %v1763 = vshll.u32 %v1345, 16
      %v1765 = vrot.slane %v1763, 2
      %v1766 = vor.u32 %v1762, %v1765
      %v1767 = vsel %vm1606, %v1757, %v1766
      %v1769 = vshrl.u32 %v1605, 16
      %v1771 = vrot.slane %v1769, 1
      %v1772 = vshll.u32 %v1605, 16
      %v1774 = vrot.slane %v1772, 2
      %v1775 = vor.u32 %v1771, %v1774
      %v1776 = vsel %vm1606, %v1766, %v1775
      %v1811 = vunpack.c.l.b16 %v1587
      %v1812 = vunpack.c.l.b16 %v1588
      %v1813 = vunpack.c.l.b16 %v1589
      %v1814 = vunpack.c.l.b16 %v1590
      %v1815 = vunpack.c.l.b16 %v1591
      %v1816 = vunpack.c.l.b16 %v1592
      %v1817 = vunpack.c.l.b16 %v1593
      %v1818 = vunpack.c.l.b16 %v1594
      %v1819 = vunpack.c.l.b16 %v1595
      %v1820 = vunpack.c.l.b16 %v1596
      %v1821 = vunpack.c.l.b16 %v1597
      %v1822 = vunpack.c.l.b16 %v1598
      %v1823 = vunpack.c.l.b16 %v1599
      %v1824 = vunpack.c.l.b16 %v1600
      %v1825 = vunpack.c.l.b16 %v1601
      %v1826 = vunpack.c.l.b16 %v1602
      %v1827 = vpack.c.b16 %v1812, %v1811
      %v1828 = vpack.c.b16 %v1814, %v1813
      %v1829 = vpack.c.b16 %v1816, %v1815
      %v1830 = vpack.c.b16 %v1818, %v1817
      %v1831 = vpack.c.b16 %v1820, %v1819
      %v1832 = vpack.c.b16 %v1822, %v1821
      %v1833 = vpack.c.b16 %v1824, %v1823
      %v1834 = vpack.c.b16 %v1826, %v1825
      %1843 = vmatpush.bf16.msra.mxu0 %v1834
      %1844 = vmatpush.bf16.msra.mxu0 %v1833
      %1845 = vmatpush.bf16.msra.mxu0 %v1832
      %1846 = vmatpush.bf16.msra.mxu0 %v1831
      %1847 = vmatpush.bf16.msra.mxu0 %v1830
      %1848 = vmatpush.bf16.msra.mxu0 %v1829
      %1849 = vmatpush.bf16.msra.mxu0 %v1828
      %1850 = vmatpush.bf16.msra.mxu0 %v1827
      %1851 = vmatmul.bf16.gmra.mxu0 %v1623
      %v1852 = vpop.f32.mrf.mxu0
      %v1853 = vadd.f32 0.0, %v1852
      %v1854 = vpop.f32.mrf.mxu0
      %v1855 = vadd.f32 0.0, %v1854
      %1856 = vmatmul.bf16.gmra.mxu0 %v1632
      %v1857 = vpop.f32.mrf.mxu0
      %v1858 = vadd.f32 0.0, %v1857
      %v1859 = vpop.f32.mrf.mxu0
      %v1860 = vadd.f32 0.0, %v1859
      %1861 = vmatmul.bf16.gmra.mxu0 %v1641
      %v1862 = vpop.f32.mrf.mxu0
      %v1863 = vadd.f32 0.0, %v1862
      %v1864 = vpop.f32.mrf.mxu0
      %v1865 = vadd.f32 0.0, %v1864
      %1866 = vmatmul.bf16.gmra.mxu0 %v1650
      %v1867 = vpop.f32.mrf.mxu0
      %v1868 = vadd.f32 0.0, %v1867
      %v1869 = vpop.f32.mrf.mxu0
      %v1870 = vadd.f32 0.0, %v1869
      %1871 = vmatmul.bf16.gmra.mxu0 %v1659
      %v1872 = vpop.f32.mrf.mxu0
      %v1873 = vadd.f32 0.0, %v1872
      %v1874 = vpop.f32.mrf.mxu0
      %v1875 = vadd.f32 0.0, %v1874
      %1876 = vmatmul.bf16.gmra.mxu0 %v1668
      %v1877 = vpop.f32.mrf.mxu0
      %v1878 = vadd.f32 0.0, %v1877
      %v1879 = vpop.f32.mrf.mxu0
      %v1880 = vadd.f32 0.0, %v1879
      %1881 = vmatmul.bf16.gmra.mxu0 %v1677
      %v1882 = vpop.f32.mrf.mxu0
      %v1883 = vadd.f32 0.0, %v1882
      %v1884 = vpop.f32.mrf.mxu0
      %v1885 = vadd.f32 0.0, %v1884
      %1886 = vmatmul.bf16.gmra.mxu0 %v1686
      %v1887 = vpop.f32.mrf.mxu0
      %v1888 = vadd.f32 0.0, %v1887
      %v1889 = vpop.f32.mrf.mxu0
      %v1890 = vadd.f32 0.0, %v1889
      %1891 = vmatmul.bf16.gmra.mxu0 %v1695
      %v1892 = vpop.f32.mrf.mxu0
      %v1893 = vadd.f32 0.0, %v1892
      %v1894 = vpop.f32.mrf.mxu0
      %v1895 = vadd.f32 0.0, %v1894
      %1896 = vmatmul.bf16.gmra.mxu0 %v1704
      %v1897 = vpop.f32.mrf.mxu0
      %v1898 = vadd.f32 0.0, %v1897
      %v1899 = vpop.f32.mrf.mxu0
      %v1900 = vadd.f32 0.0, %v1899
      %1901 = vmatmul.bf16.gmra.mxu0 %v1713
      %v1902 = vpop.f32.mrf.mxu0
      %v1903 = vadd.f32 0.0, %v1902
      %v1904 = vpop.f32.mrf.mxu0
      %v1905 = vadd.f32 0.0, %v1904
      %1906 = vmatmul.bf16.gmra.mxu0 %v1722
      %v1907 = vpop.f32.mrf.mxu0
      %v1908 = vadd.f32 0.0, %v1907
      %v1909 = vpop.f32.mrf.mxu0
      %v1910 = vadd.f32 0.0, %v1909
      %1911 = vmatmul.bf16.gmra.mxu0 %v1731
      %v1912 = vpop.f32.mrf.mxu0
      %v1913 = vadd.f32 0.0, %v1912
      %v1914 = vpop.f32.mrf.mxu0
      %v1915 = vadd.f32 0.0, %v1914
      %1916 = vmatmul.bf16.gmra.mxu0 %v1740
      %v1917 = vpop.f32.mrf.mxu0
      %v1918 = vadd.f32 0.0, %v1917
      %v1919 = vpop.f32.mrf.mxu0
      %v1920 = vadd.f32 0.0, %v1919
      %1921 = vmatmul.bf16.gmra.mxu0 %v1749
      %v1922 = vpop.f32.mrf.mxu0
      %v1923 = vadd.f32 0.0, %v1922
      %v1924 = vpop.f32.mrf.mxu0
      %v1925 = vadd.f32 0.0, %v1924
      %1926 = vmatmul.bf16.gmra.mxu0 %v1758
      %v1927 = vpop.f32.mrf.mxu0
      %v1928 = vadd.f32 0.0, %v1927
      %v1929 = vpop.f32.mrf.mxu0
      %v1930 = vadd.f32 0.0, %v1929
      %1931 = vmatmul.bf16.gmra.mxu0 %v1767
      %v1932 = vpop.f32.mrf.mxu0
      %v1933 = vadd.f32 0.0, %v1932
      %v1934 = vpop.f32.mrf.mxu0
      %v1935 = vadd.f32 0.0, %v1934
      %1936 = vmatmul.bf16.gmra.mxu0 %v1776
      %v1937 = vpop.f32.mrf.mxu0
      %v1938 = vadd.f32 0.0, %v1937
      %v1939 = vpop.f32.mrf.mxu0
      %v1940 = vadd.f32 0.0, %v1939
      %1941 = vdwg.mxu0
      %v1942 = vadd.f32 %v1549, %v1853
      %v1943 = vadd.f32 %v1550, %v1855
      %v1944 = vadd.f32 %v1551, %v1858
      %v1945 = vadd.f32 %v1552, %v1860
      %v1946 = vadd.f32 %v1553, %v1863
      %v1947 = vadd.f32 %v1554, %v1865
      %v1948 = vadd.f32 %v1555, %v1868
      %v1949 = vadd.f32 %v1556, %v1870
      %v1950 = vadd.f32 %v1557, %v1873
      %v1951 = vadd.f32 %v1558, %v1875
      %v1952 = vadd.f32 %v1559, %v1878
      %v1953 = vadd.f32 %v1560, %v1880
      %v1954 = vadd.f32 %v1561, %v1883
      %v1955 = vadd.f32 %v1562, %v1885
      %v1956 = vadd.f32 %v1563, %v1888
      %v1957 = vadd.f32 %v1564, %v1890
      %v1958 = vadd.f32 %v1565, %v1893
      %v1959 = vadd.f32 %v1566, %v1895
      %v1960 = vadd.f32 %v1567, %v1898
      %v1961 = vadd.f32 %v1568, %v1900
      %v1962 = vadd.f32 %v1569, %v1903
      %v1963 = vadd.f32 %v1570, %v1905
      %v1964 = vadd.f32 %v1571, %v1908
      %v1965 = vadd.f32 %v1572, %v1910
      %v1966 = vadd.f32 %v1573, %v1913
      %v1967 = vadd.f32 %v1574, %v1915
      %v1968 = vadd.f32 %v1575, %v1918
      %v1969 = vadd.f32 %v1576, %v1920
      %v1970 = vadd.f32 %v1577, %v1923
      %v1971 = vadd.f32 %v1578, %v1925
      %v1972 = vadd.f32 %v1579, %v1928
      %v1973 = vadd.f32 %v1580, %v1930
      %v1974 = vadd.f32 %v1581, %v1933
      %v1975 = vadd.f32 %v1582, %v1935
      %v1976 = vadd.f32 %v1583, %v1938
      %v1977 = vadd.f32 %v1584, %v1940
      %v1978 = vld [vmem:[%s270 + $0x8] sm:$0xc]
      %s1979 = scalar_lea.vmem %s279, 320
      %v1980 = vld [vmem:[%s1979] sm:$0xf]
      %v1981 = vld [vmem:[%s1979 + $0x4] sm:$0xf]
      %v1982 = vld [vmem:[%s1979 + $0x8] sm:$0xf]
      %v1983 = vld [vmem:[%s1979 + $0xc] sm:$0xf]
      %v1984 = vld [vmem:[%s1979 + $0x10] sm:$0xf]
      %v1985 = vld [vmem:[%s1979 + $0x14] sm:$0xf]
      %v1986 = vld [vmem:[%s1979 + $0x18] sm:$0xf]
      %v1987 = vld [vmem:[%s1979 + $0x1c] sm:$0xf]
      %v1988 = vld [vmem:[%s1979 + $0x20] sm:$0xf]
      %v1989 = vld [vmem:[%s1979 + $0x24] sm:$0xf]
      %v1990 = vld [vmem:[%s1979 + $0x28] sm:$0xf]
      %v1991 = vld [vmem:[%s1979 + $0x2c] sm:$0xf]
      %v1992 = vld [vmem:[%s1979 + $0x30] sm:$0xf]
      %v1993 = vld [vmem:[%s1979 + $0x34] sm:$0xf]
      %v1994 = vld [vmem:[%s1979 + $0x38] sm:$0xf]
      %v1995 = vld [vmem:[%s1979 + $0x3c] sm:$0xf]
      %v1997 = vunpack.c.l.b16 %v1978
      %v1998 = vpack.c.b16 %v1292, %v1997
      %vm1999 = vcmask 1045504
      %v2000 = vrot.slane %v1998, 2
      %v2001 = vrot.slane %v1329, 2
      %v2002 = vsel %vm1999, %v2000, %v2001
      %v2003 = vrot.slane %v1330, 2
      %v2004 = vsel %vm1999, %v2001, %v2003
      %v2005 = vrot.slane %v1331, 2
      %v2006 = vsel %vm1999, %v2003, %v2005
      %v2007 = vrot.slane %v1332, 2
      %v2008 = vsel %vm1999, %v2005, %v2007
      %v2009 = vrot.slane %v1333, 2
      %v2010 = vsel %vm1999, %v2007, %v2009
      %v2011 = vrot.slane %v1334, 2
      %v2012 = vsel %vm1999, %v2009, %v2011
      %v2013 = vrot.slane %v1335, 2
      %v2014 = vsel %vm1999, %v2011, %v2013
      %v2015 = vrot.slane %v1336, 2
      %v2016 = vsel %vm1999, %v2013, %v2015
      %v2017 = vrot.slane %v1337, 2
      %v2018 = vsel %vm1999, %v2015, %v2017
      %v2019 = vrot.slane %v1338, 2
      %v2020 = vsel %vm1999, %v2017, %v2019
      %v2021 = vrot.slane %v1339, 2
      %v2022 = vsel %vm1999, %v2019, %v2021
      %v2023 = vrot.slane %v1340, 2
      %v2024 = vsel %vm1999, %v2021, %v2023
      %v2025 = vrot.slane %v1341, 2
      %v2026 = vsel %vm1999, %v2023, %v2025
      %v2027 = vrot.slane %v1342, 2
      %v2028 = vsel %vm1999, %v2025, %v2027
      %v2029 = vrot.slane %v1343, 2
      %v2030 = vsel %vm1999, %v2027, %v2029
      %v2031 = vrot.slane %v1344, 2
      %v2032 = vsel %vm1999, %v2029, %v2031
      %v2033 = vrot.slane %v1345, 2
      %v2034 = vsel %vm1999, %v2031, %v2033
      %v2035 = vrot.slane %v1605, 2
      %v2036 = vsel %vm1999, %v2033, %v2035
      %v2071 = vunpack.c.l.b16 %v1980
      %v2072 = vunpack.c.l.b16 %v1981
      %v2073 = vunpack.c.l.b16 %v1982
      %v2074 = vunpack.c.l.b16 %v1983
      %v2075 = vunpack.c.l.b16 %v1984
      %v2076 = vunpack.c.l.b16 %v1985
      %v2077 = vunpack.c.l.b16 %v1986
      %v2078 = vunpack.c.l.b16 %v1987
      %v2079 = vunpack.c.l.b16 %v1988
      %v2080 = vunpack.c.l.b16 %v1989
      %v2081 = vunpack.c.l.b16 %v1990
      %v2082 = vunpack.c.l.b16 %v1991
      %v2083 = vunpack.c.l.b16 %v1992
      %v2084 = vunpack.c.l.b16 %v1993
      %v2085 = vunpack.c.l.b16 %v1994
      %v2086 = vunpack.c.l.b16 %v1995
      %v2087 = vpack.c.b16 %v2072, %v2071
      %v2088 = vpack.c.b16 %v2074, %v2073
      %v2089 = vpack.c.b16 %v2076, %v2075
      %v2090 = vpack.c.b16 %v2078, %v2077
      %v2091 = vpack.c.b16 %v2080, %v2079
      %v2092 = vpack.c.b16 %v2082, %v2081
      %v2093 = vpack.c.b16 %v2084, %v2083
      %v2094 = vpack.c.b16 %v2086, %v2085
      %2103 = vmatpush.bf16.msra.mxu0 %v2094
      %2104 = vmatpush.bf16.msra.mxu0 %v2093
      %2105 = vmatpush.bf16.msra.mxu0 %v2092
      %2106 = vmatpush.bf16.msra.mxu0 %v2091
      %2107 = vmatpush.bf16.msra.mxu0 %v2090
      %2108 = vmatpush.bf16.msra.mxu0 %v2089
      %2109 = vmatpush.bf16.msra.mxu0 %v2088
      %2110 = vmatpush.bf16.msra.mxu0 %v2087
      %2111 = vmatmul.bf16.gmra.mxu0 %v2002
      %v2112 = vpop.f32.mrf.mxu0
      %v2113 = vadd.f32 0.0, %v2112
      %v2114 = vpop.f32.mrf.mxu0
      %v2115 = vadd.f32 0.0, %v2114
      %2116 = vmatmul.bf16.gmra.mxu0 %v2004
      %v2117 = vpop.f32.mrf.mxu0
      %v2118 = vadd.f32 0.0, %v2117
      %v2119 = vpop.f32.mrf.mxu0
      %v2120 = vadd.f32 0.0, %v2119
      %2121 = vmatmul.bf16.gmra.mxu0 %v2006
      %v2122 = vpop.f32.mrf.mxu0
      %v2123 = vadd.f32 0.0, %v2122
      %v2124 = vpop.f32.mrf.mxu0
      %v2125 = vadd.f32 0.0, %v2124
      %2126 = vmatmul.bf16.gmra.mxu0 %v2008
      %v2127 = vpop.f32.mrf.mxu0
      %v2128 = vadd.f32 0.0, %v2127
      %v2129 = vpop.f32.mrf.mxu0
      %v2130 = vadd.f32 0.0, %v2129
      %2131 = vmatmul.bf16.gmra.mxu0 %v2010
      %v2132 = vpop.f32.mrf.mxu0
      %v2133 = vadd.f32 0.0, %v2132
      %v2134 = vpop.f32.mrf.mxu0
      %v2135 = vadd.f32 0.0, %v2134
      %2136 = vmatmul.bf16.gmra.mxu0 %v2012
      %v2137 = vpop.f32.mrf.mxu0
      %v2138 = vadd.f32 0.0, %v2137
      %v2139 = vpop.f32.mrf.mxu0
      %v2140 = vadd.f32 0.0, %v2139
      %2141 = vmatmul.bf16.gmra.mxu0 %v2014
      %v2142 = vpop.f32.mrf.mxu0
      %v2143 = vadd.f32 0.0, %v2142
      %v2144 = vpop.f32.mrf.mxu0
      %v2145 = vadd.f32 0.0, %v2144
      %2146 = vmatmul.bf16.gmra.mxu0 %v2016
      %v2147 = vpop.f32.mrf.mxu0
      %v2148 = vadd.f32 0.0, %v2147
      %v2149 = vpop.f32.mrf.mxu0
      %v2150 = vadd.f32 0.0, %v2149
      %2151 = vmatmul.bf16.gmra.mxu0 %v2018
      %v2152 = vpop.f32.mrf.mxu0
      %v2153 = vadd.f32 0.0, %v2152
      %v2154 = vpop.f32.mrf.mxu0
      %v2155 = vadd.f32 0.0, %v2154
      %2156 = vmatmul.bf16.gmra.mxu0 %v2020
      %v2157 = vpop.f32.mrf.mxu0
      %v2158 = vadd.f32 0.0, %v2157
      %v2159 = vpop.f32.mrf.mxu0
      %v2160 = vadd.f32 0.0, %v2159
      %2161 = vmatmul.bf16.gmra.mxu0 %v2022
      %v2162 = vpop.f32.mrf.mxu0
      %v2163 = vadd.f32 0.0, %v2162
      %v2164 = vpop.f32.mrf.mxu0
      %v2165 = vadd.f32 0.0, %v2164
      %2166 = vmatmul.bf16.gmra.mxu0 %v2024
      %v2167 = vpop.f32.mrf.mxu0
      %v2168 = vadd.f32 0.0, %v2167
      %v2169 = vpop.f32.mrf.mxu0
      %v2170 = vadd.f32 0.0, %v2169
      %2171 = vmatmul.bf16.gmra.mxu0 %v2026
      %v2172 = vpop.f32.mrf.mxu0
      %v2173 = vadd.f32 0.0, %v2172
      %v2174 = vpop.f32.mrf.mxu0
      %v2175 = vadd.f32 0.0, %v2174
      %2176 = vmatmul.bf16.gmra.mxu0 %v2028
      %v2177 = vpop.f32.mrf.mxu0
      %v2178 = vadd.f32 0.0, %v2177
      %v2179 = vpop.f32.mrf.mxu0
      %v2180 = vadd.f32 0.0, %v2179
      %2181 = vmatmul.bf16.gmra.mxu0 %v2030
      %v2182 = vpop.f32.mrf.mxu0
      %v2183 = vadd.f32 0.0, %v2182
      %v2184 = vpop.f32.mrf.mxu0
      %v2185 = vadd.f32 0.0, %v2184
      %2186 = vmatmul.bf16.gmra.mxu0 %v2032
      %v2187 = vpop.f32.mrf.mxu0
      %v2188 = vadd.f32 0.0, %v2187
      %v2189 = vpop.f32.mrf.mxu0
      %v2190 = vadd.f32 0.0, %v2189
      %2191 = vmatmul.bf16.gmra.mxu0 %v2034
      %v2192 = vpop.f32.mrf.mxu0
      %v2193 = vadd.f32 0.0, %v2192
      %v2194 = vpop.f32.mrf.mxu0
      %v2195 = vadd.f32 0.0, %v2194
      %2196 = vmatmul.bf16.gmra.mxu0 %v2036
      %v2197 = vpop.f32.mrf.mxu0
      %v2198 = vadd.f32 0.0, %v2197
      %v2199 = vpop.f32.mrf.mxu0
      %v2200 = vadd.f32 0.0, %v2199
      %2201 = vdwg.mxu0
      %v2202 = vadd.f32 %v1942, %v2113
      %v2203 = vadd.f32 %v1943, %v2115
      %v2204 = vadd.f32 %v1944, %v2118
      %v2205 = vadd.f32 %v1945, %v2120
      %v2206 = vadd.f32 %v1946, %v2123
      %v2207 = vadd.f32 %v1947, %v2125
      %v2208 = vadd.f32 %v1948, %v2128
      %v2209 = vadd.f32 %v1949, %v2130
      %v2210 = vadd.f32 %v1950, %v2133
      %v2211 = vadd.f32 %v1951, %v2135
      %v2212 = vadd.f32 %v1952, %v2138
      %v2213 = vadd.f32 %v1953, %v2140
      %v2214 = vadd.f32 %v1954, %v2143
      %v2215 = vadd.f32 %v1955, %v2145
      %v2216 = vadd.f32 %v1956, %v2148
      %v2217 = vadd.f32 %v1957, %v2150
      %v2218 = vadd.f32 %v1958, %v2153
      %v2219 = vadd.f32 %v1959, %v2155
      %v2220 = vadd.f32 %v1960, %v2158
      %v2221 = vadd.f32 %v1961, %v2160
      %v2222 = vadd.f32 %v1962, %v2163
      %v2223 = vadd.f32 %v1963, %v2165
      %v2224 = vadd.f32 %v1964, %v2168
      %v2225 = vadd.f32 %v1965, %v2170
      %v2226 = vadd.f32 %v1966, %v2173
      %v2227 = vadd.f32 %v1967, %v2175
      %v2228 = vadd.f32 %v1968, %v2178
      %v2229 = vadd.f32 %v1969, %v2180
      %v2230 = vadd.f32 %v1970, %v2183
      %v2231 = vadd.f32 %v1971, %v2185
      %v2232 = vadd.f32 %v1972, %v2188
      %v2233 = vadd.f32 %v1973, %v2190
      %v2234 = vadd.f32 %v1974, %v2193
      %v2235 = vadd.f32 %v1975, %v2195
      %v2236 = vadd.f32 %v1976, %v2198
      %v2237 = vadd.f32 %v1977, %v2200
      %v2238 = vld [vmem:[%s270 + $0x10] sm:$0xc]
      %v2239 = vld [vmem:[%s270 + $0x14] sm:$0xf]
      %v2240 = vld [vmem:[%s270 + $0x18] sm:$0xf]
      %v2241 = vld [vmem:[%s270 + $0x1c] sm:$0xf]
      %v2242 = vld [vmem:[%s270 + $0x20] sm:$0xf]
      %v2243 = vld [vmem:[%s270 + $0x24] sm:$0xf]
      %v2244 = vld [vmem:[%s270 + $0x28] sm:$0xf]
      %v2245 = vld [vmem:[%s270 + $0x2c] sm:$0xf]
      %v2246 = vld [vmem:[%s270 + $0x30] sm:$0xf]
      %v2247 = vld [vmem:[%s270 + $0x34] sm:$0xf]
      %v2248 = vld [vmem:[%s270 + $0x38] sm:$0xf]
      %v2249 = vld [vmem:[%s270 + $0x3c] sm:$0xf]
      %v2250 = vld [vmem:[%s270 + $0x40] sm:$0xf]
      %v2251 = vld [vmem:[%s270 + $0x44] sm:$0xf]
      %v2252 = vld [vmem:[%s270 + $0x48] sm:$0xf]
      %v2253 = vld [vmem:[%s270 + $0x4c] sm:$0xf]
      %v2254 = vld [vmem:[%s270 + $0x50] sm:$0xf]
      %v2255 = vld [vmem:[%s270 + $0x54] sm:$0xf]
      %v2256 = vld [vmem:[%s270 + $0x58] sm:$0xf]
      %v2257 = vld [vmem:[%s270 + $0x5c] sm:$0xf]
      %v2258 = vld [vmem:[%s270 + $0x60] sm:$0xf]
      %v2259 = vld [vmem:[%s270 + $0x64] sm:$0xf]
      %v2260 = vld [vmem:[%s270 + $0x68] sm:$0xf]
      %v2261 = vld [vmem:[%s270 + $0x6c] sm:$0xf]
      %v2262 = vld [vmem:[%s270 + $0x70] sm:$0xf]
      %v2263 = vld [vmem:[%s270 + $0x74] sm:$0xf]
      %v2264 = vld [vmem:[%s270 + $0x78] sm:$0xf]
      %v2265 = vld [vmem:[%s270 + $0x7c] sm:$0xf]
      %v2266 = vld [vmem:[%s270 + $0x80] sm:$0xf]
      %v2267 = vld [vmem:[%s270 + $0x84] sm:$0xf]
      %v2268 = vld [vmem:[%s270 + $0x88] sm:$0xf]
      %v2269 = vld [vmem:[%s270 + $0x8c] sm:$0xf]
      %v2270 = vld [vmem:[%s270 + $0x90] sm:$0xf]
      %v2271 = vld [vmem:[%s270 + $0x94] sm:$0xf]
      %v2272 = vld [vmem:[%s270 + $0x98] sm:$0xf]
      %v2273 = vld [vmem:[%s270 + $0x9c] sm:$0xf]
      %v2274 = vld [vmem:[%s270 + $0xa0] sm:$0x3]
      %s2275 = scalar_lea.vmem %s279, 384
      %v2276 = vld [vmem:[%s2275] sm:$0xf]
      %v2277 = vld [vmem:[%s2275 + $0x4] sm:$0xf]
      %v2278 = vld [vmem:[%s2275 + $0x8] sm:$0xf]
      %v2279 = vld [vmem:[%s2275 + $0xc] sm:$0xf]
      %v2280 = vld [vmem:[%s2275 + $0x10] sm:$0xf]
      %v2281 = vld [vmem:[%s2275 + $0x14] sm:$0xf]
      %v2282 = vld [vmem:[%s2275 + $0x18] sm:$0xf]
      %v2283 = vld [vmem:[%s2275 + $0x1c] sm:$0xf]
      %v2284 = vld [vmem:[%s2275 + $0x20] sm:$0xf]
      %v2285 = vld [vmem:[%s2275 + $0x24] sm:$0xf]
      %v2286 = vld [vmem:[%s2275 + $0x28] sm:$0xf]
      %v2287 = vld [vmem:[%s2275 + $0x2c] sm:$0xf]
      %v2288 = vld [vmem:[%s2275 + $0x30] sm:$0xf]
      %v2289 = vld [vmem:[%s2275 + $0x34] sm:$0xf]
      %v2290 = vld [vmem:[%s2275 + $0x38] sm:$0xf]
      %v2291 = vld [vmem:[%s2275 + $0x3c] sm:$0xf]
      %v2329 = vunpack.c.l.b16 %v2238
      %v2330 = vunpack.c.l.b16 %v2239
      %v2331 = vunpack.c.l.b16 %v2240
      %v2332 = vunpack.c.l.b16 %v2241
      %v2333 = vunpack.c.l.b16 %v2242
      %v2334 = vunpack.c.l.b16 %v2243
      %v2335 = vunpack.c.l.b16 %v2244
      %v2336 = vunpack.c.l.b16 %v2245
      %v2337 = vunpack.c.l.b16 %v2246
      %v2338 = vunpack.c.l.b16 %v2247
      %v2339 = vunpack.c.l.b16 %v2248
      %v2340 = vunpack.c.l.b16 %v2249
      %v2341 = vunpack.c.l.b16 %v2250
      %v2342 = vunpack.c.l.b16 %v2251
      %v2343 = vunpack.c.l.b16 %v2252
      %v2344 = vunpack.c.l.b16 %v2253
      %v2345 = vunpack.c.l.b16 %v2254
      %v2346 = vunpack.c.l.b16 %v2255
      %v2347 = vunpack.c.l.b16 %v2256
      %v2348 = vunpack.c.l.b16 %v2257
      %v2349 = vunpack.c.l.b16 %v2258
      %v2350 = vunpack.c.l.b16 %v2259
      %v2351 = vunpack.c.l.b16 %v2260
      %v2352 = vunpack.c.l.b16 %v2261
      %v2353 = vunpack.c.l.b16 %v2262
      %v2354 = vunpack.c.l.b16 %v2263
      %v2355 = vunpack.c.l.b16 %v2264
      %v2356 = vunpack.c.l.b16 %v2265
      %v2357 = vunpack.c.l.b16 %v2266
      %v2358 = vunpack.c.l.b16 %v2267
      %v2359 = vunpack.c.l.b16 %v2268
      %v2360 = vunpack.c.l.b16 %v2269
      %v2361 = vunpack.c.l.b16 %v2270
      %v2362 = vunpack.c.l.b16 %v2271
      %v2363 = vunpack.c.l.b16 %v2272
      %v2364 = vunpack.c.l.b16 %v2273
      %v2365 = vunpack.c.l.b16 %v2274
      %v2366 = vpack.c.b16 %v2330, %v2329
      %v2367 = vpack.c.b16 %v2332, %v2331
      %v2368 = vpack.c.b16 %v2334, %v2333
      %v2369 = vpack.c.b16 %v2336, %v2335
      %v2370 = vpack.c.b16 %v2338, %v2337
      %v2371 = vpack.c.b16 %v2340, %v2339
      %v2372 = vpack.c.b16 %v2342, %v2341
      %v2373 = vpack.c.b16 %v2344, %v2343
      %v2374 = vpack.c.b16 %v2346, %v2345
      %v2375 = vpack.c.b16 %v2348, %v2347
      %v2376 = vpack.c.b16 %v2350, %v2349
      %v2377 = vpack.c.b16 %v2352, %v2351
      %v2378 = vpack.c.b16 %v2354, %v2353
      %v2379 = vpack.c.b16 %v2356, %v2355
      %v2380 = vpack.c.b16 %v2358, %v2357
      %v2381 = vpack.c.b16 %v2360, %v2359
      %v2382 = vpack.c.b16 %v2362, %v2361
      %v2383 = vpack.c.b16 %v2364, %v2363
      %v2384 = vpack.c.b16 %v2365, %v2365
      %v2385 = vrot.slane %v2366, 2
      %v2386 = vrot.slane %v2367, 2
      %v2387 = vsel %vm1999, %v2385, %v2386
      %v2388 = vrot.slane %v2368, 2
      %v2389 = vsel %vm1999, %v2386, %v2388
      %v2390 = vrot.slane %v2369, 2
      %v2391 = vsel %vm1999, %v2388, %v2390
      %v2392 = vrot.slane %v2370, 2
      %v2393 = vsel %vm1999, %v2390, %v2392
      %v2394 = vrot.slane %v2371, 2
      %v2395 = vsel %vm1999, %v2392, %v2394
      %v2396 = vrot.slane %v2372, 2
      %v2397 = vsel %vm1999, %v2394, %v2396
      %v2398 = vrot.slane %v2373, 2
      %v2399 = vsel %vm1999, %v2396, %v2398
      %v2400 = vrot.slane %v2374, 2
      %v2401 = vsel %vm1999, %v2398, %v2400
      %v2402 = vrot.slane %v2375, 2
      %v2403 = vsel %vm1999, %v2400, %v2402
      %v2404 = vrot.slane %v2376, 2
      %v2405 = vsel %vm1999, %v2402, %v2404
      %v2406 = vrot.slane %v2377, 2
      %v2407 = vsel %vm1999, %v2404, %v2406
      %v2408 = vrot.slane %v2378, 2
      %v2409 = vsel %vm1999, %v2406, %v2408
      %v2410 = vrot.slane %v2379, 2
      %v2411 = vsel %vm1999, %v2408, %v2410
      %v2412 = vrot.slane %v2380, 2
      %v2413 = vsel %vm1999, %v2410, %v2412
      %v2414 = vrot.slane %v2381, 2
      %v2415 = vsel %vm1999, %v2412, %v2414
      %v2416 = vrot.slane %v2382, 2
      %v2417 = vsel %vm1999, %v2414, %v2416
      %v2418 = vrot.slane %v2383, 2
      %v2419 = vsel %vm1999, %v2416, %v2418
      %v2420 = vrot.slane %v2384, 2
      %v2421 = vsel %vm1999, %v2418, %v2420
      %v2456 = vunpack.c.l.b16 %v2276
      %v2457 = vunpack.c.l.b16 %v2277
      %v2458 = vunpack.c.l.b16 %v2278
      %v2459 = vunpack.c.l.b16 %v2279
      %v2460 = vunpack.c.l.b16 %v2280
      %v2461 = vunpack.c.l.b16 %v2281
      %v2462 = vunpack.c.l.b16 %v2282
      %v2463 = vunpack.c.l.b16 %v2283
      %v2464 = vunpack.c.l.b16 %v2284
      %v2465 = vunpack.c.l.b16 %v2285
      %v2466 = vunpack.c.l.b16 %v2286
      %v2467 = vunpack.c.l.b16 %v2287
      %v2468 = vunpack.c.l.b16 %v2288
      %v2469 = vunpack.c.l.b16 %v2289
      %v2470 = vunpack.c.l.b16 %v2290
      %v2471 = vunpack.c.l.b16 %v2291
      %v2472 = vpack.c.b16 %v2457, %v2456
      %v2473 = vpack.c.b16 %v2459, %v2458
      %v2474 = vpack.c.b16 %v2461, %v2460
      %v2475 = vpack.c.b16 %v2463, %v2462
      %v2476 = vpack.c.b16 %v2465, %v2464
      %v2477 = vpack.c.b16 %v2467, %v2466
      %v2478 = vpack.c.b16 %v2469, %v2468
      %v2479 = vpack.c.b16 %v2471, %v2470
      %2488 = vmatpush.bf16.msra.mxu0 %v2479
      %2489 = vmatpush.bf16.msra.mxu0 %v2478
      %2490 = vmatpush.bf16.msra.mxu0 %v2477
      %2491 = vmatpush.bf16.msra.mxu0 %v2476
      %2492 = vmatpush.bf16.msra.mxu0 %v2475
      %2493 = vmatpush.bf16.msra.mxu0 %v2474
      %2494 = vmatpush.bf16.msra.mxu0 %v2473
      %2495 = vmatpush.bf16.msra.mxu0 %v2472
      %2496 = vmatmul.bf16.gmra.mxu0 %v2387
      %v2497 = vpop.f32.mrf.mxu0
      %v2498 = vadd.f32 0.0, %v2497
      %v2499 = vpop.f32.mrf.mxu0
      %v2500 = vadd.f32 0.0, %v2499
      %2501 = vmatmul.bf16.gmra.mxu0 %v2389
      %v2502 = vpop.f32.mrf.mxu0
      %v2503 = vadd.f32 0.0, %v2502
      %v2504 = vpop.f32.mrf.mxu0
      %v2505 = vadd.f32 0.0, %v2504
      %2506 = vmatmul.bf16.gmra.mxu0 %v2391
      %v2507 = vpop.f32.mrf.mxu0
      %v2508 = vadd.f32 0.0, %v2507
      %v2509 = vpop.f32.mrf.mxu0
      %v2510 = vadd.f32 0.0, %v2509
      %2511 = vmatmul.bf16.gmra.mxu0 %v2393
      %v2512 = vpop.f32.mrf.mxu0
      %v2513 = vadd.f32 0.0, %v2512
      %v2514 = vpop.f32.mrf.mxu0
      %v2515 = vadd.f32 0.0, %v2514
      %2516 = vmatmul.bf16.gmra.mxu0 %v2395
      %v2517 = vpop.f32.mrf.mxu0
      %v2518 = vadd.f32 0.0, %v2517
      %v2519 = vpop.f32.mrf.mxu0
      %v2520 = vadd.f32 0.0, %v2519
      %2521 = vmatmul.bf16.gmra.mxu0 %v2397
      %v2522 = vpop.f32.mrf.mxu0
      %v2523 = vadd.f32 0.0, %v2522
      %v2524 = vpop.f32.mrf.mxu0
      %v2525 = vadd.f32 0.0, %v2524
      %2526 = vmatmul.bf16.gmra.mxu0 %v2399
      %v2527 = vpop.f32.mrf.mxu0
      %v2528 = vadd.f32 0.0, %v2527
      %v2529 = vpop.f32.mrf.mxu0
      %v2530 = vadd.f32 0.0, %v2529
      %2531 = vmatmul.bf16.gmra.mxu0 %v2401
      %v2532 = vpop.f32.mrf.mxu0
      %v2533 = vadd.f32 0.0, %v2532
      %v2534 = vpop.f32.mrf.mxu0
      %v2535 = vadd.f32 0.0, %v2534
      %2536 = vmatmul.bf16.gmra.mxu0 %v2403
      %v2537 = vpop.f32.mrf.mxu0
      %v2538 = vadd.f32 0.0, %v2537
      %v2539 = vpop.f32.mrf.mxu0
      %v2540 = vadd.f32 0.0, %v2539
      %2541 = vmatmul.bf16.gmra.mxu0 %v2405
      %v2542 = vpop.f32.mrf.mxu0
      %v2543 = vadd.f32 0.0, %v2542
      %v2544 = vpop.f32.mrf.mxu0
      %v2545 = vadd.f32 0.0, %v2544
      %2546 = vmatmul.bf16.gmra.mxu0 %v2407
      %v2547 = vpop.f32.mrf.mxu0
      %v2548 = vadd.f32 0.0, %v2547
      %v2549 = vpop.f32.mrf.mxu0
      %v2550 = vadd.f32 0.0, %v2549
      %2551 = vmatmul.bf16.gmra.mxu0 %v2409
      %v2552 = vpop.f32.mrf.mxu0
      %v2553 = vadd.f32 0.0, %v2552
      %v2554 = vpop.f32.mrf.mxu0
      %v2555 = vadd.f32 0.0, %v2554
      %2556 = vmatmul.bf16.gmra.mxu0 %v2411
      %v2557 = vpop.f32.mrf.mxu0
      %v2558 = vadd.f32 0.0, %v2557
      %v2559 = vpop.f32.mrf.mxu0
      %v2560 = vadd.f32 0.0, %v2559
      %2561 = vmatmul.bf16.gmra.mxu0 %v2413
      %v2562 = vpop.f32.mrf.mxu0
      %v2563 = vadd.f32 0.0, %v2562
      %v2564 = vpop.f32.mrf.mxu0
      %v2565 = vadd.f32 0.0, %v2564
      %2566 = vmatmul.bf16.gmra.mxu0 %v2415
      %v2567 = vpop.f32.mrf.mxu0
      %v2568 = vadd.f32 0.0, %v2567
      %v2569 = vpop.f32.mrf.mxu0
      %v2570 = vadd.f32 0.0, %v2569
      %2571 = vmatmul.bf16.gmra.mxu0 %v2417
      %v2572 = vpop.f32.mrf.mxu0
      %v2573 = vadd.f32 0.0, %v2572
      %v2574 = vpop.f32.mrf.mxu0
      %v2575 = vadd.f32 0.0, %v2574
      %2576 = vmatmul.bf16.gmra.mxu0 %v2419
      %v2577 = vpop.f32.mrf.mxu0
      %v2578 = vadd.f32 0.0, %v2577
      %v2579 = vpop.f32.mrf.mxu0
      %v2580 = vadd.f32 0.0, %v2579
      %2581 = vmatmul.bf16.gmra.mxu0 %v2421
      %v2582 = vpop.f32.mrf.mxu0
      %v2583 = vadd.f32 0.0, %v2582
      %v2584 = vpop.f32.mrf.mxu0
      %v2585 = vadd.f32 0.0, %v2584
      %2586 = vdwg.mxu0
      %v2587 = vadd.f32 %v2202, %v2498
      %v2588 = vadd.f32 %v2203, %v2500
      %v2589 = vadd.f32 %v2204, %v2503
      %v2590 = vadd.f32 %v2205, %v2505
      %v2591 = vadd.f32 %v2206, %v2508
      %v2592 = vadd.f32 %v2207, %v2510
      %v2593 = vadd.f32 %v2208, %v2513
      %v2594 = vadd.f32 %v2209, %v2515
      %v2595 = vadd.f32 %v2210, %v2518
      %v2596 = vadd.f32 %v2211, %v2520
      %v2597 = vadd.f32 %v2212, %v2523
      %v2598 = vadd.f32 %v2213, %v2525
      %v2599 = vadd.f32 %v2214, %v2528
      %v2600 = vadd.f32 %v2215, %v2530
      %v2601 = vadd.f32 %v2216, %v2533
      %v2602 = vadd.f32 %v2217, %v2535
      %v2603 = vadd.f32 %v2218, %v2538
      %v2604 = vadd.f32 %v2219, %v2540
      %v2605 = vadd.f32 %v2220, %v2543
      %v2606 = vadd.f32 %v2221, %v2545
      %v2607 = vadd.f32 %v2222, %v2548
      %v2608 = vadd.f32 %v2223, %v2550
      %v2609 = vadd.f32 %v2224, %v2553
      %v2610 = vadd.f32 %v2225, %v2555
      %v2611 = vadd.f32 %v2226, %v2558
      %v2612 = vadd.f32 %v2227, %v2560
      %v2613 = vadd.f32 %v2228, %v2563
      %v2614 = vadd.f32 %v2229, %v2565
      %v2615 = vadd.f32 %v2230, %v2568
      %v2616 = vadd.f32 %v2231, %v2570
      %v2617 = vadd.f32 %v2232, %v2573
      %v2618 = vadd.f32 %v2233, %v2575
      %v2619 = vadd.f32 %v2234, %v2578
      %v2620 = vadd.f32 %v2235, %v2580
      %v2621 = vadd.f32 %v2236, %v2583
      %v2622 = vadd.f32 %v2237, %v2585
      %v2623 = vld [vmem:[%s270 + $0xa0] sm:$0x7]
      %s2624 = scalar_lea.vmem %s279, 448
      %v2625 = vld [vmem:[%s2624] sm:$0xf]
      %v2626 = vld [vmem:[%s2624 + $0x4] sm:$0xf]
      %v2627 = vld [vmem:[%s2624 + $0x8] sm:$0xf]
      %v2628 = vld [vmem:[%s2624 + $0xc] sm:$0xf]
      %v2629 = vld [vmem:[%s2624 + $0x10] sm:$0xf]
      %v2630 = vld [vmem:[%s2624 + $0x14] sm:$0xf]
      %v2631 = vld [vmem:[%s2624 + $0x18] sm:$0xf]
      %v2632 = vld [vmem:[%s2624 + $0x1c] sm:$0xf]
      %v2633 = vld [vmem:[%s2624 + $0x20] sm:$0xf]
      %v2634 = vld [vmem:[%s2624 + $0x24] sm:$0xf]
      %v2635 = vld [vmem:[%s2624 + $0x28] sm:$0xf]
      %v2636 = vld [vmem:[%s2624 + $0x2c] sm:$0xf]
      %v2637 = vld [vmem:[%s2624 + $0x30] sm:$0xf]
      %v2638 = vld [vmem:[%s2624 + $0x34] sm:$0xf]
      %v2639 = vld [vmem:[%s2624 + $0x38] sm:$0xf]
      %v2640 = vld [vmem:[%s2624 + $0x3c] sm:$0xf]
      %v2642 = vunpack.c.l.b16 %v2623
      %v2643 = vpack.c.b16 %v2642, %v2642
      %vm2644 = vsmask.f32 5376
      %v2646 = vshrl.u32 %v2366, 16
      %v2648 = vrot.slane %v2646, 2
      %v2649 = vshll.u32 %v2366, 16
      %v2651 = vrot.slane %v2649, 3
      %v2652 = vor.u32 %v2648, %v2651
      %v2654 = vshrl.u32 %v2367, 16
      %v2656 = vrot.slane %v2654, 2
      %v2657 = vshll.u32 %v2367, 16
      %v2659 = vrot.slane %v2657, 3
      %v2660 = vor.u32 %v2656, %v2659
      %v2661 = vsel %vm2644, %v2652, %v2660
      %v2663 = vshrl.u32 %v2368, 16
      %v2665 = vrot.slane %v2663, 2
      %v2666 = vshll.u32 %v2368, 16
      %v2668 = vrot.slane %v2666, 3
      %v2669 = vor.u32 %v2665, %v2668
      %v2670 = vsel %vm2644, %v2660, %v2669
      %v2672 = vshrl.u32 %v2369, 16
      %v2674 = vrot.slane %v2672, 2
      %v2675 = vshll.u32 %v2369, 16
      %v2677 = vrot.slane %v2675, 3
      %v2678 = vor.u32 %v2674, %v2677
      %v2679 = vsel %vm2644, %v2669, %v2678
      %v2681 = vshrl.u32 %v2370, 16
      %v2683 = vrot.slane %v2681, 2
      %v2684 = vshll.u32 %v2370, 16
      %v2686 = vrot.slane %v2684, 3
      %v2687 = vor.u32 %v2683, %v2686
      %v2688 = vsel %vm2644, %v2678, %v2687
      %v2690 = vshrl.u32 %v2371, 16
      %v2692 = vrot.slane %v2690, 2
      %v2693 = vshll.u32 %v2371, 16
      %v2695 = vrot.slane %v2693, 3
      %v2696 = vor.u32 %v2692, %v2695
      %v2697 = vsel %vm2644, %v2687, %v2696
      %v2699 = vshrl.u32 %v2372, 16
      %v2701 = vrot.slane %v2699, 2
      %v2702 = vshll.u32 %v2372, 16
      %v2704 = vrot.slane %v2702, 3
      %v2705 = vor.u32 %v2701, %v2704
      %v2706 = vsel %vm2644, %v2696, %v2705
      %v2708 = vshrl.u32 %v2373, 16
      %v2710 = vrot.slane %v2708, 2
      %v2711 = vshll.u32 %v2373, 16
      %v2713 = vrot.slane %v2711, 3
      %v2714 = vor.u32 %v2710, %v2713
      %v2715 = vsel %vm2644, %v2705, %v2714
      %v2717 = vshrl.u32 %v2374, 16
      %v2719 = vrot.slane %v2717, 2
      %v2720 = vshll.u32 %v2374, 16
      %v2722 = vrot.slane %v2720, 3
      %v2723 = vor.u32 %v2719, %v2722
      %v2724 = vsel %vm2644, %v2714, %v2723
      %v2726 = vshrl.u32 %v2375, 16
      %v2728 = vrot.slane %v2726, 2
      %v2729 = vshll.u32 %v2375, 16
      %v2731 = vrot.slane %v2729, 3
      %v2732 = vor.u32 %v2728, %v2731
      %v2733 = vsel %vm2644, %v2723, %v2732
      %v2735 = vshrl.u32 %v2376, 16
      %v2737 = vrot.slane %v2735, 2
      %v2738 = vshll.u32 %v2376, 16
      %v2740 = vrot.slane %v2738, 3
      %v2741 = vor.u32 %v2737, %v2740
      %v2742 = vsel %vm2644, %v2732, %v2741
      %v2744 = vshrl.u32 %v2377, 16
      %v2746 = vrot.slane %v2744, 2
      %v2747 = vshll.u32 %v2377, 16
      %v2749 = vrot.slane %v2747, 3
      %v2750 = vor.u32 %v2746, %v2749
      %v2751 = vsel %vm2644, %v2741, %v2750
      %v2753 = vshrl.u32 %v2378, 16
      %v2755 = vrot.slane %v2753, 2
      %v2756 = vshll.u32 %v2378, 16
      %v2758 = vrot.slane %v2756, 3
      %v2759 = vor.u32 %v2755, %v2758
      %v2760 = vsel %vm2644, %v2750, %v2759
      %v2762 = vshrl.u32 %v2379, 16
      %v2764 = vrot.slane %v2762, 2
      %v2765 = vshll.u32 %v2379, 16
      %v2767 = vrot.slane %v2765, 3
      %v2768 = vor.u32 %v2764, %v2767
      %v2769 = vsel %vm2644, %v2759, %v2768
      %v2771 = vshrl.u32 %v2380, 16
      %v2773 = vrot.slane %v2771, 2
      %v2774 = vshll.u32 %v2380, 16
      %v2776 = vrot.slane %v2774, 3
      %v2777 = vor.u32 %v2773, %v2776
      %v2778 = vsel %vm2644, %v2768, %v2777
      %v2780 = vshrl.u32 %v2381, 16
      %v2782 = vrot.slane %v2780, 2
      %v2783 = vshll.u32 %v2381, 16
      %v2785 = vrot.slane %v2783, 3
      %v2786 = vor.u32 %v2782, %v2785
      %v2787 = vsel %vm2644, %v2777, %v2786
      %v2789 = vshrl.u32 %v2382, 16
      %v2791 = vrot.slane %v2789, 2
      %v2792 = vshll.u32 %v2382, 16
      %v2794 = vrot.slane %v2792, 3
      %v2795 = vor.u32 %v2791, %v2794
      %v2796 = vsel %vm2644, %v2786, %v2795
      %v2798 = vshrl.u32 %v2383, 16
      %v2800 = vrot.slane %v2798, 2
      %v2801 = vshll.u32 %v2383, 16
      %v2803 = vrot.slane %v2801, 3
      %v2804 = vor.u32 %v2800, %v2803
      %v2805 = vsel %vm2644, %v2795, %v2804
      %v2807 = vshrl.u32 %v2643, 16
      %v2809 = vrot.slane %v2807, 2
      %v2810 = vshll.u32 %v2643, 16
      %v2812 = vrot.slane %v2810, 3
      %v2813 = vor.u32 %v2809, %v2812
      %v2814 = vsel %vm2644, %v2804, %v2813
      %v2849 = vunpack.c.l.b16 %v2625
      %v2850 = vunpack.c.l.b16 %v2626
      %v2851 = vunpack.c.l.b16 %v2627
      %v2852 = vunpack.c.l.b16 %v2628
      %v2853 = vunpack.c.l.b16 %v2629
      %v2854 = vunpack.c.l.b16 %v2630
      %v2855 = vunpack.c.l.b16 %v2631
      %v2856 = vunpack.c.l.b16 %v2632
      %v2857 = vunpack.c.l.b16 %v2633
      %v2858 = vunpack.c.l.b16 %v2634
      %v2859 = vunpack.c.l.b16 %v2635
      %v2860 = vunpack.c.l.b16 %v2636
      %v2861 = vunpack.c.l.b16 %v2637
      %v2862 = vunpack.c.l.b16 %v2638
      %v2863 = vunpack.c.l.b16 %v2639
      %v2864 = vunpack.c.l.b16 %v2640
      %v2865 = vpack.c.b16 %v2850, %v2849
      %v2866 = vpack.c.b16 %v2852, %v2851
      %v2867 = vpack.c.b16 %v2854, %v2853
      %v2868 = vpack.c.b16 %v2856, %v2855
      %v2869 = vpack.c.b16 %v2858, %v2857
      %v2870 = vpack.c.b16 %v2860, %v2859
      %v2871 = vpack.c.b16 %v2862, %v2861
      %v2872 = vpack.c.b16 %v2864, %v2863
      %2881 = vmatpush.bf16.msra.mxu0 %v2872
      %2882 = vmatpush.bf16.msra.mxu0 %v2871
      %2883 = vmatpush.bf16.msra.mxu0 %v2870
      %2884 = vmatpush.bf16.msra.mxu0 %v2869
      %2885 = vmatpush.bf16.msra.mxu0 %v2868
      %2886 = vmatpush.bf16.msra.mxu0 %v2867
      %2887 = vmatpush.bf16.msra.mxu0 %v2866
      %2888 = vmatpush.bf16.msra.mxu0 %v2865
      %2889 = vmatmul.bf16.gmra.mxu0 %v2661
      %v2890 = vpop.f32.mrf.mxu0
      %v2891 = vadd.f32 0.0, %v2890
      %v2892 = vpop.f32.mrf.mxu0
      %v2893 = vadd.f32 0.0, %v2892
      %2894 = vmatmul.bf16.gmra.mxu0 %v2670
      %v2895 = vpop.f32.mrf.mxu0
      %v2896 = vadd.f32 0.0, %v2895
      %v2897 = vpop.f32.mrf.mxu0
      %v2898 = vadd.f32 0.0, %v2897
      %2899 = vmatmul.bf16.gmra.mxu0 %v2679
      %v2900 = vpop.f32.mrf.mxu0
      %v2901 = vadd.f32 0.0, %v2900
      %v2902 = vpop.f32.mrf.mxu0
      %v2903 = vadd.f32 0.0, %v2902
      %2904 = vmatmul.bf16.gmra.mxu0 %v2688
      %v2905 = vpop.f32.mrf.mxu0
      %v2906 = vadd.f32 0.0, %v2905
      %v2907 = vpop.f32.mrf.mxu0
      %v2908 = vadd.f32 0.0, %v2907
      %2909 = vmatmul.bf16.gmra.mxu0 %v2697
      %v2910 = vpop.f32.mrf.mxu0
      %v2911 = vadd.f32 0.0, %v2910
      %v2912 = vpop.f32.mrf.mxu0
      %v2913 = vadd.f32 0.0, %v2912
      %2914 = vmatmul.bf16.gmra.mxu0 %v2706
      %v2915 = vpop.f32.mrf.mxu0
      %v2916 = vadd.f32 0.0, %v2915
      %v2917 = vpop.f32.mrf.mxu0
      %v2918 = vadd.f32 0.0, %v2917
      %2919 = vmatmul.bf16.gmra.mxu0 %v2715
      %v2920 = vpop.f32.mrf.mxu0
      %v2921 = vadd.f32 0.0, %v2920
      %v2922 = vpop.f32.mrf.mxu0
      %v2923 = vadd.f32 0.0, %v2922
      %2924 = vmatmul.bf16.gmra.mxu0 %v2724
      %v2925 = vpop.f32.mrf.mxu0
      %v2926 = vadd.f32 0.0, %v2925
      %v2927 = vpop.f32.mrf.mxu0
      %v2928 = vadd.f32 0.0, %v2927
      %2929 = vmatmul.bf16.gmra.mxu0 %v2733
      %v2930 = vpop.f32.mrf.mxu0
      %v2931 = vadd.f32 0.0, %v2930
      %v2932 = vpop.f32.mrf.mxu0
      %v2933 = vadd.f32 0.0, %v2932
      %2934 = vmatmul.bf16.gmra.mxu0 %v2742
      %v2935 = vpop.f32.mrf.mxu0
      %v2936 = vadd.f32 0.0, %v2935
      %v2937 = vpop.f32.mrf.mxu0
      %v2938 = vadd.f32 0.0, %v2937
      %2939 = vmatmul.bf16.gmra.mxu0 %v2751
      %v2940 = vpop.f32.mrf.mxu0
      %v2941 = vadd.f32 0.0, %v2940
      %v2942 = vpop.f32.mrf.mxu0
      %v2943 = vadd.f32 0.0, %v2942
      %2944 = vmatmul.bf16.gmra.mxu0 %v2760
      %v2945 = vpop.f32.mrf.mxu0
      %v2946 = vadd.f32 0.0, %v2945
      %v2947 = vpop.f32.mrf.mxu0
      %v2948 = vadd.f32 0.0, %v2947
      %2949 = vmatmul.bf16.gmra.mxu0 %v2769
      %v2950 = vpop.f32.mrf.mxu0
      %v2951 = vadd.f32 0.0, %v2950
      %v2952 = vpop.f32.mrf.mxu0
      %v2953 = vadd.f32 0.0, %v2952
      %2954 = vmatmul.bf16.gmra.mxu0 %v2778
      %v2955 = vpop.f32.mrf.mxu0
      %v2956 = vadd.f32 0.0, %v2955
      %v2957 = vpop.f32.mrf.mxu0
      %v2958 = vadd.f32 0.0, %v2957
      %2959 = vmatmul.bf16.gmra.mxu0 %v2787
      %v2960 = vpop.f32.mrf.mxu0
      %v2961 = vadd.f32 0.0, %v2960
      %v2962 = vpop.f32.mrf.mxu0
      %v2963 = vadd.f32 0.0, %v2962
      %2964 = vmatmul.bf16.gmra.mxu0 %v2796
      %v2965 = vpop.f32.mrf.mxu0
      %v2966 = vadd.f32 0.0, %v2965
      %v2967 = vpop.f32.mrf.mxu0
      %v2968 = vadd.f32 0.0, %v2967
      %2969 = vmatmul.bf16.gmra.mxu0 %v2805
      %v2970 = vpop.f32.mrf.mxu0
      %v2971 = vadd.f32 0.0, %v2970
      %v2972 = vpop.f32.mrf.mxu0
      %v2973 = vadd.f32 0.0, %v2972
      %2974 = vmatmul.bf16.gmra.mxu0 %v2814
      %v2975 = vpop.f32.mrf.mxu0
      %v2976 = vadd.f32 0.0, %v2975
      %v2977 = vpop.f32.mrf.mxu0
      %v2978 = vadd.f32 0.0, %v2977
      %2979 = vdwg.mxu0
      %v2980 = vadd.f32 %v2587, %v2891
      %v2981 = vadd.f32 %v2588, %v2893
      %v2982 = vadd.f32 %v2589, %v2896
      %v2983 = vadd.f32 %v2590, %v2898
      %v2984 = vadd.f32 %v2591, %v2901
      %v2985 = vadd.f32 %v2592, %v2903
      %v2986 = vadd.f32 %v2593, %v2906
      %v2987 = vadd.f32 %v2594, %v2908
      %v2988 = vadd.f32 %v2595, %v2911
      %v2989 = vadd.f32 %v2596, %v2913
      %v2990 = vadd.f32 %v2597, %v2916
      %v2991 = vadd.f32 %v2598, %v2918
      %v2992 = vadd.f32 %v2599, %v2921
      %v2993 = vadd.f32 %v2600, %v2923
      %v2994 = vadd.f32 %v2601, %v2926
      %v2995 = vadd.f32 %v2602, %v2928
      %v2996 = vadd.f32 %v2603, %v2931
      %v2997 = vadd.f32 %v2604, %v2933
      %v2998 = vadd.f32 %v2605, %v2936
      %v2999 = vadd.f32 %v2606, %v2938
      %v3000 = vadd.f32 %v2607, %v2941
      %v3001 = vadd.f32 %v2608, %v2943
      %v3002 = vadd.f32 %v2609, %v2946
      %v3003 = vadd.f32 %v2610, %v2948
      %v3004 = vadd.f32 %v2611, %v2951
      %v3005 = vadd.f32 %v2612, %v2953
      %v3006 = vadd.f32 %v2613, %v2956
      %v3007 = vadd.f32 %v2614, %v2958
      %v3008 = vadd.f32 %v2615, %v2961
      %v3009 = vadd.f32 %v2616, %v2963
      %v3010 = vadd.f32 %v2617, %v2966
      %v3011 = vadd.f32 %v2618, %v2968
      %v3012 = vadd.f32 %v2619, %v2971
      %v3013 = vadd.f32 %v2620, %v2973
      %v3014 = vadd.f32 %v2621, %v2976
      %v3015 = vadd.f32 %v2622, %v2978
      %v3016 = vld [vmem:[%s270 + $0x10] sm:$0x8]
      %s3017 = scalar_lea.vmem %s279, 512
      %v3018 = vld [vmem:[%s3017] sm:$0xf]
      %v3019 = vld [vmem:[%s3017 + $0x4] sm:$0xf]
      %v3020 = vld [vmem:[%s3017 + $0x8] sm:$0xf]
      %v3021 = vld [vmem:[%s3017 + $0xc] sm:$0xf]
      %v3022 = vld [vmem:[%s3017 + $0x10] sm:$0xf]
      %v3023 = vld [vmem:[%s3017 + $0x14] sm:$0xf]
      %v3024 = vld [vmem:[%s3017 + $0x18] sm:$0xf]
      %v3025 = vld [vmem:[%s3017 + $0x1c] sm:$0xf]
      %v3026 = vld [vmem:[%s3017 + $0x20] sm:$0xf]
      %v3027 = vld [vmem:[%s3017 + $0x24] sm:$0xf]
      %v3028 = vld [vmem:[%s3017 + $0x28] sm:$0xf]
      %v3029 = vld [vmem:[%s3017 + $0x2c] sm:$0xf]
      %v3030 = vld [vmem:[%s3017 + $0x30] sm:$0xf]
      %v3031 = vld [vmem:[%s3017 + $0x34] sm:$0xf]
      %v3032 = vld [vmem:[%s3017 + $0x38] sm:$0xf]
      %v3033 = vld [vmem:[%s3017 + $0x3c] sm:$0xf]
      %v3035 = vunpack.c.l.b16 %v3016
      %v3036 = vpack.c.b16 %v2330, %v3035
      %vm3037 = vcmask 1044480
      %v3038 = vrot.slane %v3036, 3
      %v3039 = vrot.slane %v2367, 3
      %v3040 = vsel %vm3037, %v3038, %v3039
      %v3041 = vrot.slane %v2368, 3
      %v3042 = vsel %vm3037, %v3039, %v3041
      %v3043 = vrot.slane %v2369, 3
      %v3044 = vsel %vm3037, %v3041, %v3043
      %v3045 = vrot.slane %v2370, 3
      %v3046 = vsel %vm3037, %v3043, %v3045
      %v3047 = vrot.slane %v2371, 3
      %v3048 = vsel %vm3037, %v3045, %v3047
      %v3049 = vrot.slane %v2372, 3
      %v3050 = vsel %vm3037, %v3047, %v3049
      %v3051 = vrot.slane %v2373, 3
      %v3052 = vsel %vm3037, %v3049, %v3051
      %v3053 = vrot.slane %v2374, 3
      %v3054 = vsel %vm3037, %v3051, %v3053
      %v3055 = vrot.slane %v2375, 3
      %v3056 = vsel %vm3037, %v3053, %v3055
      %v3057 = vrot.slane %v2376, 3
      %v3058 = vsel %vm3037, %v3055, %v3057
      %v3059 = vrot.slane %v2377, 3
      %v3060 = vsel %vm3037, %v3057, %v3059
      %v3061 = vrot.slane %v2378, 3
      %v3062 = vsel %vm3037, %v3059, %v3061
      %v3063 = vrot.slane %v2379, 3
      %v3064 = vsel %vm3037, %v3061, %v3063
      %v3065 = vrot.slane %v2380, 3
      %v3066 = vsel %vm3037, %v3063, %v3065
      %v3067 = vrot.slane %v2381, 3
      %v3068 = vsel %vm3037, %v3065, %v3067
      %v3069 = vrot.slane %v2382, 3
      %v3070 = vsel %vm3037, %v3067, %v3069
      %v3071 = vrot.slane %v2383, 3
      %v3072 = vsel %vm3037, %v3069, %v3071
      %v3073 = vrot.slane %v2643, 3
      %v3074 = vsel %vm3037, %v3071, %v3073
      %v3109 = vunpack.c.l.b16 %v3018
      %v3110 = vunpack.c.l.b16 %v3019
      %v3111 = vunpack.c.l.b16 %v3020
      %v3112 = vunpack.c.l.b16 %v3021
      %v3113 = vunpack.c.l.b16 %v3022
      %v3114 = vunpack.c.l.b16 %v3023
      %v3115 = vunpack.c.l.b16 %v3024
      %v3116 = vunpack.c.l.b16 %v3025
      %v3117 = vunpack.c.l.b16 %v3026
      %v3118 = vunpack.c.l.b16 %v3027
      %v3119 = vunpack.c.l.b16 %v3028
      %v3120 = vunpack.c.l.b16 %v3029
      %v3121 = vunpack.c.l.b16 %v3030
      %v3122 = vunpack.c.l.b16 %v3031
      %v3123 = vunpack.c.l.b16 %v3032
      %v3124 = vunpack.c.l.b16 %v3033
      %v3125 = vpack.c.b16 %v3110, %v3109
      %v3126 = vpack.c.b16 %v3112, %v3111
      %v3127 = vpack.c.b16 %v3114, %v3113
      %v3128 = vpack.c.b16 %v3116, %v3115
      %v3129 = vpack.c.b16 %v3118, %v3117
      %v3130 = vpack.c.b16 %v3120, %v3119
      %v3131 = vpack.c.b16 %v3122, %v3121
      %v3132 = vpack.c.b16 %v3124, %v3123
      %3141 = vmatpush.bf16.msra.mxu0 %v3132
      %3142 = vmatpush.bf16.msra.mxu0 %v3131
      %3143 = vmatpush.bf16.msra.mxu0 %v3130
      %3144 = vmatpush.bf16.msra.mxu0 %v3129
      %3145 = vmatpush.bf16.msra.mxu0 %v3128
      %3146 = vmatpush.bf16.msra.mxu0 %v3127
      %3147 = vmatpush.bf16.msra.mxu0 %v3126
      %3148 = vmatpush.bf16.msra.mxu0 %v3125
      %3149 = vmatmul.bf16.gmra.mxu0 %v3040
      %v3150 = vpop.f32.mrf.mxu0
      %v3151 = vadd.f32 0.0, %v3150
      %v3152 = vpop.f32.mrf.mxu0
      %v3153 = vadd.f32 0.0, %v3152
      %3154 = vmatmul.bf16.gmra.mxu0 %v3042
      %v3155 = vpop.f32.mrf.mxu0
      %v3156 = vadd.f32 0.0, %v3155
      %v3157 = vpop.f32.mrf.mxu0
      %v3158 = vadd.f32 0.0, %v3157
      %3159 = vmatmul.bf16.gmra.mxu0 %v3044
      %v3160 = vpop.f32.mrf.mxu0
      %v3161 = vadd.f32 0.0, %v3160
      %v3162 = vpop.f32.mrf.mxu0
      %v3163 = vadd.f32 0.0, %v3162
      %3164 = vmatmul.bf16.gmra.mxu0 %v3046
      %v3165 = vpop.f32.mrf.mxu0
      %v3166 = vadd.f32 0.0, %v3165
      %v3167 = vpop.f32.mrf.mxu0
      %v3168 = vadd.f32 0.0, %v3167
      %3169 = vmatmul.bf16.gmra.mxu0 %v3048
      %v3170 = vpop.f32.mrf.mxu0
      %v3171 = vadd.f32 0.0, %v3170
      %v3172 = vpop.f32.mrf.mxu0
      %v3173 = vadd.f32 0.0, %v3172
      %3174 = vmatmul.bf16.gmra.mxu0 %v3050
      %v3175 = vpop.f32.mrf.mxu0
      %v3176 = vadd.f32 0.0, %v3175
      %v3177 = vpop.f32.mrf.mxu0
      %v3178 = vadd.f32 0.0, %v3177
      %3179 = vmatmul.bf16.gmra.mxu0 %v3052
      %v3180 = vpop.f32.mrf.mxu0
      %v3181 = vadd.f32 0.0, %v3180
      %v3182 = vpop.f32.mrf.mxu0
      %v3183 = vadd.f32 0.0, %v3182
      %3184 = vmatmul.bf16.gmra.mxu0 %v3054
      %v3185 = vpop.f32.mrf.mxu0
      %v3186 = vadd.f32 0.0, %v3185
      %v3187 = vpop.f32.mrf.mxu0
      %v3188 = vadd.f32 0.0, %v3187
      %3189 = vmatmul.bf16.gmra.mxu0 %v3056
      %v3190 = vpop.f32.mrf.mxu0
      %v3191 = vadd.f32 0.0, %v3190
      %v3192 = vpop.f32.mrf.mxu0
      %v3193 = vadd.f32 0.0, %v3192
      %3194 = vmatmul.bf16.gmra.mxu0 %v3058
      %v3195 = vpop.f32.mrf.mxu0
      %v3196 = vadd.f32 0.0, %v3195
      %v3197 = vpop.f32.mrf.mxu0
      %v3198 = vadd.f32 0.0, %v3197
      %3199 = vmatmul.bf16.gmra.mxu0 %v3060
      %v3200 = vpop.f32.mrf.mxu0
      %v3201 = vadd.f32 0.0, %v3200
      %v3202 = vpop.f32.mrf.mxu0
      %v3203 = vadd.f32 0.0, %v3202
      %3204 = vmatmul.bf16.gmra.mxu0 %v3062
      %v3205 = vpop.f32.mrf.mxu0
      %v3206 = vadd.f32 0.0, %v3205
      %v3207 = vpop.f32.mrf.mxu0
      %v3208 = vadd.f32 0.0, %v3207
      %3209 = vmatmul.bf16.gmra.mxu0 %v3064
      %v3210 = vpop.f32.mrf.mxu0
      %v3211 = vadd.f32 0.0, %v3210
      %v3212 = vpop.f32.mrf.mxu0
      %v3213 = vadd.f32 0.0, %v3212
      %3214 = vmatmul.bf16.gmra.mxu0 %v3066
      %v3215 = vpop.f32.mrf.mxu0
      %v3216 = vadd.f32 0.0, %v3215
      %v3217 = vpop.f32.mrf.mxu0
      %v3218 = vadd.f32 0.0, %v3217
      %3219 = vmatmul.bf16.gmra.mxu0 %v3068
      %v3220 = vpop.f32.mrf.mxu0
      %v3221 = vadd.f32 0.0, %v3220
      %v3222 = vpop.f32.mrf.mxu0
      %v3223 = vadd.f32 0.0, %v3222
      %3224 = vmatmul.bf16.gmra.mxu0 %v3070
      %v3225 = vpop.f32.mrf.mxu0
      %v3226 = vadd.f32 0.0, %v3225
      %v3227 = vpop.f32.mrf.mxu0
      %v3228 = vadd.f32 0.0, %v3227
      %3229 = vmatmul.bf16.gmra.mxu0 %v3072
      %v3230 = vpop.f32.mrf.mxu0
      %v3231 = vadd.f32 0.0, %v3230
      %v3232 = vpop.f32.mrf.mxu0
      %v3233 = vadd.f32 0.0, %v3232
      %3234 = vmatmul.bf16.gmra.mxu0 %v3074
      %v3235 = vpop.f32.mrf.mxu0
      %v3236 = vadd.f32 0.0, %v3235
      %v3237 = vpop.f32.mrf.mxu0
      %v3238 = vadd.f32 0.0, %v3237
      %3239 = vdwg.mxu0
      %v3240 = vadd.f32 %v2980, %v3151
      %v3241 = vadd.f32 %v2981, %v3153
      %v3242 = vadd.f32 %v2982, %v3156
      %v3243 = vadd.f32 %v2983, %v3158
      %v3244 = vadd.f32 %v2984, %v3161
      %v3245 = vadd.f32 %v2985, %v3163
      %v3246 = vadd.f32 %v2986, %v3166
      %v3247 = vadd.f32 %v2987, %v3168
      %v3248 = vadd.f32 %v2988, %v3171
      %v3249 = vadd.f32 %v2989, %v3173
      %v3250 = vadd.f32 %v2990, %v3176
      %v3251 = vadd.f32 %v2991, %v3178
      %v3252 = vadd.f32 %v2992, %v3181
      %v3253 = vadd.f32 %v2993, %v3183
      %v3254 = vadd.f32 %v2994, %v3186
      %v3255 = vadd.f32 %v2995, %v3188
      %v3256 = vadd.f32 %v2996, %v3191
      %v3257 = vadd.f32 %v2997, %v3193
      %v3258 = vadd.f32 %v2998, %v3196
      %v3259 = vadd.f32 %v2999, %v3198
      %v3260 = vadd.f32 %v3000, %v3201
      %v3261 = vadd.f32 %v3001, %v3203
      %v3262 = vadd.f32 %v3002, %v3206
      %v3263 = vadd.f32 %v3003, %v3208
      %v3264 = vadd.f32 %v3004, %v3211
      %v3265 = vadd.f32 %v3005, %v3213
      %v3266 = vadd.f32 %v3006, %v3216
      %v3267 = vadd.f32 %v3007, %v3218
      %v3268 = vadd.f32 %v3008, %v3221
      %v3269 = vadd.f32 %v3009, %v3223
      %v3270 = vadd.f32 %v3010, %v3226
      %v3271 = vadd.f32 %v3011, %v3228
      %v3272 = vadd.f32 %v3012, %v3231
      %v3273 = vadd.f32 %v3013, %v3233
      %v3274 = vadd.f32 %v3014, %v3236
      %v3275 = vadd.f32 %v3015, %v3238
      %v3276 = vld [vmem:[%s287] sm:$0x1]
      %v3278 = vperm.slane %v3276, 0
      %v3280 = vadd.f32 %v3240, %v3278
      %v3281 = vadd.f32 %v3241, %v3278
      %v3282 = vadd.f32 %v3242, %v3278
      %v3283 = vadd.f32 %v3243, %v3278
      %v3284 = vadd.f32 %v3244, %v3278
      %v3285 = vadd.f32 %v3245, %v3278
      %v3286 = vadd.f32 %v3246, %v3278
      %v3287 = vadd.f32 %v3247, %v3278
      %v3288 = vadd.f32 %v3248, %v3278
      %v3289 = vadd.f32 %v3249, %v3278
      %v3290 = vadd.f32 %v3250, %v3278
      %v3291 = vadd.f32 %v3251, %v3278
      %v3292 = vadd.f32 %v3252, %v3278
      %v3293 = vadd.f32 %v3253, %v3278
      %v3294 = vadd.f32 %v3254, %v3278
      %v3295 = vadd.f32 %v3255, %v3278
      %v3296 = vadd.f32 %v3256, %v3278
      %v3297 = vadd.f32 %v3257, %v3278
      %v3298 = vadd.f32 %v3258, %v3278
      %v3299 = vadd.f32 %v3259, %v3278
      %v3300 = vadd.f32 %v3260, %v3278
      %v3301 = vadd.f32 %v3261, %v3278
      %v3302 = vadd.f32 %v3262, %v3278
      %v3303 = vadd.f32 %v3263, %v3278
      %v3304 = vadd.f32 %v3264, %v3278
      %v3305 = vadd.f32 %v3265, %v3278
      %v3306 = vadd.f32 %v3266, %v3278
      %v3307 = vadd.f32 %v3267, %v3278
      %v3308 = vadd.f32 %v3268, %v3278
      %v3309 = vadd.f32 %v3269, %v3278
      %v3310 = vadd.f32 %v3270, %v3278
      %v3311 = vadd.f32 %v3271, %v3278
      %v3312 = vadd.f32 %v3272, %v3278
      %v3313 = vadd.f32 %v3273, %v3278
      %v3314 = vadd.f32 %v3274, %v3278
      %v3315 = vadd.f32 %v3275, %v3278
      %v3316 = vmax.f32 %v3280, 0.0
      %v3317 = vmax.f32 %v3281, 0.0
      %v3318 = vmax.f32 %v3282, 0.0
      %v3319 = vmax.f32 %v3283, 0.0
      %v3320 = vmax.f32 %v3284, 0.0
      %v3321 = vmax.f32 %v3285, 0.0
      %v3322 = vmax.f32 %v3286, 0.0
      %v3323 = vmax.f32 %v3287, 0.0
      %v3324 = vmax.f32 %v3288, 0.0
      %v3325 = vmax.f32 %v3289, 0.0
      %v3326 = vmax.f32 %v3290, 0.0
      %v3327 = vmax.f32 %v3291, 0.0
      %v3328 = vmax.f32 %v3292, 0.0
      %v3329 = vmax.f32 %v3293, 0.0
      %v3330 = vmax.f32 %v3294, 0.0
      %v3331 = vmax.f32 %v3295, 0.0
      %v3332 = vmax.f32 %v3296, 0.0
      %v3333 = vmax.f32 %v3297, 0.0
      %v3334 = vmax.f32 %v3298, 0.0
      %v3335 = vmax.f32 %v3299, 0.0
      %v3336 = vmax.f32 %v3300, 0.0
      %v3337 = vmax.f32 %v3301, 0.0
      %v3338 = vmax.f32 %v3302, 0.0
      %v3339 = vmax.f32 %v3303, 0.0
      %v3340 = vmax.f32 %v3304, 0.0
      %v3341 = vmax.f32 %v3305, 0.0
      %v3342 = vmax.f32 %v3306, 0.0
      %v3343 = vmax.f32 %v3307, 0.0
      %v3344 = vmax.f32 %v3308, 0.0
      %v3345 = vmax.f32 %v3309, 0.0
      %v3346 = vmax.f32 %v3310, 0.0
      %v3347 = vmax.f32 %v3311, 0.0
      %v3348 = vmax.f32 %v3312, 0.0
      %v3349 = vmax.f32 %v3313, 0.0
      %v3350 = vmax.f32 %v3314, 0.0
      %v3351 = vmax.f32 %v3315, 0.0
      %v3352 = vld [vmem:[%s4] sm:$0xff]
      %v3353 = vld [vmem:[%s4 + $0x8] sm:$0xff]
      %v3354 = vld [vmem:[%s4 + $0x10] sm:$0xff]
      %v3355 = vld [vmem:[%s4 + $0x18] sm:$0xff]
      %v3356 = vld [vmem:[%s4 + $0x20] sm:$0xff]
      %v3357 = vld [vmem:[%s4 + $0x28] sm:$0xff]
      %v3358 = vld [vmem:[%s4 + $0x30] sm:$0xff]
      %v3359 = vld [vmem:[%s4 + $0x38] sm:$0xff]
      %v3360 = vld [vmem:[%s4 + $0x40] sm:$0xff]
      %v3361 = vld [vmem:[%s4 + $0x48] sm:$0xff]
      %v3362 = vld [vmem:[%s4 + $0x50] sm:$0xff]
      %v3363 = vld [vmem:[%s4 + $0x58] sm:$0xff]
      %v3364 = vld [vmem:[%s4 + $0x60] sm:$0xff]
      %v3365 = vld [vmem:[%s4 + $0x68] sm:$0xff]
      %v3366 = vld [vmem:[%s4 + $0x70] sm:$0xff]
      %v3367 = vld [vmem:[%s4 + $0x78] sm:$0xff]
      %v3368 = vld [vmem:[%s4 + $0x80] sm:$0xff]
      %v3369 = vld [vmem:[%s4 + $0x88] sm:$0xff]
      %v3370 = vld [vmem:[%s4 + $0x90] sm:$0xff]
      %v3371 = vld [vmem:[%s4 + $0x98] sm:$0xff]
      %v3372 = vld [vmem:[%s4 + $0xa0] sm:$0xff]
      %v3373 = vld [vmem:[%s4 + $0xa8] sm:$0xff]
      %v3374 = vld [vmem:[%s4 + $0xb0] sm:$0xff]
      %v3375 = vld [vmem:[%s4 + $0xb8] sm:$0xff]
      %v3376 = vld [vmem:[%s4 + $0xc0] sm:$0xff]
      %v3377 = vld [vmem:[%s4 + $0xc8] sm:$0xff]
      %v3378 = vld [vmem:[%s4 + $0xd0] sm:$0xff]
      %v3379 = vld [vmem:[%s4 + $0xd8] sm:$0xff]
      %v3380 = vld [vmem:[%s4 + $0xe0] sm:$0xff]
      %v3381 = vld [vmem:[%s4 + $0xe8] sm:$0xff]
      %v3382 = vld [vmem:[%s4 + $0xf0] sm:$0xff]
      %v3383 = vld [vmem:[%s4 + $0xf8] sm:$0xff]
      %v3384 = vld [vmem:[%s4 + $0x100] sm:$0xff]
      %v3385 = vld [vmem:[%s4 + $0x108] sm:$0xff]
      %v3386 = vld [vmem:[%s4 + $0x110] sm:$0xff]
      %v3387 = vld [vmem:[%s4 + $0x118] sm:$0xff]
      %3389 = vset.pattern.permute.xlu0 0
      %3390 = vperm.xlu0 %3389, %v3352
      %v3391 = vpop.permute.xlu0 %3390
      %3394 = vset.pattern.permute.xlu0 0
      %3395 = vperm.xlu0 %3394, %v3353
      %v3396 = vpop.permute.xlu0 %3395
      %3399 = vset.pattern.permute.xlu0 0
      %3400 = vperm.xlu0 %3399, %v3354
      %v3401 = vpop.permute.xlu0 %3400
      %3404 = vset.pattern.permute.xlu0 0
      %3405 = vperm.xlu0 %3404, %v3355
      %v3406 = vpop.permute.xlu0 %3405
      %3409 = vset.pattern.permute.xlu0 0
      %3410 = vperm.xlu0 %3409, %v3356
      %v3411 = vpop.permute.xlu0 %3410
      %3414 = vset.pattern.permute.xlu0 0
      %3415 = vperm.xlu0 %3414, %v3357
      %v3416 = vpop.permute.xlu0 %3415
      %3419 = vset.pattern.permute.xlu0 0
      %3420 = vperm.xlu0 %3419, %v3358
      %v3421 = vpop.permute.xlu0 %3420
      %3424 = vset.pattern.permute.xlu0 0
      %3425 = vperm.xlu0 %3424, %v3359
      %v3426 = vpop.permute.xlu0 %3425
      %3429 = vset.pattern.permute.xlu0 0
      %3430 = vperm.xlu0 %3429, %v3360
      %v3431 = vpop.permute.xlu0 %3430
      %3434 = vset.pattern.permute.xlu0 0
      %3435 = vperm.xlu0 %3434, %v3361
      %v3436 = vpop.permute.xlu0 %3435
      %3439 = vset.pattern.permute.xlu0 0
      %3440 = vperm.xlu0 %3439, %v3362
      %v3441 = vpop.permute.xlu0 %3440
      %3444 = vset.pattern.permute.xlu0 0
      %3445 = vperm.xlu0 %3444, %v3363
      %v3446 = vpop.permute.xlu0 %3445
      %3449 = vset.pattern.permute.xlu0 0
      %3450 = vperm.xlu0 %3449, %v3364
      %v3451 = vpop.permute.xlu0 %3450
      %3454 = vset.pattern.permute.xlu0 0
      %3455 = vperm.xlu0 %3454, %v3365
      %v3456 = vpop.permute.xlu0 %3455
      %3459 = vset.pattern.permute.xlu0 0
      %3460 = vperm.xlu0 %3459, %v3366
      %v3461 = vpop.permute.xlu0 %3460
      %3464 = vset.pattern.permute.xlu0 0
      %3465 = vperm.xlu0 %3464, %v3367
      %v3466 = vpop.permute.xlu0 %3465
      %3469 = vset.pattern.permute.xlu0 0
      %3470 = vperm.xlu0 %3469, %v3368
      %v3471 = vpop.permute.xlu0 %3470
      %3474 = vset.pattern.permute.xlu0 0
      %3475 = vperm.xlu0 %3474, %v3369
      %v3476 = vpop.permute.xlu0 %3475
      %3479 = vset.pattern.permute.xlu0 0
      %3480 = vperm.xlu0 %3479, %v3370
      %v3481 = vpop.permute.xlu0 %3480
      %3484 = vset.pattern.permute.xlu0 0
      %3485 = vperm.xlu0 %3484, %v3371
      %v3486 = vpop.permute.xlu0 %3485
      %3489 = vset.pattern.permute.xlu0 0
      %3490 = vperm.xlu0 %3489, %v3372
      %v3491 = vpop.permute.xlu0 %3490
      %3494 = vset.pattern.permute.xlu0 0
      %3495 = vperm.xlu0 %3494, %v3373
      %v3496 = vpop.permute.xlu0 %3495
      %3499 = vset.pattern.permute.xlu0 0
      %3500 = vperm.xlu0 %3499, %v3374
      %v3501 = vpop.permute.xlu0 %3500
      %3504 = vset.pattern.permute.xlu0 0
      %3505 = vperm.xlu0 %3504, %v3375
      %v3506 = vpop.permute.xlu0 %3505
      %3509 = vset.pattern.permute.xlu0 0
      %3510 = vperm.xlu0 %3509, %v3376
      %v3511 = vpop.permute.xlu0 %3510
      %3514 = vset.pattern.permute.xlu0 0
      %3515 = vperm.xlu0 %3514, %v3377
      %v3516 = vpop.permute.xlu0 %3515
      %3519 = vset.pattern.permute.xlu0 0
      %3520 = vperm.xlu0 %3519, %v3378
      %v3521 = vpop.permute.xlu0 %3520
      %3524 = vset.pattern.permute.xlu0 0
      %3525 = vperm.xlu0 %3524, %v3379
      %v3526 = vpop.permute.xlu0 %3525
      %3529 = vset.pattern.permute.xlu0 0
      %3530 = vperm.xlu0 %3529, %v3380
      %v3531 = vpop.permute.xlu0 %3530
      %3534 = vset.pattern.permute.xlu0 0
      %3535 = vperm.xlu0 %3534, %v3381
      %v3536 = vpop.permute.xlu0 %3535
      %3539 = vset.pattern.permute.xlu0 0
      %3540 = vperm.xlu0 %3539, %v3382
      %v3541 = vpop.permute.xlu0 %3540
      %3544 = vset.pattern.permute.xlu0 0
      %3545 = vperm.xlu0 %3544, %v3383
      %v3546 = vpop.permute.xlu0 %3545
      %3549 = vset.pattern.permute.xlu0 0
      %3550 = vperm.xlu0 %3549, %v3384
      %v3551 = vpop.permute.xlu0 %3550
      %3554 = vset.pattern.permute.xlu0 0
      %3555 = vperm.xlu0 %3554, %v3385
      %v3556 = vpop.permute.xlu0 %3555
      %3559 = vset.pattern.permute.xlu0 0
      %3560 = vperm.xlu0 %3559, %v3386
      %v3561 = vpop.permute.xlu0 %3560
      %3564 = vset.pattern.permute.xlu0 0
      %3565 = vperm.xlu0 %3564, %v3387
      %v3566 = vpop.permute.xlu0 %3565
      %v3568 = vmul.f32 %v3316, %v3391
      %v3569 = vmul.f32 %v3317, %v3396
      %v3570 = vmul.f32 %v3318, %v3401
      %v3571 = vmul.f32 %v3319, %v3406
      %v3572 = vmul.f32 %v3320, %v3411
      %v3573 = vmul.f32 %v3321, %v3416
      %v3574 = vmul.f32 %v3322, %v3421
      %v3575 = vmul.f32 %v3323, %v3426
      %v3576 = vmul.f32 %v3324, %v3431
      %v3577 = vmul.f32 %v3325, %v3436
      %v3578 = vmul.f32 %v3326, %v3441
      %v3579 = vmul.f32 %v3327, %v3446
      %v3580 = vmul.f32 %v3328, %v3451
      %v3581 = vmul.f32 %v3329, %v3456
      %v3582 = vmul.f32 %v3330, %v3461
      %v3583 = vmul.f32 %v3331, %v3466
      %v3584 = vmul.f32 %v3332, %v3471
      %v3585 = vmul.f32 %v3333, %v3476
      %v3586 = vmul.f32 %v3334, %v3481
      %v3587 = vmul.f32 %v3335, %v3486
      %v3588 = vmul.f32 %v3336, %v3491
      %v3589 = vmul.f32 %v3337, %v3496
      %v3590 = vmul.f32 %v3338, %v3501
      %v3591 = vmul.f32 %v3339, %v3506
      %v3592 = vmul.f32 %v3340, %v3511
      %v3593 = vmul.f32 %v3341, %v3516
      %v3594 = vmul.f32 %v3342, %v3521
      %v3595 = vmul.f32 %v3343, %v3526
      %v3596 = vmul.f32 %v3344, %v3531
      %v3597 = vmul.f32 %v3345, %v3536
      %v3598 = vmul.f32 %v3346, %v3541
      %v3599 = vmul.f32 %v3347, %v3546
      %v3600 = vmul.f32 %v3348, %v3551
      %v3601 = vmul.f32 %v3349, %v3556
      %v3602 = vmul.f32 %v3350, %v3561
      %v3603 = vmul.f32 %v3351, %v3566
      %3604 = vst [vmem:[%s296] sm:$0xf] 0
      %3605 = vst [vmem:[%s296 + $0x4] sm:$0xf] 0
      %vm3606 = vcmask 1041408
      %vm3607 = vsmask.f32 1280
      %vm3608 = vmand %vm3606, %vm3607
      %v3609 = vld [vmem:[%s296 + $0x8] sm:$0x3]
      %v3610 = vsel %vm3608, 0, %v3609
      %3611 = vst [vmem:[%s296 + $0x8] sm:$0x3] %v3610
      %vm3612 = vcmask 1043457
      %vm3613 = vsmask.f32 7942
      %vm3614 = vmand %vm3612, %vm3613
      %v3615 = vld [vmem:[%s296 + $0x98] sm:$0xe]
      %v3616 = vsel %vm3614, 0, %v3615
      %3617 = vst [vmem:[%s296 + $0x98] sm:$0xe] %v3616
      %3618 = vst [vmem:[%s296 + $0x9c] sm:$0xf] 0
      %3619 = vst [vmem:[%s296 + $0xa0] sm:$0xf] 0
      %3620 = vst [vmem:[%s296 + $0xa4] sm:$0xf] 0
      %3621 = vst [vmem:[%s296 + $0xa8] sm:$0xf] 0
      %3622 = vst [vmem:[%s296 + $0xac] sm:$0xf] 0
      %3623 = vst [vmem:[%s296 + $0xb0] sm:$0xf] 0
      %v3624 = vpack.c.bf16 %v3568, %v3568
      %v3625 = vpack.c.bf16 %v3569, %v3569
      %v3626 = vpack.c.bf16 %v3570, %v3570
      %v3627 = vpack.c.bf16 %v3571, %v3571
      %v3628 = vpack.c.bf16 %v3572, %v3572
      %v3629 = vpack.c.bf16 %v3573, %v3573
      %v3630 = vpack.c.bf16 %v3574, %v3574
      %v3631 = vpack.c.bf16 %v3575, %v3575
      %v3632 = vpack.c.bf16 %v3576, %v3576
      %v3633 = vpack.c.bf16 %v3577, %v3577
      %v3634 = vpack.c.bf16 %v3578, %v3578
      %v3635 = vpack.c.bf16 %v3579, %v3579
      %v3636 = vpack.c.bf16 %v3580, %v3580
      %v3637 = vpack.c.bf16 %v3581, %v3581
      %v3638 = vpack.c.bf16 %v3582, %v3582
      %v3639 = vpack.c.bf16 %v3583, %v3583
      %v3640 = vpack.c.bf16 %v3584, %v3584
      %v3641 = vpack.c.bf16 %v3585, %v3585
      %v3642 = vpack.c.bf16 %v3586, %v3586
      %v3643 = vpack.c.bf16 %v3587, %v3587
      %v3644 = vpack.c.bf16 %v3588, %v3588
      %v3645 = vpack.c.bf16 %v3589, %v3589
      %v3646 = vpack.c.bf16 %v3590, %v3590
      %v3647 = vpack.c.bf16 %v3591, %v3591
      %v3648 = vpack.c.bf16 %v3592, %v3592
      %v3649 = vpack.c.bf16 %v3593, %v3593
      %v3650 = vpack.c.bf16 %v3594, %v3594
      %v3651 = vpack.c.bf16 %v3595, %v3595
      %v3652 = vpack.c.bf16 %v3596, %v3596
      %v3653 = vpack.c.bf16 %v3597, %v3597
      %v3654 = vpack.c.bf16 %v3598, %v3598
      %v3655 = vpack.c.bf16 %v3599, %v3599
      %v3656 = vpack.c.bf16 %v3600, %v3600
      %v3657 = vpack.c.bf16 %v3601, %v3601
      %v3658 = vpack.c.bf16 %v3602, %v3602
      %v3659 = vpack.c.bf16 %v3603, %v3603
      %vm3660 = vsmask.f32 5392
      %vm3661 = vmor %vm3607, %vm3660
      %v3663 = vshrl.u32 %v3624, 16
      %v3665 = vrot.slane %v3663, 6
      %v3666 = vshll.u32 %v3624, 16
      %v3668 = vrot.slane %v3666, 7
      %v3669 = vor.u32 %v3665, %v3668
      %v3670 = vrot.slane %v3669, 4
      %v3672 = vshrl.u32 %v3625, 16
      %v3674 = vrot.slane %v3672, 6
      %v3675 = vshll.u32 %v3625, 16
      %v3677 = vrot.slane %v3675, 7
      %v3678 = vor.u32 %v3674, %v3677
      %v3679 = vsel %vm3661, %v3670, %v3678
      %v3680 = vrot.slane %v3678, 4
      %v3682 = vshrl.u32 %v3626, 16
      %v3684 = vrot.slane %v3682, 6
      %v3685 = vshll.u32 %v3626, 16
      %v3687 = vrot.slane %v3685, 7
      %v3688 = vor.u32 %v3684, %v3687
      %v3689 = vsel %vm3661, %v3680, %v3688
      %v3690 = vrot.slane %v3688, 4
      %v3692 = vshrl.u32 %v3627, 16
      %v3694 = vrot.slane %v3692, 6
      %v3695 = vshll.u32 %v3627, 16
      %v3697 = vrot.slane %v3695, 7
      %v3698 = vor.u32 %v3694, %v3697
      %v3699 = vsel %vm3661, %v3690, %v3698
      %v3700 = vrot.slane %v3698, 4
      %v3702 = vshrl.u32 %v3628, 16
      %v3704 = vrot.slane %v3702, 6
      %v3705 = vshll.u32 %v3628, 16
      %v3707 = vrot.slane %v3705, 7
      %v3708 = vor.u32 %v3704, %v3707
      %v3709 = vsel %vm3661, %v3700, %v3708
      %v3710 = vrot.slane %v3708, 4
      %v3712 = vshrl.u32 %v3629, 16
      %v3714 = vrot.slane %v3712, 6
      %v3715 = vshll.u32 %v3629, 16
      %v3717 = vrot.slane %v3715, 7
      %v3718 = vor.u32 %v3714, %v3717
      %v3719 = vsel %vm3661, %v3710, %v3718
      %v3720 = vrot.slane %v3718, 4
      %v3722 = vshrl.u32 %v3630, 16
      %v3724 = vrot.slane %v3722, 6
      %v3725 = vshll.u32 %v3630, 16
      %v3727 = vrot.slane %v3725, 7
      %v3728 = vor.u32 %v3724, %v3727
      %v3729 = vsel %vm3661, %v3720, %v3728
      %v3730 = vrot.slane %v3728, 4
      %v3732 = vshrl.u32 %v3631, 16
      %v3734 = vrot.slane %v3732, 6
      %v3735 = vshll.u32 %v3631, 16
      %v3737 = vrot.slane %v3735, 7
      %v3738 = vor.u32 %v3734, %v3737
      %v3739 = vsel %vm3661, %v3730, %v3738
      %v3740 = vrot.slane %v3738, 4
      %v3742 = vshrl.u32 %v3632, 16
      %v3744 = vrot.slane %v3742, 6
      %v3745 = vshll.u32 %v3632, 16
      %v3747 = vrot.slane %v3745, 7
      %v3748 = vor.u32 %v3744, %v3747
      %v3749 = vsel %vm3661, %v3740, %v3748
      %v3750 = vrot.slane %v3748, 4
      %v3752 = vshrl.u32 %v3633, 16
      %v3754 = vrot.slane %v3752, 6
      %v3755 = vshll.u32 %v3633, 16
      %v3757 = vrot.slane %v3755, 7
      %v3758 = vor.u32 %v3754, %v3757
      %v3759 = vsel %vm3661, %v3750, %v3758
      %v3760 = vrot.slane %v3758, 4
      %v3762 = vshrl.u32 %v3634, 16
      %v3764 = vrot.slane %v3762, 6
      %v3765 = vshll.u32 %v3634, 16
      %v3767 = vrot.slane %v3765, 7
      %v3768 = vor.u32 %v3764, %v3767
      %v3769 = vsel %vm3661, %v3760, %v3768
      %v3770 = vrot.slane %v3768, 4
      %v3772 = vshrl.u32 %v3635, 16
      %v3774 = vrot.slane %v3772, 6
      %v3775 = vshll.u32 %v3635, 16
      %v3777 = vrot.slane %v3775, 7
      %v3778 = vor.u32 %v3774, %v3777
      %v3779 = vsel %vm3661, %v3770, %v3778
      %v3780 = vrot.slane %v3778, 4
      %v3782 = vshrl.u32 %v3636, 16
      %v3784 = vrot.slane %v3782, 6
      %v3785 = vshll.u32 %v3636, 16
      %v3787 = vrot.slane %v3785, 7
      %v3788 = vor.u32 %v3784, %v3787
      %v3789 = vsel %vm3661, %v3780, %v3788
      %v3790 = vrot.slane %v3788, 4
      %v3792 = vshrl.u32 %v3637, 16
      %v3794 = vrot.slane %v3792, 6
      %v3795 = vshll.u32 %v3637, 16
      %v3797 = vrot.slane %v3795, 7
      %v3798 = vor.u32 %v3794, %v3797
      %v3799 = vsel %vm3661, %v3790, %v3798
      %v3800 = vrot.slane %v3798, 4
      %v3802 = vshrl.u32 %v3638, 16
      %v3804 = vrot.slane %v3802, 6
      %v3805 = vshll.u32 %v3638, 16
      %v3807 = vrot.slane %v3805, 7
      %v3808 = vor.u32 %v3804, %v3807
      %v3809 = vsel %vm3661, %v3800, %v3808
      %v3810 = vrot.slane %v3808, 4
      %v3812 = vshrl.u32 %v3639, 16
      %v3814 = vrot.slane %v3812, 6
      %v3815 = vshll.u32 %v3639, 16
      %v3817 = vrot.slane %v3815, 7
      %v3818 = vor.u32 %v3814, %v3817
      %v3819 = vsel %vm3661, %v3810, %v3818
      %v3820 = vrot.slane %v3818, 4
      %v3822 = vshrl.u32 %v3640, 16
      %v3824 = vrot.slane %v3822, 6
      %v3825 = vshll.u32 %v3640, 16
      %v3827 = vrot.slane %v3825, 7
      %v3828 = vor.u32 %v3824, %v3827
      %v3829 = vsel %vm3661, %v3820, %v3828
      %v3830 = vrot.slane %v3828, 4
      %v3832 = vshrl.u32 %v3641, 16
      %v3834 = vrot.slane %v3832, 6
      %v3835 = vshll.u32 %v3641, 16
      %v3837 = vrot.slane %v3835, 7
      %v3838 = vor.u32 %v3834, %v3837
      %v3839 = vsel %vm3661, %v3830, %v3838
      %v3840 = vrot.slane %v3838, 4
      %v3842 = vshrl.u32 %v3642, 16
      %v3844 = vrot.slane %v3842, 6
      %v3845 = vshll.u32 %v3642, 16
      %v3847 = vrot.slane %v3845, 7
      %v3848 = vor.u32 %v3844, %v3847
      %v3849 = vsel %vm3661, %v3840, %v3848
      %v3850 = vrot.slane %v3848, 4
      %v3852 = vshrl.u32 %v3643, 16
      %v3854 = vrot.slane %v3852, 6
      %v3855 = vshll.u32 %v3643, 16
      %v3857 = vrot.slane %v3855, 7
      %v3858 = vor.u32 %v3854, %v3857
      %v3859 = vsel %vm3661, %v3850, %v3858
      %v3860 = vrot.slane %v3858, 4
      %v3862 = vshrl.u32 %v3644, 16
      %v3864 = vrot.slane %v3862, 6
      %v3865 = vshll.u32 %v3644, 16
      %v3867 = vrot.slane %v3865, 7
      %v3868 = vor.u32 %v3864, %v3867
      %v3869 = vsel %vm3661, %v3860, %v3868
      %v3870 = vrot.slane %v3868, 4
      %v3872 = vshrl.u32 %v3645, 16
      %v3874 = vrot.slane %v3872, 6
      %v3875 = vshll.u32 %v3645, 16
      %v3877 = vrot.slane %v3875, 7
      %v3878 = vor.u32 %v3874, %v3877
      %v3879 = vsel %vm3661, %v3870, %v3878
      %v3880 = vrot.slane %v3878, 4
      %v3882 = vshrl.u32 %v3646, 16
      %v3884 = vrot.slane %v3882, 6
      %v3885 = vshll.u32 %v3646, 16
      %v3887 = vrot.slane %v3885, 7
      %v3888 = vor.u32 %v3884, %v3887
      %v3889 = vsel %vm3661, %v3880, %v3888
      %v3890 = vrot.slane %v3888, 4
      %v3892 = vshrl.u32 %v3647, 16
      %v3894 = vrot.slane %v3892, 6
      %v3895 = vshll.u32 %v3647, 16
      %v3897 = vrot.slane %v3895, 7
      %v3898 = vor.u32 %v3894, %v3897
      %v3899 = vsel %vm3661, %v3890, %v3898
      %v3900 = vrot.slane %v3898, 4
      %v3902 = vshrl.u32 %v3648, 16
      %v3904 = vrot.slane %v3902, 6
      %v3905 = vshll.u32 %v3648, 16
      %v3907 = vrot.slane %v3905, 7
      %v3908 = vor.u32 %v3904, %v3907
      %v3909 = vsel %vm3661, %v3900, %v3908
      %v3910 = vrot.slane %v3908, 4
      %v3912 = vshrl.u32 %v3649, 16
      %v3914 = vrot.slane %v3912, 6
      %v3915 = vshll.u32 %v3649, 16
      %v3917 = vrot.slane %v3915, 7
      %v3918 = vor.u32 %v3914, %v3917
      %v3919 = vsel %vm3661, %v3910, %v3918
      %v3920 = vrot.slane %v3918, 4
      %v3922 = vshrl.u32 %v3650, 16
      %v3924 = vrot.slane %v3922, 6
      %v3925 = vshll.u32 %v3650, 16
      %v3927 = vrot.slane %v3925, 7
      %v3928 = vor.u32 %v3924, %v3927
      %v3929 = vsel %vm3661, %v3920, %v3928
      %v3930 = vrot.slane %v3928, 4
      %v3932 = vshrl.u32 %v3651, 16
      %v3934 = vrot.slane %v3932, 6
      %v3935 = vshll.u32 %v3651, 16
      %v3937 = vrot.slane %v3935, 7
      %v3938 = vor.u32 %v3934, %v3937
      %v3939 = vsel %vm3661, %v3930, %v3938
      %v3940 = vrot.slane %v3938, 4
      %v3942 = vshrl.u32 %v3652, 16
      %v3944 = vrot.slane %v3942, 6
      %v3945 = vshll.u32 %v3652, 16
      %v3947 = vrot.slane %v3945, 7
      %v3948 = vor.u32 %v3944, %v3947
      %v3949 = vsel %vm3661, %v3940, %v3948
      %v3950 = vrot.slane %v3948, 4
      %v3952 = vshrl.u32 %v3653, 16
      %v3954 = vrot.slane %v3952, 6
      %v3955 = vshll.u32 %v3653, 16
      %v3957 = vrot.slane %v3955, 7
      %v3958 = vor.u32 %v3954, %v3957
      %v3959 = vsel %vm3661, %v3950, %v3958
      %v3960 = vrot.slane %v3958, 4
      %v3962 = vshrl.u32 %v3654, 16
      %v3964 = vrot.slane %v3962, 6
      %v3965 = vshll.u32 %v3654, 16
      %v3967 = vrot.slane %v3965, 7
      %v3968 = vor.u32 %v3964, %v3967
      %v3969 = vsel %vm3661, %v3960, %v3968
      %v3970 = vrot.slane %v3968, 4
      %v3972 = vshrl.u32 %v3655, 16
      %v3974 = vrot.slane %v3972, 6
      %v3975 = vshll.u32 %v3655, 16
      %v3977 = vrot.slane %v3975, 7
      %v3978 = vor.u32 %v3974, %v3977
      %v3979 = vsel %vm3661, %v3970, %v3978
      %v3980 = vrot.slane %v3978, 4
      %v3982 = vshrl.u32 %v3656, 16
      %v3984 = vrot.slane %v3982, 6
      %v3985 = vshll.u32 %v3656, 16
      %v3987 = vrot.slane %v3985, 7
      %v3988 = vor.u32 %v3984, %v3987
      %v3989 = vsel %vm3661, %v3980, %v3988
      %v3990 = vrot.slane %v3988, 4
      %v3992 = vshrl.u32 %v3657, 16
      %v3994 = vrot.slane %v3992, 6
      %v3995 = vshll.u32 %v3657, 16
      %v3997 = vrot.slane %v3995, 7
      %v3998 = vor.u32 %v3994, %v3997
      %v3999 = vsel %vm3661, %v3990, %v3998
      %v4000 = vrot.slane %v3998, 4
      %v4002 = vshrl.u32 %v3658, 16
      %v4004 = vrot.slane %v4002, 6
      %v4005 = vshll.u32 %v3658, 16
      %v4007 = vrot.slane %v4005, 7
      %v4008 = vor.u32 %v4004, %v4007
      %v4009 = vsel %vm3661, %v4000, %v4008
      %v4010 = vrot.slane %v4008, 4
      %v4012 = vshrl.u32 %v3659, 16
      %v4014 = vrot.slane %v4012, 6
      %v4015 = vshll.u32 %v3659, 16
      %v4017 = vrot.slane %v4015, 7
      %v4018 = vor.u32 %v4014, %v4017
      %v4019 = vsel %vm3661, %v4010, %v4018
      %v4020 = vrot.slane %v4018, 4
      %v4058 = vld [vmem:[%s296 + $0x8] sm:$0xe]
      %v4059 = vsel %vm3614, %v3669, %v4058
      %4060 = vst [vmem:[%s296 + $0x8] sm:$0xe] %v4059
      %4061 = vst [vmem:[%s296 + $0xc] sm:$0xf] %v3679
      %4062 = vst [vmem:[%s296 + $0x10] sm:$0xf] %v3689
      %4063 = vst [vmem:[%s296 + $0x14] sm:$0xf] %v3699
      %4064 = vst [vmem:[%s296 + $0x18] sm:$0xf] %v3709
      %4065 = vst [vmem:[%s296 + $0x1c] sm:$0xf] %v3719
      %4066 = vst [vmem:[%s296 + $0x20] sm:$0xf] %v3729
      %4067 = vst [vmem:[%s296 + $0x24] sm:$0xf] %v3739
      %4068 = vst [vmem:[%s296 + $0x28] sm:$0xf] %v3749
      %4069 = vst [vmem:[%s296 + $0x2c] sm:$0xf] %v3759
      %4070 = vst [vmem:[%s296 + $0x30] sm:$0xf] %v3769
      %4071 = vst [vmem:[%s296 + $0x34] sm:$0xf] %v3779
      %4072 = vst [vmem:[%s296 + $0x38] sm:$0xf] %v3789
      %4073 = vst [vmem:[%s296 + $0x3c] sm:$0xf] %v3799
      %4074 = vst [vmem:[%s296 + $0x40] sm:$0xf] %v3809
      %4075 = vst [vmem:[%s296 + $0x44] sm:$0xf] %v3819
      %4076 = vst [vmem:[%s296 + $0x48] sm:$0xf] %v3829
      %4077 = vst [vmem:[%s296 + $0x4c] sm:$0xf] %v3839
      %4078 = vst [vmem:[%s296 + $0x50] sm:$0xf] %v3849
      %4079 = vst [vmem:[%s296 + $0x54] sm:$0xf] %v3859
      %4080 = vst [vmem:[%s296 + $0x58] sm:$0xf] %v3869
      %4081 = vst [vmem:[%s296 + $0x5c] sm:$0xf] %v3879
      %4082 = vst [vmem:[%s296 + $0x60] sm:$0xf] %v3889
      %4083 = vst [vmem:[%s296 + $0x64] sm:$0xf] %v3899
      %4084 = vst [vmem:[%s296 + $0x68] sm:$0xf] %v3909
      %4085 = vst [vmem:[%s296 + $0x6c] sm:$0xf] %v3919
      %4086 = vst [vmem:[%s296 + $0x70] sm:$0xf] %v3929
      %4087 = vst [vmem:[%s296 + $0x74] sm:$0xf] %v3939
      %4088 = vst [vmem:[%s296 + $0x78] sm:$0xf] %v3949
      %4089 = vst [vmem:[%s296 + $0x7c] sm:$0xf] %v3959
      %4090 = vst [vmem:[%s296 + $0x80] sm:$0xf] %v3969
      %4091 = vst [vmem:[%s296 + $0x84] sm:$0xf] %v3979
      %4092 = vst [vmem:[%s296 + $0x88] sm:$0xf] %v3989
      %4093 = vst [vmem:[%s296 + $0x8c] sm:$0xf] %v3999
      %4094 = vst [vmem:[%s296 + $0x90] sm:$0xf] %v4009
      %4095 = vst [vmem:[%s296 + $0x94] sm:$0xf] %v4019
      %v4096 = vld [vmem:[%s296 + $0x98] sm:$0x3]
      %v4097 = vsel %vm3608, %v4020, %v4096
      %4098 = vst [vmem:[%s296 + $0x98] sm:$0x3] %v4097
      %p4099 = scmp.lt.s32.totalorder %s28, 3
      %s4100 = scalar_select %p4099, %s28, 3
      %p4101 = scmp.lt.s32.totalorder %s29, 0
      %s4102 = scalar_select %p4101, %s29, 0
      %s4103 = smul.addr %s4100, 45
      %s4104 = sadd.s32 %s4102, %s4103
      %s4105 = smul.addr %s4104, 4
      %s4106 = scalar_lea.vmem %s5, %s4105
      // Predicated region
      $region37: #{_lambda_.12} parent=35 // pred_check
        %p4107 = pneg %p163
      $region38: #{_lambda_.12} parent=35 // pred_check_branch
        %4109 = sbr.rel (%p4107) target = $region40
      $region39: #{_lambda_.12} parent=35 // pred_region
        _
      $region40: #{_lambda_.12} parent=35 // pred_fallthru
        _
    $region36: #{_lambda_.12} parent=5 // pred_fallthru
      _
    %p4110 = scmp.le.s32.totalorder 2, %s19
    // Predicated region
    $region41: #{_lambda_.12} parent=5 // pred_check
      %p4111 = pneg %p4110
    $region42: #{_lambda_.12} parent=5 // pred_check_branch
      %4113 = sbr.rel (%p4111) target = $region44
    $region43: #{_lambda_.12} parent=5 // pred_region
      %s4114 = ssub.s32 %s19, 2
      // Predicated region
      $region45: #{_lambda_.12} parent=43 // pred_check
        %p4115 = pneg %p169
      $region46: #{_lambda_.12} parent=43 // pred_check_branch
        %4117 = sbr.rel (%p4115) target = $region48
      $region47: #{_lambda_.12} parent=43 // pred_region
        %p4118 = scmp.lt.s32.totalorder %s30, 3
        %s4119 = scalar_select %p4118, %s30, 3
        %p4120 = scmp.lt.s32.totalorder %s31, 0
        %s4121 = scalar_select %p4120, %s31, 0
        %s4122 = smul.addr %s4119, 45
        %s4123 = sadd.s32 %s4121, %s4122
        %s4124 = smul.addr %s4123, 4
        %s4125 = scalar_lea.vmem %s5, %s4124
      $region48: #{_lambda_.12} parent=43 // pred_fallthru
        _
    $region44: #{_lambda_.12} parent=5 // pred_fallthru
      _
  $region6: #{_lambda_.12} parent=0 // loop_footer
    %s23 = sadd.s32 1, %s19
  $region7: #{_lambda_.12} parent=0 // loop_footer_branch
    %18 = sbr.rel target = $region3
  $region8: #{_lambda_.12} parent=0 // loop_exit
    _

// kernel: _lambda_.16
$region0: #{_lambda_.16}
  #allocation0 [shape = 'u32[]', space=smem, size = 0x4, offset = 0x4, fixed_abs, tag = 'smem constant byte address 0x4 - core index']
  #allocation1 [shape = 'u32[72,128]{1,0:T(1,128)}', space=vmem, size = 0x9000, scoped, tag = 'internal scratch']
  #allocation2 [shape = 's32[1]{0}', space=sflag, size = 0x4, scoped, tag = 'scoped memory for _lambda_.16']
  #allocation3 [shape = 'u8[512]{0}', space=smem, size = 0x200, scoped, tag = 'prefetched SMEM operand 0']
  %s0 = inlined_call_operand.vmem [shape: s32[4], index: 0, kind: input, shape index: {}]
  %s1 = inlined_call_operand.vmem [shape: bf16[4,120,128], index: 1, kind: input, shape index: {}]
  %s2 = inlined_call_operand.vmem [shape: bf16[2,9,128,128], index: 2, kind: input, shape index: {}]
  %s3 = inlined_call_operand.vmem [shape: f32[2,1,128], index: 3, kind: input, shape index: {}]
  %s4 = inlined_call_operand.vmem [shape: f32[80,1], index: 4, kind: input, shape index: {}]
  %s5 = inlined_call_operand.vmem [shape: bf16[4,120,128], index: 5, kind: output, shape index: {}]
  %s6 = sld [smem:[#allocation0]]
  $region49: #{_lambda_.16} parent=0
    _
  %s8 = ssub.s32 1, %s6
  %s9 = scalar_select 0, %s8, %s6
  %s11 = sshll.u32 %s0, 4
  %s12 = int_to_ptr.vmem [resolvable:$true] %s11
  %14 = dma.vmem_to_smem %s12, 16, [#allocation3], [#allocation2]
  %16 = dma.done [#allocation2], 16
  %17 = sfence
  loop: start=0, step=1, limit=6
  $region2: #{_lambda_.16} parent=0 // loop_pre_header
    _
  $region3: #{_lambda_.16} parent=0 // loop_header
    %s19 = sphi 0, %s23
    %p20 = scmp.ge.s32.totalorder %s19, 6
    %s26 = sphi 0, %s38
    %s27 = sphi 0, %s34
    %s28 = sphi 0, %s26
    %s29 = sphi 0, %s27
    %s30 = sphi 0, %s28
    %s31 = sphi 0, %s29
    %s41 = sphi 0, %s43
    %s44 = sphi 0, %s41
    %s45 = sphi 0, %s44
    %s61 = sphi 0, %s45
    %s71 = sphi 0, %s73
    %s74 = sphi 0, %s71
    %s75 = sphi 0, %s74
    %s91 = sphi 0, %s75
    %s101 = sphi 0, %s103
    %s104 = sphi 0, %s101
    %s105 = sphi 0, %s104
    %s121 = sphi 0, %s105
    %s125 = sphi 0, %s125
    %s127 = sphi 0, %s125
    %s128 = sphi 0, %s127
    %s142 = sphi 0, %s128
    %s150 = sphi 0, %s152
    %s153 = sphi 0, %s150
    %s154 = sphi 0, %s153
    %s170 = sphi 0, %s154
  $region4: #{_lambda_.16} parent=0 // loop_header_branch
    %22 = sbr.rel (%p20) target = $region8
  $region5: #{_lambda_.16} parent=0 // loop_body
    %s24 = ssub.s32 %s19, 1
    %s25 = ssub.s32 %s19, 2
    %s32 = sadd.s32 1, %s27
    %p33 = scmp.ge.s32.totalorder %s32, 1
    %s34 = scalar_select %p33, 0, %s32
    %s35 = sadd.s32 1, %s26
    %s36 = scalar_select %p33, %s35, %s26
    %p37 = scmp.ge.s32.totalorder %s36, 4
    %s38 = scalar_select %p37, 0, %s36
    %s39 = ssub.s32 %s26, %s38
    %p40 = scmp.eq.s32.totalorder %s39, 0
    %s42 = sadd.s32 %s41, 1
    %s43 = scalar_select %p40, %s41, %s42
    %p46 = pneg %p40
    %p47 = scmp.eq.s32.totalorder %s19, 3
    %p48 = por %p46, %p47
    %p49 = scmp.ne.s32.totalorder %s41, %s44
    %p50 = scmp.eq.s32.totalorder %s19, 0
    %p51 = por %p49, %p50
    %p52 = scmp.ne.s32.totalorder %s41, %s44
    %p53 = scmp.eq.s32.totalorder %s24, 3
    %p54 = por %p52, %p53
    %p55 = scmp.ne.s32.totalorder %s44, %s45
    %p56 = scmp.eq.s32.totalorder %s24, 0
    %p57 = por %p55, %p56
    %p58 = scmp.ne.s32.totalorder %s44, %s45
    %p59 = scmp.eq.s32.totalorder %s25, 3
    %p60 = por %p58, %p59
    %p62 = scmp.ne.s32.totalorder %s45, %s61
    %p63 = scmp.eq.s32.totalorder %s25, 0
    %p64 = por %p62, %p63
    %s65 = sld [smem:[#allocation3 + %s26]]
    %s66 = sld [smem:[#allocation3 + %s38]]
    %s67 = ssub.s32 %s65, %s66
    %s68 = ssub.s32 %s27, %s34
    %s69 = sor.u32 %s67, %s68
    %p70 = scmp.eq.s32.totalorder %s69, 0
    %s72 = sadd.s32 %s71, 1
    %s73 = scalar_select %p70, %s71, %s72
    %p76 = pneg %p70
    %p77 = scmp.eq.s32.totalorder %s19, 3
    %p78 = por %p76, %p77
    %p79 = scmp.ne.s32.totalorder %s71, %s74
    %p80 = scmp.eq.s32.totalorder %s19, 0
    %p81 = por %p79, %p80
    %p82 = scmp.ne.s32.totalorder %s71, %s74
    %p83 = scmp.eq.s32.totalorder %s24, 3
    %p84 = por %p82, %p83
    %p85 = scmp.ne.s32.totalorder %s74, %s75
    %p86 = scmp.eq.s32.totalorder %s24, 0
    %p87 = por %p85, %p86
    %p88 = scmp.ne.s32.totalorder %s74, %s75
    %p89 = scmp.eq.s32.totalorder %s25, 3
    %p90 = por %p88, %p89
    %p92 = scmp.ne.s32.totalorder %s75, %s91
    %p93 = scmp.eq.s32.totalorder %s25, 0
    %p94 = por %p92, %p93
    %s95 = sld [smem:[#allocation3 + %s26]]
    %s96 = sld [smem:[#allocation3 + %s38]]
    %s97 = ssub.s32 %s95, %s96
    %s98 = ssub.s32 %s27, %s34
    %s99 = sor.u32 %s97, %s98
    %p100 = scmp.eq.s32.totalorder %s99, 0
    %s102 = sadd.s32 %s101, 1
    %s103 = scalar_select %p100, %s101, %s102
    %p106 = pneg %p100
    %p107 = scmp.eq.s32.totalorder %s19, 3
    %p108 = por %p106, %p107
    %p109 = scmp.ne.s32.totalorder %s101, %s104
    %p110 = scmp.eq.s32.totalorder %s19, 0
    %p111 = por %p109, %p110
    %p112 = scmp.ne.s32.totalorder %s101, %s104
    %p113 = scmp.eq.s32.totalorder %s24, 3
    %p114 = por %p112, %p113
    %p115 = scmp.ne.s32.totalorder %s104, %s105
    %p116 = scmp.eq.s32.totalorder %s24, 0
    %p117 = por %p115, %p116
    %p118 = scmp.ne.s32.totalorder %s104, %s105
    %p119 = scmp.eq.s32.totalorder %s25, 3
    %p120 = por %p118, %p119
    %p122 = scmp.ne.s32.totalorder %s105, %s121
    %p123 = scmp.eq.s32.totalorder %s25, 0
    %p124 = por %p122, %p123
    %s126 = sadd.s32 %s125, 1
    %p129 = scmp.eq.s32.totalorder %s19, 3
    %p130 = scmp.ne.s32.totalorder %s125, %s127
    %p131 = scmp.eq.s32.totalorder %s19, 0
    %p132 = por %p130, %p131
    %p133 = scmp.ne.s32.totalorder %s125, %s127
    %p134 = scmp.eq.s32.totalorder %s24, 3
    %p135 = por %p133, %p134
    %p136 = scmp.ne.s32.totalorder %s127, %s128
    %p137 = scmp.eq.s32.totalorder %s24, 0
    %p138 = por %p136, %p137
    %p139 = scmp.ne.s32.totalorder %s127, %s128
    %p140 = scmp.eq.s32.totalorder %s25, 3
    %p141 = por %p139, %p140
    %p143 = scmp.ne.s32.totalorder %s128, %s142
    %p144 = scmp.eq.s32.totalorder %s25, 0
    %p145 = por %p143, %p144
    %s146 = ssub.s32 %s26, %s38
    %s147 = ssub.s32 %s27, %s34
    %s148 = sor.u32 %s146, %s147
    %p149 = scmp.eq.s32.totalorder %s148, 0
    %s151 = sadd.s32 %s150, 1
    %s152 = scalar_select %p149, %s150, %s151
    %p155 = pneg %p149
    %p156 = scmp.eq.s32.totalorder %s19, 3
    %p157 = por %p155, %p156
    %p158 = scmp.ne.s32.totalorder %s150, %s153
    %p159 = scmp.eq.s32.totalorder %s19, 0
    %p160 = por %p158, %p159
    %p161 = scmp.ne.s32.totalorder %s150, %s153
    %p162 = scmp.eq.s32.totalorder %s24, 3
    %p163 = por %p161, %p162
    %p164 = scmp.ne.s32.totalorder %s153, %s154
    %p165 = scmp.eq.s32.totalorder %s24, 0
    %p166 = por %p164, %p165
    %p167 = scmp.ne.s32.totalorder %s153, %s154
    %p168 = scmp.eq.s32.totalorder %s25, 3
    %p169 = por %p167, %p168
    %p171 = scmp.ne.s32.totalorder %s154, %s170
    %p172 = scmp.eq.s32.totalorder %s25, 0
    %p173 = por %p171, %p172
    %p174 = scmp.le.s32.totalorder 1, %s19
    %p175 = scmp.lt.s32.totalorder %s19, 5
    %p176 = pnand %p174, %p175
    %p177 = pneg %p176
    // Predicated region
    $region9: #{_lambda_.16} parent=5 // pred_check
      _
    $region10: #{_lambda_.16} parent=5 // pred_check_branch
      %179 = sbr.rel (%p176) target = $region12
    $region11: #{_lambda_.16} parent=5 // pred_region
      %s180 = ssub.s32 %s19, 1
      // Predicated region
      $region13: #{_lambda_.16} parent=11 // pred_check
        %p181 = pneg %p138
      $region14: #{_lambda_.16} parent=11 // pred_check_branch
        %183 = sbr.rel (%p181) target = $region16
      $region15: #{_lambda_.16} parent=11 // pred_region
        _
      $region16: #{_lambda_.16} parent=11 // pred_fallthru
        _
    $region12: #{_lambda_.16} parent=5 // pred_fallthru
      _
    %p184 = scmp.lt.s32.totalorder %s19, 4
    // Predicated region
    $region17: #{_lambda_.16} parent=5 // pred_check
      %p185 = pneg %p184
    $region18: #{_lambda_.16} parent=5 // pred_check_branch
      %187 = sbr.rel (%p185) target = $region20
    $region19: #{_lambda_.16} parent=5 // pred_region
      // Predicated region
      $region21: #{_lambda_.16} parent=19 // pred_check
        %p188 = pneg %p51
      $region22: #{_lambda_.16} parent=19 // pred_check_branch
        %190 = sbr.rel (%p188) target = $region24
      $region23: #{_lambda_.16} parent=19 // pred_region
        %p191 = scmp.lt.s32.totalorder %s26, 3
        %s192 = scalar_select %p191, %s26, 3
        %s193 = smul.addr %s192, 15
        %s194 = smul.addr %s193, 4
        %s195 = scalar_lea.vmem %s1, %s194
      $region24: #{_lambda_.16} parent=19 // pred_fallthru
        _
      // Predicated region
      $region25: #{_lambda_.16} parent=19 // pred_check
        %p196 = pneg %p81
      $region26: #{_lambda_.16} parent=19 // pred_check_branch
        %198 = sbr.rel (%p196) target = $region28
      $region27: #{_lambda_.16} parent=19 // pred_region
        %s199 = sld [smem:[#allocation3 + %s26]]
        %p200 = scmp.lt.s32.totalorder %s199, 1
        %s201 = scalar_select %p200, %s199, 1
        %p202 = scmp.lt.s32.totalorder %s27, 0
        %s203 = scalar_select %p202, %s27, 0
        %s204 = smul.addr %s201, 144
        %s205 = sadd.s32 %s203, %s204
        %s206 = smul.addr %s205, 4
        %s207 = scalar_lea.vmem %s2, %s206
        %s208 = sld [smem:[#allocation3 + %s26]]
      $region28: #{_lambda_.16} parent=19 // pred_fallthru
        _
      // Predicated region
      $region29: #{_lambda_.16} parent=19 // pred_check
        %p209 = pneg %p111
      $region30: #{_lambda_.16} parent=19 // pred_check_branch
        %211 = sbr.rel (%p209) target = $region32
      $region31: #{_lambda_.16} parent=19 // pred_region
        %s212 = sld [smem:[#allocation3 + %s26]]
        %p213 = scmp.lt.s32.totalorder %s212, 1
        %s214 = scalar_select %p213, %s212, 1
        %p215 = scmp.lt.s32.totalorder %s27, 0
        %s216 = scalar_select %p215, %s27, 0
        %s217 = sadd.s32 %s216, %s214
        %s218 = scalar_lea.vmem %s3, %s217
        %s219 = sld [smem:[#allocation3 + %s26]]
      $region32: #{_lambda_.16} parent=19 // pred_fallthru
        _
    $region20: #{_lambda_.16} parent=5 // pred_fallthru
      _
    %p220 = scmp.le.s32.totalorder 1, %s19
    %p221 = scmp.lt.s32.totalorder %s19, 5
    %p222 = pnand %p220, %p221
    %p223 = pneg %p222
    // Predicated region
    $region33: #{_lambda_.16} parent=5 // pred_check
      _
    $region34: #{_lambda_.16} parent=5 // pred_check_branch
      %225 = sbr.rel (%p222) target = $region36
    $region35: #{_lambda_.16} parent=5 // pred_region
      %s226 = ssub.s32 %s19, 1
      %p227 = scmp.lt.s32.totalorder %s28, 3
      %s228 = scalar_select %p227, %s28, 3
      %s229 = smul.addr %s228, 15
      %s230 = smul.addr %s229, 4
      %s231 = scalar_lea.vmem %s1, %s230
      %p232 = pneg %p57
      %p233 = pneg %p54
      %s234 = sld [smem:[#allocation3 + %s28]]
      %p235 = scmp.lt.s32.totalorder %s234, 1
      %s236 = scalar_select %p235, %s234, 1
      %p237 = scmp.lt.s32.totalorder %s29, 0
      %s238 = scalar_select %p237, %s29, 0
      %s239 = smul.addr %s236, 144
      %s240 = sadd.s32 %s238, %s239
      %s241 = smul.addr %s240, 4
      %s242 = scalar_lea.vmem %s2, %s241
      %p243 = pneg %p87
      %p244 = pneg %p84
      %s245 = sld [smem:[#allocation3 + %s28]]
      %p246 = scmp.lt.s32.totalorder %s245, 1
      %s247 = scalar_select %p246, %s245, 1
      %p248 = scmp.lt.s32.totalorder %s29, 0
      %s249 = scalar_select %p248, %s29, 0
      %s250 = sadd.s32 %s249, %s247
      %s251 = scalar_lea.vmem %s3, %s250
      %p252 = pneg %p117
      %p253 = pneg %p114
      %p254 = pneg %p138
      %p255 = pneg %p135
      %p256 = pneg %p166
      %p257 = pneg %p163
      %p258 = scmp.lt.s32.totalorder %s28, 3
      %s259 = scalar_select %p258, %s28, 3
      %p260 = scmp.lt.s32.totalorder %s29, 0
      %s261 = scalar_select %p260, %s29, 0
      %s262 = smul.addr %s259, 15
      %s263 = sadd.s32 %s261, %s262
      %s264 = smul.addr %s263, 4
      %s265 = scalar_lea.vmem %s5, %s264
      %p266 = scmp.lt.s32.totalorder %s28, 3
      %s267 = scalar_select %p266, %s28, 3
      %s268 = smul.addr %s267, 15
      %s269 = smul.addr %s268, 4
      %s270 = scalar_lea.vmem %s1, %s269
      %s271 = sld [smem:[#allocation3 + %s28]]
      %p272 = scmp.lt.s32.totalorder %s271, 1
      %s273 = scalar_select %p272, %s271, 1
      %p274 = scmp.lt.s32.totalorder %s29, 0
      %s275 = scalar_select %p274, %s29, 0
      %s276 = smul.addr %s273, 144
      %s277 = sadd.s32 %s275, %s276
      %s278 = smul.addr %s277, 4
      %s279 = scalar_lea.vmem %s2, %s278
      %s280 = sld [smem:[#allocation3 + %s28]]
      %s281 = sld [smem:[#allocation3 + %s28]]
      %p282 = scmp.lt.s32.totalorder %s281, 1
      %s283 = scalar_select %p282, %s281, 1
      %p284 = scmp.lt.s32.totalorder %s29, 0
      %s285 = scalar_select %p284, %s29, 0
      %s286 = sadd.s32 %s285, %s283
      %s287 = scalar_lea.vmem %s3, %s286
      %s288 = sld [smem:[#allocation3 + %s28]]
      %p289 = scmp.lt.s32.totalorder %s28, 3
      %s290 = scalar_select %p289, %s28, 3
      %p291 = scmp.lt.s32.totalorder %s29, 0
      %s292 = scalar_select %p291, %s29, 0
      %s293 = smul.addr %s290, 15
      %s294 = sadd.s32 %s292, %s293
      %s295 = smul.addr %s294, 4
      %s296 = scalar_lea.vmem %s5, %s295
      %v298 = vld [vmem:[%s270] sm:$0xf]
      %v299 = vld [vmem:[%s270 + $0x4] sm:$0xf]
      %v300 = vld [vmem:[%s270 + $0x8] sm:$0xf]
      %v301 = vld [vmem:[%s270 + $0xc] sm:$0xf]
      %v302 = vld [vmem:[%s270 + $0x10] sm:$0xf]
      %v303 = vld [vmem:[%s270 + $0x14] sm:$0xf]
      %v304 = vld [vmem:[%s270 + $0x18] sm:$0xf]
      %v305 = vld [vmem:[%s270 + $0x1c] sm:$0xf]
      %v306 = vld [vmem:[%s270 + $0x20] sm:$0xf]
      %v307 = vld [vmem:[%s270 + $0x24] sm:$0xf]
      %v308 = vld [vmem:[%s279] sm:$0xf]
      %v309 = vld [vmem:[%s279 + $0x4] sm:$0xf]
      %v310 = vld [vmem:[%s279 + $0x8] sm:$0xf]
      %v311 = vld [vmem:[%s279 + $0xc] sm:$0xf]
      %v312 = vld [vmem:[%s279 + $0x10] sm:$0xf]
      %v313 = vld [vmem:[%s279 + $0x14] sm:$0xf]
      %v314 = vld [vmem:[%s279 + $0x18] sm:$0xf]
      %v315 = vld [vmem:[%s279 + $0x1c] sm:$0xf]
      %v316 = vld [vmem:[%s279 + $0x20] sm:$0xf]
      %v317 = vld [vmem:[%s279 + $0x24] sm:$0xf]
      %v318 = vld [vmem:[%s279 + $0x28] sm:$0xf]
      %v319 = vld [vmem:[%s279 + $0x2c] sm:$0xf]
      %v320 = vld [vmem:[%s279 + $0x30] sm:$0xf]
      %v321 = vld [vmem:[%s279 + $0x34] sm:$0xf]
      %v322 = vld [vmem:[%s279 + $0x38] sm:$0xf]
      %v323 = vld [vmem:[%s279 + $0x3c] sm:$0xf]
      %v324 = vld [vmem:[%s270 + $0x28] sm:$0x1]
      %s325 = scalar_lea.vmem %s279, 64
      %v326 = vld [vmem:[%s325] sm:$0xf]
      %v327 = vld [vmem:[%s325 + $0x4] sm:$0xf]
      %v328 = vld [vmem:[%s325 + $0x8] sm:$0xf]
      %v329 = vld [vmem:[%s325 + $0xc] sm:$0xf]
      %v330 = vld [vmem:[%s325 + $0x10] sm:$0xf]
      %v331 = vld [vmem:[%s325 + $0x14] sm:$0xf]
      %v332 = vld [vmem:[%s325 + $0x18] sm:$0xf]
      %v333 = vld [vmem:[%s325 + $0x1c] sm:$0xf]
      %v334 = vld [vmem:[%s325 + $0x20] sm:$0xf]
      %v335 = vld [vmem:[%s325 + $0x24] sm:$0xf]
      %v336 = vld [vmem:[%s325 + $0x28] sm:$0xf]
      %v337 = vld [vmem:[%s325 + $0x2c] sm:$0xf]
      %v338 = vld [vmem:[%s325 + $0x30] sm:$0xf]
      %v339 = vld [vmem:[%s325 + $0x34] sm:$0xf]
      %v340 = vld [vmem:[%s325 + $0x38] sm:$0xf]
      %v341 = vld [vmem:[%s325 + $0x3c] sm:$0xf]
      %v353 = vunpack.c.l.b16 %v298
      %v354 = vunpack.c.l.b16 %v299
      %v355 = vunpack.c.l.b16 %v300
      %v356 = vunpack.c.l.b16 %v301
      %v357 = vunpack.c.l.b16 %v302
      %v358 = vunpack.c.l.b16 %v303
      %v359 = vunpack.c.l.b16 %v304
      %v360 = vunpack.c.l.b16 %v305
      %v361 = vunpack.c.l.b16 %v306
      %v362 = vunpack.c.l.b16 %v307
      %v363 = vunpack.c.l.b16 %v324
      %v364 = vpack.c.b16 %v354, %v353
      %v365 = vpack.c.b16 %v356, %v355
      %v366 = vpack.c.b16 %v358, %v357
      %v367 = vpack.c.b16 %v360, %v359
      %v368 = vpack.c.b16 %v362, %v361
      %v369 = vpack.c.b16 %v363, %v363
      %vm370 = vsmask.f32 7424
      %v372 = vshrl.u32 %v364, 16
      %v374 = vshll.u32 %v364, 16
      %v376 = vrot.slane %v374, 1
      %v377 = vor.u32 %v372, %v376
      %v379 = vshll.u32 %v365, 16
      %v381 = vrot.slane %v379, 1
      %v382 = vsel %vm370, %v377, %v381
      %v383 = vshrl.u32 %v365, 16
      %v385 = vor.u32 %v383, %v381
      %v387 = vshll.u32 %v366, 16
      %v389 = vrot.slane %v387, 1
      %v390 = vsel %vm370, %v385, %v389
      %v391 = vshrl.u32 %v366, 16
      %v393 = vor.u32 %v391, %v389
      %v395 = vshll.u32 %v367, 16
      %v397 = vrot.slane %v395, 1
      %v398 = vsel %vm370, %v393, %v397
      %v399 = vshrl.u32 %v367, 16
      %v401 = vor.u32 %v399, %v397
      %v403 = vshll.u32 %v368, 16
      %v405 = vrot.slane %v403, 1
      %v406 = vsel %vm370, %v401, %v405
      %v407 = vshrl.u32 %v368, 16
      %v409 = vor.u32 %v407, %v405
      %v411 = vshll.u32 %v369, 16
      %v413 = vrot.slane %v411, 1
      %v414 = vsel %vm370, %v409, %v413
      %v436 = vunpack.c.l.b16 %v326
      %v437 = vunpack.c.l.b16 %v327
      %v438 = vunpack.c.l.b16 %v328
      %v439 = vunpack.c.l.b16 %v329
      %v440 = vunpack.c.l.b16 %v330
      %v441 = vunpack.c.l.b16 %v331
      %v442 = vunpack.c.l.b16 %v332
      %v443 = vunpack.c.l.b16 %v333
      %v444 = vunpack.c.l.b16 %v334
      %v445 = vunpack.c.l.b16 %v335
      %v446 = vunpack.c.l.b16 %v336
      %v447 = vunpack.c.l.b16 %v337
      %v448 = vunpack.c.l.b16 %v338
      %v449 = vunpack.c.l.b16 %v339
      %v450 = vunpack.c.l.b16 %v340
      %v451 = vunpack.c.l.b16 %v341
      %v452 = vpack.c.b16 %v437, %v436
      %v453 = vpack.c.b16 %v439, %v438
      %v454 = vpack.c.b16 %v441, %v440
      %v455 = vpack.c.b16 %v443, %v442
      %v456 = vpack.c.b16 %v445, %v444
      %v457 = vpack.c.b16 %v447, %v446
      %v458 = vpack.c.b16 %v449, %v448
      %v459 = vpack.c.b16 %v451, %v450
      %468 = vmatpush.bf16.msra.mxu0 %v459
      %469 = vmatpush.bf16.msra.mxu0 %v458
      %470 = vmatpush.bf16.msra.mxu0 %v457
      %471 = vmatpush.bf16.msra.mxu0 %v456
      %472 = vmatpush.bf16.msra.mxu0 %v455
      %473 = vmatpush.bf16.msra.mxu0 %v454
      %474 = vmatpush.bf16.msra.mxu0 %v453
      %475 = vmatpush.bf16.msra.mxu0 %v452
      %476 = vmatmul.bf16.gmra.mxu0 %v382
      %v477 = vpop.f32.mrf.mxu0
      %v478 = vadd.f32 0.0, %v477
      %v479 = vpop.f32.mrf.mxu0
      %v480 = vadd.f32 0.0, %v479
      %481 = vmatmul.bf16.gmra.mxu0 %v390
      %v482 = vpop.f32.mrf.mxu0
      %v483 = vadd.f32 0.0, %v482
      %v484 = vpop.f32.mrf.mxu0
      %v485 = vadd.f32 0.0, %v484
      %486 = vmatmul.bf16.gmra.mxu0 %v398
      %v487 = vpop.f32.mrf.mxu0
      %v488 = vadd.f32 0.0, %v487
      %v489 = vpop.f32.mrf.mxu0
      %v490 = vadd.f32 0.0, %v489
      %491 = vmatmul.bf16.gmra.mxu0 %v406
      %v492 = vpop.f32.mrf.mxu0
      %v493 = vadd.f32 0.0, %v492
      %v494 = vpop.f32.mrf.mxu0
      %v495 = vadd.f32 0.0, %v494
      %496 = vmatmul.bf16.gmra.mxu0 %v414
      %v497 = vpop.f32.mrf.mxu0
      %v498 = vadd.f32 0.0, %v497
      %v499 = vpop.f32.mrf.mxu0
      %v500 = vadd.f32 0.0, %v499
      %501 = vdwg.mxu0
      %v523 = vunpack.c.l.b16 %v308
      %v524 = vunpack.c.l.b16 %v309
      %v525 = vunpack.c.l.b16 %v310
      %v526 = vunpack.c.l.b16 %v311
      %v527 = vunpack.c.l.b16 %v312
      %v528 = vunpack.c.l.b16 %v313
      %v529 = vunpack.c.l.b16 %v314
      %v530 = vunpack.c.l.b16 %v315
      %v531 = vunpack.c.l.b16 %v316
      %v532 = vunpack.c.l.b16 %v317
      %v533 = vunpack.c.l.b16 %v318
      %v534 = vunpack.c.l.b16 %v319
      %v535 = vunpack.c.l.b16 %v320
      %v536 = vunpack.c.l.b16 %v321
      %v537 = vunpack.c.l.b16 %v322
      %v538 = vunpack.c.l.b16 %v323
      %v539 = vpack.c.b16 %v524, %v523
      %v540 = vpack.c.b16 %v526, %v525
      %v541 = vpack.c.b16 %v528, %v527
      %v542 = vpack.c.b16 %v530, %v529
      %v543 = vpack.c.b16 %v532, %v531
      %v544 = vpack.c.b16 %v534, %v533
      %v545 = vpack.c.b16 %v536, %v535
      %v546 = vpack.c.b16 %v538, %v537
      %555 = vmatpush.bf16.msra.mxu0 %v546
      %556 = vmatpush.bf16.msra.mxu0 %v545
      %557 = vmatpush.bf16.msra.mxu0 %v544
      %558 = vmatpush.bf16.msra.mxu0 %v543
      %559 = vmatpush.bf16.msra.mxu0 %v542
      %560 = vmatpush.bf16.msra.mxu0 %v541
      %561 = vmatpush.bf16.msra.mxu0 %v540
      %562 = vmatpush.bf16.msra.mxu0 %v539
      %563 = vmatmul.bf16.gmra.mxu0 %v364
      %v564 = vpop.f32.mrf.mxu0
      %v565 = vadd.f32 %v478, %v564
      %v566 = vpop.f32.mrf.mxu0
      %v567 = vadd.f32 %v480, %v566
      %568 = vmatmul.bf16.gmra.mxu0 %v365
      %v569 = vpop.f32.mrf.mxu0
      %v570 = vadd.f32 %v483, %v569
      %v571 = vpop.f32.mrf.mxu0
      %v572 = vadd.f32 %v485, %v571
      %573 = vmatmul.bf16.gmra.mxu0 %v366
      %v574 = vpop.f32.mrf.mxu0
      %v575 = vadd.f32 %v488, %v574
      %v576 = vpop.f32.mrf.mxu0
      %v577 = vadd.f32 %v490, %v576
      %578 = vmatmul.bf16.gmra.mxu0 %v367
      %v579 = vpop.f32.mrf.mxu0
      %v580 = vadd.f32 %v493, %v579
      %v581 = vpop.f32.mrf.mxu0
      %v582 = vadd.f32 %v495, %v581
      %583 = vmatmul.bf16.gmra.mxu0 %v368
      %v584 = vpop.f32.mrf.mxu0
      %v585 = vadd.f32 %v498, %v584
      %v586 = vpop.f32.mrf.mxu0
      %v587 = vadd.f32 %v500, %v586
      %588 = vdwg.mxu0
      %v589 = vld [vmem:[%s270] sm:$0xe]
      %s590 = scalar_lea.vmem %s279, 128
      %v591 = vld [vmem:[%s590] sm:$0xf]
      %v592 = vld [vmem:[%s590 + $0x4] sm:$0xf]
      %v593 = vld [vmem:[%s590 + $0x8] sm:$0xf]
      %v594 = vld [vmem:[%s590 + $0xc] sm:$0xf]
      %v595 = vld [vmem:[%s590 + $0x10] sm:$0xf]
      %v596 = vld [vmem:[%s590 + $0x14] sm:$0xf]
      %v597 = vld [vmem:[%s590 + $0x18] sm:$0xf]
      %v598 = vld [vmem:[%s590 + $0x1c] sm:$0xf]
      %v599 = vld [vmem:[%s590 + $0x20] sm:$0xf]
      %v600 = vld [vmem:[%s590 + $0x24] sm:$0xf]
      %v601 = vld [vmem:[%s590 + $0x28] sm:$0xf]
      %v602 = vld [vmem:[%s590 + $0x2c] sm:$0xf]
      %v603 = vld [vmem:[%s590 + $0x30] sm:$0xf]
      %v604 = vld [vmem:[%s590 + $0x34] sm:$0xf]
      %v605 = vld [vmem:[%s590 + $0x38] sm:$0xf]
      %v606 = vld [vmem:[%s590 + $0x3c] sm:$0xf]
      %v608 = vunpack.c.l.b16 %v589
      %v609 = vpack.c.b16 %v354, %v608
      %vm610 = vcmask 1046528
      %v611 = vrot.slane %v609, 1
      %v612 = vrot.slane %v365, 1
      %v613 = vsel %vm610, %v611, %v612
      %v614 = vrot.slane %v366, 1
      %v615 = vsel %vm610, %v612, %v614
      %v616 = vrot.slane %v367, 1
      %v617 = vsel %vm610, %v614, %v616
      %v618 = vrot.slane %v368, 1
      %v619 = vsel %vm610, %v616, %v618
      %v620 = vrot.slane %v369, 1
      %v621 = vsel %vm610, %v618, %v620
      %v643 = vunpack.c.l.b16 %v591
      %v644 = vunpack.c.l.b16 %v592
      %v645 = vunpack.c.l.b16 %v593
      %v646 = vunpack.c.l.b16 %v594
      %v647 = vunpack.c.l.b16 %v595
      %v648 = vunpack.c.l.b16 %v596
      %v649 = vunpack.c.l.b16 %v597
      %v650 = vunpack.c.l.b16 %v598
      %v651 = vunpack.c.l.b16 %v599
      %v652 = vunpack.c.l.b16 %v600
      %v653 = vunpack.c.l.b16 %v601
      %v654 = vunpack.c.l.b16 %v602
      %v655 = vunpack.c.l.b16 %v603
      %v656 = vunpack.c.l.b16 %v604
      %v657 = vunpack.c.l.b16 %v605
      %v658 = vunpack.c.l.b16 %v606
      %v659 = vpack.c.b16 %v644, %v643
      %v660 = vpack.c.b16 %v646, %v645
      %v661 = vpack.c.b16 %v648, %v647
      %v662 = vpack.c.b16 %v650, %v649
      %v663 = vpack.c.b16 %v652, %v651
      %v664 = vpack.c.b16 %v654, %v653
      %v665 = vpack.c.b16 %v656, %v655
      %v666 = vpack.c.b16 %v658, %v657
      %675 = vmatpush.bf16.msra.mxu0 %v666
      %676 = vmatpush.bf16.msra.mxu0 %v665
      %677 = vmatpush.bf16.msra.mxu0 %v664
      %678 = vmatpush.bf16.msra.mxu0 %v663
      %679 = vmatpush.bf16.msra.mxu0 %v662
      %680 = vmatpush.bf16.msra.mxu0 %v661
      %681 = vmatpush.bf16.msra.mxu0 %v660
      %682 = vmatpush.bf16.msra.mxu0 %v659
      %683 = vmatmul.bf16.gmra.mxu0 %v613
      %v684 = vpop.f32.mrf.mxu0
      %v685 = vadd.f32 0.0, %v684
      %v686 = vpop.f32.mrf.mxu0
      %v687 = vadd.f32 0.0, %v686
      %688 = vmatmul.bf16.gmra.mxu0 %v615
      %v689 = vpop.f32.mrf.mxu0
      %v690 = vadd.f32 0.0, %v689
      %v691 = vpop.f32.mrf.mxu0
      %v692 = vadd.f32 0.0, %v691
      %693 = vmatmul.bf16.gmra.mxu0 %v617
      %v694 = vpop.f32.mrf.mxu0
      %v695 = vadd.f32 0.0, %v694
      %v696 = vpop.f32.mrf.mxu0
      %v697 = vadd.f32 0.0, %v696
      %698 = vmatmul.bf16.gmra.mxu0 %v619
      %v699 = vpop.f32.mrf.mxu0
      %v700 = vadd.f32 0.0, %v699
      %v701 = vpop.f32.mrf.mxu0
      %v702 = vadd.f32 0.0, %v701
      %703 = vmatmul.bf16.gmra.mxu0 %v621
      %v704 = vpop.f32.mrf.mxu0
      %v705 = vadd.f32 0.0, %v704
      %v706 = vpop.f32.mrf.mxu0
      %v707 = vadd.f32 0.0, %v706
      %708 = vdwg.mxu0
      %v709 = vadd.f32 %v565, %v685
      %v710 = vadd.f32 %v567, %v687
      %v711 = vadd.f32 %v570, %v690
      %v712 = vadd.f32 %v572, %v692
      %v713 = vadd.f32 %v575, %v695
      %v714 = vadd.f32 %v577, %v697
      %v715 = vadd.f32 %v580, %v700
      %v716 = vadd.f32 %v582, %v702
      %v717 = vadd.f32 %v585, %v705
      %v718 = vadd.f32 %v587, %v707
      %v719 = vld [vmem:[%s270 + $0x4] sm:$0xe]
      %v720 = vld [vmem:[%s270 + $0x8] sm:$0xf]
      %v721 = vld [vmem:[%s270 + $0xc] sm:$0xf]
      %v722 = vld [vmem:[%s270 + $0x10] sm:$0xf]
      %v723 = vld [vmem:[%s270 + $0x14] sm:$0xf]
      %v724 = vld [vmem:[%s270 + $0x18] sm:$0xf]
      %v725 = vld [vmem:[%s270 + $0x1c] sm:$0xf]
      %v726 = vld [vmem:[%s270 + $0x20] sm:$0xf]
      %v727 = vld [vmem:[%s270 + $0x24] sm:$0xf]
      %v728 = vld [vmem:[%s270 + $0x28] sm:$0xf]
      %v729 = vld [vmem:[%s270 + $0x2c] sm:$0x1]
      %s730 = scalar_lea.vmem %s279, 192
      %v731 = vld [vmem:[%s730] sm:$0xf]
      %v732 = vld [vmem:[%s730 + $0x4] sm:$0xf]
      %v733 = vld [vmem:[%s730 + $0x8] sm:$0xf]
      %v734 = vld [vmem:[%s730 + $0xc] sm:$0xf]
      %v735 = vld [vmem:[%s730 + $0x10] sm:$0xf]
      %v736 = vld [vmem:[%s730 + $0x14] sm:$0xf]
      %v737 = vld [vmem:[%s730 + $0x18] sm:$0xf]
      %v738 = vld [vmem:[%s730 + $0x1c] sm:$0xf]
      %v739 = vld [vmem:[%s730 + $0x20] sm:$0xf]
      %v740 = vld [vmem:[%s730 + $0x24] sm:$0xf]
      %v741 = vld [vmem:[%s730 + $0x28] sm:$0xf]
      %v742 = vld [vmem:[%s730 + $0x2c] sm:$0xf]
      %v743 = vld [vmem:[%s730 + $0x30] sm:$0xf]
      %v744 = vld [vmem:[%s730 + $0x34] sm:$0xf]
      %v745 = vld [vmem:[%s730 + $0x38] sm:$0xf]
      %v746 = vld [vmem:[%s730 + $0x3c] sm:$0xf]
      %v758 = vunpack.c.l.b16 %v719
      %v759 = vunpack.c.l.b16 %v720
      %v760 = vunpack.c.l.b16 %v721
      %v761 = vunpack.c.l.b16 %v722
      %v762 = vunpack.c.l.b16 %v723
      %v763 = vunpack.c.l.b16 %v724
      %v764 = vunpack.c.l.b16 %v725
      %v765 = vunpack.c.l.b16 %v726
      %v766 = vunpack.c.l.b16 %v727
      %v767 = vunpack.c.l.b16 %v728
      %v768 = vunpack.c.l.b16 %v729
      %v769 = vpack.c.b16 %v759, %v758
      %v770 = vpack.c.b16 %v761, %v760
      %v771 = vpack.c.b16 %v763, %v762
      %v772 = vpack.c.b16 %v765, %v764
      %v773 = vpack.c.b16 %v767, %v766
      %v774 = vpack.c.b16 %v768, %v768
      %v775 = vrot.slane %v769, 1
      %v776 = vrot.slane %v770, 1
      %v777 = vsel %vm610, %v775, %v776
      %v778 = vrot.slane %v771, 1
      %v779 = vsel %vm610, %v776, %v778
      %v780 = vrot.slane %v772, 1
      %v781 = vsel %vm610, %v778, %v780
      %v782 = vrot.slane %v773, 1
      %v783 = vsel %vm610, %v780, %v782
      %v784 = vrot.slane %v774, 1
      %v785 = vsel %vm610, %v782, %v784
      %v807 = vunpack.c.l.b16 %v731
      %v808 = vunpack.c.l.b16 %v732
      %v809 = vunpack.c.l.b16 %v733
      %v810 = vunpack.c.l.b16 %v734
      %v811 = vunpack.c.l.b16 %v735
      %v812 = vunpack.c.l.b16 %v736
      %v813 = vunpack.c.l.b16 %v737
      %v814 = vunpack.c.l.b16 %v738
      %v815 = vunpack.c.l.b16 %v739
      %v816 = vunpack.c.l.b16 %v740
      %v817 = vunpack.c.l.b16 %v741
      %v818 = vunpack.c.l.b16 %v742
      %v819 = vunpack.c.l.b16 %v743
      %v820 = vunpack.c.l.b16 %v744
      %v821 = vunpack.c.l.b16 %v745
      %v822 = vunpack.c.l.b16 %v746
      %v823 = vpack.c.b16 %v808, %v807
      %v824 = vpack.c.b16 %v810, %v809
      %v825 = vpack.c.b16 %v812, %v811
      %v826 = vpack.c.b16 %v814, %v813
      %v827 = vpack.c.b16 %v816, %v815
      %v828 = vpack.c.b16 %v818, %v817
      %v829 = vpack.c.b16 %v820, %v819
      %v830 = vpack.c.b16 %v822, %v821
      %839 = vmatpush.bf16.msra.mxu0 %v830
      %840 = vmatpush.bf16.msra.mxu0 %v829
      %841 = vmatpush.bf16.msra.mxu0 %v828
      %842 = vmatpush.bf16.msra.mxu0 %v827
      %843 = vmatpush.bf16.msra.mxu0 %v826
      %844 = vmatpush.bf16.msra.mxu0 %v825
      %845 = vmatpush.bf16.msra.mxu0 %v824
      %846 = vmatpush.bf16.msra.mxu0 %v823
      %847 = vmatmul.bf16.gmra.mxu0 %v777
      %v848 = vpop.f32.mrf.mxu0
      %v849 = vadd.f32 0.0, %v848
      %v850 = vpop.f32.mrf.mxu0
      %v851 = vadd.f32 0.0, %v850
      %852 = vmatmul.bf16.gmra.mxu0 %v779
      %v853 = vpop.f32.mrf.mxu0
      %v854 = vadd.f32 0.0, %v853
      %v855 = vpop.f32.mrf.mxu0
      %v856 = vadd.f32 0.0, %v855
      %857 = vmatmul.bf16.gmra.mxu0 %v781
      %v858 = vpop.f32.mrf.mxu0
      %v859 = vadd.f32 0.0, %v858
      %v860 = vpop.f32.mrf.mxu0
      %v861 = vadd.f32 0.0, %v860
      %862 = vmatmul.bf16.gmra.mxu0 %v783
      %v863 = vpop.f32.mrf.mxu0
      %v864 = vadd.f32 0.0, %v863
      %v865 = vpop.f32.mrf.mxu0
      %v866 = vadd.f32 0.0, %v865
      %867 = vmatmul.bf16.gmra.mxu0 %v785
      %v868 = vpop.f32.mrf.mxu0
      %v869 = vadd.f32 0.0, %v868
      %v870 = vpop.f32.mrf.mxu0
      %v871 = vadd.f32 0.0, %v870
      %872 = vdwg.mxu0
      %v873 = vadd.f32 %v709, %v849
      %v874 = vadd.f32 %v710, %v851
      %v875 = vadd.f32 %v711, %v854
      %v876 = vadd.f32 %v712, %v856
      %v877 = vadd.f32 %v713, %v859
      %v878 = vadd.f32 %v714, %v861
      %v879 = vadd.f32 %v715, %v864
      %v880 = vadd.f32 %v716, %v866
      %v881 = vadd.f32 %v717, %v869
      %v882 = vadd.f32 %v718, %v871
      %v883 = vld [vmem:[%s270 + $0x2c] sm:$0x3]
      %s884 = scalar_lea.vmem %s279, 256
      %v885 = vld [vmem:[%s884] sm:$0xf]
      %v886 = vld [vmem:[%s884 + $0x4] sm:$0xf]
      %v887 = vld [vmem:[%s884 + $0x8] sm:$0xf]
      %v888 = vld [vmem:[%s884 + $0xc] sm:$0xf]
      %v889 = vld [vmem:[%s884 + $0x10] sm:$0xf]
      %v890 = vld [vmem:[%s884 + $0x14] sm:$0xf]
      %v891 = vld [vmem:[%s884 + $0x18] sm:$0xf]
      %v892 = vld [vmem:[%s884 + $0x1c] sm:$0xf]
      %v893 = vld [vmem:[%s884 + $0x20] sm:$0xf]
      %v894 = vld [vmem:[%s884 + $0x24] sm:$0xf]
      %v895 = vld [vmem:[%s884 + $0x28] sm:$0xf]
      %v896 = vld [vmem:[%s884 + $0x2c] sm:$0xf]
      %v897 = vld [vmem:[%s884 + $0x30] sm:$0xf]
      %v898 = vld [vmem:[%s884 + $0x34] sm:$0xf]
      %v899 = vld [vmem:[%s884 + $0x38] sm:$0xf]
      %v900 = vld [vmem:[%s884 + $0x3c] sm:$0xf]
      %v902 = vunpack.c.l.b16 %v883
      %v903 = vpack.c.b16 %v902, %v902
      %vm904 = vsmask.f32 6400
      %v906 = vshrl.u32 %v769, 16
      %v908 = vrot.slane %v906, 1
      %v909 = vshll.u32 %v769, 16
      %v911 = vrot.slane %v909, 2
      %v912 = vor.u32 %v908, %v911
      %v914 = vshrl.u32 %v770, 16
      %v916 = vrot.slane %v914, 1
      %v917 = vshll.u32 %v770, 16
      %v919 = vrot.slane %v917, 2
      %v920 = vor.u32 %v916, %v919
      %v921 = vsel %vm904, %v912, %v920
      %v923 = vshrl.u32 %v771, 16
      %v925 = vrot.slane %v923, 1
      %v926 = vshll.u32 %v771, 16
      %v928 = vrot.slane %v926, 2
      %v929 = vor.u32 %v925, %v928
      %v930 = vsel %vm904, %v920, %v929
      %v932 = vshrl.u32 %v772, 16
      %v934 = vrot.slane %v932, 1
      %v935 = vshll.u32 %v772, 16
      %v937 = vrot.slane %v935, 2
      %v938 = vor.u32 %v934, %v937
      %v939 = vsel %vm904, %v929, %v938
      %v941 = vshrl.u32 %v773, 16
      %v943 = vrot.slane %v941, 1
      %v944 = vshll.u32 %v773, 16
      %v946 = vrot.slane %v944, 2
      %v947 = vor.u32 %v943, %v946
      %v948 = vsel %vm904, %v938, %v947
      %v950 = vshrl.u32 %v903, 16
      %v952 = vrot.slane %v950, 1
      %v953 = vshll.u32 %v903, 16
      %v955 = vrot.slane %v953, 2
      %v956 = vor.u32 %v952, %v955
      %v957 = vsel %vm904, %v947, %v956
      %v979 = vunpack.c.l.b16 %v885
      %v980 = vunpack.c.l.b16 %v886
      %v981 = vunpack.c.l.b16 %v887
      %v982 = vunpack.c.l.b16 %v888
      %v983 = vunpack.c.l.b16 %v889
      %v984 = vunpack.c.l.b16 %v890
      %v985 = vunpack.c.l.b16 %v891
      %v986 = vunpack.c.l.b16 %v892
      %v987 = vunpack.c.l.b16 %v893
      %v988 = vunpack.c.l.b16 %v894
      %v989 = vunpack.c.l.b16 %v895
      %v990 = vunpack.c.l.b16 %v896
      %v991 = vunpack.c.l.b16 %v897
      %v992 = vunpack.c.l.b16 %v898
      %v993 = vunpack.c.l.b16 %v899
      %v994 = vunpack.c.l.b16 %v900
      %v995 = vpack.c.b16 %v980, %v979
      %v996 = vpack.c.b16 %v982, %v981
      %v997 = vpack.c.b16 %v984, %v983
      %v998 = vpack.c.b16 %v986, %v985
      %v999 = vpack.c.b16 %v988, %v987
      %v1000 = vpack.c.b16 %v990, %v989
      %v1001 = vpack.c.b16 %v992, %v991
      %v1002 = vpack.c.b16 %v994, %v993
      %1011 = vmatpush.bf16.msra.mxu0 %v1002
      %1012 = vmatpush.bf16.msra.mxu0 %v1001
      %1013 = vmatpush.bf16.msra.mxu0 %v1000
      %1014 = vmatpush.bf16.msra.mxu0 %v999
      %1015 = vmatpush.bf16.msra.mxu0 %v998
      %1016 = vmatpush.bf16.msra.mxu0 %v997
      %1017 = vmatpush.bf16.msra.mxu0 %v996
      %1018 = vmatpush.bf16.msra.mxu0 %v995
      %1019 = vmatmul.bf16.gmra.mxu0 %v921
      %v1020 = vpop.f32.mrf.mxu0
      %v1021 = vadd.f32 0.0, %v1020
      %v1022 = vpop.f32.mrf.mxu0
      %v1023 = vadd.f32 0.0, %v1022
      %1024 = vmatmul.bf16.gmra.mxu0 %v930
      %v1025 = vpop.f32.mrf.mxu0
      %v1026 = vadd.f32 0.0, %v1025
      %v1027 = vpop.f32.mrf.mxu0
      %v1028 = vadd.f32 0.0, %v1027
      %1029 = vmatmul.bf16.gmra.mxu0 %v939
      %v1030 = vpop.f32.mrf.mxu0
      %v1031 = vadd.f32 0.0, %v1030
      %v1032 = vpop.f32.mrf.mxu0
      %v1033 = vadd.f32 0.0, %v1032
      %1034 = vmatmul.bf16.gmra.mxu0 %v948
      %v1035 = vpop.f32.mrf.mxu0
      %v1036 = vadd.f32 0.0, %v1035
      %v1037 = vpop.f32.mrf.mxu0
      %v1038 = vadd.f32 0.0, %v1037
      %1039 = vmatmul.bf16.gmra.mxu0 %v957
      %v1040 = vpop.f32.mrf.mxu0
      %v1041 = vadd.f32 0.0, %v1040
      %v1042 = vpop.f32.mrf.mxu0
      %v1043 = vadd.f32 0.0, %v1042
      %1044 = vdwg.mxu0
      %v1045 = vadd.f32 %v873, %v1021
      %v1046 = vadd.f32 %v874, %v1023
      %v1047 = vadd.f32 %v875, %v1026
      %v1048 = vadd.f32 %v876, %v1028
      %v1049 = vadd.f32 %v877, %v1031
      %v1050 = vadd.f32 %v878, %v1033
      %v1051 = vadd.f32 %v879, %v1036
      %v1052 = vadd.f32 %v880, %v1038
      %v1053 = vadd.f32 %v881, %v1041
      %v1054 = vadd.f32 %v882, %v1043
      %v1055 = vld [vmem:[%s270 + $0x4] sm:$0xc]
      %s1056 = scalar_lea.vmem %s279, 320
      %v1057 = vld [vmem:[%s1056] sm:$0xf]
      %v1058 = vld [vmem:[%s1056 + $0x4] sm:$0xf]
      %v1059 = vld [vmem:[%s1056 + $0x8] sm:$0xf]
      %v1060 = vld [vmem:[%s1056 + $0xc] sm:$0xf]
      %v1061 = vld [vmem:[%s1056 + $0x10] sm:$0xf]
      %v1062 = vld [vmem:[%s1056 + $0x14] sm:$0xf]
      %v1063 = vld [vmem:[%s1056 + $0x18] sm:$0xf]
      %v1064 = vld [vmem:[%s1056 + $0x1c] sm:$0xf]
      %v1065 = vld [vmem:[%s1056 + $0x20] sm:$0xf]
      %v1066 = vld [vmem:[%s1056 + $0x24] sm:$0xf]
      %v1067 = vld [vmem:[%s1056 + $0x28] sm:$0xf]
      %v1068 = vld [vmem:[%s1056 + $0x2c] sm:$0xf]
      %v1069 = vld [vmem:[%s1056 + $0x30] sm:$0xf]
      %v1070 = vld [vmem:[%s1056 + $0x34] sm:$0xf]
      %v1071 = vld [vmem:[%s1056 + $0x38] sm:$0xf]
      %v1072 = vld [vmem:[%s1056 + $0x3c] sm:$0xf]
      %v1074 = vunpack.c.l.b16 %v1055
      %v1075 = vpack.c.b16 %v759, %v1074
      %vm1076 = vcmask 1045504
      %v1077 = vrot.slane %v1075, 2
      %v1078 = vrot.slane %v770, 2
      %v1079 = vsel %vm1076, %v1077, %v1078
      %v1080 = vrot.slane %v771, 2
      %v1081 = vsel %vm1076, %v1078, %v1080
      %v1082 = vrot.slane %v772, 2
      %v1083 = vsel %vm1076, %v1080, %v1082
      %v1084 = vrot.slane %v773, 2
      %v1085 = vsel %vm1076, %v1082, %v1084
      %v1086 = vrot.slane %v903, 2
      %v1087 = vsel %vm1076, %v1084, %v1086
      %v1109 = vunpack.c.l.b16 %v1057
      %v1110 = vunpack.c.l.b16 %v1058
      %v1111 = vunpack.c.l.b16 %v1059
      %v1112 = vunpack.c.l.b16 %v1060
      %v1113 = vunpack.c.l.b16 %v1061
      %v1114 = vunpack.c.l.b16 %v1062
      %v1115 = vunpack.c.l.b16 %v1063
      %v1116 = vunpack.c.l.b16 %v1064
      %v1117 = vunpack.c.l.b16 %v1065
      %v1118 = vunpack.c.l.b16 %v1066
      %v1119 = vunpack.c.l.b16 %v1067
      %v1120 = vunpack.c.l.b16 %v1068
      %v1121 = vunpack.c.l.b16 %v1069
      %v1122 = vunpack.c.l.b16 %v1070
      %v1123 = vunpack.c.l.b16 %v1071
      %v1124 = vunpack.c.l.b16 %v1072
      %v1125 = vpack.c.b16 %v1110, %v1109
      %v1126 = vpack.c.b16 %v1112, %v1111
      %v1127 = vpack.c.b16 %v1114, %v1113
      %v1128 = vpack.c.b16 %v1116, %v1115
      %v1129 = vpack.c.b16 %v1118, %v1117
      %v1130 = vpack.c.b16 %v1120, %v1119
      %v1131 = vpack.c.b16 %v1122, %v1121
      %v1132 = vpack.c.b16 %v1124, %v1123
      %1141 = vmatpush.bf16.msra.mxu0 %v1132
      %1142 = vmatpush.bf16.msra.mxu0 %v1131
      %1143 = vmatpush.bf16.msra.mxu0 %v1130
      %1144 = vmatpush.bf16.msra.mxu0 %v1129
      %1145 = vmatpush.bf16.msra.mxu0 %v1128
      %1146 = vmatpush.bf16.msra.mxu0 %v1127
      %1147 = vmatpush.bf16.msra.mxu0 %v1126
      %1148 = vmatpush.bf16.msra.mxu0 %v1125
      %1149 = vmatmul.bf16.gmra.mxu0 %v1079
      %v1150 = vpop.f32.mrf.mxu0
      %v1151 = vadd.f32 0.0, %v1150
      %v1152 = vpop.f32.mrf.mxu0
      %v1153 = vadd.f32 0.0, %v1152
      %1154 = vmatmul.bf16.gmra.mxu0 %v1081
      %v1155 = vpop.f32.mrf.mxu0
      %v1156 = vadd.f32 0.0, %v1155
      %v1157 = vpop.f32.mrf.mxu0
      %v1158 = vadd.f32 0.0, %v1157
      %1159 = vmatmul.bf16.gmra.mxu0 %v1083
      %v1160 = vpop.f32.mrf.mxu0
      %v1161 = vadd.f32 0.0, %v1160
      %v1162 = vpop.f32.mrf.mxu0
      %v1163 = vadd.f32 0.0, %v1162
      %1164 = vmatmul.bf16.gmra.mxu0 %v1085
      %v1165 = vpop.f32.mrf.mxu0
      %v1166 = vadd.f32 0.0, %v1165
      %v1167 = vpop.f32.mrf.mxu0
      %v1168 = vadd.f32 0.0, %v1167
      %1169 = vmatmul.bf16.gmra.mxu0 %v1087
      %v1170 = vpop.f32.mrf.mxu0
      %v1171 = vadd.f32 0.0, %v1170
      %v1172 = vpop.f32.mrf.mxu0
      %v1173 = vadd.f32 0.0, %v1172
      %1174 = vdwg.mxu0
      %v1175 = vadd.f32 %v1045, %v1151
      %v1176 = vadd.f32 %v1046, %v1153
      %v1177 = vadd.f32 %v1047, %v1156
      %v1178 = vadd.f32 %v1048, %v1158
      %v1179 = vadd.f32 %v1049, %v1161
      %v1180 = vadd.f32 %v1050, %v1163
      %v1181 = vadd.f32 %v1051, %v1166
      %v1182 = vadd.f32 %v1052, %v1168
      %v1183 = vadd.f32 %v1053, %v1171
      %v1184 = vadd.f32 %v1054, %v1173
      %v1185 = vld [vmem:[%s270 + $0x8] sm:$0xc]
      %v1186 = vld [vmem:[%s270 + $0xc] sm:$0xf]
      %v1187 = vld [vmem:[%s270 + $0x10] sm:$0xf]
      %v1188 = vld [vmem:[%s270 + $0x14] sm:$0xf]
      %v1189 = vld [vmem:[%s270 + $0x18] sm:$0xf]
      %v1190 = vld [vmem:[%s270 + $0x1c] sm:$0xf]
      %v1191 = vld [vmem:[%s270 + $0x20] sm:$0xf]
      %v1192 = vld [vmem:[%s270 + $0x24] sm:$0xf]
      %v1193 = vld [vmem:[%s270 + $0x28] sm:$0xf]
      %v1194 = vld [vmem:[%s270 + $0x2c] sm:$0xf]
      %v1195 = vld [vmem:[%s270 + $0x30] sm:$0x3]
      %s1196 = scalar_lea.vmem %s279, 384
      %v1197 = vld [vmem:[%s1196] sm:$0xf]
      %v1198 = vld [vmem:[%s1196 + $0x4] sm:$0xf]
      %v1199 = vld [vmem:[%s1196 + $0x8] sm:$0xf]
      %v1200 = vld [vmem:[%s1196 + $0xc] sm:$0xf]
      %v1201 = vld [vmem:[%s1196 + $0x10] sm:$0xf]
      %v1202 = vld [vmem:[%s1196 + $0x14] sm:$0xf]
      %v1203 = vld [vmem:[%s1196 + $0x18] sm:$0xf]
      %v1204 = vld [vmem:[%s1196 + $0x1c] sm:$0xf]
      %v1205 = vld [vmem:[%s1196 + $0x20] sm:$0xf]
      %v1206 = vld [vmem:[%s1196 + $0x24] sm:$0xf]
      %v1207 = vld [vmem:[%s1196 + $0x28] sm:$0xf]
      %v1208 = vld [vmem:[%s1196 + $0x2c] sm:$0xf]
      %v1209 = vld [vmem:[%s1196 + $0x30] sm:$0xf]
      %v1210 = vld [vmem:[%s1196 + $0x34] sm:$0xf]
      %v1211 = vld [vmem:[%s1196 + $0x38] sm:$0xf]
      %v1212 = vld [vmem:[%s1196 + $0x3c] sm:$0xf]
      %v1224 = vunpack.c.l.b16 %v1185
      %v1225 = vunpack.c.l.b16 %v1186
      %v1226 = vunpack.c.l.b16 %v1187
      %v1227 = vunpack.c.l.b16 %v1188
      %v1228 = vunpack.c.l.b16 %v1189
      %v1229 = vunpack.c.l.b16 %v1190
      %v1230 = vunpack.c.l.b16 %v1191
      %v1231 = vunpack.c.l.b16 %v1192
      %v1232 = vunpack.c.l.b16 %v1193
      %v1233 = vunpack.c.l.b16 %v1194
      %v1234 = vunpack.c.l.b16 %v1195
      %v1235 = vpack.c.b16 %v1225, %v1224
      %v1236 = vpack.c.b16 %v1227, %v1226
      %v1237 = vpack.c.b16 %v1229, %v1228
      %v1238 = vpack.c.b16 %v1231, %v1230
      %v1239 = vpack.c.b16 %v1233, %v1232
      %v1240 = vpack.c.b16 %v1234, %v1234
      %v1241 = vrot.slane %v1235, 2
      %v1242 = vrot.slane %v1236, 2
      %v1243 = vsel %vm1076, %v1241, %v1242
      %v1244 = vrot.slane %v1237, 2
      %v1245 = vsel %vm1076, %v1242, %v1244
      %v1246 = vrot.slane %v1238, 2
      %v1247 = vsel %vm1076, %v1244, %v1246
      %v1248 = vrot.slane %v1239, 2
      %v1249 = vsel %vm1076, %v1246, %v1248
      %v1250 = vrot.slane %v1240, 2
      %v1251 = vsel %vm1076, %v1248, %v1250
      %v1273 = vunpack.c.l.b16 %v1197
      %v1274 = vunpack.c.l.b16 %v1198
      %v1275 = vunpack.c.l.b16 %v1199
      %v1276 = vunpack.c.l.b16 %v1200
      %v1277 = vunpack.c.l.b16 %v1201
      %v1278 = vunpack.c.l.b16 %v1202
      %v1279 = vunpack.c.l.b16 %v1203
      %v1280 = vunpack.c.l.b16 %v1204
      %v1281 = vunpack.c.l.b16 %v1205
      %v1282 = vunpack.c.l.b16 %v1206
      %v1283 = vunpack.c.l.b16 %v1207
      %v1284 = vunpack.c.l.b16 %v1208
      %v1285 = vunpack.c.l.b16 %v1209
      %v1286 = vunpack.c.l.b16 %v1210
      %v1287 = vunpack.c.l.b16 %v1211
      %v1288 = vunpack.c.l.b16 %v1212
      %v1289 = vpack.c.b16 %v1274, %v1273
      %v1290 = vpack.c.b16 %v1276, %v1275
      %v1291 = vpack.c.b16 %v1278, %v1277
      %v1292 = vpack.c.b16 %v1280, %v1279
      %v1293 = vpack.c.b16 %v1282, %v1281
      %v1294 = vpack.c.b16 %v1284, %v1283
      %v1295 = vpack.c.b16 %v1286, %v1285
      %v1296 = vpack.c.b16 %v1288, %v1287
      %1305 = vmatpush.bf16.msra.mxu0 %v1296
      %1306 = vmatpush.bf16.msra.mxu0 %v1295
      %1307 = vmatpush.bf16.msra.mxu0 %v1294
      %1308 = vmatpush.bf16.msra.mxu0 %v1293
      %1309 = vmatpush.bf16.msra.mxu0 %v1292
      %1310 = vmatpush.bf16.msra.mxu0 %v1291
      %1311 = vmatpush.bf16.msra.mxu0 %v1290
      %1312 = vmatpush.bf16.msra.mxu0 %v1289
      %1313 = vmatmul.bf16.gmra.mxu0 %v1243
      %v1314 = vpop.f32.mrf.mxu0
      %v1315 = vadd.f32 0.0, %v1314
      %v1316 = vpop.f32.mrf.mxu0
      %v1317 = vadd.f32 0.0, %v1316
      %1318 = vmatmul.bf16.gmra.mxu0 %v1245
      %v1319 = vpop.f32.mrf.mxu0
      %v1320 = vadd.f32 0.0, %v1319
      %v1321 = vpop.f32.mrf.mxu0
      %v1322 = vadd.f32 0.0, %v1321
      %1323 = vmatmul.bf16.gmra.mxu0 %v1247
      %v1324 = vpop.f32.mrf.mxu0
      %v1325 = vadd.f32 0.0, %v1324
      %v1326 = vpop.f32.mrf.mxu0
      %v1327 = vadd.f32 0.0, %v1326
      %1328 = vmatmul.bf16.gmra.mxu0 %v1249
      %v1329 = vpop.f32.mrf.mxu0
      %v1330 = vadd.f32 0.0, %v1329
      %v1331 = vpop.f32.mrf.mxu0
      %v1332 = vadd.f32 0.0, %v1331
      %1333 = vmatmul.bf16.gmra.mxu0 %v1251
      %v1334 = vpop.f32.mrf.mxu0
      %v1335 = vadd.f32 0.0, %v1334
      %v1336 = vpop.f32.mrf.mxu0
      %v1337 = vadd.f32 0.0, %v1336
      %1338 = vdwg.mxu0
      %v1339 = vadd.f32 %v1175, %v1315
      %v1340 = vadd.f32 %v1176, %v1317
      %v1341 = vadd.f32 %v1177, %v1320
      %v1342 = vadd.f32 %v1178, %v1322
      %v1343 = vadd.f32 %v1179, %v1325
      %v1344 = vadd.f32 %v1180, %v1327
      %v1345 = vadd.f32 %v1181, %v1330
      %v1346 = vadd.f32 %v1182, %v1332
      %v1347 = vadd.f32 %v1183, %v1335
      %v1348 = vadd.f32 %v1184, %v1337
      %v1349 = vld [vmem:[%s270 + $0x30] sm:$0x7]
      %s1350 = scalar_lea.vmem %s279, 448
      %v1351 = vld [vmem:[%s1350] sm:$0xf]
      %v1352 = vld [vmem:[%s1350 + $0x4] sm:$0xf]
      %v1353 = vld [vmem:[%s1350 + $0x8] sm:$0xf]
      %v1354 = vld [vmem:[%s1350 + $0xc] sm:$0xf]
      %v1355 = vld [vmem:[%s1350 + $0x10] sm:$0xf]
      %v1356 = vld [vmem:[%s1350 + $0x14] sm:$0xf]
      %v1357 = vld [vmem:[%s1350 + $0x18] sm:$0xf]
      %v1358 = vld [vmem:[%s1350 + $0x1c] sm:$0xf]
      %v1359 = vld [vmem:[%s1350 + $0x20] sm:$0xf]
      %v1360 = vld [vmem:[%s1350 + $0x24] sm:$0xf]
      %v1361 = vld [vmem:[%s1350 + $0x28] sm:$0xf]
      %v1362 = vld [vmem:[%s1350 + $0x2c] sm:$0xf]
      %v1363 = vld [vmem:[%s1350 + $0x30] sm:$0xf]
      %v1364 = vld [vmem:[%s1350 + $0x34] sm:$0xf]
      %v1365 = vld [vmem:[%s1350 + $0x38] sm:$0xf]
      %v1366 = vld [vmem:[%s1350 + $0x3c] sm:$0xf]
      %v1368 = vunpack.c.l.b16 %v1349
      %v1369 = vpack.c.b16 %v1368, %v1368
      %vm1370 = vsmask.f32 5376
      %v1372 = vshrl.u32 %v1235, 16
      %v1374 = vrot.slane %v1372, 2
      %v1375 = vshll.u32 %v1235, 16
      %v1377 = vrot.slane %v1375, 3
      %v1378 = vor.u32 %v1374, %v1377
      %v1380 = vshrl.u32 %v1236, 16
      %v1382 = vrot.slane %v1380, 2
      %v1383 = vshll.u32 %v1236, 16
      %v1385 = vrot.slane %v1383, 3
      %v1386 = vor.u32 %v1382, %v1385
      %v1387 = vsel %vm1370, %v1378, %v1386
      %v1389 = vshrl.u32 %v1237, 16
      %v1391 = vrot.slane %v1389, 2
      %v1392 = vshll.u32 %v1237, 16
      %v1394 = vrot.slane %v1392, 3
      %v1395 = vor.u32 %v1391, %v1394
      %v1396 = vsel %vm1370, %v1386, %v1395
      %v1398 = vshrl.u32 %v1238, 16
      %v1400 = vrot.slane %v1398, 2
      %v1401 = vshll.u32 %v1238, 16
      %v1403 = vrot.slane %v1401, 3
      %v1404 = vor.u32 %v1400, %v1403
      %v1405 = vsel %vm1370, %v1395, %v1404
      %v1407 = vshrl.u32 %v1239, 16
      %v1409 = vrot.slane %v1407, 2
      %v1410 = vshll.u32 %v1239, 16
      %v1412 = vrot.slane %v1410, 3
      %v1413 = vor.u32 %v1409, %v1412
      %v1414 = vsel %vm1370, %v1404, %v1413
      %v1416 = vshrl.u32 %v1369, 16
      %v1418 = vrot.slane %v1416, 2
      %v1419 = vshll.u32 %v1369, 16
      %v1421 = vrot.slane %v1419, 3
      %v1422 = vor.u32 %v1418, %v1421
      %v1423 = vsel %vm1370, %v1413, %v1422
      %v1445 = vunpack.c.l.b16 %v1351
      %v1446 = vunpack.c.l.b16 %v1352
      %v1447 = vunpack.c.l.b16 %v1353
      %v1448 = vunpack.c.l.b16 %v1354
      %v1449 = vunpack.c.l.b16 %v1355
      %v1450 = vunpack.c.l.b16 %v1356
      %v1451 = vunpack.c.l.b16 %v1357
      %v1452 = vunpack.c.l.b16 %v1358
      %v1453 = vunpack.c.l.b16 %v1359
      %v1454 = vunpack.c.l.b16 %v1360
      %v1455 = vunpack.c.l.b16 %v1361
      %v1456 = vunpack.c.l.b16 %v1362
      %v1457 = vunpack.c.l.b16 %v1363
      %v1458 = vunpack.c.l.b16 %v1364
      %v1459 = vunpack.c.l.b16 %v1365
      %v1460 = vunpack.c.l.b16 %v1366
      %v1461 = vpack.c.b16 %v1446, %v1445
      %v1462 = vpack.c.b16 %v1448, %v1447
      %v1463 = vpack.c.b16 %v1450, %v1449
      %v1464 = vpack.c.b16 %v1452, %v1451
      %v1465 = vpack.c.b16 %v1454, %v1453
      %v1466 = vpack.c.b16 %v1456, %v1455
      %v1467 = vpack.c.b16 %v1458, %v1457
      %v1468 = vpack.c.b16 %v1460, %v1459
      %1477 = vmatpush.bf16.msra.mxu0 %v1468
      %1478 = vmatpush.bf16.msra.mxu0 %v1467
      %1479 = vmatpush.bf16.msra.mxu0 %v1466
      %1480 = vmatpush.bf16.msra.mxu0 %v1465
      %1481 = vmatpush.bf16.msra.mxu0 %v1464
      %1482 = vmatpush.bf16.msra.mxu0 %v1463
      %1483 = vmatpush.bf16.msra.mxu0 %v1462
      %1484 = vmatpush.bf16.msra.mxu0 %v1461
      %1485 = vmatmul.bf16.gmra.mxu0 %v1387
      %v1486 = vpop.f32.mrf.mxu0
      %v1487 = vadd.f32 0.0, %v1486
      %v1488 = vpop.f32.mrf.mxu0
      %v1489 = vadd.f32 0.0, %v1488
      %1490 = vmatmul.bf16.gmra.mxu0 %v1396
      %v1491 = vpop.f32.mrf.mxu0
      %v1492 = vadd.f32 0.0, %v1491
      %v1493 = vpop.f32.mrf.mxu0
      %v1494 = vadd.f32 0.0, %v1493
      %1495 = vmatmul.bf16.gmra.mxu0 %v1405
      %v1496 = vpop.f32.mrf.mxu0
      %v1497 = vadd.f32 0.0, %v1496
      %v1498 = vpop.f32.mrf.mxu0
      %v1499 = vadd.f32 0.0, %v1498
      %1500 = vmatmul.bf16.gmra.mxu0 %v1414
      %v1501 = vpop.f32.mrf.mxu0
      %v1502 = vadd.f32 0.0, %v1501
      %v1503 = vpop.f32.mrf.mxu0
      %v1504 = vadd.f32 0.0, %v1503
      %1505 = vmatmul.bf16.gmra.mxu0 %v1423
      %v1506 = vpop.f32.mrf.mxu0
      %v1507 = vadd.f32 0.0, %v1506
      %v1508 = vpop.f32.mrf.mxu0
      %v1509 = vadd.f32 0.0, %v1508
      %1510 = vdwg.mxu0
      %v1511 = vadd.f32 %v1339, %v1487
      %v1512 = vadd.f32 %v1340, %v1489
      %v1513 = vadd.f32 %v1341, %v1492
      %v1514 = vadd.f32 %v1342, %v1494
      %v1515 = vadd.f32 %v1343, %v1497
      %v1516 = vadd.f32 %v1344, %v1499
      %v1517 = vadd.f32 %v1345, %v1502
      %v1518 = vadd.f32 %v1346, %v1504
      %v1519 = vadd.f32 %v1347, %v1507
      %v1520 = vadd.f32 %v1348, %v1509
      %v1521 = vld [vmem:[%s270 + $0x8] sm:$0x8]
      %s1522 = scalar_lea.vmem %s279, 512
      %v1523 = vld [vmem:[%s1522] sm:$0xf]
      %v1524 = vld [vmem:[%s1522 + $0x4] sm:$0xf]
      %v1525 = vld [vmem:[%s1522 + $0x8] sm:$0xf]
      %v1526 = vld [vmem:[%s1522 + $0xc] sm:$0xf]
      %v1527 = vld [vmem:[%s1522 + $0x10] sm:$0xf]
      %v1528 = vld [vmem:[%s1522 + $0x14] sm:$0xf]
      %v1529 = vld [vmem:[%s1522 + $0x18] sm:$0xf]
      %v1530 = vld [vmem:[%s1522 + $0x1c] sm:$0xf]
      %v1531 = vld [vmem:[%s1522 + $0x20] sm:$0xf]
      %v1532 = vld [vmem:[%s1522 + $0x24] sm:$0xf]
      %v1533 = vld [vmem:[%s1522 + $0x28] sm:$0xf]
      %v1534 = vld [vmem:[%s1522 + $0x2c] sm:$0xf]
      %v1535 = vld [vmem:[%s1522 + $0x30] sm:$0xf]
      %v1536 = vld [vmem:[%s1522 + $0x34] sm:$0xf]
      %v1537 = vld [vmem:[%s1522 + $0x38] sm:$0xf]
      %v1538 = vld [vmem:[%s1522 + $0x3c] sm:$0xf]
      %v1540 = vunpack.c.l.b16 %v1521
      %v1541 = vpack.c.b16 %v1225, %v1540
      %vm1542 = vcmask 1044480
      %v1543 = vrot.slane %v1541, 3
      %v1544 = vrot.slane %v1236, 3
      %v1545 = vsel %vm1542, %v1543, %v1544
      %v1546 = vrot.slane %v1237, 3
      %v1547 = vsel %vm1542, %v1544, %v1546
      %v1548 = vrot.slane %v1238, 3
      %v1549 = vsel %vm1542, %v1546, %v1548
      %v1550 = vrot.slane %v1239, 3
      %v1551 = vsel %vm1542, %v1548, %v1550
      %v1552 = vrot.slane %v1369, 3
      %v1553 = vsel %vm1542, %v1550, %v1552
      %v1575 = vunpack.c.l.b16 %v1523
      %v1576 = vunpack.c.l.b16 %v1524
      %v1577 = vunpack.c.l.b16 %v1525
      %v1578 = vunpack.c.l.b16 %v1526
      %v1579 = vunpack.c.l.b16 %v1527
      %v1580 = vunpack.c.l.b16 %v1528
      %v1581 = vunpack.c.l.b16 %v1529
      %v1582 = vunpack.c.l.b16 %v1530
      %v1583 = vunpack.c.l.b16 %v1531
      %v1584 = vunpack.c.l.b16 %v1532
      %v1585 = vunpack.c.l.b16 %v1533
      %v1586 = vunpack.c.l.b16 %v1534
      %v1587 = vunpack.c.l.b16 %v1535
      %v1588 = vunpack.c.l.b16 %v1536
      %v1589 = vunpack.c.l.b16 %v1537
      %v1590 = vunpack.c.l.b16 %v1538
      %v1591 = vpack.c.b16 %v1576, %v1575
      %v1592 = vpack.c.b16 %v1578, %v1577
      %v1593 = vpack.c.b16 %v1580, %v1579
      %v1594 = vpack.c.b16 %v1582, %v1581
      %v1595 = vpack.c.b16 %v1584, %v1583
      %v1596 = vpack.c.b16 %v1586, %v1585
      %v1597 = vpack.c.b16 %v1588, %v1587
      %v1598 = vpack.c.b16 %v1590, %v1589
      %1607 = vmatpush.bf16.msra.mxu0 %v1598
      %1608 = vmatpush.bf16.msra.mxu0 %v1597
      %1609 = vmatpush.bf16.msra.mxu0 %v1596
      %1610 = vmatpush.bf16.msra.mxu0 %v1595
      %1611 = vmatpush.bf16.msra.mxu0 %v1594
      %1612 = vmatpush.bf16.msra.mxu0 %v1593
      %1613 = vmatpush.bf16.msra.mxu0 %v1592
      %1614 = vmatpush.bf16.msra.mxu0 %v1591
      %1615 = vmatmul.bf16.gmra.mxu0 %v1545
      %v1616 = vpop.f32.mrf.mxu0
      %v1617 = vadd.f32 0.0, %v1616
      %v1618 = vpop.f32.mrf.mxu0
      %v1619 = vadd.f32 0.0, %v1618
      %1620 = vmatmul.bf16.gmra.mxu0 %v1547
      %v1621 = vpop.f32.mrf.mxu0
      %v1622 = vadd.f32 0.0, %v1621
      %v1623 = vpop.f32.mrf.mxu0
      %v1624 = vadd.f32 0.0, %v1623
      %1625 = vmatmul.bf16.gmra.mxu0 %v1549
      %v1626 = vpop.f32.mrf.mxu0
      %v1627 = vadd.f32 0.0, %v1626
      %v1628 = vpop.f32.mrf.mxu0
      %v1629 = vadd.f32 0.0, %v1628
      %1630 = vmatmul.bf16.gmra.mxu0 %v1551
      %v1631 = vpop.f32.mrf.mxu0
      %v1632 = vadd.f32 0.0, %v1631
      %v1633 = vpop.f32.mrf.mxu0
      %v1634 = vadd.f32 0.0, %v1633
      %1635 = vmatmul.bf16.gmra.mxu0 %v1553
      %v1636 = vpop.f32.mrf.mxu0
      %v1637 = vadd.f32 0.0, %v1636
      %v1638 = vpop.f32.mrf.mxu0
      %v1639 = vadd.f32 0.0, %v1638
      %1640 = vdwg.mxu0
      %v1641 = vadd.f32 %v1511, %v1617
      %v1642 = vadd.f32 %v1512, %v1619
      %v1643 = vadd.f32 %v1513, %v1622
      %v1644 = vadd.f32 %v1514, %v1624
      %v1645 = vadd.f32 %v1515, %v1627
      %v1646 = vadd.f32 %v1516, %v1629
      %v1647 = vadd.f32 %v1517, %v1632
      %v1648 = vadd.f32 %v1518, %v1634
      %v1649 = vadd.f32 %v1519, %v1637
      %v1650 = vadd.f32 %v1520, %v1639
      %v1651 = vld [vmem:[%s287] sm:$0x1]
      %v1653 = vperm.slane %v1651, 0
      %v1655 = vadd.f32 %v1641, %v1653
      %v1656 = vadd.f32 %v1642, %v1653
      %v1657 = vadd.f32 %v1643, %v1653
      %v1658 = vadd.f32 %v1644, %v1653
      %v1659 = vadd.f32 %v1645, %v1653
      %v1660 = vadd.f32 %v1646, %v1653
      %v1661 = vadd.f32 %v1647, %v1653
      %v1662 = vadd.f32 %v1648, %v1653
      %v1663 = vadd.f32 %v1649, %v1653
      %v1664 = vadd.f32 %v1650, %v1653
      %v1665 = vmax.f32 %v1655, 0.0
      %v1666 = vmax.f32 %v1656, 0.0
      %v1667 = vmax.f32 %v1657, 0.0
      %v1668 = vmax.f32 %v1658, 0.0
      %v1669 = vmax.f32 %v1659, 0.0
      %v1670 = vmax.f32 %v1660, 0.0
      %v1671 = vmax.f32 %v1661, 0.0
      %v1672 = vmax.f32 %v1662, 0.0
      %v1673 = vmax.f32 %v1663, 0.0
      %v1674 = vmax.f32 %v1664, 0.0
      %v1675 = vld [vmem:[%s4] sm:$0xff]
      %v1676 = vld [vmem:[%s4 + $0x8] sm:$0xff]
      %v1677 = vld [vmem:[%s4 + $0x10] sm:$0xff]
      %v1678 = vld [vmem:[%s4 + $0x18] sm:$0xff]
      %v1679 = vld [vmem:[%s4 + $0x20] sm:$0xff]
      %v1680 = vld [vmem:[%s4 + $0x28] sm:$0xff]
      %v1681 = vld [vmem:[%s4 + $0x30] sm:$0xff]
      %v1682 = vld [vmem:[%s4 + $0x38] sm:$0xff]
      %v1683 = vld [vmem:[%s4 + $0x40] sm:$0xff]
      %v1684 = vld [vmem:[%s4 + $0x48] sm:$0xff]
      %1686 = vset.pattern.permute.xlu0 0
      %1687 = vperm.xlu0 %1686, %v1675
      %v1688 = vpop.permute.xlu0 %1687
      %1691 = vset.pattern.permute.xlu0 0
      %1692 = vperm.xlu0 %1691, %v1676
      %v1693 = vpop.permute.xlu0 %1692
      %1696 = vset.pattern.permute.xlu0 0
      %1697 = vperm.xlu0 %1696, %v1677
      %v1698 = vpop.permute.xlu0 %1697
      %1701 = vset.pattern.permute.xlu0 0
      %1702 = vperm.xlu0 %1701, %v1678
      %v1703 = vpop.permute.xlu0 %1702
      %1706 = vset.pattern.permute.xlu0 0
      %1707 = vperm.xlu0 %1706, %v1679
      %v1708 = vpop.permute.xlu0 %1707
      %1711 = vset.pattern.permute.xlu0 0
      %1712 = vperm.xlu0 %1711, %v1680
      %v1713 = vpop.permute.xlu0 %1712
      %1716 = vset.pattern.permute.xlu0 0
      %1717 = vperm.xlu0 %1716, %v1681
      %v1718 = vpop.permute.xlu0 %1717
      %1721 = vset.pattern.permute.xlu0 0
      %1722 = vperm.xlu0 %1721, %v1682
      %v1723 = vpop.permute.xlu0 %1722
      %1726 = vset.pattern.permute.xlu0 0
      %1727 = vperm.xlu0 %1726, %v1683
      %v1728 = vpop.permute.xlu0 %1727
      %1731 = vset.pattern.permute.xlu0 0
      %1732 = vperm.xlu0 %1731, %v1684
      %v1733 = vpop.permute.xlu0 %1732
      %v1735 = vmul.f32 %v1665, %v1688
      %v1736 = vmul.f32 %v1666, %v1693
      %v1737 = vmul.f32 %v1667, %v1698
      %v1738 = vmul.f32 %v1668, %v1703
      %v1739 = vmul.f32 %v1669, %v1708
      %v1740 = vmul.f32 %v1670, %v1713
      %v1741 = vmul.f32 %v1671, %v1718
      %v1742 = vmul.f32 %v1672, %v1723
      %v1743 = vmul.f32 %v1673, %v1728
      %v1744 = vmul.f32 %v1674, %v1733
      %1745 = vst [vmem:[%s296] sm:$0xf] 0
      %vm1746 = vcmask 1041408
      %vm1747 = vsmask.f32 1280
      %vm1748 = vmand %vm1746, %vm1747
      %v1749 = vld [vmem:[%s296 + $0x4] sm:$0x3]
      %v1750 = vsel %vm1748, 0, %v1749
      %1751 = vst [vmem:[%s296 + $0x4] sm:$0x3] %v1750
      %vm1752 = vcmask 1043457
      %vm1753 = vsmask.f32 7942
      %vm1754 = vmand %vm1752, %vm1753
      %v1755 = vld [vmem:[%s296 + $0x2c] sm:$0xe]
      %v1756 = vsel %vm1754, 0, %v1755
      %1757 = vst [vmem:[%s296 + $0x2c] sm:$0xe] %v1756
      %1758 = vst [vmem:[%s296 + $0x30] sm:$0xf] 0
      %1759 = vst [vmem:[%s296 + $0x34] sm:$0xf] 0
      %1760 = vst [vmem:[%s296 + $0x38] sm:$0xf] 0
      %v1761 = vpack.c.bf16 %v1735, %v1735
      %v1762 = vpack.c.bf16 %v1736, %v1736
      %v1763 = vpack.c.bf16 %v1737, %v1737
      %v1764 = vpack.c.bf16 %v1738, %v1738
      %v1765 = vpack.c.bf16 %v1739, %v1739
      %v1766 = vpack.c.bf16 %v1740, %v1740
      %v1767 = vpack.c.bf16 %v1741, %v1741
      %v1768 = vpack.c.bf16 %v1742, %v1742
      %v1769 = vpack.c.bf16 %v1743, %v1743
      %v1770 = vpack.c.bf16 %v1744, %v1744
      %vm1771 = vsmask.f32 5392
      %vm1772 = vmor %vm1747, %vm1771
      %v1774 = vshrl.u32 %v1761, 16
      %v1776 = vrot.slane %v1774, 6
      %v1777 = vshll.u32 %v1761, 16
      %v1779 = vrot.slane %v1777, 7
      %v1780 = vor.u32 %v1776, %v1779
      %v1781 = vrot.slane %v1780, 4
      %v1783 = vshrl.u32 %v1762, 16
      %v1785 = vrot.slane %v1783, 6
      %v1786 = vshll.u32 %v1762, 16
      %v1788 = vrot.slane %v1786, 7
      %v1789 = vor.u32 %v1785, %v1788
      %v1790 = vsel %vm1772, %v1781, %v1789
      %v1791 = vrot.slane %v1789, 4
      %v1793 = vshrl.u32 %v1763, 16
      %v1795 = vrot.slane %v1793, 6
      %v1796 = vshll.u32 %v1763, 16
      %v1798 = vrot.slane %v1796, 7
      %v1799 = vor.u32 %v1795, %v1798
      %v1800 = vsel %vm1772, %v1791, %v1799
      %v1801 = vrot.slane %v1799, 4
      %v1803 = vshrl.u32 %v1764, 16
      %v1805 = vrot.slane %v1803, 6
      %v1806 = vshll.u32 %v1764, 16
      %v1808 = vrot.slane %v1806, 7
      %v1809 = vor.u32 %v1805, %v1808
      %v1810 = vsel %vm1772, %v1801, %v1809
      %v1811 = vrot.slane %v1809, 4
      %v1813 = vshrl.u32 %v1765, 16
      %v1815 = vrot.slane %v1813, 6
      %v1816 = vshll.u32 %v1765, 16
      %v1818 = vrot.slane %v1816, 7
      %v1819 = vor.u32 %v1815, %v1818
      %v1820 = vsel %vm1772, %v1811, %v1819
      %v1821 = vrot.slane %v1819, 4
      %v1823 = vshrl.u32 %v1766, 16
      %v1825 = vrot.slane %v1823, 6
      %v1826 = vshll.u32 %v1766, 16
      %v1828 = vrot.slane %v1826, 7
      %v1829 = vor.u32 %v1825, %v1828
      %v1830 = vsel %vm1772, %v1821, %v1829
      %v1831 = vrot.slane %v1829, 4
      %v1833 = vshrl.u32 %v1767, 16
      %v1835 = vrot.slane %v1833, 6
      %v1836 = vshll.u32 %v1767, 16
      %v1838 = vrot.slane %v1836, 7
      %v1839 = vor.u32 %v1835, %v1838
      %v1840 = vsel %vm1772, %v1831, %v1839
      %v1841 = vrot.slane %v1839, 4
      %v1843 = vshrl.u32 %v1768, 16
      %v1845 = vrot.slane %v1843, 6
      %v1846 = vshll.u32 %v1768, 16
      %v1848 = vrot.slane %v1846, 7
      %v1849 = vor.u32 %v1845, %v1848
      %v1850 = vsel %vm1772, %v1841, %v1849
      %v1851 = vrot.slane %v1849, 4
      %v1853 = vshrl.u32 %v1769, 16
      %v1855 = vrot.slane %v1853, 6
      %v1856 = vshll.u32 %v1769, 16
      %v1858 = vrot.slane %v1856, 7
      %v1859 = vor.u32 %v1855, %v1858
      %v1860 = vsel %vm1772, %v1851, %v1859
      %v1861 = vrot.slane %v1859, 4
      %v1863 = vshrl.u32 %v1770, 16
      %v1865 = vrot.slane %v1863, 6
      %v1866 = vshll.u32 %v1770, 16
      %v1868 = vrot.slane %v1866, 7
      %v1869 = vor.u32 %v1865, %v1868
      %v1870 = vsel %vm1772, %v1861, %v1869
      %v1871 = vrot.slane %v1869, 4
      %v1883 = vld [vmem:[%s296 + $0x4] sm:$0xe]
      %v1884 = vsel %vm1754, %v1780, %v1883
      %1885 = vst [vmem:[%s296 + $0x4] sm:$0xe] %v1884
      %1886 = vst [vmem:[%s296 + $0x8] sm:$0xf] %v1790
      %1887 = vst [vmem:[%s296 + $0xc] sm:$0xf] %v1800
      %1888 = vst [vmem:[%s296 + $0x10] sm:$0xf] %v1810
      %1889 = vst [vmem:[%s296 + $0x14] sm:$0xf] %v1820
      %1890 = vst [vmem:[%s296 + $0x18] sm:$0xf] %v1830
      %1891 = vst [vmem:[%s296 + $0x1c] sm:$0xf] %v1840
      %1892 = vst [vmem:[%s296 + $0x20] sm:$0xf] %v1850
      %1893 = vst [vmem:[%s296 + $0x24] sm:$0xf] %v1860
      %1894 = vst [vmem:[%s296 + $0x28] sm:$0xf] %v1870
      %v1895 = vld [vmem:[%s296 + $0x2c] sm:$0x3]
      %v1896 = vsel %vm1748, %v1871, %v1895
      %1897 = vst [vmem:[%s296 + $0x2c] sm:$0x3] %v1896
      %p1898 = scmp.lt.s32.totalorder %s28, 3
      %s1899 = scalar_select %p1898, %s28, 3
      %p1900 = scmp.lt.s32.totalorder %s29, 0
      %s1901 = scalar_select %p1900, %s29, 0
      %s1902 = smul.addr %s1899, 15
      %s1903 = sadd.s32 %s1901, %s1902
      %s1904 = smul.addr %s1903, 4
      %s1905 = scalar_lea.vmem %s5, %s1904
      // Predicated region
      $region37: #{_lambda_.16} parent=35 // pred_check
        %p1906 = pneg %p163
      $region38: #{_lambda_.16} parent=35 // pred_check_branch
        %1908 = sbr.rel (%p1906) target = $region40
      $region39: #{_lambda_.16} parent=35 // pred_region
        _
      $region40: #{_lambda_.16} parent=35 // pred_fallthru
        _
    $region36: #{_lambda_.16} parent=5 // pred_fallthru
      _
    %p1909 = scmp.le.s32.totalorder 2, %s19
    // Predicated region
    $region41: #{_lambda_.16} parent=5 // pred_check
      %p1910 = pneg %p1909
    $region42: #{_lambda_.16} parent=5 // pred_check_branch
      %1912 = sbr.rel (%p1910) target = $region44
    $region43: #{_lambda_.16} parent=5 // pred_region
      %s1913 = ssub.s32 %s19, 2
      // Predicated region
      $region45: #{_lambda_.16} parent=43 // pred_check
        %p1914 = pneg %p169
      $region46: #{_lambda_.16} parent=43 // pred_check_branch
        %1916 = sbr.rel (%p1914) target = $region48
      $region47: #{_lambda_.16} parent=43 // pred_region
        %p1917 = scmp.lt.s32.totalorder %s30, 3
        %s1918 = scalar_select %p1917, %s30, 3
        %p1919 = scmp.lt.s32.totalorder %s31, 0
        %s1920 = scalar_select %p1919, %s31, 0
        %s1921 = smul.addr %s1918, 15
        %s1922 = sadd.s32 %s1920, %s1921
        %s1923 = smul.addr %s1922, 4
        %s1924 = scalar_lea.vmem %s5, %s1923
      $region48: #{_lambda_.16} parent=43 // pred_fallthru
        _
    $region44: #{_lambda_.16} parent=5 // pred_fallthru
      _
  $region6: #{_lambda_.16} parent=0 // loop_footer
    %s23 = sadd.s32 1, %s19
  $region7: #{_lambda_.16} parent=0 // loop_footer_branch
    %18 = sbr.rel target = $region3
  $region8: #{_lambda_.16} parent=0 // loop_exit
    _

// kernel: _lambda_.19
$region0: #{_lambda_.19}
  #allocation0 [shape = 'u32[]', space=smem, size = 0x4, offset = 0x4, fixed_abs, tag = 'smem constant byte address 0x4 - core index']
  #allocation1 [shape = 'u32[72,128]{1,0:T(1,128)}', space=vmem, size = 0x9000, scoped, tag = 'internal scratch']
  %s0 = inlined_call_operand.vmem [shape: bf16[24,2,5,256], index: 0, kind: input, shape index: {}]
  %s1 = inlined_call_operand.vmem [shape: bf16[4,8,10,128], index: 1, kind: output, shape index: {}]
  %s2 = sld [smem:[#allocation0]]
  $region37: #{_lambda_.19} parent=0
    _
  %s4 = ssub.s32 1, %s2
  %s5 = scalar_select 0, %s4, %s2
  loop: start=0, step=1, limit=6
  $region2: #{_lambda_.19} parent=0 // loop_pre_header
    _
  $region3: #{_lambda_.19} parent=0 // loop_header
    %s7 = sphi 0, %s11
    %p8 = scmp.ge.s32.totalorder %s7, 6
    %s17 = sphi 0, %s19
    %s20 = sphi 0, %s17
    %s21 = sphi 0, %s20
    %s37 = sphi 0, %s21
    %s43 = sphi 0, %s45
    %s46 = sphi 0, %s43
    %s47 = sphi 0, %s46
    %s63 = sphi 0, %s47
  $region4: #{_lambda_.19} parent=0 // loop_header_branch
    %10 = sbr.rel (%p8) target = $region8
  $region5: #{_lambda_.19} parent=0 // loop_body
    %s12 = ssub.s32 %s7, 1
    %s13 = ssub.s32 %s7, 2
    %s14 = sadd.s32 %s7, 1
    %s15 = ssub.s32 %s7, %s14
    %p16 = scmp.eq.s32.totalorder %s15, 0
    %s18 = sadd.s32 %s17, 1
    %s19 = scalar_select %p16, %s17, %s18
    %p22 = pneg %p16
    %p23 = scmp.eq.s32.totalorder %s7, 3
    %p24 = por %p22, %p23
    %p25 = scmp.ne.s32.totalorder %s17, %s20
    %p26 = scmp.eq.s32.totalorder %s7, 0
    %p27 = por %p25, %p26
    %p28 = scmp.ne.s32.totalorder %s17, %s20
    %p29 = scmp.eq.s32.totalorder %s12, 3
    %p30 = por %p28, %p29
    %p31 = scmp.ne.s32.totalorder %s20, %s21
    %p32 = scmp.eq.s32.totalorder %s12, 0
    %p33 = por %p31, %p32
    %p34 = scmp.ne.s32.totalorder %s20, %s21
    %p35 = scmp.eq.s32.totalorder %s13, 3
    %p36 = por %p34, %p35
    %p38 = scmp.ne.s32.totalorder %s21, %s37
    %p39 = scmp.eq.s32.totalorder %s13, 0
    %p40 = por %p38, %p39
    %s41 = ssub.s32 %s7, %s14
    %p42 = scmp.eq.s32.totalorder %s41, 0
    %s44 = sadd.s32 %s43, 1
    %s45 = scalar_select %p42, %s43, %s44
    %p48 = pneg %p42
    %p49 = scmp.eq.s32.totalorder %s7, 3
    %p50 = por %p48, %p49
    %p51 = scmp.ne.s32.totalorder %s43, %s46
    %p52 = scmp.eq.s32.totalorder %s7, 0
    %p53 = por %p51, %p52
    %p54 = scmp.ne.s32.totalorder %s43, %s46
    %p55 = scmp.eq.s32.totalorder %s12, 3
    %p56 = por %p54, %p55
    %p57 = scmp.ne.s32.totalorder %s46, %s47
    %p58 = scmp.eq.s32.totalorder %s12, 0
    %p59 = por %p57, %p58
    %p60 = scmp.ne.s32.totalorder %s46, %s47
    %p61 = scmp.eq.s32.totalorder %s13, 3
    %p62 = por %p60, %p61
    %p64 = scmp.ne.s32.totalorder %s47, %s63
    %p65 = scmp.eq.s32.totalorder %s13, 0
    %p66 = por %p64, %p65
    %p67 = scmp.le.s32.totalorder 1, %s7
    %p68 = scmp.lt.s32.totalorder %s7, 5
    %p69 = pnand %p67, %p68
    %p70 = pneg %p69
    // Predicated region
    $region9: #{_lambda_.19} parent=5 // pred_check
      _
    $region10: #{_lambda_.19} parent=5 // pred_check_branch
      %72 = sbr.rel (%p69) target = $region12
    $region11: #{_lambda_.19} parent=5 // pred_region
      %s73 = ssub.s32 %s7, 1
    $region12: #{_lambda_.19} parent=5 // pred_fallthru
      _
    %p74 = scmp.lt.s32.totalorder %s7, 4
    // Predicated region
    $region13: #{_lambda_.19} parent=5 // pred_check
      %p75 = pneg %p74
    $region14: #{_lambda_.19} parent=5 // pred_check_branch
      %77 = sbr.rel (%p75) target = $region16
    $region15: #{_lambda_.19} parent=5 // pred_region
      // Predicated region
      $region17: #{_lambda_.19} parent=15 // pred_check
        %p78 = pneg %p27
      $region18: #{_lambda_.19} parent=15 // pred_check_branch
        %80 = sbr.rel (%p78) target = $region20
      $region19: #{_lambda_.19} parent=15 // pred_region
        %s81 = smul.u32 6, %s7
        %p82 = scmp.lt.s32.totalorder %s81, 23
        %s83 = scalar_select %p82, %s81, 23
        %s84 = smul.addr %s83, 4
        %s85 = smul.addr %s84, 4
        %s86 = scalar_lea.vmem %s0, %s85
        %s87 = smul.u32 6, %s7
      $region20: #{_lambda_.19} parent=15 // pred_fallthru
        _
    $region16: #{_lambda_.19} parent=5 // pred_fallthru
      _
    %p88 = scmp.le.s32.totalorder 1, %s7
    %p89 = scmp.lt.s32.totalorder %s7, 5
    %p90 = pnand %p88, %p89
    %p91 = pneg %p90
    // Predicated region
    $region21: #{_lambda_.19} parent=5 // pred_check
      _
    $region22: #{_lambda_.19} parent=5 // pred_check_branch
      %93 = sbr.rel (%p90) target = $region24
    $region23: #{_lambda_.19} parent=5 // pred_region
      %s94 = ssub.s32 %s7, 1
      %s95 = smul.u32 6, %s12
      %p96 = scmp.lt.s32.totalorder %s95, 23
      %s97 = scalar_select %p96, %s95, 23
      %s98 = smul.addr %s97, 4
      %s99 = smul.addr %s98, 4
      %s100 = scalar_lea.vmem %s0, %s99
      %p101 = pneg %p33
      %p102 = pneg %p30
      %p103 = pneg %p59
      %p104 = pneg %p56
      %p105 = scmp.lt.s32.totalorder %s12, 3
      %s106 = scalar_select %p105, %s12, 3
      %s107 = smul.addr %s106, 16
      %s108 = smul.addr %s107, 4
      %s109 = scalar_lea.vmem %s1, %s108
      %s110 = smul.u32 6, %s12
      %p111 = scmp.lt.s32.totalorder %s110, 23
      %s112 = scalar_select %p111, %s110, 23
      %s113 = smul.addr %s112, 4
      %s114 = smul.addr %s113, 4
      %s115 = scalar_lea.vmem %s0, %s114
      %s116 = smul.u32 6, %s12
      %p117 = scmp.lt.s32.totalorder %s12, 3
      %s118 = scalar_select %p117, %s12, 3
      %s119 = smul.addr %s118, 16
      %s120 = smul.addr %s119, 4
      %s121 = scalar_lea.vmem %s1, %s120
      %v123 = vld [vmem:[%s115 + $0x8] sm:$0x77]
      %v124 = vld [vmem:[%s115 + $0x10] sm:$0x77]
      %v125 = vld [vmem:[%s115 + $0x18] sm:$0x77]
      %v126 = vld [vmem:[%s115 + $0x20] sm:$0x77]
      %v127 = vld [vmem:[%s115 + $0x28] sm:$0x77]
      %v128 = vld [vmem:[%s115 + $0x30] sm:$0x77]
      %v129 = vld [vmem:[%s115 + $0x38] sm:$0x77]
      %v130 = vld [vmem:[%s115 + $0x40] sm:$0x77]
      %v131 = vld [vmem:[%s115 + $0x48] sm:$0x77]
      %v132 = vunpack.c.l.bf16 %v123
      %v133 = vunpack.c.h.bf16 %v123
      %v134 = vunpack.c.l.bf16 %v124
      %v135 = vunpack.c.h.bf16 %v124
      %v136 = vunpack.c.l.bf16 %v125
      %v137 = vunpack.c.h.bf16 %v125
      %v138 = vunpack.c.l.bf16 %v126
      %v139 = vunpack.c.h.bf16 %v126
      %v140 = vunpack.c.l.bf16 %v127
      %v141 = vunpack.c.h.bf16 %v127
      %v142 = vunpack.c.l.bf16 %v128
      %v143 = vunpack.c.h.bf16 %v128
      %v144 = vunpack.c.l.bf16 %v129
      %v145 = vunpack.c.h.bf16 %v129
      %v146 = vunpack.c.l.bf16 %v130
      %v147 = vunpack.c.h.bf16 %v130
      %v148 = vunpack.c.l.bf16 %v131
      %v149 = vunpack.c.h.bf16 %v131
      %v154 = vrot.slane %v132, 1
      %v155 = vrot.slane %v136, 1
      %v156 = vrot.slane %v140, 1
      %v157 = vrot.slane %v144, 1
      %v162 = vadd.f32 %v133, %v154
      %v163 = vadd.f32 %v137, %v155
      %v164 = vadd.f32 %v141, %v156
      %v165 = vadd.f32 %v145, %v157
      %v170 = vrot.slane %v133, 1
      %v171 = vrot.slane %v137, 1
      %v172 = vrot.slane %v141, 1
      %v173 = vrot.slane %v145, 1
      %v178 = vadd.f32 %v162, %v170
      %v179 = vadd.f32 %v163, %v171
      %v180 = vadd.f32 %v164, %v172
      %v181 = vadd.f32 %v165, %v173
      %v186 = vrot.slane %v134, 1
      %v187 = vrot.slane %v138, 1
      %v188 = vrot.slane %v142, 1
      %v189 = vrot.slane %v146, 1
      %v194 = vadd.f32 %v135, %v186
      %v195 = vadd.f32 %v139, %v187
      %v196 = vadd.f32 %v143, %v188
      %v197 = vadd.f32 %v147, %v189
      %v202 = vrot.slane %v135, 1
      %v203 = vrot.slane %v139, 1
      %v204 = vrot.slane %v143, 1
      %v205 = vrot.slane %v147, 1
      %v210 = vadd.f32 %v194, %v202
      %v211 = vadd.f32 %v195, %v203
      %v212 = vadd.f32 %v196, %v204
      %v213 = vadd.f32 %v197, %v205
      %v214 = vadd.f32 %v178, %v210
      %v215 = vadd.f32 %v179, %v211
      %v216 = vadd.f32 %v180, %v212
      %v217 = vadd.f32 %v181, %v213
      %v219 = vrot.slane %v148, 1
      %v221 = vadd.f32 %v149, %v219
      %v223 = vrot.slane %v149, 1
      %v225 = vadd.f32 %v221, %v223
      %v226 = vadd.f32 %v214, %v179
      %v227 = vadd.f32 %v215, %v180
      %v228 = vadd.f32 %v216, %v181
      %v229 = vadd.f32 %v217, %v225
      %v230 = vlaneseq
      %v231 = vshrl.u32 %v230, 7
      %v232 = vlaneseq
      %v233 = vand.u32 %v232, 127
      %v234 = vmul.u32 %v231, 2
      %v235 = vadd.s32 %v234, 3
      %vm236 = vcmp.lt.s32.totalorder %v235, 8
      %v237 = vsel %vm236, %v235, 8
      %v238 = vsub.s32 %v237, %v234
      %v239 = vmul.u32 %v233, 2
      %v240 = vadd.s32 %v239, 3
      %vm241 = vcmp.lt.s32.totalorder %v240, 8
      %v242 = vsel %vm241, %v240, 8
      %v243 = vsub.s32 %v242, %v239
      %v244 = vmul.u32 %v238, %v243
      %v245 = vcvt.s32.f32 %v244
      %v246 = vrcp.pop %v245
      %v247 = vmul.f32 %v245, %v246
      %v248 = vsub.f32 1.0, %v247
      %v249 = vmul.f32 %v246, %v248
      %v250 = vadd.f32 %v246, %v249
      %vm251 = vweird.f32 %v245
      %vm252 = vweird.f32 %v246
      %vm253 = vmor %vm251, %vm252
      %v254 = vsel %vm253, %v246, %v250
      %v255 = vand.u32 2147483647, %v245
      %vm256 = vcmp.eq.f32.partialorder %v255, 8.507059e+37
      %v257 = vand.u32 %v245, 2147483648
      %v258 = vor.u32 1.1754944e-38, %v257
      %v259 = vsel %vm256, %v258, %v254
      %v260 = vmul.f32 1.0, %v259
      %v261 = vperm.slane %v260, 0
      %v262 = vlaneseq
      %v263 = vshrl.u32 %v262, 7
      %265 = vset.pattern.permute.xlu0 %v263
      %266 = vperm.xlu0 %265, %v261
      %v267 = vpop.permute.xlu0 %266
      %v268 = vperm.slane %v260, 1
      %v269 = vlaneseq
      %v270 = vshrl.u32 %v269, 7
      %272 = vset.pattern.permute.xlu0 %v270
      %273 = vperm.xlu0 %272, %v268
      %v274 = vpop.permute.xlu0 %273
      %v275 = vperm.slane %v260, 2
      %v276 = vlaneseq
      %v277 = vshrl.u32 %v276, 7
      %279 = vset.pattern.permute.xlu0 %v277
      %280 = vperm.xlu0 %279, %v275
      %v281 = vpop.permute.xlu0 %280
      %v282 = vperm.slane %v260, 3
      %v283 = vlaneseq
      %v284 = vshrl.u32 %v283, 7
      %286 = vset.pattern.permute.xlu0 %v284
      %287 = vperm.xlu0 %286, %v282
      %v288 = vpop.permute.xlu0 %287
      %v289 = vmul.f32 %v226, %v267
      %v290 = vmul.f32 %v227, %v274
      %v291 = vmul.f32 %v228, %v281
      %v292 = vmul.f32 %v229, %v288
      %293 = vst [vmem:[%s121] sm:$0xf] 0
      %294 = vst [vmem:[%s121 + $0x4] sm:$0x1] 0
      %295 = vst [vmem:[%s121 + $0x8] sm:$0xf] 0
      %296 = vst [vmem:[%s121 + $0xc] sm:$0x1] 0
      %297 = vst [vmem:[%s121 + $0x10] sm:$0xf] 0
      %298 = vst [vmem:[%s121 + $0x14] sm:$0x1] 0
      %299 = vst [vmem:[%s121 + $0x18] sm:$0xf] 0
      %300 = vst [vmem:[%s121 + $0x1c] sm:$0x1] 0
      %301 = vst [vmem:[%s121 + $0x20] sm:$0xf] 0
      %302 = vst [vmem:[%s121 + $0x24] sm:$0x1] 0
      %303 = vst [vmem:[%s121 + $0x28] sm:$0xf] 0
      %304 = vst [vmem:[%s121 + $0x2c] sm:$0x1] 0
      %305 = vst [vmem:[%s121 + $0x30] sm:$0xf] 0
      %306 = vst [vmem:[%s121 + $0x34] sm:$0x1] 0
      %307 = vst [vmem:[%s121 + $0x38] sm:$0xf] 0
      %308 = vst [vmem:[%s121 + $0x3c] sm:$0x1] 0
      %v309 = vpack.c.bf16 %v289, %v289
      %v310 = vpack.c.bf16 %v290, %v290
      %v311 = vpack.c.bf16 %v291, %v291
      %v312 = vpack.c.bf16 %v292, %v292
      %v314 = vshrl.u32 %v309, 16
      %v316 = vrot.slane %v314, 7
      %v317 = vshll.u32 %v309, 16
      %v319 = vor.u32 %v316, %v317
      %v321 = vshrl.u32 %v310, 16
      %v323 = vrot.slane %v321, 7
      %v324 = vshll.u32 %v310, 16
      %v326 = vor.u32 %v323, %v324
      %v328 = vshrl.u32 %v311, 16
      %v330 = vrot.slane %v328, 7
      %v331 = vshll.u32 %v311, 16
      %v333 = vor.u32 %v330, %v331
      %v335 = vshrl.u32 %v312, 16
      %v337 = vrot.slane %v335, 7
      %v338 = vshll.u32 %v312, 16
      %v340 = vor.u32 %v337, %v338
      %s345 = scalar_lea.vmem %s121, 8
      %vm346 = vcmask 1042432
      %vm347 = vsmask.f32 2306
      %vm348 = vmand %vm346, %vm347
      %v349 = vld [vmem:[%s345] sm:$0x7]
      %v350 = vsel %vm348, %v319, %v349
      %351 = vst [vmem:[%s345] sm:$0x7] %v350
      %v352 = vld [vmem:[%s345 + $0x8] sm:$0x7]
      %v353 = vsel %vm348, %v326, %v352
      %354 = vst [vmem:[%s345 + $0x8] sm:$0x7] %v353
      %v355 = vld [vmem:[%s345 + $0x10] sm:$0x7]
      %v356 = vsel %vm348, %v333, %v355
      %357 = vst [vmem:[%s345 + $0x10] sm:$0x7] %v356
      %v358 = vld [vmem:[%s345 + $0x18] sm:$0x7]
      %v359 = vsel %vm348, %v340, %v358
      %360 = vst [vmem:[%s345 + $0x18] sm:$0x7] %v359
      %p361 = scmp.lt.s32.totalorder %s12, 3
      %s362 = scalar_select %p361, %s12, 3
      %s363 = smul.addr %s362, 16
      %s364 = smul.addr %s363, 4
      %s365 = scalar_lea.vmem %s1, %s364
      // Predicated region
      $region25: #{_lambda_.19} parent=23 // pred_check
        %p366 = pneg %p56
      $region26: #{_lambda_.19} parent=23 // pred_check_branch
        %368 = sbr.rel (%p366) target = $region28
      $region27: #{_lambda_.19} parent=23 // pred_region
        _
      $region28: #{_lambda_.19} parent=23 // pred_fallthru
        _
    $region24: #{_lambda_.19} parent=5 // pred_fallthru
      _
    %p369 = scmp.le.s32.totalorder 2, %s7
    // Predicated region
    $region29: #{_lambda_.19} parent=5 // pred_check
      %p370 = pneg %p369
    $region30: #{_lambda_.19} parent=5 // pred_check_branch
      %372 = sbr.rel (%p370) target = $region32
    $region31: #{_lambda_.19} parent=5 // pred_region
      %s373 = ssub.s32 %s7, 2
      // Predicated region
      $region33: #{_lambda_.19} parent=31 // pred_check
        %p374 = pneg %p62
      $region34: #{_lambda_.19} parent=31 // pred_check_branch
        %376 = sbr.rel (%p374) target = $region36
      $region35: #{_lambda_.19} parent=31 // pred_region
        %p377 = scmp.lt.s32.totalorder %s13, 3
        %s378 = scalar_select %p377, %s13, 3
        %s379 = smul.addr %s378, 16
        %s380 = smul.addr %s379, 4
        %s381 = scalar_lea.vmem %s1, %s380
      $region36: #{_lambda_.19} parent=31 // pred_fallthru
        _
    $region32: #{_lambda_.19} parent=5 // pred_fallthru
      _
  $region6: #{_lambda_.19} parent=0 // loop_footer
    %s11 = sadd.s32 1, %s7
  $region7: #{_lambda_.19} parent=0 // loop_footer_branch
    %6 = sbr.rel target = $region3
  $region8: #{_lambda_.19} parent=0 // loop_exit
    _

// kernel: _lambda_.23
$region0: #{_lambda_.23}
  #allocation0 [shape = 'u32[]', space=smem, size = 0x4, offset = 0x4, fixed_abs, tag = 'smem constant byte address 0x4 - core index']
  #allocation1 [shape = 'u32[72,128]{1,0:T(1,128)}', space=vmem, size = 0x9000, scoped, tag = 'internal scratch']
  #allocation2 [shape = 's32[1]{0}', space=sflag, size = 0x4, scoped, tag = 'scoped memory for _lambda_.23']
  #allocation3 [shape = 'u8[512]{0}', space=smem, size = 0x200, scoped, tag = 'prefetched SMEM operand 0']
  %s0 = inlined_call_operand.vmem [shape: s32[4], index: 0, kind: input, shape index: {}]
  %s1 = inlined_call_operand.vmem [shape: bf16[4,80,128], index: 1, kind: input, shape index: {}]
  %s2 = inlined_call_operand.vmem [shape: f32[2,128,128], index: 2, kind: input, shape index: {}]
  %s3 = inlined_call_operand.vmem [shape: f32[2,1,128], index: 3, kind: input, shape index: {}]
  %s4 = inlined_call_operand.vmem [shape: f32[4,1,128], index: 4, kind: output, shape index: {}]
  %s5 = sld [smem:[#allocation0]]
  $region45: #{_lambda_.23} parent=0
    _
  %s7 = ssub.s32 1, %s5
  %s8 = scalar_select 0, %s7, %s5
  %s10 = sshll.u32 %s0, 4
  %s11 = int_to_ptr.vmem [resolvable:$true] %s10
  %13 = dma.vmem_to_smem %s11, 16, [#allocation3], [#allocation2]
  %15 = dma.done [#allocation2], 16
  %16 = sfence
  loop: start=0, step=1, limit=6
  $region2: #{_lambda_.23} parent=0 // loop_pre_header
    _
  $region3: #{_lambda_.23} parent=0 // loop_header
    %s18 = sphi 0, %s22
    %p19 = scmp.ge.s32.totalorder %s18, 6
    %s28 = sphi 0, %s30
    %s31 = sphi 0, %s28
    %s32 = sphi 0, %s31
    %s48 = sphi 0, %s32
    %s56 = sphi 0, %s58
    %s59 = sphi 0, %s56
    %s60 = sphi 0, %s59
    %s76 = sphi 0, %s60
    %s84 = sphi 0, %s86
    %s87 = sphi 0, %s84
    %s88 = sphi 0, %s87
    %s104 = sphi 0, %s88
    %s110 = sphi 0, %s112
    %s113 = sphi 0, %s110
    %s114 = sphi 0, %s113
    %s130 = sphi 0, %s114
  $region4: #{_lambda_.23} parent=0 // loop_header_branch
    %21 = sbr.rel (%p19) target = $region8
  $region5: #{_lambda_.23} parent=0 // loop_body
    %s23 = ssub.s32 %s18, 1
    %s24 = ssub.s32 %s18, 2
    %s25 = sadd.s32 %s18, 1
    %s26 = ssub.s32 %s18, %s25
    %p27 = scmp.eq.s32.totalorder %s26, 0
    %s29 = sadd.s32 %s28, 1
    %s30 = scalar_select %p27, %s28, %s29
    %p33 = pneg %p27
    %p34 = scmp.eq.s32.totalorder %s18, 3
    %p35 = por %p33, %p34
    %p36 = scmp.ne.s32.totalorder %s28, %s31
    %p37 = scmp.eq.s32.totalorder %s18, 0
    %p38 = por %p36, %p37
    %p39 = scmp.ne.s32.totalorder %s28, %s31
    %p40 = scmp.eq.s32.totalorder %s23, 3
    %p41 = por %p39, %p40
    %p42 = scmp.ne.s32.totalorder %s31, %s32
    %p43 = scmp.eq.s32.totalorder %s23, 0
    %p44 = por %p42, %p43
    %p45 = scmp.ne.s32.totalorder %s31, %s32
    %p46 = scmp.eq.s32.totalorder %s24, 3
    %p47 = por %p45, %p46
    %p49 = scmp.ne.s32.totalorder %s32, %s48
    %p50 = scmp.eq.s32.totalorder %s24, 0
    %p51 = por %p49, %p50
    %s52 = sld [smem:[#allocation3 + %s18]]
    %s53 = sld [smem:[#allocation3 + %s25]]
    %s54 = ssub.s32 %s52, %s53
    %p55 = scmp.eq.s32.totalorder %s54, 0
    %s57 = sadd.s32 %s56, 1
    %s58 = scalar_select %p55, %s56, %s57
    %p61 = pneg %p55
    %p62 = scmp.eq.s32.totalorder %s18, 3
    %p63 = por %p61, %p62
    %p64 = scmp.ne.s32.totalorder %s56, %s59
    %p65 = scmp.eq.s32.totalorder %s18, 0
    %p66 = por %p64, %p65
    %p67 = scmp.ne.s32.totalorder %s56, %s59
    %p68 = scmp.eq.s32.totalorder %s23, 3
    %p69 = por %p67, %p68
    %p70 = scmp.ne.s32.totalorder %s59, %s60
    %p71 = scmp.eq.s32.totalorder %s23, 0
    %p72 = por %p70, %p71
    %p73 = scmp.ne.s32.totalorder %s59, %s60
    %p74 = scmp.eq.s32.totalorder %s24, 3
    %p75 = por %p73, %p74
    %p77 = scmp.ne.s32.totalorder %s60, %s76
    %p78 = scmp.eq.s32.totalorder %s24, 0
    %p79 = por %p77, %p78
    %s80 = sld [smem:[#allocation3 + %s18]]
    %s81 = sld [smem:[#allocation3 + %s25]]
    %s82 = ssub.s32 %s80, %s81
    %p83 = scmp.eq.s32.totalorder %s82, 0
    %s85 = sadd.s32 %s84, 1
    %s86 = scalar_select %p83, %s84, %s85
    %p89 = pneg %p83
    %p90 = scmp.eq.s32.totalorder %s18, 3
    %p91 = por %p89, %p90
    %p92 = scmp.ne.s32.totalorder %s84, %s87
    %p93 = scmp.eq.s32.totalorder %s18, 0
    %p94 = por %p92, %p93
    %p95 = scmp.ne.s32.totalorder %s84, %s87
    %p96 = scmp.eq.s32.totalorder %s23, 3
    %p97 = por %p95, %p96
    %p98 = scmp.ne.s32.totalorder %s87, %s88
    %p99 = scmp.eq.s32.totalorder %s23, 0
    %p100 = por %p98, %p99
    %p101 = scmp.ne.s32.totalorder %s87, %s88
    %p102 = scmp.eq.s32.totalorder %s24, 3
    %p103 = por %p101, %p102
    %p105 = scmp.ne.s32.totalorder %s88, %s104
    %p106 = scmp.eq.s32.totalorder %s24, 0
    %p107 = por %p105, %p106
    %s108 = ssub.s32 %s18, %s25
    %p109 = scmp.eq.s32.totalorder %s108, 0
    %s111 = sadd.s32 %s110, 1
    %s112 = scalar_select %p109, %s110, %s111
    %p115 = pneg %p109
    %p116 = scmp.eq.s32.totalorder %s18, 3
    %p117 = por %p115, %p116
    %p118 = scmp.ne.s32.totalorder %s110, %s113
    %p119 = scmp.eq.s32.totalorder %s18, 0
    %p120 = por %p118, %p119
    %p121 = scmp.ne.s32.totalorder %s110, %s113
    %p122 = scmp.eq.s32.totalorder %s23, 3
    %p123 = por %p121, %p122
    %p124 = scmp.ne.s32.totalorder %s113, %s114
    %p125 = scmp.eq.s32.totalorder %s23, 0
    %p126 = por %p124, %p125
    %p127 = scmp.ne.s32.totalorder %s113, %s114
    %p128 = scmp.eq.s32.totalorder %s24, 3
    %p129 = por %p127, %p128
    %p131 = scmp.ne.s32.totalorder %s114, %s130
    %p132 = scmp.eq.s32.totalorder %s24, 0
    %p133 = por %p131, %p132
    %p134 = scmp.le.s32.totalorder 1, %s18
    %p135 = scmp.lt.s32.totalorder %s18, 5
    %p136 = pnand %p134, %p135
    %p137 = pneg %p136
    // Predicated region
    $region9: #{_lambda_.23} parent=5 // pred_check
      _
    $region10: #{_lambda_.23} parent=5 // pred_check_branch
      %139 = sbr.rel (%p136) target = $region12
    $region11: #{_lambda_.23} parent=5 // pred_region
      %s140 = ssub.s32 %s18, 1
    $region12: #{_lambda_.23} parent=5 // pred_fallthru
      _
    %p141 = scmp.lt.s32.totalorder %s18, 4
    // Predicated region
    $region13: #{_lambda_.23} parent=5 // pred_check
      %p142 = pneg %p141
    $region14: #{_lambda_.23} parent=5 // pred_check_branch
      %144 = sbr.rel (%p142) target = $region16
    $region15: #{_lambda_.23} parent=5 // pred_region
      // Predicated region
      $region17: #{_lambda_.23} parent=15 // pred_check
        %p145 = pneg %p38
      $region18: #{_lambda_.23} parent=15 // pred_check_branch
        %147 = sbr.rel (%p145) target = $region20
      $region19: #{_lambda_.23} parent=15 // pred_region
        %p148 = scmp.lt.s32.totalorder %s18, 3
        %s149 = scalar_select %p148, %s18, 3
        %s150 = smul.addr %s149, 10
        %s151 = smul.addr %s150, 4
        %s152 = scalar_lea.vmem %s1, %s151
      $region20: #{_lambda_.23} parent=15 // pred_fallthru
        _
      // Predicated region
      $region21: #{_lambda_.23} parent=15 // pred_check
        %p153 = pneg %p66
      $region22: #{_lambda_.23} parent=15 // pred_check_branch
        %155 = sbr.rel (%p153) target = $region24
      $region23: #{_lambda_.23} parent=15 // pred_region
        %s156 = sld [smem:[#allocation3 + %s18]]
        %p157 = scmp.lt.s32.totalorder %s156, 1
        %s158 = scalar_select %p157, %s156, 1
        %s159 = smul.addr %s158, 16
        %s160 = smul.addr %s159, 8
        %s161 = scalar_lea.vmem %s2, %s160
        %s162 = sld [smem:[#allocation3 + %s18]]
      $region24: #{_lambda_.23} parent=15 // pred_fallthru
        _
      // Predicated region
      $region25: #{_lambda_.23} parent=15 // pred_check
        %p163 = pneg %p94
      $region26: #{_lambda_.23} parent=15 // pred_check_branch
        %165 = sbr.rel (%p163) target = $region28
      $region27: #{_lambda_.23} parent=15 // pred_region
        %s166 = sld [smem:[#allocation3 + %s18]]
        %p167 = scmp.lt.s32.totalorder %s166, 1
        %s168 = scalar_select %p167, %s166, 1
        %s169 = scalar_lea.vmem %s3, %s168
        %s170 = sld [smem:[#allocation3 + %s18]]
      $region28: #{_lambda_.23} parent=15 // pred_fallthru
        _
    $region16: #{_lambda_.23} parent=5 // pred_fallthru
      _
    %p171 = scmp.le.s32.totalorder 1, %s18
    %p172 = scmp.lt.s32.totalorder %s18, 5
    %p173 = pnand %p171, %p172
    %p174 = pneg %p173
    // Predicated region
    $region29: #{_lambda_.23} parent=5 // pred_check
      _
    $region30: #{_lambda_.23} parent=5 // pred_check_branch
      %176 = sbr.rel (%p173) target = $region32
    $region31: #{_lambda_.23} parent=5 // pred_region
      %s177 = ssub.s32 %s18, 1
      %p178 = scmp.lt.s32.totalorder %s23, 3
      %s179 = scalar_select %p178, %s23, 3
      %s180 = smul.addr %s179, 10
      %s181 = smul.addr %s180, 4
      %s182 = scalar_lea.vmem %s1, %s181
      %p183 = pneg %p44
      %p184 = pneg %p41
      %s185 = sld [smem:[#allocation3 + %s23]]
      %p186 = scmp.lt.s32.totalorder %s185, 1
      %s187 = scalar_select %p186, %s185, 1
      %s188 = smul.addr %s187, 16
      %s189 = smul.addr %s188, 8
      %s190 = scalar_lea.vmem %s2, %s189
      %p191 = pneg %p72
      %p192 = pneg %p69
      %s193 = sld [smem:[#allocation3 + %s23]]
      %p194 = scmp.lt.s32.totalorder %s193, 1
      %s195 = scalar_select %p194, %s193, 1
      %s196 = scalar_lea.vmem %s3, %s195
      %p197 = pneg %p100
      %p198 = pneg %p97
      %p199 = pneg %p126
      %p200 = pneg %p123
      %p201 = scmp.lt.s32.totalorder %s23, 3
      %s202 = scalar_select %p201, %s23, 3
      %s203 = scalar_lea.vmem %s4, %s202
      %p204 = scmp.lt.s32.totalorder %s23, 3
      %s205 = scalar_select %p204, %s23, 3
      %s206 = smul.addr %s205, 10
      %s207 = smul.addr %s206, 4
      %s208 = scalar_lea.vmem %s1, %s207
      %s209 = sld [smem:[#allocation3 + %s23]]
      %p210 = scmp.lt.s32.totalorder %s209, 1
      %s211 = scalar_select %p210, %s209, 1
      %s212 = smul.addr %s211, 16
      %s213 = smul.addr %s212, 8
      %s214 = scalar_lea.vmem %s2, %s213
      %s215 = sld [smem:[#allocation3 + %s23]]
      %s216 = sld [smem:[#allocation3 + %s23]]
      %p217 = scmp.lt.s32.totalorder %s216, 1
      %s218 = scalar_select %p217, %s216, 1
      %s219 = scalar_lea.vmem %s3, %s218
      %s220 = sld [smem:[#allocation3 + %s23]]
      %p221 = scmp.lt.s32.totalorder %s23, 3
      %s222 = scalar_select %p221, %s23, 3
      %s223 = scalar_lea.vmem %s4, %s222
      %v224 = vld [vmem:[%s208] sm:$0xf]
      %v225 = vld [vmem:[%s208 + $0x4] sm:$0xf]
      %v226 = vld [vmem:[%s208 + $0x8] sm:$0xf]
      %v227 = vld [vmem:[%s208 + $0xc] sm:$0xf]
      %v228 = vld [vmem:[%s208 + $0x10] sm:$0xf]
      %v229 = vld [vmem:[%s208 + $0x14] sm:$0xf]
      %v230 = vld [vmem:[%s208 + $0x18] sm:$0xf]
      %v231 = vld [vmem:[%s208 + $0x1c] sm:$0xf]
      %v232 = vld [vmem:[%s208 + $0x20] sm:$0xf]
      %v233 = vld [vmem:[%s208 + $0x24] sm:$0xf]
      %v234 = vunpack.c.l.bf16 %v224
      %v235 = vunpack.c.l.bf16 %v225
      %v236 = vunpack.c.l.bf16 %v226
      %v237 = vunpack.c.l.bf16 %v227
      %v238 = vunpack.c.l.bf16 %v228
      %v239 = vunpack.c.l.bf16 %v229
      %v240 = vunpack.c.l.bf16 %v230
      %v241 = vunpack.c.l.bf16 %v231
      %v242 = vunpack.c.l.bf16 %v232
      %v243 = vunpack.c.l.bf16 %v233
      %v244 = vadd.f32 %v234, %v235
      %v245 = vadd.f32 %v244, %v236
      %v246 = vadd.f32 %v245, %v237
      %v247 = vadd.f32 %v246, %v238
      %v248 = vadd.f32 %v247, %v239
      %v249 = vadd.f32 %v248, %v240
      %v250 = vadd.f32 %v249, %v241
      %v251 = vadd.f32 %v250, %v242
      %v252 = vadd.f32 %v251, %v243
      %v253 = vrot.slane %v252, 4
      %v254 = vadd.f32 %v252, %v253
      %v255 = vrot.slane %v254, 2
      %v256 = vadd.f32 %v254, %v255
      %v257 = vrot.slane %v256, 1
      %v258 = vadd.f32 %v256, %v257
      %v259 = vmul.f32 %v258, 0.0625
      %v260 = vld [vmem:[%s214] sm:$0xff]
      %v261 = vld [vmem:[%s214 + $0x8] sm:$0xff]
      %v262 = vld [vmem:[%s214 + $0x10] sm:$0xff]
      %v263 = vld [vmem:[%s214 + $0x18] sm:$0xff]
      %v264 = vld [vmem:[%s214 + $0x20] sm:$0xff]
      %v265 = vld [vmem:[%s214 + $0x28] sm:$0xff]
      %v266 = vld [vmem:[%s214 + $0x30] sm:$0xff]
      %v267 = vld [vmem:[%s214 + $0x38] sm:$0xff]
      %v268 = vld [vmem:[%s214 + $0x40] sm:$0xff]
      %v269 = vld [vmem:[%s214 + $0x48] sm:$0xff]
      %v270 = vld [vmem:[%s214 + $0x50] sm:$0xff]
      %v271 = vld [vmem:[%s214 + $0x58] sm:$0xff]
      %v272 = vld [vmem:[%s214 + $0x60] sm:$0xff]
      %v273 = vld [vmem:[%s214 + $0x68] sm:$0xff]
      %v274 = vld [vmem:[%s214 + $0x70] sm:$0xff]
      %v275 = vld [vmem:[%s214 + $0x78] sm:$0xff]
      %v276 = vld [vmem:[%s219] sm:$0x1]
      %277 = vmatpush.msra.mxu0 %v275
      %278 = vmatpush.msra.mxu0 %v274
      %279 = vmatpush.msra.mxu0 %v273
      %280 = vmatpush.msra.mxu0 %v272
      %281 = vmatpush.msra.mxu0 %v271
      %282 = vmatpush.msra.mxu0 %v270
      %283 = vmatpush.msra.mxu0 %v269
      %284 = vmatpush.msra.mxu0 %v268
      %285 = vmatpush.msra.mxu0 %v267
      %286 = vmatpush.msra.mxu0 %v266
      %287 = vmatpush.msra.mxu0 %v265
      %288 = vmatpush.msra.mxu0 %v264
      %289 = vmatpush.msra.mxu0 %v263
      %290 = vmatpush.msra.mxu0 %v262
      %291 = vmatpush.msra.mxu0 %v261
      %292 = vmatpush.msra.mxu0 %v260
      %293 = vmatmul.f32.gmra.mxu0 %v259
      %v294 = vpop.f32.mrf.mxu0
      %v295 = vadd.f32 %v276, %v294
      %296 = vdwg.mxu0
      %297 = vst [vmem:[%s223] sm:$0x1] %v295
      %p298 = scmp.lt.s32.totalorder %s23, 3
      %s299 = scalar_select %p298, %s23, 3
      %s300 = scalar_lea.vmem %s4, %s299
      // Predicated region
      $region33: #{_lambda_.23} parent=31 // pred_check
        %p301 = pneg %p123
      $region34: #{_lambda_.23} parent=31 // pred_check_branch
        %303 = sbr.rel (%p301) target = $region36
      $region35: #{_lambda_.23} parent=31 // pred_region
        _
      $region36: #{_lambda_.23} parent=31 // pred_fallthru
        _
    $region32: #{_lambda_.23} parent=5 // pred_fallthru
      _
    %p304 = scmp.le.s32.totalorder 2, %s18
    // Predicated region
    $region37: #{_lambda_.23} parent=5 // pred_check
      %p305 = pneg %p304
    $region38: #{_lambda_.23} parent=5 // pred_check_branch
      %307 = sbr.rel (%p305) target = $region40
    $region39: #{_lambda_.23} parent=5 // pred_region
      %s308 = ssub.s32 %s18, 2
      // Predicated region
      $region41: #{_lambda_.23} parent=39 // pred_check
        %p309 = pneg %p129
      $region42: #{_lambda_.23} parent=39 // pred_check_branch
        %311 = sbr.rel (%p309) target = $region44
      $region43: #{_lambda_.23} parent=39 // pred_region
        %p312 = scmp.lt.s32.totalorder %s24, 3
        %s313 = scalar_select %p312, %s24, 3
        %s314 = scalar_lea.vmem %s4, %s313
      $region44: #{_lambda_.23} parent=39 // pred_fallthru
        _
    $region40: #{_lambda_.23} parent=5 // pred_fallthru
      _
  $region6: #{_lambda_.23} parent=0 // loop_footer
    %s22 = sadd.s32 1, %s18
  $region7: #{_lambda_.23} parent=0 // loop_footer_branch
    %17 = sbr.rel target = $region3
  $region8: #{_lambda_.23} parent=0 // loop_exit
    _

// kernel: _lambda_.20
$region0: #{_lambda_.20}
  #allocation0 [shape = 'u32[]', space=smem, size = 0x4, offset = 0x4, fixed_abs, tag = 'smem constant byte address 0x4 - core index']
  #allocation1 [shape = 'u32[72,128]{1,0:T(1,128)}', space=vmem, size = 0x9000, scoped, tag = 'internal scratch']
  #allocation2 [shape = 's32[1]{0}', space=sflag, size = 0x4, scoped, tag = 'scoped memory for _lambda_.20']
  #allocation3 [shape = 'u8[512]{0}', space=smem, size = 0x200, scoped, tag = 'prefetched SMEM operand 0']
  %s0 = inlined_call_operand.vmem [shape: s32[4], index: 0, kind: input, shape index: {}]
  %s1 = inlined_call_operand.vmem [shape: bf16[4,80,128], index: 1, kind: input, shape index: {}]
  %s2 = inlined_call_operand.vmem [shape: bf16[2,9,128,128], index: 2, kind: input, shape index: {}]
  %s3 = inlined_call_operand.vmem [shape: f32[2,1,128], index: 3, kind: input, shape index: {}]
  %s4 = inlined_call_operand.vmem [shape: f32[40,1], index: 4, kind: input, shape index: {}]
  %s5 = inlined_call_operand.vmem [shape: bf16[4,80,128], index: 5, kind: output, shape index: {}]
  %s6 = sld [smem:[#allocation0]]
  $region49: #{_lambda_.20} parent=0
    _
  %s8 = ssub.s32 1, %s6
  %s9 = scalar_select 0, %s8, %s6
  %s11 = sshll.u32 %s0, 4
  %s12 = int_to_ptr.vmem [resolvable:$true] %s11
  %14 = dma.vmem_to_smem %s12, 16, [#allocation3], [#allocation2]
  %16 = dma.done [#allocation2], 16
  %17 = sfence
  loop: start=0, step=1, limit=6
  $region2: #{_lambda_.20} parent=0 // loop_pre_header
    _
  $region3: #{_lambda_.20} parent=0 // loop_header
    %s19 = sphi 0, %s23
    %p20 = scmp.ge.s32.totalorder %s19, 6
    %s26 = sphi 0, %s38
    %s27 = sphi 0, %s34
    %s28 = sphi 0, %s26
    %s29 = sphi 0, %s27
    %s30 = sphi 0, %s28
    %s31 = sphi 0, %s29
    %s41 = sphi 0, %s43
    %s44 = sphi 0, %s41
    %s45 = sphi 0, %s44
    %s61 = sphi 0, %s45
    %s71 = sphi 0, %s73
    %s74 = sphi 0, %s71
    %s75 = sphi 0, %s74
    %s91 = sphi 0, %s75
    %s101 = sphi 0, %s103
    %s104 = sphi 0, %s101
    %s105 = sphi 0, %s104
    %s121 = sphi 0, %s105
    %s125 = sphi 0, %s125
    %s127 = sphi 0, %s125
    %s128 = sphi 0, %s127
    %s142 = sphi 0, %s128
    %s150 = sphi 0, %s152
    %s153 = sphi 0, %s150
    %s154 = sphi 0, %s153
    %s170 = sphi 0, %s154
  $region4: #{_lambda_.20} parent=0 // loop_header_branch
    %22 = sbr.rel (%p20) target = $region8
  $region5: #{_lambda_.20} parent=0 // loop_body
    %s24 = ssub.s32 %s19, 1
    %s25 = ssub.s32 %s19, 2
    %s32 = sadd.s32 1, %s27
    %p33 = scmp.ge.s32.totalorder %s32, 1
    %s34 = scalar_select %p33, 0, %s32
    %s35 = sadd.s32 1, %s26
    %s36 = scalar_select %p33, %s35, %s26
    %p37 = scmp.ge.s32.totalorder %s36, 4
    %s38 = scalar_select %p37, 0, %s36
    %s39 = ssub.s32 %s26, %s38
    %p40 = scmp.eq.s32.totalorder %s39, 0
    %s42 = sadd.s32 %s41, 1
    %s43 = scalar_select %p40, %s41, %s42
    %p46 = pneg %p40
    %p47 = scmp.eq.s32.totalorder %s19, 3
    %p48 = por %p46, %p47
    %p49 = scmp.ne.s32.totalorder %s41, %s44
    %p50 = scmp.eq.s32.totalorder %s19, 0
    %p51 = por %p49, %p50
    %p52 = scmp.ne.s32.totalorder %s41, %s44
    %p53 = scmp.eq.s32.totalorder %s24, 3
    %p54 = por %p52, %p53
    %p55 = scmp.ne.s32.totalorder %s44, %s45
    %p56 = scmp.eq.s32.totalorder %s24, 0
    %p57 = por %p55, %p56
    %p58 = scmp.ne.s32.totalorder %s44, %s45
    %p59 = scmp.eq.s32.totalorder %s25, 3
    %p60 = por %p58, %p59
    %p62 = scmp.ne.s32.totalorder %s45, %s61
    %p63 = scmp.eq.s32.totalorder %s25, 0
    %p64 = por %p62, %p63
    %s65 = sld [smem:[#allocation3 + %s26]]
    %s66 = sld [smem:[#allocation3 + %s38]]
    %s67 = ssub.s32 %s65, %s66
    %s68 = ssub.s32 %s27, %s34
    %s69 = sor.u32 %s67, %s68
    %p70 = scmp.eq.s32.totalorder %s69, 0
    %s72 = sadd.s32 %s71, 1
    %s73 = scalar_select %p70, %s71, %s72
    %p76 = pneg %p70
    %p77 = scmp.eq.s32.totalorder %s19, 3
    %p78 = por %p76, %p77
    %p79 = scmp.ne.s32.totalorder %s71, %s74
    %p80 = scmp.eq.s32.totalorder %s19, 0
    %p81 = por %p79, %p80
    %p82 = scmp.ne.s32.totalorder %s71, %s74
    %p83 = scmp.eq.s32.totalorder %s24, 3
    %p84 = por %p82, %p83
    %p85 = scmp.ne.s32.totalorder %s74, %s75
    %p86 = scmp.eq.s32.totalorder %s24, 0
    %p87 = por %p85, %p86
    %p88 = scmp.ne.s32.totalorder %s74, %s75
    %p89 = scmp.eq.s32.totalorder %s25, 3
    %p90 = por %p88, %p89
    %p92 = scmp.ne.s32.totalorder %s75, %s91
    %p93 = scmp.eq.s32.totalorder %s25, 0
    %p94 = por %p92, %p93
    %s95 = sld [smem:[#allocation3 + %s26]]
    %s96 = sld [smem:[#allocation3 + %s38]]
    %s97 = ssub.s32 %s95, %s96
    %s98 = ssub.s32 %s27, %s34
    %s99 = sor.u32 %s97, %s98
    %p100 = scmp.eq.s32.totalorder %s99, 0
    %s102 = sadd.s32 %s101, 1
    %s103 = scalar_select %p100, %s101, %s102
    %p106 = pneg %p100
    %p107 = scmp.eq.s32.totalorder %s19, 3
    %p108 = por %p106, %p107
    %p109 = scmp.ne.s32.totalorder %s101, %s104
    %p110 = scmp.eq.s32.totalorder %s19, 0
    %p111 = por %p109, %p110
    %p112 = scmp.ne.s32.totalorder %s101, %s104
    %p113 = scmp.eq.s32.totalorder %s24, 3
    %p114 = por %p112, %p113
    %p115 = scmp.ne.s32.totalorder %s104, %s105
    %p116 = scmp.eq.s32.totalorder %s24, 0
    %p117 = por %p115, %p116
    %p118 = scmp.ne.s32.totalorder %s104, %s105
    %p119 = scmp.eq.s32.totalorder %s25, 3
    %p120 = por %p118, %p119
    %p122 = scmp.ne.s32.totalorder %s105, %s121
    %p123 = scmp.eq.s32.totalorder %s25, 0
    %p124 = por %p122, %p123
    %s126 = sadd.s32 %s125, 1
    %p129 = scmp.eq.s32.totalorder %s19, 3
    %p130 = scmp.ne.s32.totalorder %s125, %s127
    %p131 = scmp.eq.s32.totalorder %s19, 0
    %p132 = por %p130, %p131
    %p133 = scmp.ne.s32.totalorder %s125, %s127
    %p134 = scmp.eq.s32.totalorder %s24, 3
    %p135 = por %p133, %p134
    %p136 = scmp.ne.s32.totalorder %s127, %s128
    %p137 = scmp.eq.s32.totalorder %s24, 0
    %p138 = por %p136, %p137
    %p139 = scmp.ne.s32.totalorder %s127, %s128
    %p140 = scmp.eq.s32.totalorder %s25, 3
    %p141 = por %p139, %p140
    %p143 = scmp.ne.s32.totalorder %s128, %s142
    %p144 = scmp.eq.s32.totalorder %s25, 0
    %p145 = por %p143, %p144
    %s146 = ssub.s32 %s26, %s38
    %s147 = ssub.s32 %s27, %s34
    %s148 = sor.u32 %s146, %s147
    %p149 = scmp.eq.s32.totalorder %s148, 0
    %s151 = sadd.s32 %s150, 1
    %s152 = scalar_select %p149, %s150, %s151
    %p155 = pneg %p149
    %p156 = scmp.eq.s32.totalorder %s19, 3
    %p157 = por %p155, %p156
    %p158 = scmp.ne.s32.totalorder %s150, %s153
    %p159 = scmp.eq.s32.totalorder %s19, 0
    %p160 = por %p158, %p159
    %p161 = scmp.ne.s32.totalorder %s150, %s153
    %p162 = scmp.eq.s32.totalorder %s24, 3
    %p163 = por %p161, %p162
    %p164 = scmp.ne.s32.totalorder %s153, %s154
    %p165 = scmp.eq.s32.totalorder %s24, 0
    %p166 = por %p164, %p165
    %p167 = scmp.ne.s32.totalorder %s153, %s154
    %p168 = scmp.eq.s32.totalorder %s25, 3
    %p169 = por %p167, %p168
    %p171 = scmp.ne.s32.totalorder %s154, %s170
    %p172 = scmp.eq.s32.totalorder %s25, 0
    %p173 = por %p171, %p172
    %p174 = scmp.le.s32.totalorder 1, %s19
    %p175 = scmp.lt.s32.totalorder %s19, 5
    %p176 = pnand %p174, %p175
    %p177 = pneg %p176
    // Predicated region
    $region9: #{_lambda_.20} parent=5 // pred_check
      _
    $region10: #{_lambda_.20} parent=5 // pred_check_branch
      %179 = sbr.rel (%p176) target = $region12
    $region11: #{_lambda_.20} parent=5 // pred_region
      %s180 = ssub.s32 %s19, 1
      // Predicated region
      $region13: #{_lambda_.20} parent=11 // pred_check
        %p181 = pneg %p138
      $region14: #{_lambda_.20} parent=11 // pred_check_branch
        %183 = sbr.rel (%p181) target = $region16
      $region15: #{_lambda_.20} parent=11 // pred_region
        _
      $region16: #{_lambda_.20} parent=11 // pred_fallthru
        _
    $region12: #{_lambda_.20} parent=5 // pred_fallthru
      _
    %p184 = scmp.lt.s32.totalorder %s19, 4
    // Predicated region
    $region17: #{_lambda_.20} parent=5 // pred_check
      %p185 = pneg %p184
    $region18: #{_lambda_.20} parent=5 // pred_check_branch
      %187 = sbr.rel (%p185) target = $region20
    $region19: #{_lambda_.20} parent=5 // pred_region
      // Predicated region
      $region21: #{_lambda_.20} parent=19 // pred_check
        %p188 = pneg %p51
      $region22: #{_lambda_.20} parent=19 // pred_check_branch
        %190 = sbr.rel (%p188) target = $region24
      $region23: #{_lambda_.20} parent=19 // pred_region
        %p191 = scmp.lt.s32.totalorder %s26, 3
        %s192 = scalar_select %p191, %s26, 3
        %s193 = smul.addr %s192, 10
        %s194 = smul.addr %s193, 4
        %s195 = scalar_lea.vmem %s1, %s194
      $region24: #{_lambda_.20} parent=19 // pred_fallthru
        _
      // Predicated region
      $region25: #{_lambda_.20} parent=19 // pred_check
        %p196 = pneg %p81
      $region26: #{_lambda_.20} parent=19 // pred_check_branch
        %198 = sbr.rel (%p196) target = $region28
      $region27: #{_lambda_.20} parent=19 // pred_region
        %s199 = sld [smem:[#allocation3 + %s26]]
        %p200 = scmp.lt.s32.totalorder %s199, 1
        %s201 = scalar_select %p200, %s199, 1
        %p202 = scmp.lt.s32.totalorder %s27, 0
        %s203 = scalar_select %p202, %s27, 0
        %s204 = smul.addr %s201, 144
        %s205 = sadd.s32 %s203, %s204
        %s206 = smul.addr %s205, 4
        %s207 = scalar_lea.vmem %s2, %s206
        %s208 = sld [smem:[#allocation3 + %s26]]
      $region28: #{_lambda_.20} parent=19 // pred_fallthru
        _
      // Predicated region
      $region29: #{_lambda_.20} parent=19 // pred_check
        %p209 = pneg %p111
      $region30: #{_lambda_.20} parent=19 // pred_check_branch
        %211 = sbr.rel (%p209) target = $region32
      $region31: #{_lambda_.20} parent=19 // pred_region
        %s212 = sld [smem:[#allocation3 + %s26]]
        %p213 = scmp.lt.s32.totalorder %s212, 1
        %s214 = scalar_select %p213, %s212, 1
        %p215 = scmp.lt.s32.totalorder %s27, 0
        %s216 = scalar_select %p215, %s27, 0
        %s217 = sadd.s32 %s216, %s214
        %s218 = scalar_lea.vmem %s3, %s217
        %s219 = sld [smem:[#allocation3 + %s26]]
      $region32: #{_lambda_.20} parent=19 // pred_fallthru
        _
    $region20: #{_lambda_.20} parent=5 // pred_fallthru
      _
    %p220 = scmp.le.s32.totalorder 1, %s19
    %p221 = scmp.lt.s32.totalorder %s19, 5
    %p222 = pnand %p220, %p221
    %p223 = pneg %p222
    // Predicated region
    $region33: #{_lambda_.20} parent=5 // pred_check
      _
    $region34: #{_lambda_.20} parent=5 // pred_check_branch
      %225 = sbr.rel (%p222) target = $region36
    $region35: #{_lambda_.20} parent=5 // pred_region
      %s226 = ssub.s32 %s19, 1
      %p227 = scmp.lt.s32.totalorder %s28, 3
      %s228 = scalar_select %p227, %s28, 3
      %s229 = smul.addr %s228, 10
      %s230 = smul.addr %s229, 4
      %s231 = scalar_lea.vmem %s1, %s230
      %p232 = pneg %p57
      %p233 = pneg %p54
      %s234 = sld [smem:[#allocation3 + %s28]]
      %p235 = scmp.lt.s32.totalorder %s234, 1
      %s236 = scalar_select %p235, %s234, 1
      %p237 = scmp.lt.s32.totalorder %s29, 0
      %s238 = scalar_select %p237, %s29, 0
      %s239 = smul.addr %s236, 144
      %s240 = sadd.s32 %s238, %s239
      %s241 = smul.addr %s240, 4
      %s242 = scalar_lea.vmem %s2, %s241
      %p243 = pneg %p87
      %p244 = pneg %p84
      %s245 = sld [smem:[#allocation3 + %s28]]
      %p246 = scmp.lt.s32.totalorder %s245, 1
      %s247 = scalar_select %p246, %s245, 1
      %p248 = scmp.lt.s32.totalorder %s29, 0
      %s249 = scalar_select %p248, %s29, 0
      %s250 = sadd.s32 %s249, %s247
      %s251 = scalar_lea.vmem %s3, %s250
      %p252 = pneg %p117
      %p253 = pneg %p114
      %p254 = pneg %p138
      %p255 = pneg %p135
      %p256 = pneg %p166
      %p257 = pneg %p163
      %p258 = scmp.lt.s32.totalorder %s28, 3
      %s259 = scalar_select %p258, %s28, 3
      %p260 = scmp.lt.s32.totalorder %s29, 0
      %s261 = scalar_select %p260, %s29, 0
      %s262 = smul.addr %s259, 10
      %s263 = sadd.s32 %s261, %s262
      %s264 = smul.addr %s263, 4
      %s265 = scalar_lea.vmem %s5, %s264
      %p266 = scmp.lt.s32.totalorder %s28, 3
      %s267 = scalar_select %p266, %s28, 3
      %s268 = smul.addr %s267, 10
      %s269 = smul.addr %s268, 4
      %s270 = scalar_lea.vmem %s1, %s269
      %s271 = sld [smem:[#allocation3 + %s28]]
      %p272 = scmp.lt.s32.totalorder %s271, 1
      %s273 = scalar_select %p272, %s271, 1
      %p274 = scmp.lt.s32.totalorder %s29, 0
      %s275 = scalar_select %p274, %s29, 0
      %s276 = smul.addr %s273, 144
      %s277 = sadd.s32 %s275, %s276
      %s278 = smul.addr %s277, 4
      %s279 = scalar_lea.vmem %s2, %s278
      %s280 = sld [smem:[#allocation3 + %s28]]
      %s281 = sld [smem:[#allocation3 + %s28]]
      %p282 = scmp.lt.s32.totalorder %s281, 1
      %s283 = scalar_select %p282, %s281, 1
      %p284 = scmp.lt.s32.totalorder %s29, 0
      %s285 = scalar_select %p284, %s29, 0
      %s286 = sadd.s32 %s285, %s283
      %s287 = scalar_lea.vmem %s3, %s286
      %s288 = sld [smem:[#allocation3 + %s28]]
      %p289 = scmp.lt.s32.totalorder %s28, 3
      %s290 = scalar_select %p289, %s28, 3
      %p291 = scmp.lt.s32.totalorder %s29, 0
      %s292 = scalar_select %p291, %s29, 0
      %s293 = smul.addr %s290, 10
      %s294 = sadd.s32 %s292, %s293
      %s295 = smul.addr %s294, 4
      %s296 = scalar_lea.vmem %s5, %s295
      %v298 = vld [vmem:[%s270] sm:$0xf]
      %v299 = vld [vmem:[%s270 + $0x4] sm:$0xf]
      %v300 = vld [vmem:[%s270 + $0x8] sm:$0xf]
      %v301 = vld [vmem:[%s270 + $0xc] sm:$0xf]
      %v302 = vld [vmem:[%s270 + $0x10] sm:$0xf]
      %v303 = vld [vmem:[%s279] sm:$0xf]
      %v304 = vld [vmem:[%s279 + $0x4] sm:$0xf]
      %v305 = vld [vmem:[%s279 + $0x8] sm:$0xf]
      %v306 = vld [vmem:[%s279 + $0xc] sm:$0xf]
      %v307 = vld [vmem:[%s279 + $0x10] sm:$0xf]
      %v308 = vld [vmem:[%s279 + $0x14] sm:$0xf]
      %v309 = vld [vmem:[%s279 + $0x18] sm:$0xf]
      %v310 = vld [vmem:[%s279 + $0x1c] sm:$0xf]
      %v311 = vld [vmem:[%s279 + $0x20] sm:$0xf]
      %v312 = vld [vmem:[%s279 + $0x24] sm:$0xf]
      %v313 = vld [vmem:[%s279 + $0x28] sm:$0xf]
      %v314 = vld [vmem:[%s279 + $0x2c] sm:$0xf]
      %v315 = vld [vmem:[%s279 + $0x30] sm:$0xf]
      %v316 = vld [vmem:[%s279 + $0x34] sm:$0xf]
      %v317 = vld [vmem:[%s279 + $0x38] sm:$0xf]
      %v318 = vld [vmem:[%s279 + $0x3c] sm:$0xf]
      %v319 = vld [vmem:[%s270 + $0x14] sm:$0x1]
      %s320 = scalar_lea.vmem %s279, 64
      %v321 = vld [vmem:[%s320] sm:$0xf]
      %v322 = vld [vmem:[%s320 + $0x4] sm:$0xf]
      %v323 = vld [vmem:[%s320 + $0x8] sm:$0xf]
      %v324 = vld [vmem:[%s320 + $0xc] sm:$0xf]
      %v325 = vld [vmem:[%s320 + $0x10] sm:$0xf]
      %v326 = vld [vmem:[%s320 + $0x14] sm:$0xf]
      %v327 = vld [vmem:[%s320 + $0x18] sm:$0xf]
      %v328 = vld [vmem:[%s320 + $0x1c] sm:$0xf]
      %v329 = vld [vmem:[%s320 + $0x20] sm:$0xf]
      %v330 = vld [vmem:[%s320 + $0x24] sm:$0xf]
      %v331 = vld [vmem:[%s320 + $0x28] sm:$0xf]
      %v332 = vld [vmem:[%s320 + $0x2c] sm:$0xf]
      %v333 = vld [vmem:[%s320 + $0x30] sm:$0xf]
      %v334 = vld [vmem:[%s320 + $0x34] sm:$0xf]
      %v335 = vld [vmem:[%s320 + $0x38] sm:$0xf]
      %v336 = vld [vmem:[%s320 + $0x3c] sm:$0xf]
      %v343 = vunpack.c.l.b16 %v298
      %v344 = vunpack.c.l.b16 %v299
      %v345 = vunpack.c.l.b16 %v300
      %v346 = vunpack.c.l.b16 %v301
      %v347 = vunpack.c.l.b16 %v302
      %v348 = vunpack.c.l.b16 %v319
      %v349 = vpack.c.b16 %v344, %v343
      %v350 = vpack.c.b16 %v346, %v345
      %v351 = vpack.c.b16 %v348, %v347
      %vm352 = vsmask.f32 7424
      %v354 = vshrl.u32 %v349, 16
      %v356 = vshll.u32 %v349, 16
      %v358 = vrot.slane %v356, 1
      %v359 = vor.u32 %v354, %v358
      %v361 = vshll.u32 %v350, 16
      %v363 = vrot.slane %v361, 1
      %v364 = vsel %vm352, %v359, %v363
      %v365 = vshrl.u32 %v350, 16
      %v367 = vor.u32 %v365, %v363
      %v369 = vshll.u32 %v351, 16
      %v371 = vrot.slane %v369, 1
      %v372 = vsel %vm352, %v367, %v371
      %v373 = vshrl.u32 %v351, 16
      %v375 = vor.u32 %v373, %v371
      %v395 = vunpack.c.l.b16 %v321
      %v396 = vunpack.c.l.b16 %v322
      %v397 = vunpack.c.l.b16 %v323
      %v398 = vunpack.c.l.b16 %v324
      %v399 = vunpack.c.l.b16 %v325
      %v400 = vunpack.c.l.b16 %v326
      %v401 = vunpack.c.l.b16 %v327
      %v402 = vunpack.c.l.b16 %v328
      %v403 = vunpack.c.l.b16 %v329
      %v404 = vunpack.c.l.b16 %v330
      %v405 = vunpack.c.l.b16 %v331
      %v406 = vunpack.c.l.b16 %v332
      %v407 = vunpack.c.l.b16 %v333
      %v408 = vunpack.c.l.b16 %v334
      %v409 = vunpack.c.l.b16 %v335
      %v410 = vunpack.c.l.b16 %v336
      %v411 = vpack.c.b16 %v396, %v395
      %v412 = vpack.c.b16 %v398, %v397
      %v413 = vpack.c.b16 %v400, %v399
      %v414 = vpack.c.b16 %v402, %v401
      %v415 = vpack.c.b16 %v404, %v403
      %v416 = vpack.c.b16 %v406, %v405
      %v417 = vpack.c.b16 %v408, %v407
      %v418 = vpack.c.b16 %v410, %v409
      %427 = vmatpush.bf16.msra.mxu0 %v418
      %428 = vmatpush.bf16.msra.mxu0 %v417
      %429 = vmatpush.bf16.msra.mxu0 %v416
      %430 = vmatpush.bf16.msra.mxu0 %v415
      %431 = vmatpush.bf16.msra.mxu0 %v414
      %432 = vmatpush.bf16.msra.mxu0 %v413
      %433 = vmatpush.bf16.msra.mxu0 %v412
      %434 = vmatpush.bf16.msra.mxu0 %v411
      %435 = vmatmul.bf16.gmra.mxu0 %v364
      %v436 = vpop.f32.mrf.mxu0
      %v437 = vadd.f32 0.0, %v436
      %v438 = vpop.f32.mrf.mxu0
      %v439 = vadd.f32 0.0, %v438
      %440 = vmatmul.bf16.gmra.mxu0 %v372
      %v441 = vpop.f32.mrf.mxu0
      %v442 = vadd.f32 0.0, %v441
      %v443 = vpop.f32.mrf.mxu0
      %v444 = vadd.f32 0.0, %v443
      %445 = vmatmul.bf16.gmra.mxu0 %v375
      %v446 = vpop.f32.mrf.mxu0
      %v447 = vadd.f32 0.0, %v446
      %v448 = vpop.f32.mrf.mxu0
      %449 = vdwg.mxu0
      %v450 = vpack.c.b16 %v347, %v347
      %v470 = vunpack.c.l.b16 %v303
      %v471 = vunpack.c.l.b16 %v304
      %v472 = vunpack.c.l.b16 %v305
      %v473 = vunpack.c.l.b16 %v306
      %v474 = vunpack.c.l.b16 %v307
      %v475 = vunpack.c.l.b16 %v308
      %v476 = vunpack.c.l.b16 %v309
      %v477 = vunpack.c.l.b16 %v310
      %v478 = vunpack.c.l.b16 %v311
      %v479 = vunpack.c.l.b16 %v312
      %v480 = vunpack.c.l.b16 %v313
      %v481 = vunpack.c.l.b16 %v314
      %v482 = vunpack.c.l.b16 %v315
      %v483 = vunpack.c.l.b16 %v316
      %v484 = vunpack.c.l.b16 %v317
      %v485 = vunpack.c.l.b16 %v318
      %v486 = vpack.c.b16 %v471, %v470
      %v487 = vpack.c.b16 %v473, %v472
      %v488 = vpack.c.b16 %v475, %v474
      %v489 = vpack.c.b16 %v477, %v476
      %v490 = vpack.c.b16 %v479, %v478
      %v491 = vpack.c.b16 %v481, %v480
      %v492 = vpack.c.b16 %v483, %v482
      %v493 = vpack.c.b16 %v485, %v484
      %502 = vmatpush.bf16.msra.mxu0 %v493
      %503 = vmatpush.bf16.msra.mxu0 %v492
      %504 = vmatpush.bf16.msra.mxu0 %v491
      %505 = vmatpush.bf16.msra.mxu0 %v490
      %506 = vmatpush.bf16.msra.mxu0 %v489
      %507 = vmatpush.bf16.msra.mxu0 %v488
      %508 = vmatpush.bf16.msra.mxu0 %v487
      %509 = vmatpush.bf16.msra.mxu0 %v486
      %510 = vmatmul.bf16.gmra.mxu0 %v349
      %v511 = vpop.f32.mrf.mxu0
      %v512 = vadd.f32 %v437, %v511
      %v513 = vpop.f32.mrf.mxu0
      %v514 = vadd.f32 %v439, %v513
      %515 = vmatmul.bf16.gmra.mxu0 %v350
      %v516 = vpop.f32.mrf.mxu0
      %v517 = vadd.f32 %v442, %v516
      %v518 = vpop.f32.mrf.mxu0
      %v519 = vadd.f32 %v444, %v518
      %520 = vmatmul.bf16.gmra.mxu0 %v450
      %v521 = vpop.f32.mrf.mxu0
      %v522 = vadd.f32 %v447, %v521
      %v523 = vpop.f32.mrf.mxu0
      %524 = vdwg.mxu0
      %v525 = vld [vmem:[%s270] sm:$0xe]
      %s526 = scalar_lea.vmem %s279, 128
      %v527 = vld [vmem:[%s526] sm:$0xf]
      %v528 = vld [vmem:[%s526 + $0x4] sm:$0xf]
      %v529 = vld [vmem:[%s526 + $0x8] sm:$0xf]
      %v530 = vld [vmem:[%s526 + $0xc] sm:$0xf]
      %v531 = vld [vmem:[%s526 + $0x10] sm:$0xf]
      %v532 = vld [vmem:[%s526 + $0x14] sm:$0xf]
      %v533 = vld [vmem:[%s526 + $0x18] sm:$0xf]
      %v534 = vld [vmem:[%s526 + $0x1c] sm:$0xf]
      %v535 = vld [vmem:[%s526 + $0x20] sm:$0xf]
      %v536 = vld [vmem:[%s526 + $0x24] sm:$0xf]
      %v537 = vld [vmem:[%s526 + $0x28] sm:$0xf]
      %v538 = vld [vmem:[%s526 + $0x2c] sm:$0xf]
      %v539 = vld [vmem:[%s526 + $0x30] sm:$0xf]
      %v540 = vld [vmem:[%s526 + $0x34] sm:$0xf]
      %v541 = vld [vmem:[%s526 + $0x38] sm:$0xf]
      %v542 = vld [vmem:[%s526 + $0x3c] sm:$0xf]
      %v544 = vunpack.c.l.b16 %v525
      %v545 = vpack.c.b16 %v344, %v544
      %vm546 = vcmask 1046528
      %v547 = vrot.slane %v545, 1
      %v548 = vrot.slane %v350, 1
      %v549 = vsel %vm546, %v547, %v548
      %v550 = vrot.slane %v351, 1
      %v551 = vsel %vm546, %v548, %v550
      %v571 = vunpack.c.l.b16 %v527
      %v572 = vunpack.c.l.b16 %v528
      %v573 = vunpack.c.l.b16 %v529
      %v574 = vunpack.c.l.b16 %v530
      %v575 = vunpack.c.l.b16 %v531
      %v576 = vunpack.c.l.b16 %v532
      %v577 = vunpack.c.l.b16 %v533
      %v578 = vunpack.c.l.b16 %v534
      %v579 = vunpack.c.l.b16 %v535
      %v580 = vunpack.c.l.b16 %v536
      %v581 = vunpack.c.l.b16 %v537
      %v582 = vunpack.c.l.b16 %v538
      %v583 = vunpack.c.l.b16 %v539
      %v584 = vunpack.c.l.b16 %v540
      %v585 = vunpack.c.l.b16 %v541
      %v586 = vunpack.c.l.b16 %v542
      %v587 = vpack.c.b16 %v572, %v571
      %v588 = vpack.c.b16 %v574, %v573
      %v589 = vpack.c.b16 %v576, %v575
      %v590 = vpack.c.b16 %v578, %v577
      %v591 = vpack.c.b16 %v580, %v579
      %v592 = vpack.c.b16 %v582, %v581
      %v593 = vpack.c.b16 %v584, %v583
      %v594 = vpack.c.b16 %v586, %v585
      %603 = vmatpush.bf16.msra.mxu0 %v594
      %604 = vmatpush.bf16.msra.mxu0 %v593
      %605 = vmatpush.bf16.msra.mxu0 %v592
      %606 = vmatpush.bf16.msra.mxu0 %v591
      %607 = vmatpush.bf16.msra.mxu0 %v590
      %608 = vmatpush.bf16.msra.mxu0 %v589
      %609 = vmatpush.bf16.msra.mxu0 %v588
      %610 = vmatpush.bf16.msra.mxu0 %v587
      %611 = vmatmul.bf16.gmra.mxu0 %v549
      %v612 = vpop.f32.mrf.mxu0
      %v613 = vadd.f32 0.0, %v612
      %v614 = vpop.f32.mrf.mxu0
      %v615 = vadd.f32 0.0, %v614
      %616 = vmatmul.bf16.gmra.mxu0 %v551
      %v617 = vpop.f32.mrf.mxu0
      %v618 = vadd.f32 0.0, %v617
      %v619 = vpop.f32.mrf.mxu0
      %v620 = vadd.f32 0.0, %v619
      %621 = vmatmul.bf16.gmra.mxu0 %v550
      %v622 = vpop.f32.mrf.mxu0
      %v623 = vadd.f32 0.0, %v622
      %v624 = vpop.f32.mrf.mxu0
      %625 = vdwg.mxu0
      %v626 = vadd.f32 %v512, %v613
      %v627 = vadd.f32 %v514, %v615
      %v628 = vadd.f32 %v517, %v618
      %v629 = vadd.f32 %v519, %v620
      %v630 = vadd.f32 %v522, %v623
      %v631 = vld [vmem:[%s270 + $0x4] sm:$0xe]
      %v632 = vld [vmem:[%s270 + $0x8] sm:$0xf]
      %v633 = vld [vmem:[%s270 + $0xc] sm:$0xf]
      %v634 = vld [vmem:[%s270 + $0x10] sm:$0xf]
      %v635 = vld [vmem:[%s270 + $0x14] sm:$0xf]
      %v636 = vld [vmem:[%s270 + $0x18] sm:$0x1]
      %s637 = scalar_lea.vmem %s279, 192
      %v638 = vld [vmem:[%s637] sm:$0xf]
      %v639 = vld [vmem:[%s637 + $0x4] sm:$0xf]
      %v640 = vld [vmem:[%s637 + $0x8] sm:$0xf]
      %v641 = vld [vmem:[%s637 + $0xc] sm:$0xf]
      %v642 = vld [vmem:[%s637 + $0x10] sm:$0xf]
      %v643 = vld [vmem:[%s637 + $0x14] sm:$0xf]
      %v644 = vld [vmem:[%s637 + $0x18] sm:$0xf]
      %v645 = vld [vmem:[%s637 + $0x1c] sm:$0xf]
      %v646 = vld [vmem:[%s637 + $0x20] sm:$0xf]
      %v647 = vld [vmem:[%s637 + $0x24] sm:$0xf]
      %v648 = vld [vmem:[%s637 + $0x28] sm:$0xf]
      %v649 = vld [vmem:[%s637 + $0x2c] sm:$0xf]
      %v650 = vld [vmem:[%s637 + $0x30] sm:$0xf]
      %v651 = vld [vmem:[%s637 + $0x34] sm:$0xf]
      %v652 = vld [vmem:[%s637 + $0x38] sm:$0xf]
      %v653 = vld [vmem:[%s637 + $0x3c] sm:$0xf]
      %v660 = vunpack.c.l.b16 %v631
      %v661 = vunpack.c.l.b16 %v632
      %v662 = vunpack.c.l.b16 %v633
      %v663 = vunpack.c.l.b16 %v634
      %v664 = vunpack.c.l.b16 %v635
      %v665 = vunpack.c.l.b16 %v636
      %v666 = vpack.c.b16 %v661, %v660
      %v667 = vpack.c.b16 %v663, %v662
      %v668 = vpack.c.b16 %v665, %v664
      %v669 = vrot.slane %v666, 1
      %v670 = vrot.slane %v667, 1
      %v671 = vsel %vm546, %v669, %v670
      %v672 = vrot.slane %v668, 1
      %v673 = vsel %vm546, %v670, %v672
      %v693 = vunpack.c.l.b16 %v638
      %v694 = vunpack.c.l.b16 %v639
      %v695 = vunpack.c.l.b16 %v640
      %v696 = vunpack.c.l.b16 %v641
      %v697 = vunpack.c.l.b16 %v642
      %v698 = vunpack.c.l.b16 %v643
      %v699 = vunpack.c.l.b16 %v644
      %v700 = vunpack.c.l.b16 %v645
      %v701 = vunpack.c.l.b16 %v646
      %v702 = vunpack.c.l.b16 %v647
      %v703 = vunpack.c.l.b16 %v648
      %v704 = vunpack.c.l.b16 %v649
      %v705 = vunpack.c.l.b16 %v650
      %v706 = vunpack.c.l.b16 %v651
      %v707 = vunpack.c.l.b16 %v652
      %v708 = vunpack.c.l.b16 %v653
      %v709 = vpack.c.b16 %v694, %v693
      %v710 = vpack.c.b16 %v696, %v695
      %v711 = vpack.c.b16 %v698, %v697
      %v712 = vpack.c.b16 %v700, %v699
      %v713 = vpack.c.b16 %v702, %v701
      %v714 = vpack.c.b16 %v704, %v703
      %v715 = vpack.c.b16 %v706, %v705
      %v716 = vpack.c.b16 %v708, %v707
      %725 = vmatpush.bf16.msra.mxu0 %v716
      %726 = vmatpush.bf16.msra.mxu0 %v715
      %727 = vmatpush.bf16.msra.mxu0 %v714
      %728 = vmatpush.bf16.msra.mxu0 %v713
      %729 = vmatpush.bf16.msra.mxu0 %v712
      %730 = vmatpush.bf16.msra.mxu0 %v711
      %731 = vmatpush.bf16.msra.mxu0 %v710
      %732 = vmatpush.bf16.msra.mxu0 %v709
      %733 = vmatmul.bf16.gmra.mxu0 %v671
      %v734 = vpop.f32.mrf.mxu0
      %v735 = vadd.f32 0.0, %v734
      %v736 = vpop.f32.mrf.mxu0
      %v737 = vadd.f32 0.0, %v736
      %738 = vmatmul.bf16.gmra.mxu0 %v673
      %v739 = vpop.f32.mrf.mxu0
      %v740 = vadd.f32 0.0, %v739
      %v741 = vpop.f32.mrf.mxu0
      %v742 = vadd.f32 0.0, %v741
      %743 = vmatmul.bf16.gmra.mxu0 %v672
      %v744 = vpop.f32.mrf.mxu0
      %v745 = vadd.f32 0.0, %v744
      %v746 = vpop.f32.mrf.mxu0
      %747 = vdwg.mxu0
      %v748 = vadd.f32 %v626, %v735
      %v749 = vadd.f32 %v627, %v737
      %v750 = vadd.f32 %v628, %v740
      %v751 = vadd.f32 %v629, %v742
      %v752 = vadd.f32 %v630, %v745
      %v753 = vld [vmem:[%s270 + $0x18] sm:$0x3]
      %s754 = scalar_lea.vmem %s279, 256
      %v755 = vld [vmem:[%s754] sm:$0xf]
      %v756 = vld [vmem:[%s754 + $0x4] sm:$0xf]
      %v757 = vld [vmem:[%s754 + $0x8] sm:$0xf]
      %v758 = vld [vmem:[%s754 + $0xc] sm:$0xf]
      %v759 = vld [vmem:[%s754 + $0x10] sm:$0xf]
      %v760 = vld [vmem:[%s754 + $0x14] sm:$0xf]
      %v761 = vld [vmem:[%s754 + $0x18] sm:$0xf]
      %v762 = vld [vmem:[%s754 + $0x1c] sm:$0xf]
      %v763 = vld [vmem:[%s754 + $0x20] sm:$0xf]
      %v764 = vld [vmem:[%s754 + $0x24] sm:$0xf]
      %v765 = vld [vmem:[%s754 + $0x28] sm:$0xf]
      %v766 = vld [vmem:[%s754 + $0x2c] sm:$0xf]
      %v767 = vld [vmem:[%s754 + $0x30] sm:$0xf]
      %v768 = vld [vmem:[%s754 + $0x34] sm:$0xf]
      %v769 = vld [vmem:[%s754 + $0x38] sm:$0xf]
      %v770 = vld [vmem:[%s754 + $0x3c] sm:$0xf]
      %v772 = vunpack.c.l.b16 %v753
      %v773 = vpack.c.b16 %v772, %v664
      %vm774 = vsmask.f32 6400
      %v776 = vshrl.u32 %v666, 16
      %v778 = vrot.slane %v776, 1
      %v779 = vshll.u32 %v666, 16
      %v781 = vrot.slane %v779, 2
      %v782 = vor.u32 %v778, %v781
      %v784 = vshrl.u32 %v667, 16
      %v786 = vrot.slane %v784, 1
      %v787 = vshll.u32 %v667, 16
      %v789 = vrot.slane %v787, 2
      %v790 = vor.u32 %v786, %v789
      %v791 = vsel %vm774, %v782, %v790
      %v793 = vshrl.u32 %v773, 16
      %v795 = vrot.slane %v793, 1
      %v796 = vshll.u32 %v773, 16
      %v798 = vrot.slane %v796, 2
      %v799 = vor.u32 %v795, %v798
      %v800 = vsel %vm774, %v790, %v799
      %v820 = vunpack.c.l.b16 %v755
      %v821 = vunpack.c.l.b16 %v756
      %v822 = vunpack.c.l.b16 %v757
      %v823 = vunpack.c.l.b16 %v758
      %v824 = vunpack.c.l.b16 %v759
      %v825 = vunpack.c.l.b16 %v760
      %v826 = vunpack.c.l.b16 %v761
      %v827 = vunpack.c.l.b16 %v762
      %v828 = vunpack.c.l.b16 %v763
      %v829 = vunpack.c.l.b16 %v764
      %v830 = vunpack.c.l.b16 %v765
      %v831 = vunpack.c.l.b16 %v766
      %v832 = vunpack.c.l.b16 %v767
      %v833 = vunpack.c.l.b16 %v768
      %v834 = vunpack.c.l.b16 %v769
      %v835 = vunpack.c.l.b16 %v770
      %v836 = vpack.c.b16 %v821, %v820
      %v837 = vpack.c.b16 %v823, %v822
      %v838 = vpack.c.b16 %v825, %v824
      %v839 = vpack.c.b16 %v827, %v826
      %v840 = vpack.c.b16 %v829, %v828
      %v841 = vpack.c.b16 %v831, %v830
      %v842 = vpack.c.b16 %v833, %v832
      %v843 = vpack.c.b16 %v835, %v834
      %852 = vmatpush.bf16.msra.mxu0 %v843
      %853 = vmatpush.bf16.msra.mxu0 %v842
      %854 = vmatpush.bf16.msra.mxu0 %v841
      %855 = vmatpush.bf16.msra.mxu0 %v840
      %856 = vmatpush.bf16.msra.mxu0 %v839
      %857 = vmatpush.bf16.msra.mxu0 %v838
      %858 = vmatpush.bf16.msra.mxu0 %v837
      %859 = vmatpush.bf16.msra.mxu0 %v836
      %860 = vmatmul.bf16.gmra.mxu0 %v791
      %v861 = vpop.f32.mrf.mxu0
      %v862 = vadd.f32 0.0, %v861
      %v863 = vpop.f32.mrf.mxu0
      %v864 = vadd.f32 0.0, %v863
      %865 = vmatmul.bf16.gmra.mxu0 %v800
      %v866 = vpop.f32.mrf.mxu0
      %v867 = vadd.f32 0.0, %v866
      %v868 = vpop.f32.mrf.mxu0
      %v869 = vadd.f32 0.0, %v868
      %870 = vmatmul.bf16.gmra.mxu0 %v799
      %v871 = vpop.f32.mrf.mxu0
      %v872 = vadd.f32 0.0, %v871
      %v873 = vpop.f32.mrf.mxu0
      %874 = vdwg.mxu0
      %v875 = vadd.f32 %v748, %v862
      %v876 = vadd.f32 %v749, %v864
      %v877 = vadd.f32 %v750, %v867
      %v878 = vadd.f32 %v751, %v869
      %v879 = vadd.f32 %v752, %v872
      %v880 = vld [vmem:[%s270 + $0x4] sm:$0xc]
      %s881 = scalar_lea.vmem %s279, 320
      %v882 = vld [vmem:[%s881] sm:$0xf]
      %v883 = vld [vmem:[%s881 + $0x4] sm:$0xf]
      %v884 = vld [vmem:[%s881 + $0x8] sm:$0xf]
      %v885 = vld [vmem:[%s881 + $0xc] sm:$0xf]
      %v886 = vld [vmem:[%s881 + $0x10] sm:$0xf]
      %v887 = vld [vmem:[%s881 + $0x14] sm:$0xf]
      %v888 = vld [vmem:[%s881 + $0x18] sm:$0xf]
      %v889 = vld [vmem:[%s881 + $0x1c] sm:$0xf]
      %v890 = vld [vmem:[%s881 + $0x20] sm:$0xf]
      %v891 = vld [vmem:[%s881 + $0x24] sm:$0xf]
      %v892 = vld [vmem:[%s881 + $0x28] sm:$0xf]
      %v893 = vld [vmem:[%s881 + $0x2c] sm:$0xf]
      %v894 = vld [vmem:[%s881 + $0x30] sm:$0xf]
      %v895 = vld [vmem:[%s881 + $0x34] sm:$0xf]
      %v896 = vld [vmem:[%s881 + $0x38] sm:$0xf]
      %v897 = vld [vmem:[%s881 + $0x3c] sm:$0xf]
      %v899 = vunpack.c.l.b16 %v880
      %v900 = vpack.c.b16 %v661, %v899
      %vm901 = vcmask 1045504
      %v902 = vrot.slane %v900, 2
      %v903 = vrot.slane %v667, 2
      %v904 = vsel %vm901, %v902, %v903
      %v905 = vrot.slane %v773, 2
      %v906 = vsel %vm901, %v903, %v905
      %v926 = vunpack.c.l.b16 %v882
      %v927 = vunpack.c.l.b16 %v883
      %v928 = vunpack.c.l.b16 %v884
      %v929 = vunpack.c.l.b16 %v885
      %v930 = vunpack.c.l.b16 %v886
      %v931 = vunpack.c.l.b16 %v887
      %v932 = vunpack.c.l.b16 %v888
      %v933 = vunpack.c.l.b16 %v889
      %v934 = vunpack.c.l.b16 %v890
      %v935 = vunpack.c.l.b16 %v891
      %v936 = vunpack.c.l.b16 %v892
      %v937 = vunpack.c.l.b16 %v893
      %v938 = vunpack.c.l.b16 %v894
      %v939 = vunpack.c.l.b16 %v895
      %v940 = vunpack.c.l.b16 %v896
      %v941 = vunpack.c.l.b16 %v897
      %v942 = vpack.c.b16 %v927, %v926
      %v943 = vpack.c.b16 %v929, %v928
      %v944 = vpack.c.b16 %v931, %v930
      %v945 = vpack.c.b16 %v933, %v932
      %v946 = vpack.c.b16 %v935, %v934
      %v947 = vpack.c.b16 %v937, %v936
      %v948 = vpack.c.b16 %v939, %v938
      %v949 = vpack.c.b16 %v941, %v940
      %958 = vmatpush.bf16.msra.mxu0 %v949
      %959 = vmatpush.bf16.msra.mxu0 %v948
      %960 = vmatpush.bf16.msra.mxu0 %v947
      %961 = vmatpush.bf16.msra.mxu0 %v946
      %962 = vmatpush.bf16.msra.mxu0 %v945
      %963 = vmatpush.bf16.msra.mxu0 %v944
      %964 = vmatpush.bf16.msra.mxu0 %v943
      %965 = vmatpush.bf16.msra.mxu0 %v942
      %966 = vmatmul.bf16.gmra.mxu0 %v904
      %v967 = vpop.f32.mrf.mxu0
      %v968 = vadd.f32 0.0, %v967
      %v969 = vpop.f32.mrf.mxu0
      %v970 = vadd.f32 0.0, %v969
      %971 = vmatmul.bf16.gmra.mxu0 %v906
      %v972 = vpop.f32.mrf.mxu0
      %v973 = vadd.f32 0.0, %v972
      %v974 = vpop.f32.mrf.mxu0
      %v975 = vadd.f32 0.0, %v974
      %976 = vmatmul.bf16.gmra.mxu0 %v905
      %v977 = vpop.f32.mrf.mxu0
      %v978 = vadd.f32 0.0, %v977
      %v979 = vpop.f32.mrf.mxu0
      %980 = vdwg.mxu0
      %v981 = vadd.f32 %v875, %v968
      %v982 = vadd.f32 %v876, %v970
      %v983 = vadd.f32 %v877, %v973
      %v984 = vadd.f32 %v878, %v975
      %v985 = vadd.f32 %v879, %v978
      %v986 = vld [vmem:[%s270 + $0x8] sm:$0xc]
      %v987 = vld [vmem:[%s270 + $0xc] sm:$0xf]
      %v988 = vld [vmem:[%s270 + $0x10] sm:$0xf]
      %v989 = vld [vmem:[%s270 + $0x14] sm:$0xf]
      %v990 = vld [vmem:[%s270 + $0x18] sm:$0xf]
      %v991 = vld [vmem:[%s270 + $0x1c] sm:$0x3]
      %s992 = scalar_lea.vmem %s279, 384
      %v993 = vld [vmem:[%s992] sm:$0xf]
      %v994 = vld [vmem:[%s992 + $0x4] sm:$0xf]
      %v995 = vld [vmem:[%s992 + $0x8] sm:$0xf]
      %v996 = vld [vmem:[%s992 + $0xc] sm:$0xf]
      %v997 = vld [vmem:[%s992 + $0x10] sm:$0xf]
      %v998 = vld [vmem:[%s992 + $0x14] sm:$0xf]
      %v999 = vld [vmem:[%s992 + $0x18] sm:$0xf]
      %v1000 = vld [vmem:[%s992 + $0x1c] sm:$0xf]
      %v1001 = vld [vmem:[%s992 + $0x20] sm:$0xf]
      %v1002 = vld [vmem:[%s992 + $0x24] sm:$0xf]
      %v1003 = vld [vmem:[%s992 + $0x28] sm:$0xf]
      %v1004 = vld [vmem:[%s992 + $0x2c] sm:$0xf]
      %v1005 = vld [vmem:[%s992 + $0x30] sm:$0xf]
      %v1006 = vld [vmem:[%s992 + $0x34] sm:$0xf]
      %v1007 = vld [vmem:[%s992 + $0x38] sm:$0xf]
      %v1008 = vld [vmem:[%s992 + $0x3c] sm:$0xf]
      %v1015 = vunpack.c.l.b16 %v986
      %v1016 = vunpack.c.l.b16 %v987
      %v1017 = vunpack.c.l.b16 %v988
      %v1018 = vunpack.c.l.b16 %v989
      %v1019 = vunpack.c.l.b16 %v990
      %v1020 = vunpack.c.l.b16 %v991
      %v1021 = vpack.c.b16 %v1016, %v1015
      %v1022 = vpack.c.b16 %v1018, %v1017
      %v1023 = vpack.c.b16 %v1020, %v1019
      %v1024 = vrot.slane %v1021, 2
      %v1025 = vrot.slane %v1022, 2
      %v1026 = vsel %vm901, %v1024, %v1025
      %v1027 = vrot.slane %v1023, 2
      %v1028 = vsel %vm901, %v1025, %v1027
      %v1048 = vunpack.c.l.b16 %v993
      %v1049 = vunpack.c.l.b16 %v994
      %v1050 = vunpack.c.l.b16 %v995
      %v1051 = vunpack.c.l.b16 %v996
      %v1052 = vunpack.c.l.b16 %v997
      %v1053 = vunpack.c.l.b16 %v998
      %v1054 = vunpack.c.l.b16 %v999
      %v1055 = vunpack.c.l.b16 %v1000
      %v1056 = vunpack.c.l.b16 %v1001
      %v1057 = vunpack.c.l.b16 %v1002
      %v1058 = vunpack.c.l.b16 %v1003
      %v1059 = vunpack.c.l.b16 %v1004
      %v1060 = vunpack.c.l.b16 %v1005
      %v1061 = vunpack.c.l.b16 %v1006
      %v1062 = vunpack.c.l.b16 %v1007
      %v1063 = vunpack.c.l.b16 %v1008
      %v1064 = vpack.c.b16 %v1049, %v1048
      %v1065 = vpack.c.b16 %v1051, %v1050
      %v1066 = vpack.c.b16 %v1053, %v1052
      %v1067 = vpack.c.b16 %v1055, %v1054
      %v1068 = vpack.c.b16 %v1057, %v1056
      %v1069 = vpack.c.b16 %v1059, %v1058
      %v1070 = vpack.c.b16 %v1061, %v1060
      %v1071 = vpack.c.b16 %v1063, %v1062
      %1080 = vmatpush.bf16.msra.mxu0 %v1071
      %1081 = vmatpush.bf16.msra.mxu0 %v1070
      %1082 = vmatpush.bf16.msra.mxu0 %v1069
      %1083 = vmatpush.bf16.msra.mxu0 %v1068
      %1084 = vmatpush.bf16.msra.mxu0 %v1067
      %1085 = vmatpush.bf16.msra.mxu0 %v1066
      %1086 = vmatpush.bf16.msra.mxu0 %v1065
      %1087 = vmatpush.bf16.msra.mxu0 %v1064
      %1088 = vmatmul.bf16.gmra.mxu0 %v1026
      %v1089 = vpop.f32.mrf.mxu0
      %v1090 = vadd.f32 0.0, %v1089
      %v1091 = vpop.f32.mrf.mxu0
      %v1092 = vadd.f32 0.0, %v1091
      %1093 = vmatmul.bf16.gmra.mxu0 %v1028
      %v1094 = vpop.f32.mrf.mxu0
      %v1095 = vadd.f32 0.0, %v1094
      %v1096 = vpop.f32.mrf.mxu0
      %v1097 = vadd.f32 0.0, %v1096
      %1098 = vmatmul.bf16.gmra.mxu0 %v1027
      %v1099 = vpop.f32.mrf.mxu0
      %v1100 = vadd.f32 0.0, %v1099
      %v1101 = vpop.f32.mrf.mxu0
      %1102 = vdwg.mxu0
      %v1103 = vadd.f32 %v981, %v1090
      %v1104 = vadd.f32 %v982, %v1092
      %v1105 = vadd.f32 %v983, %v1095
      %v1106 = vadd.f32 %v984, %v1097
      %v1107 = vadd.f32 %v985, %v1100
      %v1108 = vld [vmem:[%s270 + $0x1c] sm:$0x7]
      %s1109 = scalar_lea.vmem %s279, 448
      %v1110 = vld [vmem:[%s1109] sm:$0xf]
      %v1111 = vld [vmem:[%s1109 + $0x4] sm:$0xf]
      %v1112 = vld [vmem:[%s1109 + $0x8] sm:$0xf]
      %v1113 = vld [vmem:[%s1109 + $0xc] sm:$0xf]
      %v1114 = vld [vmem:[%s1109 + $0x10] sm:$0xf]
      %v1115 = vld [vmem:[%s1109 + $0x14] sm:$0xf]
      %v1116 = vld [vmem:[%s1109 + $0x18] sm:$0xf]
      %v1117 = vld [vmem:[%s1109 + $0x1c] sm:$0xf]
      %v1118 = vld [vmem:[%s1109 + $0x20] sm:$0xf]
      %v1119 = vld [vmem:[%s1109 + $0x24] sm:$0xf]
      %v1120 = vld [vmem:[%s1109 + $0x28] sm:$0xf]
      %v1121 = vld [vmem:[%s1109 + $0x2c] sm:$0xf]
      %v1122 = vld [vmem:[%s1109 + $0x30] sm:$0xf]
      %v1123 = vld [vmem:[%s1109 + $0x34] sm:$0xf]
      %v1124 = vld [vmem:[%s1109 + $0x38] sm:$0xf]
      %v1125 = vld [vmem:[%s1109 + $0x3c] sm:$0xf]
      %v1127 = vunpack.c.l.b16 %v1108
      %v1128 = vpack.c.b16 %v1127, %v1019
      %vm1129 = vsmask.f32 5376
      %v1131 = vshrl.u32 %v1021, 16
      %v1133 = vrot.slane %v1131, 2
      %v1134 = vshll.u32 %v1021, 16
      %v1136 = vrot.slane %v1134, 3
      %v1137 = vor.u32 %v1133, %v1136
      %v1139 = vshrl.u32 %v1022, 16
      %v1141 = vrot.slane %v1139, 2
      %v1142 = vshll.u32 %v1022, 16
      %v1144 = vrot.slane %v1142, 3
      %v1145 = vor.u32 %v1141, %v1144
      %v1146 = vsel %vm1129, %v1137, %v1145
      %v1148 = vshrl.u32 %v1128, 16
      %v1150 = vrot.slane %v1148, 2
      %v1151 = vshll.u32 %v1128, 16
      %v1153 = vrot.slane %v1151, 3
      %v1154 = vor.u32 %v1150, %v1153
      %v1155 = vsel %vm1129, %v1145, %v1154
      %v1175 = vunpack.c.l.b16 %v1110
      %v1176 = vunpack.c.l.b16 %v1111
      %v1177 = vunpack.c.l.b16 %v1112
      %v1178 = vunpack.c.l.b16 %v1113
      %v1179 = vunpack.c.l.b16 %v1114
      %v1180 = vunpack.c.l.b16 %v1115
      %v1181 = vunpack.c.l.b16 %v1116
      %v1182 = vunpack.c.l.b16 %v1117
      %v1183 = vunpack.c.l.b16 %v1118
      %v1184 = vunpack.c.l.b16 %v1119
      %v1185 = vunpack.c.l.b16 %v1120
      %v1186 = vunpack.c.l.b16 %v1121
      %v1187 = vunpack.c.l.b16 %v1122
      %v1188 = vunpack.c.l.b16 %v1123
      %v1189 = vunpack.c.l.b16 %v1124
      %v1190 = vunpack.c.l.b16 %v1125
      %v1191 = vpack.c.b16 %v1176, %v1175
      %v1192 = vpack.c.b16 %v1178, %v1177
      %v1193 = vpack.c.b16 %v1180, %v1179
      %v1194 = vpack.c.b16 %v1182, %v1181
      %v1195 = vpack.c.b16 %v1184, %v1183
      %v1196 = vpack.c.b16 %v1186, %v1185
      %v1197 = vpack.c.b16 %v1188, %v1187
      %v1198 = vpack.c.b16 %v1190, %v1189
      %1207 = vmatpush.bf16.msra.mxu0 %v1198
      %1208 = vmatpush.bf16.msra.mxu0 %v1197
      %1209 = vmatpush.bf16.msra.mxu0 %v1196
      %1210 = vmatpush.bf16.msra.mxu0 %v1195
      %1211 = vmatpush.bf16.msra.mxu0 %v1194
      %1212 = vmatpush.bf16.msra.mxu0 %v1193
      %1213 = vmatpush.bf16.msra.mxu0 %v1192
      %1214 = vmatpush.bf16.msra.mxu0 %v1191
      %1215 = vmatmul.bf16.gmra.mxu0 %v1146
      %v1216 = vpop.f32.mrf.mxu0
      %v1217 = vadd.f32 0.0, %v1216
      %v1218 = vpop.f32.mrf.mxu0
      %v1219 = vadd.f32 0.0, %v1218
      %1220 = vmatmul.bf16.gmra.mxu0 %v1155
      %v1221 = vpop.f32.mrf.mxu0
      %v1222 = vadd.f32 0.0, %v1221
      %v1223 = vpop.f32.mrf.mxu0
      %v1224 = vadd.f32 0.0, %v1223
      %1225 = vmatmul.bf16.gmra.mxu0 %v1154
      %v1226 = vpop.f32.mrf.mxu0
      %v1227 = vadd.f32 0.0, %v1226
      %v1228 = vpop.f32.mrf.mxu0
      %1229 = vdwg.mxu0
      %v1230 = vadd.f32 %v1103, %v1217
      %v1231 = vadd.f32 %v1104, %v1219
      %v1232 = vadd.f32 %v1105, %v1222
      %v1233 = vadd.f32 %v1106, %v1224
      %v1234 = vadd.f32 %v1107, %v1227
      %v1235 = vld [vmem:[%s270 + $0x8] sm:$0x8]
      %s1236 = scalar_lea.vmem %s279, 512
      %v1237 = vld [vmem:[%s1236] sm:$0xf]
      %v1238 = vld [vmem:[%s1236 + $0x4] sm:$0xf]
      %v1239 = vld [vmem:[%s1236 + $0x8] sm:$0xf]
      %v1240 = vld [vmem:[%s1236 + $0xc] sm:$0xf]
      %v1241 = vld [vmem:[%s1236 + $0x10] sm:$0xf]
      %v1242 = vld [vmem:[%s1236 + $0x14] sm:$0xf]
      %v1243 = vld [vmem:[%s1236 + $0x18] sm:$0xf]
      %v1244 = vld [vmem:[%s1236 + $0x1c] sm:$0xf]
      %v1245 = vld [vmem:[%s1236 + $0x20] sm:$0xf]
      %v1246 = vld [vmem:[%s1236 + $0x24] sm:$0xf]
      %v1247 = vld [vmem:[%s1236 + $0x28] sm:$0xf]
      %v1248 = vld [vmem:[%s1236 + $0x2c] sm:$0xf]
      %v1249 = vld [vmem:[%s1236 + $0x30] sm:$0xf]
      %v1250 = vld [vmem:[%s1236 + $0x34] sm:$0xf]
      %v1251 = vld [vmem:[%s1236 + $0x38] sm:$0xf]
      %v1252 = vld [vmem:[%s1236 + $0x3c] sm:$0xf]
      %v1254 = vunpack.c.l.b16 %v1235
      %v1255 = vpack.c.b16 %v1016, %v1254
      %vm1256 = vcmask 1044480
      %v1257 = vrot.slane %v1255, 3
      %v1258 = vrot.slane %v1022, 3
      %v1259 = vsel %vm1256, %v1257, %v1258
      %v1260 = vrot.slane %v1128, 3
      %v1261 = vsel %vm1256, %v1258, %v1260
      %v1281 = vunpack.c.l.b16 %v1237
      %v1282 = vunpack.c.l.b16 %v1238
      %v1283 = vunpack.c.l.b16 %v1239
      %v1284 = vunpack.c.l.b16 %v1240
      %v1285 = vunpack.c.l.b16 %v1241
      %v1286 = vunpack.c.l.b16 %v1242
      %v1287 = vunpack.c.l.b16 %v1243
      %v1288 = vunpack.c.l.b16 %v1244
      %v1289 = vunpack.c.l.b16 %v1245
      %v1290 = vunpack.c.l.b16 %v1246
      %v1291 = vunpack.c.l.b16 %v1247
      %v1292 = vunpack.c.l.b16 %v1248
      %v1293 = vunpack.c.l.b16 %v1249
      %v1294 = vunpack.c.l.b16 %v1250
      %v1295 = vunpack.c.l.b16 %v1251
      %v1296 = vunpack.c.l.b16 %v1252
      %v1297 = vpack.c.b16 %v1282, %v1281
      %v1298 = vpack.c.b16 %v1284, %v1283
      %v1299 = vpack.c.b16 %v1286, %v1285
      %v1300 = vpack.c.b16 %v1288, %v1287
      %v1301 = vpack.c.b16 %v1290, %v1289
      %v1302 = vpack.c.b16 %v1292, %v1291
      %v1303 = vpack.c.b16 %v1294, %v1293
      %v1304 = vpack.c.b16 %v1296, %v1295
      %1313 = vmatpush.bf16.msra.mxu0 %v1304
      %1314 = vmatpush.bf16.msra.mxu0 %v1303
      %1315 = vmatpush.bf16.msra.mxu0 %v1302
      %1316 = vmatpush.bf16.msra.mxu0 %v1301
      %1317 = vmatpush.bf16.msra.mxu0 %v1300
      %1318 = vmatpush.bf16.msra.mxu0 %v1299
      %1319 = vmatpush.bf16.msra.mxu0 %v1298
      %1320 = vmatpush.bf16.msra.mxu0 %v1297
      %1321 = vmatmul.bf16.gmra.mxu0 %v1259
      %v1322 = vpop.f32.mrf.mxu0
      %v1323 = vadd.f32 0.0, %v1322
      %v1324 = vpop.f32.mrf.mxu0
      %v1325 = vadd.f32 0.0, %v1324
      %1326 = vmatmul.bf16.gmra.mxu0 %v1261
      %v1327 = vpop.f32.mrf.mxu0
      %v1328 = vadd.f32 0.0, %v1327
      %v1329 = vpop.f32.mrf.mxu0
      %v1330 = vadd.f32 0.0, %v1329
      %1331 = vmatmul.bf16.gmra.mxu0 %v1260
      %v1332 = vpop.f32.mrf.mxu0
      %v1333 = vadd.f32 0.0, %v1332
      %v1334 = vpop.f32.mrf.mxu0
      %1335 = vdwg.mxu0
      %v1336 = vadd.f32 %v1230, %v1323
      %v1337 = vadd.f32 %v1231, %v1325
      %v1338 = vadd.f32 %v1232, %v1328
      %v1339 = vadd.f32 %v1233, %v1330
      %v1340 = vadd.f32 %v1234, %v1333
      %v1341 = vld [vmem:[%s287] sm:$0x1]
      %v1343 = vperm.slane %v1341, 0
      %v1345 = vadd.f32 %v1336, %v1343
      %v1346 = vadd.f32 %v1337, %v1343
      %v1347 = vadd.f32 %v1338, %v1343
      %v1348 = vadd.f32 %v1339, %v1343
      %v1349 = vadd.f32 %v1340, %v1343
      %v1350 = vmax.f32 %v1345, 0.0
      %v1351 = vmax.f32 %v1346, 0.0
      %v1352 = vmax.f32 %v1347, 0.0
      %v1353 = vmax.f32 %v1348, 0.0
      %v1354 = vmax.f32 %v1349, 0.0
      %v1355 = vld [vmem:[%s4] sm:$0xff]
      %v1356 = vld [vmem:[%s4 + $0x8] sm:$0xff]
      %v1357 = vld [vmem:[%s4 + $0x10] sm:$0xff]
      %v1358 = vld [vmem:[%s4 + $0x18] sm:$0xff]
      %v1359 = vld [vmem:[%s4 + $0x20] sm:$0xff]
      %1361 = vset.pattern.permute.xlu0 0
      %1362 = vperm.xlu0 %1361, %v1355
      %v1363 = vpop.permute.xlu0 %1362
      %1366 = vset.pattern.permute.xlu0 0
      %1367 = vperm.xlu0 %1366, %v1356
      %v1368 = vpop.permute.xlu0 %1367
      %1371 = vset.pattern.permute.xlu0 0
      %1372 = vperm.xlu0 %1371, %v1357
      %v1373 = vpop.permute.xlu0 %1372
      %1376 = vset.pattern.permute.xlu0 0
      %1377 = vperm.xlu0 %1376, %v1358
      %v1378 = vpop.permute.xlu0 %1377
      %1381 = vset.pattern.permute.xlu0 0
      %1382 = vperm.xlu0 %1381, %v1359
      %v1383 = vpop.permute.xlu0 %1382
      %v1385 = vmul.f32 %v1350, %v1363
      %v1386 = vmul.f32 %v1351, %v1368
      %v1387 = vmul.f32 %v1352, %v1373
      %v1388 = vmul.f32 %v1353, %v1378
      %v1389 = vmul.f32 %v1354, %v1383
      %1390 = vst [vmem:[%s296] sm:$0xf] 0
      %vm1391 = vcmask 1041408
      %vm1392 = vsmask.f32 1280
      %vm1393 = vmand %vm1391, %vm1392
      %v1394 = vld [vmem:[%s296 + $0x4] sm:$0x3]
      %v1395 = vsel %vm1393, 0, %v1394
      %1396 = vst [vmem:[%s296 + $0x4] sm:$0x3] %v1395
      %vm1397 = vcmask 1043457
      %vm1398 = vsmask.f32 7942
      %vm1399 = vmand %vm1397, %vm1398
      %v1400 = vld [vmem:[%s296 + $0x18] sm:$0xe]
      %v1401 = vsel %vm1399, 0, %v1400
      %1402 = vst [vmem:[%s296 + $0x18] sm:$0xe] %v1401
      %1403 = vst [vmem:[%s296 + $0x1c] sm:$0xf] 0
      %1404 = vst [vmem:[%s296 + $0x20] sm:$0xf] 0
      %1405 = vst [vmem:[%s296 + $0x24] sm:$0xf] 0
      %v1406 = vpack.c.bf16 %v1385, %v1385
      %v1407 = vpack.c.bf16 %v1386, %v1386
      %v1408 = vpack.c.bf16 %v1387, %v1387
      %v1409 = vpack.c.bf16 %v1388, %v1388
      %v1410 = vpack.c.bf16 %v1389, %v1389
      %vm1411 = vsmask.f32 5392
      %vm1412 = vmor %vm1392, %vm1411
      %v1414 = vshrl.u32 %v1406, 16
      %v1416 = vrot.slane %v1414, 6
      %v1417 = vshll.u32 %v1406, 16
      %v1419 = vrot.slane %v1417, 7
      %v1420 = vor.u32 %v1416, %v1419
      %v1421 = vrot.slane %v1420, 4
      %v1423 = vshrl.u32 %v1407, 16
      %v1425 = vrot.slane %v1423, 6
      %v1426 = vshll.u32 %v1407, 16
      %v1428 = vrot.slane %v1426, 7
      %v1429 = vor.u32 %v1425, %v1428
      %v1430 = vsel %vm1412, %v1421, %v1429
      %v1431 = vrot.slane %v1429, 4
      %v1433 = vshrl.u32 %v1408, 16
      %v1435 = vrot.slane %v1433, 6
      %v1436 = vshll.u32 %v1408, 16
      %v1438 = vrot.slane %v1436, 7
      %v1439 = vor.u32 %v1435, %v1438
      %v1440 = vsel %vm1412, %v1431, %v1439
      %v1441 = vrot.slane %v1439, 4
      %v1443 = vshrl.u32 %v1409, 16
      %v1445 = vrot.slane %v1443, 6
      %v1446 = vshll.u32 %v1409, 16
      %v1448 = vrot.slane %v1446, 7
      %v1449 = vor.u32 %v1445, %v1448
      %v1450 = vsel %vm1412, %v1441, %v1449
      %v1451 = vrot.slane %v1449, 4
      %v1453 = vshrl.u32 %v1410, 16
      %v1455 = vrot.slane %v1453, 6
      %v1456 = vshll.u32 %v1410, 16
      %v1458 = vrot.slane %v1456, 7
      %v1459 = vor.u32 %v1455, %v1458
      %v1460 = vsel %vm1412, %v1451, %v1459
      %v1461 = vrot.slane %v1459, 4
      %v1468 = vld [vmem:[%s296 + $0x4] sm:$0xe]
      %v1469 = vsel %vm1399, %v1420, %v1468
      %1470 = vst [vmem:[%s296 + $0x4] sm:$0xe] %v1469
      %1471 = vst [vmem:[%s296 + $0x8] sm:$0xf] %v1430
      %1472 = vst [vmem:[%s296 + $0xc] sm:$0xf] %v1440
      %1473 = vst [vmem:[%s296 + $0x10] sm:$0xf] %v1450
      %1474 = vst [vmem:[%s296 + $0x14] sm:$0xf] %v1460
      %v1475 = vld [vmem:[%s296 + $0x18] sm:$0x3]
      %v1476 = vsel %vm1393, %v1461, %v1475
      %1477 = vst [vmem:[%s296 + $0x18] sm:$0x3] %v1476
      %p1478 = scmp.lt.s32.totalorder %s28, 3
      %s1479 = scalar_select %p1478, %s28, 3
      %p1480 = scmp.lt.s32.totalorder %s29, 0
      %s1481 = scalar_select %p1480, %s29, 0
      %s1482 = smul.addr %s1479, 10
      %s1483 = sadd.s32 %s1481, %s1482
      %s1484 = smul.addr %s1483, 4
      %s1485 = scalar_lea.vmem %s5, %s1484
      // Predicated region
      $region37: #{_lambda_.20} parent=35 // pred_check
        %p1486 = pneg %p163
      $region38: #{_lambda_.20} parent=35 // pred_check_branch
        %1488 = sbr.rel (%p1486) target = $region40
      $region39: #{_lambda_.20} parent=35 // pred_region
        _
      $region40: #{_lambda_.20} parent=35 // pred_fallthru
        _
    $region36: #{_lambda_.20} parent=5 // pred_fallthru
      _
    %p1489 = scmp.le.s32.totalorder 2, %s19
    // Predicated region
    $region41: #{_lambda_.20} parent=5 // pred_check
      %p1490 = pneg %p1489
    $region42: #{_lambda_.20} parent=5 // pred_check_branch
      %1492 = sbr.rel (%p1490) target = $region44
    $region43: #{_lambda_.20} parent=5 // pred_region
      %s1493 = ssub.s32 %s19, 2
      // Predicated region
      $region45: #{_lambda_.20} parent=43 // pred_check
        %p1494 = pneg %p169
      $region46: #{_lambda_.20} parent=43 // pred_check_branch
        %1496 = sbr.rel (%p1494) target = $region48
      $region47: #{_lambda_.20} parent=43 // pred_region
        %p1497 = scmp.lt.s32.totalorder %s30, 3
        %s1498 = scalar_select %p1497, %s30, 3
        %p1499 = scmp.lt.s32.totalorder %s31, 0
        %s1500 = scalar_select %p1499, %s31, 0
        %s1501 = smul.addr %s1498, 10
        %s1502 = sadd.s32 %s1500, %s1501
        %s1503 = smul.addr %s1502, 4
        %s1504 = scalar_lea.vmem %s5, %s1503
      $region48: #{_lambda_.20} parent=43 // pred_fallthru
        _
    $region44: #{_lambda_.20} parent=5 // pred_fallthru
      _
  $region6: #{_lambda_.20} parent=0 // loop_footer
    %s23 = sadd.s32 1, %s19
  $region7: #{_lambda_.20} parent=0 // loop_footer_branch
    %18 = sbr.rel target = $region3
  $region8: #{_lambda_.20} parent=0 // loop_exit
    _

</llo_original>
